<compile_context>
chip_gen: v5e
topology: v5e:2x2
jax: 0.10.0
libtpu: 0.0.40
codegen_flags: <defaults>
</compile_context>

<pallas_src>
import numpy as np
import jax
import jax.numpy as jnp
from jax.experimental import pallas as pl
from jax.experimental.pallas import tpu as pltpu

NEG_SLOPE = 0.2     # LeakyReLU(0.2)
BN_EPS = 1e-5       # nn.BatchNorm3d default eps


# ----------------------------------------------------------------------------
# Pallas kernels
# ----------------------------------------------------------------------------
def _conv_bias_act_kernel(p_ref, w_ref, b_ref, o_ref):
    """One M-tile of  LeakyReLU( patches @ W_blockdiag + b )   (first conv)."""
    y = jnp.dot(p_ref[...], w_ref[...], preferred_element_type=jnp.float32)
    y = y + b_ref[...]
    o_ref[...] = jnp.where(y >= 0, y, NEG_SLOPE * y).astype(o_ref.dtype)


def _conv_bn_act_kernel(p_ref, w_ref, g_ref, be_ref, o_ref, acc_ref):
    """LeakyReLU( BN( patches @ W ) ), contraction dim pipelined over the grid."""
    k = pl.program_id(0)

    @pl.when(k == 0)
    def _init():
        acc_ref[...] = jnp.zeros_like(acc_ref)

    acc_ref[...] += jnp.dot(p_ref[...], w_ref[...],
                            preferred_element_type=jnp.float32)

    @pl.when(k == pl.num_programs(0) - 1)
    def _finalize():
        y = acc_ref[...]
        mean = jnp.mean(y, axis=0, keepdims=True)
        var = jnp.mean(jnp.square(y - mean), axis=0, keepdims=True)
        y = (y - mean) * jax.lax.rsqrt(var + BN_EPS)
        y = y * g_ref[...] + be_ref[...]
        o_ref[...] = jnp.where(y >= 0, y, NEG_SLOPE * y).astype(o_ref.dtype)


def _tail_kernel(p_ref, w3_ref, g3_ref, be3_ref, w4_ref, g4_ref, be4_ref,
                 w5_ref, b5_ref, o_ref, y2_ref, y2n_ref):
    """Fused conv3(32->64)+BN+LReLU, conv4(64->128)+BN+LReLU, conv5(128->1)+bias.

    Valid for the 16^3 input: conv3's output is 2^3, conv4's output is 1^3 so
    only the 8 interior taps of its 4^3 kernel touch data, and the final
    3^3/pad-1 conv on a 1^3 volume reduces to its center tap.

    p_ref rows are position-major: rows [P*nb, (P+1)*nb) hold output position
    P for all nb batch samples.  conv3's results are stored position-block by
    position-block into a lane-major (nb, 8*64) VMEM scratch so that conv4 is
    a single (nb, 512) @ (512, 128) matmul.
    """
    nb = o_ref.shape[0]
    npos = 8
    c3 = w3_ref.shape[1]

    # ---- conv3: 8 per-position matmuls + BN statistics accumulation --------
    s = jnp.zeros((1, c3), jnp.float32)
    ss = jnp.zeros((1, c3), jnp.float32)
    for P in range(npos):
        lhs = p_ref[P * nb:(P + 1) * nb, :]                       # [nb, 2048]
        yP = jnp.dot(lhs, w3_ref[...], preferred_element_type=jnp.float32)
        y2_ref[:, P * c3:(P + 1) * c3] = yP
        s = s + jnp.sum(yP, axis=0, keepdims=True)
        ss = ss + jnp.sum(yP * yP, axis=0, keepdims=True)
    cnt = float(npos * nb)
    mean = s / cnt
    var = jnp.maximum(ss / cnt - mean * mean, 0.0)
    scale = g3_ref[...] * jax.lax.rsqrt(var + BN_EPS)
    shift = be3_ref[...] - mean * scale
    for P in range(npos):
        z = y2_ref[:, P * c3:(P + 1) * c3] * scale + shift
        z = jnp.where(z >= 0, z, NEG_SLOPE * z)
        y2n_ref[:, P * c3:(P + 1) * c3] = z.astype(y2n_ref.dtype)

    # ---- conv4: single (nb, 512) @ (512, 128) matmul + BN + LReLU ----------
    y3 = jnp.dot(y2n_ref[...], w4_ref[...], preferred_element_type=jnp.float32)
    mean4 = jnp.mean(y3, axis=0, keepdims=True)
    var4 = jnp.mean(jnp.square(y3 - mean4), axis=0, keepdims=True)
    y3 = (y3 - mean4) * jax.lax.rsqrt(var4 + BN_EPS)
    y3 = y3 * g4_ref[...] + be4_ref[...]
    y3 = jnp.where(y3 >= 0, y3, NEG_SLOPE * y3)

    # ---- conv5: center tap only -> lane reduction + bias -------------------
    out = jnp.sum(y3 * w5_ref[...], axis=1, keepdims=True) + b5_ref[...]
    o_ref[...] = out.astype(o_ref.dtype)


# ----------------------------------------------------------------------------
# pallas_call wrappers
# ----------------------------------------------------------------------------
def _full_spec(shape):
    zeros = (0,) * len(shape)
    return pl.BlockSpec(shape, lambda *_: zeros)


def _layer0_num_blocks():
    """2 parallel M-blocks on v7x (two TensorCores), 1 block elsewhere."""
    try:
        kind = jax.devices()[0].device_kind.lower()
    except Exception:
        kind = ""
    return 2 if ("v7" in kind or "7x" in kind) else 1


def _layer0(p0, w, b):
    M, K = p0.shape
    Cout = w.shape[1]
    nblk = _layer0_num_blocks()
    if M % nblk != 0 or (M // nblk) % 8 != 0:
        nblk = 1
    tm = M // nblk
    return pl.pallas_call(
        _conv_bias_act_kernel,
        out_shape=jax.ShapeDtypeStruct((M, Cout), jnp.bfloat16),
        grid=(nblk,),
        in_specs=[pl.BlockSpec((tm, K), lambda i: (i, 0)),
                  pl.BlockSpec((K, Cout), lambda i: (0, 0)),
                  pl.BlockSpec((1, Cout), lambda i: (0, 0))],
        out_specs=pl.BlockSpec((tm, Cout), lambda i: (i, 0)),
        compiler_params=pltpu.CompilerParams(
            dimension_semantics=("parallel",)),
    )(p0, w, b)


def _conv2(p1, w, g, be):
    M, K = p1.shape
    Cout = w.shape[1]
    kt = 512 if K % 512 == 0 else K            # pipeline the contraction dim
    return pl.pallas_call(
        _conv_bn_act_kernel,
        out_shape=jax.ShapeDtypeStruct((M, Cout), jnp.bfloat16),
        grid=(K // kt,),
        in_specs=[pl.BlockSpec((M, kt), lambda k: (0, k)),
                  pl.BlockSpec((kt, Cout), lambda k: (k, 0)),
                  pl.BlockSpec((1, Cout), lambda k: (0, 0)),
                  pl.BlockSpec((1, Cout), lambda k: (0, 0))],
        out_specs=pl.BlockSpec((M, Cout), lambda k: (0, 0)),
        scratch_shapes=[pltpu.VMEM((M, Cout), jnp.float32)],
        compiler_params=pltpu.CompilerParams(
            dimension_semantics=("arbitrary",)),
    )(p1, w, g, be)


def _tail(p2, w3, g3, be3, w4, g4, be4, w5c, b5, n_batch):
    M, K = p2.shape
    C3 = w3.shape[1]
    C4 = w4.shape[1]
    return pl.pallas_call(
        _tail_kernel,
        out_shape=jax.ShapeDtypeStruct((n_batch, 1), jnp.float32),
        grid=(1,),
        in_specs=[_full_spec((M, K)), _full_spec((K, C3)),
                  _full_spec((1, C3)), _full_spec((1, C3)),
                  _full_spec((8 * C3, C4)),
                  _full_spec((1, C4)), _full_spec((1, C4)),
                  _full_spec((1, C4)), _full_spec((1, 1))],
        out_specs=_full_spec((n_batch, 1)),
        scratch_shapes=[pltpu.VMEM((n_batch, 8 * C3), jnp.float32),
                        pltpu.VMEM((n_batch, 8 * C3), jnp.bfloat16)],
        compiler_params=pltpu.CompilerParams(
            dimension_semantics=("arbitrary",)),
    )(p2, w3, g3, be3, w4, g4, be4, w5c, b5)


# ----------------------------------------------------------------------------
# One-time parameter preprocessing (hoisted out of the forward)
# ----------------------------------------------------------------------------
def _conv_weight_to_mat(w):
    """PyTorch Conv3d weight [Cout, Cin, kD, kH, kW] -> [kD*kH*kW*Cin, Cout]."""
    cout, cin, kd, kh, kw = w.shape
    return jnp.transpose(w, (2, 3, 4, 1, 0)).reshape(kd * kh * kw * cin, cout)


def prepare_params(params, input_shape):
    n, c, d, h, w = input_shape
    # The fused tail kernel relies on conv3 output being 2^3 / conv4 output 1^3.
    assert (d, h, w) == (16, 16, 16), (
        "tail fusion is specialized to the 16^3 demo input")
    prep = {}

    # Layer 0: Conv3d(c->16, 4, 2, 1) + bias.  Fold 8 consecutive output rows
    # into 128 lanes with a block-diagonal weight so the kernel's output
    # stores are lane-dense (and K grows 64c -> 512c for the MXU).
    w1m = _conv_weight_to_mat(params["w1"])                      # [64c, 16]
    prep["w1bd"] = jnp.kron(jnp.eye(8, dtype=jnp.float32),
                            w1m.astype(jnp.float32)).astype(jnp.bfloat16)
    prep["b1t"] = jnp.tile(params["b1"].reshape(1, -1), (1, 8)).astype(jnp.float32)

    # Layer 1: Conv3d(16->32, 4, 2, 1, bias=False) + BN + LReLU.
    prep["w2"] = _conv_weight_to_mat(params["w2"]).astype(jnp.bfloat16)
    prep["g2"] = params["g2"].reshape(1, -1).astype(jnp.float32)
    prep["be2"] = params["beta2"].reshape(1, -1).astype(jnp.float32)

    # Layer 2: Conv3d(32->64, 4, 2, 1, bias=False) + BN + LReLU (fused tail).
    prep["w3"] = _conv_weight_to_mat(params["w3"]).astype(jnp.bfloat16)
    prep["g3"] = params["g3"].reshape(1, -1).astype(jnp.float32)
    prep["be3"] = params["beta3"].reshape(1, -1).astype(jnp.float32)

    # Layer 3: Conv3d(64->128, 4, 2, 1, bias=False) on a 2^3 volume: only the
    # 8 interior taps touch data -> one [8*64, 128] matrix, rows = (pos, cin)
    # matching the tail kernel's (nb, 8*64) scratch layout.
    w4 = params["w4"][:, :, 1:3, 1:3, 1:3]                       # [128,64,2,2,2]
    prep["w4"] = jnp.transpose(w4, (2, 3, 4, 1, 0)).reshape(
        8 * w4.shape[1], w4.shape[0]).astype(jnp.bfloat16)       # [512, 128]
    prep["g4"] = params["g4"].reshape(1, -1).astype(jnp.float32)
    prep["be4"] = params["beta4"].reshape(1, -1).astype(jnp.float32)

    # Final: Conv3d(128->1, 3, 1, 1) on a 1^3 volume -> center tap only.
    prep["w5c"] = params["w5"][:, :, 1, 1, 1].astype(jnp.float32)    # [1, 128]
    prep["b5"] = params["b5"].reshape(1, 1).astype(jnp.float32)
    return prep


# ----------------------------------------------------------------------------
# im2col via pad + static strided slices (no index tables, no gathers)
# ----------------------------------------------------------------------------
def _im2col(x, k, s, p):
    """x: [n, D, H, W, C] -> [n, Do, Ho, Wo, k^3*C], taps ordered (kd,kh,kw)."""
    n, D, H, W, C = x.shape
    do = (D + 2 * p - k) // s + 1
    ho = (H + 2 * p - k) // s + 1
    wo = (W + 2 * p - k) // s + 1
    xp = jnp.pad(x, ((0, 0), (p, p), (p, p), (p, p), (0, 0)))
    taps = []
    for kd in range(k):
        for kh in range(k):
            for kw in range(k):
                taps.append(xp[:, kd:kd + s * (do - 1) + 1:s,
                               kh:kh + s * (ho - 1) + 1:s,
                               kw:kw + s * (wo - 1) + 1:s, :])
    pat = jnp.stack(taps, axis=4)                     # [n,do,ho,wo,k^3,C]
    return pat.reshape(n, do, ho, wo, (k ** 3) * C)


# ----------------------------------------------------------------------------
# Forward (jitted): 3 pallas_calls, index-table-free im2col glue in between
# ----------------------------------------------------------------------------
@jax.jit
def discriminator_forward(x_ncdhw, prep):
    n, c, d, h, w = x_ncdhw.shape
    x = jnp.transpose(x_ncdhw, (0, 2, 3, 4, 1)).astype(jnp.bfloat16)  # NDHWC

    # conv1 (c->16) + bias + LeakyReLU
    p0 = _im2col(x, 4, 2, 1).reshape(n * 64, -1)          # [n*64, 8*64c]
    a1 = _layer0(p0, prep["w1bd"], prep["b1t"])           # [n*64, 128] bf16
    a1 = a1.reshape(n, 8, 8, 8, 16)

    # conv2 (16->32) + BN + LeakyReLU
    p1 = _im2col(a1, 4, 2, 1).reshape(n * 64, -1)         # [n*64, 1024]
    a2 = _conv2(p1, prep["w2"], prep["g2"], prep["be2"])  # [n*64, 32] bf16
    a2 = a2.reshape(n, 4, 4, 4, 32)

    # conv3 + conv4 + conv5 (fused tail), patch rows ordered (position, batch)
    p2 = _im2col(a2, 4, 2, 1).reshape(n, 8, -1)           # [n, 8, 2048]
    p2 = jnp.transpose(p2, (1, 0, 2)).reshape(8 * n, -1)  # [8n, 2048]
    out = _tail(p2, prep["w3"], prep["g3"], prep["be3"],
                prep["w4"], prep["g4"], prep["be4"],
                prep["w5c"], prep["b5"], n)               # [n, 1]
    return out.reshape(n, 1, 1, 1, 1)                     # NCDHW


# ----------------------------------------------------------------------------
# Pure-JAX f32 reference (lax.conv) for a correctness sanity check
# ----------------------------------------------------------------------------
def _leaky(x):
    return jnp.where(x >= 0, x, NEG_SLOPE * x)


def reference_forward(x, params):
    dn = ("NCDHW", "OIDHW", "NCDHW")

    def conv(x, w, stride, pad):
        return jax.lax.conv_general_dilated(
            x, w, window_strides=(stride,) * 3, padding=[(pad, pad)] * 3,
            dimension_numbers=dn, precision=jax.lax.Precision.HIGHEST)

    y = _leaky(conv(x, params["w1"], 2, 1) + params["b1"].reshape(1, -1, 1, 1, 1))
    for i in (2, 3, 4):
        y = conv(y, params[f"w{i}"], 2, 1)
        mean = jnp.mean(y, axis=(0, 2, 3, 4), keepdims=True)
        var = jnp.mean(jnp.square(y - mean), axis=(0, 2, 3, 4), keepdims=True)
        y = (y - mean) * jax.lax.rsqrt(var + BN_EPS)
        y = _leaky(y * params[f"g{i}"].reshape(1, -1, 1, 1, 1)
                   + params[f"beta{i}"].reshape(1, -1, 1, 1, 1))
    return conv(y, params["w5"], 1, 1) + params["b5"].reshape(1, -1, 1, 1, 1)


# ----------------------------------------------------------------------------
if __name__ == "__main__":
    key = jax.random.PRNGKey(0)
    ks = jax.random.split(key, 16)
    f32 = jnp.float32

    # Deterministic synthetic parameters (PyTorch Conv3d weight layout OIDHW).
    params = {
        "w1": 0.05 * jax.random.normal(ks[0], (16, 1, 4, 4, 4), f32),
        "b1": 0.05 * jax.random.normal(ks[1], (16,), f32),

        "w2": 0.05 * jax.random.normal(ks[2], (32, 16, 4, 4, 4), f32),
        "g2": 1.0 + 0.1 * jax.random.normal(ks[3], (32,), f32),
        "beta2": 0.1 * jax.random.normal(ks[4], (32,), f32),

        "w3": 0.05 * jax.random.normal(ks[5], (64, 32, 4, 4, 4), f32),
        "g3": 1.0 + 0.1 * jax.random.normal(ks[6], (64,), f32),
        "beta3": 0.1 * jax.random.normal(ks[7], (64,), f32),

        "w4": 0.05 * jax.random.normal(ks[8], (128, 64, 4, 4, 4), f32),
        "g4": 1.0 + 0.1 * jax.random.normal(ks[9], (128,), f32),
        "beta4": 0.1 * jax.random.normal(ks[10], (128,), f32),

        "w5": 0.05 * jax.random.normal(ks[11], (1, 128, 3, 3, 3), f32),
        "b5": 0.05 * jax.random.normal(ks[12], (1,), f32),
    }

    # batch=4, channels=1, spatial 16^3 (every BatchNorm sees >2 samples/channel).
    x = jax.random.normal(ks[15], (4, 1, 16, 16, 16), f32)

    prep = prepare_params(params, x.shape)           # one-time preprocessing
    out = jax.block_until_ready(discriminator_forward(x, prep))
    ref = jax.block_until_ready(reference_forward(x, params))

    assert out.shape == (4, 1, 1, 1, 1), out.shape
    assert np.all(np.isfinite(np.asarray(out)))
    # bf16 MXU operands + f32 accumulation vs an f32 HIGHEST reference across
    # five conv layers and three batch-norms.
    np.testing.assert_allclose(np.asarray(out), np.asarray(ref),
                               rtol=5e-2, atol=1e-1)
    print("KERNEL_OK")
</pallas_src>

<mosaic_0001>
module attributes {stable_mosaic.version = 11 : i64} {
  func.func @_conv_bias_act_kernel(%arg0: i32, %arg1: memref<256x512xbf16, #tpu.memory_space<vmem>>, %arg2: memref<512x128xbf16, #tpu.memory_space<vmem>>, %arg3: memref<1x128xf32, #tpu.memory_space<vmem>>, %arg4: memref<256x128xbf16, #tpu.memory_space<vmem>>) attributes {dimension_semantics = [#tpu.dimension_semantics<parallel>], iteration_bounds = array<i64: 1>, scalar_prefetch = 0 : i64, scratch_operands = 0 : i64, tpu.core_type = #tpu.core_type<tc>, window_params = [{transform_indices = @transform_0, window_bounds = array<i64: 256, 512>}, {pipeline_mode = #tpu.pipeline_mode<synchronous>, transform_indices = @transform_1, window_bounds = array<i64: 512, 128>}, {pipeline_mode = #tpu.pipeline_mode<synchronous>, transform_indices = @transform_2, window_bounds = array<i64: 1, 128>}, {transform_indices = @transform_3, window_bounds = array<i64: 256, 128>}]} {
    %c0 = arith.constant 0 : index
    %c0_0 = arith.constant 0 : index
    %0 = vector.load %arg1[%c0, %c0_0] : memref<256x512xbf16, #tpu.memory_space<vmem>>, vector<256x512xbf16>
    %c0_1 = arith.constant 0 : index
    %c0_2 = arith.constant 0 : index
    %1 = vector.load %arg2[%c0_1, %c0_2] : memref<512x128xbf16, #tpu.memory_space<vmem>>, vector<512x128xbf16>
    %cst = arith.constant dense<0.000000e+00> : vector<256x128xf32>
    %2 = tpu.matmul %0, %1, %cst {dimension_numbers = #tpu.dot_dimension_numbers<[1], [0], [0], [1], [0, 0, 1, 1], [], []>} : vector<256x512xbf16>, vector<512x128xbf16>, vector<256x128xf32> -> vector<256x128xf32>
    %c0_3 = arith.constant 0 : index
    %c0_4 = arith.constant 0 : index
    %3 = vector.load %arg3[%c0_3, %c0_4] : memref<1x128xf32, #tpu.memory_space<vmem>>, vector<1x128xf32>
    %4 = vector.broadcast %3 : vector<1x128xf32> to vector<256x128xf32>
    %5 = arith.addf %2, %4 : vector<256x128xf32>
    %cst_5 = arith.constant 0.000000e+00 : f32
    %6 = vector.broadcast %cst_5 : f32 to vector<256x128xf32>
    %7 = arith.cmpf oge, %5, %6 : vector<256x128xf32>
    %cst_6 = arith.constant 2.000000e-01 : f32
    %8 = vector.broadcast %cst_6 : f32 to vector<256x128xf32>
    %9 = arith.mulf %8, %5 : vector<256x128xf32>
    %10 = arith.select %7, %5, %9 : vector<256x128xi1>, vector<256x128xf32>
    %11 = arith.truncf %10 : vector<256x128xf32> to vector<256x128xbf16>
    %c0_7 = arith.constant 0 : index
    %c0_8 = arith.constant 0 : index
    %12 = vector.load %arg4[%c0_7, %c0_8] : memref<256x128xbf16, #tpu.memory_space<vmem>>, vector<256x128xbf16>
    tpu.vector_store %arg4[%c0_7, %c0_8], %11 {strides = array<i32>} : memref<256x128xbf16, #tpu.memory_space<vmem>>, vector<256x128xbf16>,
    return
  }
  func.func @transform_0(%arg0: i32) -> (i32, i32) {
    %c0_i32 = arith.constant 0 : i32
    %c0_i32_0 = arith.constant 0 : i32
    return %arg0, %c0_i32 : i32, i32
  }
  func.func @transform_1(%arg0: i32) -> (i32, i32) {
    %c0_i32 = arith.constant 0 : i32
    %c0_i32_0 = arith.constant 0 : i32
    %c0_i32_1 = arith.constant 0 : i32
    return %c0_i32, %c0_i32_0 : i32, i32
  }
  func.func @transform_2(%arg0: i32) -> (i32, i32) {
    %c0_i32 = arith.constant 0 : i32
    %c0_i32_0 = arith.constant 0 : i32
    %c0_i32_1 = arith.constant 0 : i32
    return %c0_i32, %c0_i32_0 : i32, i32
  }
  func.func @transform_3(%arg0: i32) -> (i32, i32) {
    %c0_i32 = arith.constant 0 : i32
    %c0_i32_0 = arith.constant 0 : i32
    return %arg0, %c0_i32 : i32, i32
  }
}

module attributes {stable_mosaic.version = 11 : i64} {
  func.func @_conv_bn_act_kernel(%arg0: i32, %arg1: memref<256x512xbf16, #tpu.memory_space<vmem>>, %arg2: memref<512x32xbf16, #tpu.memory_space<vmem>>, %arg3: memref<1x32xf32, #tpu.memory_space<vmem>>, %arg4: memref<1x32xf32, #tpu.memory_space<vmem>>, %arg5: memref<256x32xbf16, #tpu.memory_space<vmem>>, %arg6: memref<256x32xf32, #tpu.memory_space<vmem>>) attributes {dimension_semantics = [#tpu.dimension_semantics<arbitrary>], iteration_bounds = array<i64: 2>, scalar_prefetch = 0 : i64, scratch_operands = 1 : i64, tpu.core_type = #tpu.core_type<tc>, window_params = [{transform_indices = @transform_0, window_bounds = array<i64: 256, 512>}, {transform_indices = @transform_1, window_bounds = array<i64: 512, 32>}, {pipeline_mode = #tpu.pipeline_mode<synchronous>, transform_indices = @transform_2, window_bounds = array<i64: 1, 32>}, {pipeline_mode = #tpu.pipeline_mode<synchronous>, transform_indices = @transform_3, window_bounds = array<i64: 1, 32>}, {pipeline_mode = #tpu.pipeline_mode<synchronous>, transform_indices = @transform_4, window_bounds = array<i64: 256, 32>}]} {
    %c0_i32 = arith.constant 0 : i32
    %0 = arith.cmpi eq, %arg0, %c0_i32 : i32
    %1 = arith.extui %0 : i1 to i32
    %c0_i32_0 = arith.constant 0 : i32
    %2 = arith.cmpi ne, %1, %c0_i32_0 : i32
    scf.if %2 {
      %cst_9 = arith.constant 0.000000e+00 : f32
      %12 = vector.broadcast %cst_9 : f32 to vector<256x32xf32>
      %c0_10 = arith.constant 0 : index
      %c0_11 = arith.constant 0 : index
      %13 = vector.load %arg6[%c0_10, %c0_11] : memref<256x32xf32, #tpu.memory_space<vmem>>, vector<256x32xf32>
      tpu.vector_store %arg6[%c0_10, %c0_11], %12 {strides = array<i32>} : memref<256x32xf32, #tpu.memory_space<vmem>>, vector<256x32xf32>,
    } else {
    }
    %c0 = arith.constant 0 : index
    %c0_1 = arith.constant 0 : index
    %3 = vector.load %arg6[%c0, %c0_1] : memref<256x32xf32, #tpu.memory_space<vmem>>, vector<256x32xf32>
    %c0_2 = arith.constant 0 : index
    %c0_3 = arith.constant 0 : index
    %4 = vector.load %arg1[%c0_2, %c0_3] : memref<256x512xbf16, #tpu.memory_space<vmem>>, vector<256x512xbf16>
    %c0_4 = arith.constant 0 : index
    %c0_5 = arith.constant 0 : index
    %5 = vector.load %arg2[%c0_4, %c0_5] : memref<512x32xbf16, #tpu.memory_space<vmem>>, vector<512x32xbf16>
    %cst = arith.constant dense<0.000000e+00> : vector<256x32xf32>
    %6 = tpu.matmul %4, %5, %cst {dimension_numbers = #tpu.dot_dimension_numbers<[1], [0], [0], [1], [0, 0, 1, 1], [], []>} : vector<256x512xbf16>, vector<512x32xbf16>, vector<256x32xf32> -> vector<256x32xf32>
    %7 = arith.addf %3, %6 : vector<256x32xf32>
    %c0_6 = arith.constant 0 : index
    %c0_7 = arith.constant 0 : index
    %8 = vector.load %arg6[%c0_6, %c0_7] : memref<256x32xf32, #tpu.memory_space<vmem>>, vector<256x32xf32>
    tpu.vector_store %arg6[%c0_6, %c0_7], %7 {strides = array<i32>} : memref<256x32xf32, #tpu.memory_space<vmem>>, vector<256x32xf32>,
    %c1_i32 = arith.constant 1 : i32
    %9 = arith.cmpi eq, %arg0, %c1_i32 : i32
    %10 = arith.extui %9 : i1 to i32
    %c0_i32_8 = arith.constant 0 : i32
    %11 = arith.cmpi ne, %10, %c0_i32_8 : i32
    scf.if %11 {
      %c0_9 = arith.constant 0 : index
      %c0_10 = arith.constant 0 : index
      %12 = vector.load %arg6[%c0_9, %c0_10] : memref<256x32xf32, #tpu.memory_space<vmem>>, vector<256x32xf32>
      %cst_11 = arith.constant dense<0.000000e+00> : vector<32xf32>
      %13 = vector.multi_reduction <add>, %12, %cst_11 [0] : vector<256x32xf32> to vector<32xf32>
      %14 = vector.shape_cast %13 : vector<32xf32> to vector<1x32xf32>
      %cst_12 = arith.constant 2.560000e+02 : f32
      %15 = vector.broadcast %cst_12 : f32 to vector<1x32xf32>
      %16 = arith.divf %14, %15 : vector<1x32xf32>
      %17 = vector.broadcast %16 : vector<1x32xf32> to vector<256x32xf32>
      %18 = arith.subf %12, %17 : vector<256x32xf32>
      %19 = arith.mulf %18, %18 : vector<256x32xf32>
      %cst_13 = arith.constant dense<0.000000e+00> : vector<32xf32>
      %20 = vector.multi_reduction <add>, %19, %cst_13 [0] : vector<256x32xf32> to vector<32xf32>
      %21 = vector.shape_cast %20 : vector<32xf32> to vector<1x32xf32>
      %cst_14 = arith.constant 2.560000e+02 : f32
      %22 = vector.broadcast %cst_14 : f32 to vector<1x32xf32>
      %23 = arith.divf %21, %22 : vector<1x32xf32>
      %24 = vector.broadcast %16 : vector<1x32xf32> to vector<256x32xf32>
      %25 = arith.subf %12, %24 : vector<256x32xf32>
      %cst_15 = arith.constant 9.99999974E-6 : f32
      %26 = vector.broadcast %cst_15 : f32 to vector<1x32xf32>
      %27 = arith.addf %23, %26 : vector<1x32xf32>
      %28 = math.rsqrt %27 : vector<1x32xf32>
      %29 = vector.broadcast %28 : vector<1x32xf32> to vector<256x32xf32>
      %30 = arith.mulf %25, %29 : vector<256x32xf32>
      %c0_16 = arith.constant 0 : index
      %c0_17 = arith.constant 0 : index
      %31 = vector.load %arg3[%c0_16, %c0_17] : memref<1x32xf32, #tpu.memory_space<vmem>>, vector<1x32xf32>
      %32 = vector.broadcast %31 : vector<1x32xf32> to vector<256x32xf32>
      %33 = arith.mulf %30, %32 : vector<256x32xf32>
      %c0_18 = arith.constant 0 : index
      %c0_19 = arith.constant 0 : index
      %34 = vector.load %arg4[%c0_18, %c0_19] : memref<1x32xf32, #tpu.memory_space<vmem>>, vector<1x32xf32>
      %35 = vector.broadcast %34 : vector<1x32xf32> to vector<256x32xf32>
      %36 = arith.addf %33, %35 : vector<256x32xf32>
      %cst_20 = arith.constant 0.000000e+00 : f32
      %37 = vector.broadcast %cst_20 : f32 to vector<256x32xf32>
      %38 = arith.cmpf oge, %36, %37 : vector<256x32xf32>
      %cst_21 = arith.constant 2.000000e-01 : f32
      %39 = vector.broadcast %cst_21 : f32 to vector<256x32xf32>
      %40 = arith.mulf %39, %36 : vector<256x32xf32>
      %41 = arith.select %38, %36, %40 : vector<256x32xi1>, vector<256x32xf32>
      %42 = arith.truncf %41 : vector<256x32xf32> to vector<256x32xbf16>
      %c0_22 = arith.constant 0 : index
      %c0_23 = arith.constant 0 : index
      %43 = vector.load %arg5[%c0_22, %c0_23] : memref<256x32xbf16, #tpu.memory_space<vmem>>, vector<256x32xbf16>
      tpu.vector_store %arg5[%c0_22, %c0_23], %42 {strides = array<i32>} : memref<256x32xbf16, #tpu.memory_space<vmem>>, vector<256x32xbf16>,
    } else {
    }
    return
  }
  func.func @transform_0(%arg0: i32) -> (i32, i32) {
    %c0_i32 = arith.constant 0 : i32
    %c0_i32_0 = arith.constant 0 : i32
    return %c0_i32, %arg0 : i32, i32
  }
  func.func @transform_1(%arg0: i32) -> (i32, i32) {
    %c0_i32 = arith.constant 0 : i32
    %c0_i32_0 = arith.constant 0 : i32
    return %arg0, %c0_i32 : i32, i32
  }
  func.func @transform_2(%arg0: i32) -> (i32, i32) {
    %c0_i32 = arith.constant 0 : i32
    %c0_i32_0 = arith.constant 0 : i32
    %c0_i32_1 = arith.constant 0 : i32
    return %c0_i32, %c0_i32_0 : i32, i32
  }
  func.func @transform_3(%arg0: i32) -> (i32, i32) {
    %c0_i32 = arith.constant 0 : i32
    %c0_i32_0 = arith.constant 0 : i32
    %c0_i32_1 = arith.constant 0 : i32
    return %c0_i32, %c0_i32_0 : i32, i32
  }
  func.func @transform_4(%arg0: i32) -> (i32, i32) {
    %c0_i32 = arith.constant 0 : i32
    %c0_i32_0 = arith.constant 0 : i32
    %c0_i32_1 = arith.constant 0 : i32
    return %c0_i32, %c0_i32_0 : i32, i32
  }
}

module attributes {stable_mosaic.version = 11 : i64} {
  func.func @_tail_kernel(%arg0: i32, %arg1: memref<32x2048xbf16, #tpu.memory_space<vmem>>, %arg2: memref<2048x64xbf16, #tpu.memory_space<vmem>>, %arg3: memref<1x64xf32, #tpu.memory_space<vmem>>, %arg4: memref<1x64xf32, #tpu.memory_space<vmem>>, %arg5: memref<512x128xbf16, #tpu.memory_space<vmem>>, %arg6: memref<1x128xf32, #tpu.memory_space<vmem>>, %arg7: memref<1x128xf32, #tpu.memory_space<vmem>>, %arg8: memref<1x128xf32, #tpu.memory_space<vmem>>, %arg9: memref<1x1xf32, #tpu.memory_space<vmem>>, %arg10: memref<4x1xf32, #tpu.memory_space<vmem>>, %arg11: memref<4x512xf32, #tpu.memory_space<vmem>>, %arg12: memref<4x512xbf16, #tpu.memory_space<vmem>>) attributes {dimension_semantics = [#tpu.dimension_semantics<arbitrary>], iteration_bounds = array<i64: 1>, scalar_prefetch = 0 : i64, scratch_operands = 2 : i64, tpu.core_type = #tpu.core_type<tc>, window_params = [{pipeline_mode = #tpu.pipeline_mode<synchronous>, transform_indices = @transform_0, window_bounds = array<i64: 32, 2048>}, {pipeline_mode = #tpu.pipeline_mode<synchronous>, transform_indices = @transform_1, window_bounds = array<i64: 2048, 64>}, {pipeline_mode = #tpu.pipeline_mode<synchronous>, transform_indices = @transform_2, window_bounds = array<i64: 1, 64>}, {pipeline_mode = #tpu.pipeline_mode<synchronous>, transform_indices = @transform_3, window_bounds = array<i64: 1, 64>}, {pipeline_mode = #tpu.pipeline_mode<synchronous>, transform_indices = @transform_4, window_bounds = array<i64: 512, 128>}, {pipeline_mode = #tpu.pipeline_mode<synchronous>, transform_indices = @transform_5, window_bounds = array<i64: 1, 128>}, {pipeline_mode = #tpu.pipeline_mode<synchronous>, transform_indices = @transform_6, window_bounds = array<i64: 1, 128>}, {pipeline_mode = #tpu.pipeline_mode<synchronous>, transform_indices = @transform_7, window_bounds = array<i64: 1, 128>}, {pipeline_mode = #tpu.pipeline_mode<synchronous>, transform_indices = @transform_8, window_bounds = array<i64: 1, 1>}, {pipeline_mode = #tpu.pipeline_mode<synchronous>, transform_indices = @transform_9, window_bounds = array<i64: 4, 1>}]} {
    %cst = arith.constant 0.000000e+00 : f32
    %0 = vector.broadcast %cst : f32 to vector<1x64xf32>
    %cst_0 = arith.constant 0.000000e+00 : f32
    %1 = vector.broadcast %cst_0 : f32 to vector<1x64xf32>
    %c0 = arith.constant 0 : index
    %c0_1 = arith.constant 0 : index
    %2 = vector.load %arg1[%c0, %c0_1] : memref<32x2048xbf16, #tpu.memory_space<vmem>>, vector<4x2048xbf16>
    %c0_2 = arith.constant 0 : index
    %c0_3 = arith.constant 0 : index
    %3 = vector.load %arg2[%c0_2, %c0_3] : memref<2048x64xbf16, #tpu.memory_space<vmem>>, vector<2048x64xbf16>
    %cst_4 = arith.constant dense<0.000000e+00> : vector<4x64xf32>
    %4 = tpu.matmul %2, %3, %cst_4 {dimension_numbers = #tpu.dot_dimension_numbers<[1], [0], [0], [1], [0, 0, 1, 1], [], []>} : vector<4x2048xbf16>, vector<2048x64xbf16>, vector<4x64xf32> -> vector<4x64xf32>
    %c0_5 = arith.constant 0 : index
    %c0_6 = arith.constant 0 : index
    %5 = vector.load %arg11[%c0_5, %c0_6] : memref<4x512xf32, #tpu.memory_space<vmem>>, vector<4x64xf32>
    tpu.vector_store %arg11[%c0_5, %c0_6], %4 {strides = array<i32>} : memref<4x512xf32, #tpu.memory_space<vmem>>, vector<4x64xf32>,
    %cst_7 = arith.constant dense<0.000000e+00> : vector<64xf32>
    %6 = vector.multi_reduction <add>, %4, %cst_7 [0] : vector<4x64xf32> to vector<64xf32>
    %7 = vector.shape_cast %6 : vector<64xf32> to vector<1x64xf32>
    %8 = arith.addf %0, %7 : vector<1x64xf32>
    %9 = arith.mulf %4, %4 : vector<4x64xf32>
    %cst_8 = arith.constant dense<0.000000e+00> : vector<64xf32>
    %10 = vector.multi_reduction <add>, %9, %cst_8 [0] : vector<4x64xf32> to vector<64xf32>
    %11 = vector.shape_cast %10 : vector<64xf32> to vector<1x64xf32>
    %12 = arith.addf %1, %11 : vector<1x64xf32>
    %c4 = arith.constant 4 : index
    %c0_9 = arith.constant 0 : index
    %13 = vector.load %arg1[%c4, %c0_9] : memref<32x2048xbf16, #tpu.memory_space<vmem>>, vector<4x2048xbf16>
    %c0_10 = arith.constant 0 : index
    %c0_11 = arith.constant 0 : index
    %14 = vector.load %arg2[%c0_10, %c0_11] : memref<2048x64xbf16, #tpu.memory_space<vmem>>, vector<2048x64xbf16>
    %cst_12 = arith.constant dense<0.000000e+00> : vector<4x64xf32>
    %15 = tpu.matmul %13, %14, %cst_12 {dimension_numbers = #tpu.dot_dimension_numbers<[1], [0], [0], [1], [0, 0, 1, 1], [], []>} : vector<4x2048xbf16>, vector<2048x64xbf16>, vector<4x64xf32> -> vector<4x64xf32>
    %c0_13 = arith.constant 0 : index
    %c64 = arith.constant 64 : index
    %16 = vector.load %arg11[%c0_13, %c64] : memref<4x512xf32, #tpu.memory_space<vmem>>, vector<4x64xf32>
    tpu.vector_store %arg11[%c0_13, %c64], %15 {strides = array<i32>} : memref<4x512xf32, #tpu.memory_space<vmem>>, vector<4x64xf32>,
    %cst_14 = arith.constant dense<0.000000e+00> : vector<64xf32>
    %17 = vector.multi_reduction <add>, %15, %cst_14 [0] : vector<4x64xf32> to vector<64xf32>
    %18 = vector.shape_cast %17 : vector<64xf32> to vector<1x64xf32>
    %19 = arith.addf %8, %18 : vector<1x64xf32>
    %20 = arith.mulf %15, %15 : vector<4x64xf32>
    %cst_15 = arith.constant dense<0.000000e+00> : vector<64xf32>
    %21 = vector.multi_reduction <add>, %20, %cst_15 [0] : vector<4x64xf32> to vector<64xf32>
    %22 = vector.shape_cast %21 : vector<64xf32> to vector<1x64xf32>
    %23 = arith.addf %12, %22 : vector<1x64xf32>
    %c8 = arith.constant 8 : index
    %c0_16 = arith.constant 0 : index
    %24 = vector.load %arg1[%c8, %c0_16] : memref<32x2048xbf16, #tpu.memory_space<vmem>>, vector<4x2048xbf16>
    %c0_17 = arith.constant 0 : index
    %c0_18 = arith.constant 0 : index
    %25 = vector.load %arg2[%c0_17, %c0_18] : memref<2048x64xbf16, #tpu.memory_space<vmem>>, vector<2048x64xbf16>
    %cst_19 = arith.constant dense<0.000000e+00> : vector<4x64xf32>
    %26 = tpu.matmul %24, %25, %cst_19 {dimension_numbers = #tpu.dot_dimension_numbers<[1], [0], [0], [1], [0, 0, 1, 1], [], []>} : vector<4x2048xbf16>, vector<2048x64xbf16>, vector<4x64xf32> -> vector<4x64xf32>
    %c0_20 = arith.constant 0 : index
    %c128 = arith.constant 128 : index
    %27 = vector.load %arg11[%c0_20, %c128] : memref<4x512xf32, #tpu.memory_space<vmem>>, vector<4x64xf32>
    tpu.vector_store %arg11[%c0_20, %c128], %26 {strides = array<i32>} : memref<4x512xf32, #tpu.memory_space<vmem>>, vector<4x64xf32>,
    %cst_21 = arith.constant dense<0.000000e+00> : vector<64xf32>
    %28 = vector.multi_reduction <add>, %26, %cst_21 [0] : vector<4x64xf32> to vector<64xf32>
    %29 = vector.shape_cast %28 : vector<64xf32> to vector<1x64xf32>
    %30 = arith.addf %19, %29 : vector<1x64xf32>
    %31 = arith.mulf %26, %26 : vector<4x64xf32>
    %cst_22 = arith.constant dense<0.000000e+00> : vector<64xf32>
    %32 = vector.multi_reduction <add>, %31, %cst_22 [0] : vector<4x64xf32> to vector<64xf32>
    %33 = vector.shape_cast %32 : vector<64xf32> to vector<1x64xf32>
    %34 = arith.addf %23, %33 : vector<1x64xf32>
    %c12 = arith.constant 12 : index
    %c0_23 = arith.constant 0 : index
    %35 = vector.load %arg1[%c12, %c0_23] : memref<32x2048xbf16, #tpu.memory_space<vmem>>, vector<4x2048xbf16>
    %c0_24 = arith.constant 0 : index
    %c0_25 = arith.constant 0 : index
    %36 = vector.load %arg2[%c0_24, %c0_25] : memref<2048x64xbf16, #tpu.memory_space<vmem>>, vector<2048x64xbf16>
    %cst_26 = arith.constant dense<0.000000e+00> : vector<4x64xf32>
    %37 = tpu.matmul %35, %36, %cst_26 {dimension_numbers = #tpu.dot_dimension_numbers<[1], [0], [0], [1], [0, 0, 1, 1], [], []>} : vector<4x2048xbf16>, vector<2048x64xbf16>, vector<4x64xf32> -> vector<4x64xf32>
    %c0_27 = arith.constant 0 : index
    %c192 = arith.constant 192 : index
    %38 = vector.load %arg11[%c0_27, %c192] : memref<4x512xf32, #tpu.memory_space<vmem>>, vector<4x64xf32>
    tpu.vector_store %arg11[%c0_27, %c192], %37 {strides = array<i32>} : memref<4x512xf32, #tpu.memory_space<vmem>>, vector<4x64xf32>,
    %cst_28 = arith.constant dense<0.000000e+00> : vector<64xf32>
    %39 = vector.multi_reduction <add>, %37, %cst_28 [0] : vector<4x64xf32> to vector<64xf32>
    %40 = vector.shape_cast %39 : vector<64xf32> to vector<1x64xf32>
    %41 = arith.addf %30, %40 : vector<1x64xf32>
    %42 = arith.mulf %37, %37 : vector<4x64xf32>
    %cst_29 = arith.constant dense<0.000000e+00> : vector<64xf32>
    %43 = vector.multi_reduction <add>, %42, %cst_29 [0] : vector<4x64xf32> to vector<64xf32>
    %44 = vector.shape_cast %43 : vector<64xf32> to vector<1x64xf32>
    %45 = arith.addf %34, %44 : vector<1x64xf32>
    %c16 = arith.constant 16 : index
    %c0_30 = arith.constant 0 : index
    %46 = vector.load %arg1[%c16, %c0_30] : memref<32x2048xbf16, #tpu.memory_space<vmem>>, vector<4x2048xbf16>
    %c0_31 = arith.constant 0 : index
    %c0_32 = arith.constant 0 : index
    %47 = vector.load %arg2[%c0_31, %c0_32] : memref<2048x64xbf16, #tpu.memory_space<vmem>>, vector<2048x64xbf16>
    %cst_33 = arith.constant dense<0.000000e+00> : vector<4x64xf32>
    %48 = tpu.matmul %46, %47, %cst_33 {dimension_numbers = #tpu.dot_dimension_numbers<[1], [0], [0], [1], [0, 0, 1, 1], [], []>} : vector<4x2048xbf16>, vector<2048x64xbf16>, vector<4x64xf32> -> vector<4x64xf32>
    %c0_34 = arith.constant 0 : index
    %c256 = arith.constant 256 : index
    %49 = vector.load %arg11[%c0_34, %c256] : memref<4x512xf32, #tpu.memory_space<vmem>>, vector<4x64xf32>
    tpu.vector_store %arg11[%c0_34, %c256], %48 {strides = array<i32>} : memref<4x512xf32, #tpu.memory_space<vmem>>, vector<4x64xf32>,
    %cst_35 = arith.constant dense<0.000000e+00> : vector<64xf32>
    %50 = vector.multi_reduction <add>, %48, %cst_35 [0] : vector<4x64xf32> to vector<64xf32>
    %51 = vector.shape_cast %50 : vector<64xf32> to vector<1x64xf32>
    %52 = arith.addf %41, %51 : vector<1x64xf32>
    %53 = arith.mulf %48, %48 : vector<4x64xf32>
    %cst_36 = arith.constant dense<0.000000e+00> : vector<64xf32>
    %54 = vector.multi_reduction <add>, %53, %cst_36 [0] : vector<4x64xf32> to vector<64xf32>
    %55 = vector.shape_cast %54 : vector<64xf32> to vector<1x64xf32>
    %56 = arith.addf %45, %55 : vector<1x64xf32>
    %c20 = arith.constant 20 : index
    %c0_37 = arith.constant 0 : index
    %57 = vector.load %arg1[%c20, %c0_37] : memref<32x2048xbf16, #tpu.memory_space<vmem>>, vector<4x2048xbf16>
    %c0_38 = arith.constant 0 : index
    %c0_39 = arith.constant 0 : index
    %58 = vector.load %arg2[%c0_38, %c0_39] : memref<2048x64xbf16, #tpu.memory_space<vmem>>, vector<2048x64xbf16>
    %cst_40 = arith.constant dense<0.000000e+00> : vector<4x64xf32>
    %59 = tpu.matmul %57, %58, %cst_40 {dimension_numbers = #tpu.dot_dimension_numbers<[1], [0], [0], [1], [0, 0, 1, 1], [], []>} : vector<4x2048xbf16>, vector<2048x64xbf16>, vector<4x64xf32> -> vector<4x64xf32>
    %c0_41 = arith.constant 0 : index
    %c320 = arith.constant 320 : index
    %60 = vector.load %arg11[%c0_41, %c320] : memref<4x512xf32, #tpu.memory_space<vmem>>, vector<4x64xf32>
    tpu.vector_store %arg11[%c0_41, %c320], %59 {strides = array<i32>} : memref<4x512xf32, #tpu.memory_space<vmem>>, vector<4x64xf32>,
    %cst_42 = arith.constant dense<0.000000e+00> : vector<64xf32>
    %61 = vector.multi_reduction <add>, %59, %cst_42 [0] : vector<4x64xf32> to vector<64xf32>
    %62 = vector.shape_cast %61 : vector<64xf32> to vector<1x64xf32>
    %63 = arith.addf %52, %62 : vector<1x64xf32>
    %64 = arith.mulf %59, %59 : vector<4x64xf32>
    %cst_43 = arith.constant dense<0.000000e+00> : vector<64xf32>
    %65 = vector.multi_reduction <add>, %64, %cst_43 [0] : vector<4x64xf32> to vector<64xf32>
    %66 = vector.shape_cast %65 : vector<64xf32> to vector<1x64xf32>
    %67 = arith.addf %56, %66 : vector<1x64xf32>
    %c24 = arith.constant 24 : index
    %c0_44 = arith.constant 0 : index
    %68 = vector.load %arg1[%c24, %c0_44] : memref<32x2048xbf16, #tpu.memory_space<vmem>>, vector<4x2048xbf16>
    %c0_45 = arith.constant 0 : index
    %c0_46 = arith.constant 0 : index
    %69 = vector.load %arg2[%c0_45, %c0_46] : memref<2048x64xbf16, #tpu.memory_space<vmem>>, vector<2048x64xbf16>
    %cst_47 = arith.constant dense<0.000000e+00> : vector<4x64xf32>
    %70 = tpu.matmul %68, %69, %cst_47 {dimension_numbers = #tpu.dot_dimension_numbers<[1], [0], [0], [1], [0, 0, 1, 1], [], []>} : vector<4x2048xbf16>, vector<2048x64xbf16>, vector<4x64xf32> -> vector<4x64xf32>
    %c0_48 = arith.constant 0 : index
    %c384 = arith.constant 384 : index
    %71 = vector.load %arg11[%c0_48, %c384] : memref<4x512xf32, #tpu.memory_space<vmem>>, vector<4x64xf32>
    tpu.vector_store %arg11[%c0_48, %c384], %70 {strides = array<i32>} : memref<4x512xf32, #tpu.memory_space<vmem>>, vector<4x64xf32>,
    %cst_49 = arith.constant dense<0.000000e+00> : vector<64xf32>
    %72 = vector.multi_reduction <add>, %70, %cst_49 [0] : vector<4x64xf32> to vector<64xf32>
    %73 = vector.shape_cast %72 : vector<64xf32> to vector<1x64xf32>
    %74 = arith.addf %63, %73 : vector<1x64xf32>
    %75 = arith.mulf %70, %70 : vector<4x64xf32>
    %cst_50 = arith.constant dense<0.000000e+00> : vector<64xf32>
    %76 = vector.multi_reduction <add>, %75, %cst_50 [0] : vector<4x64xf32> to vector<64xf32>
    %77 = vector.shape_cast %76 : vector<64xf32> to vector<1x64xf32>
    %78 = arith.addf %67, %77 : vector<1x64xf32>
    %c28 = arith.constant 28 : index
    %c0_51 = arith.constant 0 : index
    %79 = vector.load %arg1[%c28, %c0_51] : memref<32x2048xbf16, #tpu.memory_space<vmem>>, vector<4x2048xbf16>
    %c0_52 = arith.constant 0 : index
    %c0_53 = arith.constant 0 : index
    %80 = vector.load %arg2[%c0_52, %c0_53] : memref<2048x64xbf16, #tpu.memory_space<vmem>>, vector<2048x64xbf16>
    %cst_54 = arith.constant dense<0.000000e+00> : vector<4x64xf32>
    %81 = tpu.matmul %79, %80, %cst_54 {dimension_numbers = #tpu.dot_dimension_numbers<[1], [0], [0], [1], [0, 0, 1, 1], [], []>} : vector<4x2048xbf16>, vector<2048x64xbf16>, vector<4x64xf32> -> vector<4x64xf32>
    %c0_55 = arith.constant 0 : index
    %c448 = arith.constant 448 : index
    %82 = vector.load %arg11[%c0_55, %c448] : memref<4x512xf32, #tpu.memory_space<vmem>>, vector<4x64xf32>
    tpu.vector_store %arg11[%c0_55, %c448], %81 {strides = array<i32>} : memref<4x512xf32, #tpu.memory_space<vmem>>, vector<4x64xf32>,
    %cst_56 = arith.constant dense<0.000000e+00> : vector<64xf32>
    %83 = vector.multi_reduction <add>, %81, %cst_56 [0] : vector<4x64xf32> to vector<64xf32>
    %84 = vector.shape_cast %83 : vector<64xf32> to vector<1x64xf32>
    %85 = arith.addf %74, %84 : vector<1x64xf32>
    %86 = arith.mulf %81, %81 : vector<4x64xf32>
    %cst_57 = arith.constant dense<0.000000e+00> : vector<64xf32>
    %87 = vector.multi_reduction <add>, %86, %cst_57 [0] : vector<4x64xf32> to vector<64xf32>
    %88 = vector.shape_cast %87 : vector<64xf32> to vector<1x64xf32>
    %89 = arith.addf %78, %88 : vector<1x64xf32>
    %cst_58 = arith.constant 3.200000e+01 : f32
    %90 = vector.broadcast %cst_58 : f32 to vector<1x64xf32>
    %91 = arith.divf %85, %90 : vector<1x64xf32>
    %cst_59 = arith.constant 3.200000e+01 : f32
    %92 = vector.broadcast %cst_59 : f32 to vector<1x64xf32>
    %93 = arith.divf %89, %92 : vector<1x64xf32>
    %94 = arith.mulf %91, %91 : vector<1x64xf32>
    %95 = arith.subf %93, %94 : vector<1x64xf32>
    %cst_60 = arith.constant 0.000000e+00 : f32
    %96 = vector.broadcast %cst_60 : f32 to vector<1x64xf32>
    %97 = arith.maximumf %95, %96 : vector<1x64xf32>
    %c0_61 = arith.constant 0 : index
    %c0_62 = arith.constant 0 : index
    %98 = vector.load %arg3[%c0_61, %c0_62] : memref<1x64xf32, #tpu.memory_space<vmem>>, vector<1x64xf32>
    %cst_63 = arith.constant 9.99999974E-6 : f32
    %99 = vector.broadcast %cst_63 : f32 to vector<1x64xf32>
    %100 = arith.addf %97, %99 : vector<1x64xf32>
    %101 = math.rsqrt %100 : vector<1x64xf32>
    %102 = arith.mulf %98, %101 : vector<1x64xf32>
    %c0_64 = arith.constant 0 : index
    %c0_65 = arith.constant 0 : index
    %103 = vector.load %arg4[%c0_64, %c0_65] : memref<1x64xf32, #tpu.memory_space<vmem>>, vector<1x64xf32>
    %104 = arith.mulf %91, %102 : vector<1x64xf32>
    %105 = arith.subf %103, %104 : vector<1x64xf32>
    %c0_66 = arith.constant 0 : index
    %c0_67 = arith.constant 0 : index
    %106 = vector.load %arg11[%c0_66, %c0_67] : memref<4x512xf32, #tpu.memory_space<vmem>>, vector<4x64xf32>
    %107 = vector.broadcast %102 : vector<1x64xf32> to vector<4x64xf32>
    %108 = arith.mulf %106, %107 : vector<4x64xf32>
    %109 = vector.broadcast %105 : vector<1x64xf32> to vector<4x64xf32>
    %110 = arith.addf %108, %109 : vector<4x64xf32>
    %cst_68 = arith.constant 0.000000e+00 : f32
    %111 = vector.broadcast %cst_68 : f32 to vector<4x64xf32>
    %112 = arith.cmpf oge, %110, %111 : vector<4x64xf32>
    %cst_69 = arith.constant 2.000000e-01 : f32
    %113 = vector.broadcast %cst_69 : f32 to vector<4x64xf32>
    %114 = arith.mulf %113, %110 : vector<4x64xf32>
    %115 = arith.select %112, %110, %114 : vector<4x64xi1>, vector<4x64xf32>
    %116 = arith.truncf %115 : vector<4x64xf32> to vector<4x64xbf16>
    %c0_70 = arith.constant 0 : index
    %c0_71 = arith.constant 0 : index
    %117 = vector.load %arg12[%c0_70, %c0_71] : memref<4x512xbf16, #tpu.memory_space<vmem>>, vector<4x64xbf16>
    tpu.vector_store %arg12[%c0_70, %c0_71], %116 {strides = array<i32>} : memref<4x512xbf16, #tpu.memory_space<vmem>>, vector<4x64xbf16>,
    %c0_72 = arith.constant 0 : index
    %c64_73 = arith.constant 64 : index
    %118 = vector.load %arg11[%c0_72, %c64_73] : memref<4x512xf32, #tpu.memory_space<vmem>>, vector<4x64xf32>
    %119 = vector.broadcast %102 : vector<1x64xf32> to vector<4x64xf32>
    %120 = arith.mulf %118, %119 : vector<4x64xf32>
    %121 = vector.broadcast %105 : vector<1x64xf32> to vector<4x64xf32>
    %122 = arith.addf %120, %121 : vector<4x64xf32>
    %cst_74 = arith.constant 0.000000e+00 : f32
    %123 = vector.broadcast %cst_74 : f32 to vector<4x64xf32>
    %124 = arith.cmpf oge, %122, %123 : vector<4x64xf32>
    %cst_75 = arith.constant 2.000000e-01 : f32
    %125 = vector.broadcast %cst_75 : f32 to vector<4x64xf32>
    %126 = arith.mulf %125, %122 : vector<4x64xf32>
    %127 = arith.select %124, %122, %126 : vector<4x64xi1>, vector<4x64xf32>
    %128 = arith.truncf %127 : vector<4x64xf32> to vector<4x64xbf16>
    %c0_76 = arith.constant 0 : index
    %c64_77 = arith.constant 64 : index
    %129 = vector.load %arg12[%c0_76, %c64_77] : memref<4x512xbf16, #tpu.memory_space<vmem>>, vector<4x64xbf16>
    tpu.vector_store %arg12[%c0_76, %c64_77], %128 {strides = array<i32>} : memref<4x512xbf16, #tpu.memory_space<vmem>>, vector<4x64xbf16>,
    %c0_78 = arith.constant 0 : index
    %c128_79 = arith.constant 128 : index
    %130 = vector.load %arg11[%c0_78, %c128_79] : memref<4x512xf32, #tpu.memory_space<vmem>>, vector<4x64xf32>
    %131 = vector.broadcast %102 : vector<1x64xf32> to vector<4x64xf32>
    %132 = arith.mulf %130, %131 : vector<4x64xf32>
    %133 = vector.broadcast %105 : vector<1x64xf32> to vector<4x64xf32>
    %134 = arith.addf %132, %133 : vector<4x64xf32>
    %cst_80 = arith.constant 0.000000e+00 : f32
    %135 = vector.broadcast %cst_80 : f32 to vector<4x64xf32>
    %136 = arith.cmpf oge, %134, %135 : vector<4x64xf32>
    %cst_81 = arith.constant 2.000000e-01 : f32
    %137 = vector.broadcast %cst_81 : f32 to vector<4x64xf32>
    %138 = arith.mulf %137, %134 : vector<4x64xf32>
    %139 = arith.select %136, %134, %138 : vector<4x64xi1>, vector<4x64xf32>
    %140 = arith.truncf %139 : vector<4x64xf32> to vector<4x64xbf16>
    %c0_82 = arith.constant 0 : index
    %c128_83 = arith.constant 128 : index
    %141 = vector.load %arg12[%c0_82, %c128_83] : memref<4x512xbf16, #tpu.memory_space<vmem>>, vector<4x64xbf16>
    tpu.vector_store %arg12[%c0_82, %c128_83], %140 {strides = array<i32>} : memref<4x512xbf16, #tpu.memory_space<vmem>>, vector<4x64xbf16>,
    %c0_84 = arith.constant 0 : index
    %c192_85 = arith.constant 192 : index
    %142 = vector.load %arg11[%c0_84, %c192_85] : memref<4x512xf32, #tpu.memory_space<vmem>>, vector<4x64xf32>
    %143 = vector.broadcast %102 : vector<1x64xf32> to vector<4x64xf32>
    %144 = arith.mulf %142, %143 : vector<4x64xf32>
    %145 = vector.broadcast %105 : vector<1x64xf32> to vector<4x64xf32>
    %146 = arith.addf %144, %145 : vector<4x64xf32>
    %cst_86 = arith.constant 0.000000e+00 : f32
    %147 = vector.broadcast %cst_86 : f32 to vector<4x64xf32>
    %148 = arith.cmpf oge, %146, %147 : vector<4x64xf32>
    %cst_87 = arith.constant 2.000000e-01 : f32
    %149 = vector.broadcast %cst_87 : f32 to vector<4x64xf32>
    %150 = arith.mulf %149, %146 : vector<4x64xf32>
    %151 = arith.select %148, %146, %150 : vector<4x64xi1>, vector<4x64xf32>
    %152 = arith.truncf %151 : vector<4x64xf32> to vector<4x64xbf16>
    %c0_88 = arith.constant 0 : index
    %c192_89 = arith.constant 192 : index
    %153 = vector.load %arg12[%c0_88, %c192_89] : memref<4x512xbf16, #tpu.memory_space<vmem>>, vector<4x64xbf16>
    tpu.vector_store %arg12[%c0_88, %c192_89], %152 {strides = array<i32>} : memref<4x512xbf16, #tpu.memory_space<vmem>>, vector<4x64xbf16>,
    %c0_90 = arith.constant 0 : index
    %c256_91 = arith.constant 256 : index
    %154 = vector.load %arg11[%c0_90, %c256_91] : memref<4x512xf32, #tpu.memory_space<vmem>>, vector<4x64xf32>
    %155 = vector.broadcast %102 : vector<1x64xf32> to vector<4x64xf32>
    %156 = arith.mulf %154, %155 : vector<4x64xf32>
    %157 = vector.broadcast %105 : vector<1x64xf32> to vector<4x64xf32>
    %158 = arith.addf %156, %157 : vector<4x64xf32>
    %cst_92 = arith.constant 0.000000e+00 : f32
    %159 = vector.broadcast %cst_92 : f32 to vector<4x64xf32>
    %160 = arith.cmpf oge, %158, %159 : vector<4x64xf32>
    %cst_93 = arith.constant 2.000000e-01 : f32
    %161 = vector.broadcast %cst_93 : f32 to vector<4x64xf32>
    %162 = arith.mulf %161, %158 : vector<4x64xf32>
    %163 = arith.select %160, %158, %162 : vector<4x64xi1>, vector<4x64xf32>
    %164 = arith.truncf %163 : vector<4x64xf32> to vector<4x64xbf16>
    %c0_94 = arith.constant 0 : index
    %c256_95 = arith.constant 256 : index
    %165 = vector.load %arg12[%c0_94, %c256_95] : memref<4x512xbf16, #tpu.memory_space<vmem>>, vector<4x64xbf16>
    tpu.vector_store %arg12[%c0_94, %c256_95], %164 {strides = array<i32>} : memref<4x512xbf16, #tpu.memory_space<vmem>>, vector<4x64xbf16>,
    %c0_96 = arith.constant 0 : index
    %c320_97 = arith.constant 320 : index
    %166 = vector.load %arg11[%c0_96, %c320_97] : memref<4x512xf32, #tpu.memory_space<vmem>>, vector<4x64xf32>
    %167 = vector.broadcast %102 : vector<1x64xf32> to vector<4x64xf32>
    %168 = arith.mulf %166, %167 : vector<4x64xf32>
    %169 = vector.broadcast %105 : vector<1x64xf32> to vector<4x64xf32>
    %170 = arith.addf %168, %169 : vector<4x64xf32>
    %cst_98 = arith.constant 0.000000e+00 : f32
    %171 = vector.broadcast %cst_98 : f32 to vector<4x64xf32>
    %172 = arith.cmpf oge, %170, %171 : vector<4x64xf32>
    %cst_99 = arith.constant 2.000000e-01 : f32
    %173 = vector.broadcast %cst_99 : f32 to vector<4x64xf32>
    %174 = arith.mulf %173, %170 : vector<4x64xf32>
    %175 = arith.select %172, %170, %174 : vector<4x64xi1>, vector<4x64xf32>
    %176 = arith.truncf %175 : vector<4x64xf32> to vector<4x64xbf16>
    %c0_100 = arith.constant 0 : index
    %c320_101 = arith.constant 320 : index
    %177 = vector.load %arg12[%c0_100, %c320_101] : memref<4x512xbf16, #tpu.memory_space<vmem>>, vector<4x64xbf16>
    tpu.vector_store %arg12[%c0_100, %c320_101], %176 {strides = array<i32>} : memref<4x512xbf16, #tpu.memory_space<vmem>>, vector<4x64xbf16>,
    %c0_102 = arith.constant 0 : index
    %c384_103 = arith.constant 384 : index
    %178 = vector.load %arg11[%c0_102, %c384_103] : memref<4x512xf32, #tpu.memory_space<vmem>>, vector<4x64xf32>
    %179 = vector.broadcast %102 : vector<1x64xf32> to vector<4x64xf32>
    %180 = arith.mulf %178, %179 : vector<4x64xf32>
    %181 = vector.broadcast %105 : vector<1x64xf32> to vector<4x64xf32>
    %182 = arith.addf %180, %181 : vector<4x64xf32>
    %cst_104 = arith.constant 0.000000e+00 : f32
    %183 = vector.broadcast %cst_104 : f32 to vector<4x64xf32>
    %184 = arith.cmpf oge, %182, %183 : vector<4x64xf32>
    %cst_105 = arith.constant 2.000000e-01 : f32
    %185 = vector.broadcast %cst_105 : f32 to vector<4x64xf32>
    %186 = arith.mulf %185, %182 : vector<4x64xf32>
    %187 = arith.select %184, %182, %186 : vector<4x64xi1>, vector<4x64xf32>
    %188 = arith.truncf %187 : vector<4x64xf32> to vector<4x64xbf16>
    %c0_106 = arith.constant 0 : index
    %c384_107 = arith.constant 384 : index
    %189 = vector.load %arg12[%c0_106, %c384_107] : memref<4x512xbf16, #tpu.memory_space<vmem>>, vector<4x64xbf16>
    tpu.vector_store %arg12[%c0_106, %c384_107], %188 {strides = array<i32>} : memref<4x512xbf16, #tpu.memory_space<vmem>>, vector<4x64xbf16>,
    %c0_108 = arith.constant 0 : index
    %c448_109 = arith.constant 448 : index
    %190 = vector.load %arg11[%c0_108, %c448_109] : memref<4x512xf32, #tpu.memory_space<vmem>>, vector<4x64xf32>
    %191 = vector.broadcast %102 : vector<1x64xf32> to vector<4x64xf32>
    %192 = arith.mulf %190, %191 : vector<4x64xf32>
    %193 = vector.broadcast %105 : vector<1x64xf32> to vector<4x64xf32>
    %194 = arith.addf %192, %193 : vector<4x64xf32>
    %cst_110 = arith.constant 0.000000e+00 : f32
    %195 = vector.broadcast %cst_110 : f32 to vector<4x64xf32>
    %196 = arith.cmpf oge, %194, %195 : vector<4x64xf32>
    %cst_111 = arith.constant 2.000000e-01 : f32
    %197 = vector.broadcast %cst_111 : f32 to vector<4x64xf32>
    %198 = arith.mulf %197, %194 : vector<4x64xf32>
    %199 = arith.select %196, %194, %198 : vector<4x64xi1>, vector<4x64xf32>
    %200 = arith.truncf %199 : vector<4x64xf32> to vector<4x64xbf16>
    %c0_112 = arith.constant 0 : index
    %c448_113 = arith.constant 448 : index
    %201 = vector.load %arg12[%c0_112, %c448_113] : memref<4x512xbf16, #tpu.memory_space<vmem>>, vector<4x64xbf16>
    tpu.vector_store %arg12[%c0_112, %c448_113], %200 {strides = array<i32>} : memref<4x512xbf16, #tpu.memory_space<vmem>>, vector<4x64xbf16>,
    %c0_114 = arith.constant 0 : index
    %c0_115 = arith.constant 0 : index
    %202 = vector.load %arg12[%c0_114, %c0_115] : memref<4x512xbf16, #tpu.memory_space<vmem>>, vector<4x512xbf16>
    %c0_116 = arith.constant 0 : index
    %c0_117 = arith.constant 0 : index
    %203 = vector.load %arg5[%c0_116, %c0_117] : memref<512x128xbf16, #tpu.memory_space<vmem>>, vector<512x128xbf16>
    %cst_118 = arith.constant dense<0.000000e+00> : vector<4x128xf32>
    %204 = tpu.matmul %202, %203, %cst_118 {dimension_numbers = #tpu.dot_dimension_numbers<[1], [0], [0], [1], [0, 0, 1, 1], [], []>} : vector<4x512xbf16>, vector<512x128xbf16>, vector<4x128xf32> -> vector<4x128xf32>
    %cst_119 = arith.constant dense<0.000000e+00> : vector<128xf32>
    %205 = vector.multi_reduction <add>, %204, %cst_119 [0] : vector<4x128xf32> to vector<128xf32>
    %206 = vector.shape_cast %205 : vector<128xf32> to vector<1x128xf32>
    %cst_120 = arith.constant 4.000000e+00 : f32
    %207 = vector.broadcast %cst_120 : f32 to vector<1x128xf32>
    %208 = arith.divf %206, %207 : vector<1x128xf32>
    %209 = vector.broadcast %208 : vector<1x128xf32> to vector<4x128xf32>
    %210 = arith.subf %204, %209 : vector<4x128xf32>
    %211 = arith.mulf %210, %210 : vector<4x128xf32>
    %cst_121 = arith.constant dense<0.000000e+00> : vector<128xf32>
    %212 = vector.multi_reduction <add>, %211, %cst_121 [0] : vector<4x128xf32> to vector<128xf32>
    %213 = vector.shape_cast %212 : vector<128xf32> to vector<1x128xf32>
    %cst_122 = arith.constant 4.000000e+00 : f32
    %214 = vector.broadcast %cst_122 : f32 to vector<1x128xf32>
    %215 = arith.divf %213, %214 : vector<1x128xf32>
    %216 = vector.broadcast %208 : vector<1x128xf32> to vector<4x128xf32>
    %217 = arith.subf %204, %216 : vector<4x128xf32>
    %cst_123 = arith.constant 9.99999974E-6 : f32
    %218 = vector.broadcast %cst_123 : f32 to vector<1x128xf32>
    %219 = arith.addf %215, %218 : vector<1x128xf32>
    %220 = math.rsqrt %219 : vector<1x128xf32>
    %221 = vector.broadcast %220 : vector<1x128xf32> to vector<4x128xf32>
    %222 = arith.mulf %217, %221 : vector<4x128xf32>
    %c0_124 = arith.constant 0 : index
    %c0_125 = arith.constant 0 : index
    %223 = vector.load %arg6[%c0_124, %c0_125] : memref<1x128xf32, #tpu.memory_space<vmem>>, vector<1x128xf32>
    %224 = vector.broadcast %223 : vector<1x128xf32> to vector<4x128xf32>
    %225 = arith.mulf %222, %224 : vector<4x128xf32>
    %c0_126 = arith.constant 0 : index
    %c0_127 = arith.constant 0 : index
    %226 = vector.load %arg7[%c0_126, %c0_127] : memref<1x128xf32, #tpu.memory_space<vmem>>, vector<1x128xf32>
    %227 = vector.broadcast %226 : vector<1x128xf32> to vector<4x128xf32>
    %228 = arith.addf %225, %227 : vector<4x128xf32>
    %cst_128 = arith.constant 0.000000e+00 : f32
    %229 = vector.broadcast %cst_128 : f32 to vector<4x128xf32>
    %230 = arith.cmpf oge, %228, %229 : vector<4x128xf32>
    %cst_129 = arith.constant 2.000000e-01 : f32
    %231 = vector.broadcast %cst_129 : f32 to vector<4x128xf32>
    %232 = arith.mulf %231, %228 : vector<4x128xf32>
    %233 = arith.select %230, %228, %232 : vector<4x128xi1>, vector<4x128xf32>
    %c0_130 = arith.constant 0 : index
    %c0_131 = arith.constant 0 : index
    %234 = vector.load %arg8[%c0_130, %c0_131] : memref<1x128xf32, #tpu.memory_space<vmem>>, vector<1x128xf32>
    %235 = vector.broadcast %234 : vector<1x128xf32> to vector<4x128xf32>
    %236 = arith.mulf %233, %235 : vector<4x128xf32>
    %cst_132 = arith.constant dense<0.000000e+00> : vector<4xf32>
    %237 = vector.multi_reduction <add>, %236, %cst_132 [1] : vector<4x128xf32> to vector<4xf32>
    %238 = vector.shape_cast %237 : vector<4xf32> to vector<4x1xf32>
    %c0_133 = arith.constant 0 : index
    %c0_134 = arith.constant 0 : index
    %239 = vector.load %arg9[%c0_133, %c0_134] : memref<1x1xf32, #tpu.memory_space<vmem>>, vector<1x1xf32>
    %240 = vector.broadcast %239 : vector<1x1xf32> to vector<4x1xf32>
    %241 = arith.addf %238, %240 : vector<4x1xf32>
    %c0_135 = arith.constant 0 : index
    %c0_136 = arith.constant 0 : index
    %242 = vector.load %arg10[%c0_135, %c0_136] : memref<4x1xf32, #tpu.memory_space<vmem>>, vector<4x1xf32>
    tpu.vector_store %arg10[%c0_135, %c0_136], %241 {strides = array<i32>} : memref<4x1xf32, #tpu.memory_space<vmem>>, vector<4x1xf32>,
    return
  }
  func.func @transform_0(%arg0: i32) -> (i32, i32) {
    %c0_i32 = arith.constant 0 : i32
    %c0_i32_0 = arith.constant 0 : i32
    %c0_i32_1 = arith.constant 0 : i32
    return %c0_i32, %c0_i32_0 : i32, i32
  }
  func.func @transform_1(%arg0: i32) -> (i32, i32) {
    %c0_i32 = arith.constant 0 : i32
    %c0_i32_0 = arith.constant 0 : i32
    %c0_i32_1 = arith.constant 0 : i32
    return %c0_i32, %c0_i32_0 : i32, i32
  }
  func.func @transform_2(%arg0: i32) -> (i32, i32) {
    %c0_i32 = arith.constant 0 : i32
    %c0_i32_0 = arith.constant 0 : i32
    %c0_i32_1 = arith.constant 0 : i32
    return %c0_i32, %c0_i32_0 : i32, i32
  }
  func.func @transform_3(%arg0: i32) -> (i32, i32) {
    %c0_i32 = arith.constant 0 : i32
    %c0_i32_0 = arith.constant 0 : i32
    %c0_i32_1 = arith.constant 0 : i32
    return %c0_i32, %c0_i32_0 : i32, i32
  }
  func.func @transform_4(%arg0: i32) -> (i32, i32) {
    %c0_i32 = arith.constant 0 : i32
    %c0_i32_0 = arith.constant 0 : i32
    %c0_i32_1 = arith.constant 0 : i32
    return %c0_i32, %c0_i32_0 : i32, i32
  }
  func.func @transform_5(%arg0: i32) -> (i32, i32) {
    %c0_i32 = arith.constant 0 : i32
    %c0_i32_0 = arith.constant 0 : i32
    %c0_i32_1 = arith.constant 0 : i32
    return %c0_i32, %c0_i32_0 : i32, i32
  }
  func.func @transform_6(%arg0: i32) -> (i32, i32) {
    %c0_i32 = arith.constant 0 : i32
    %c0_i32_0 = arith.constant 0 : i32
    %c0_i32_1 = arith.constant 0 : i32
    return %c0_i32, %c0_i32_0 : i32, i32
  }
  func.func @transform_7(%arg0: i32) -> (i32, i32) {
    %c0_i32 = arith.constant 0 : i32
    %c0_i32_0 = arith.constant 0 : i32
    %c0_i32_1 = arith.constant 0 : i32
    return %c0_i32, %c0_i32_0 : i32, i32
  }
  func.func @transform_8(%arg0: i32) -> (i32, i32) {
    %c0_i32 = arith.constant 0 : i32
    %c0_i32_0 = arith.constant 0 : i32
    %c0_i32_1 = arith.constant 0 : i32
    return %c0_i32, %c0_i32_0 : i32, i32
  }
  func.func @transform_9(%arg0: i32) -> (i32, i32) {
    %c0_i32 = arith.constant 0 : i32
    %c0_i32_0 = arith.constant 0 : i32
    %c0_i32_1 = arith.constant 0 : i32
    return %c0_i32, %c0_i32_0 : i32, i32
  }
}

</mosaic_0001>

<llo_original>
// kernel: discriminator_forward.3
$region0: #{discriminator_forward.3}
  #allocation0 [shape = 'u32[]', space=smem, size = 0x4, offset = 0x4, fixed_abs, tag = 'smem constant byte address 0x4 - core index']
  #allocation1 [shape = 'u32[72,128]{1,0:T(1,128)}', space=vmem, size = 0x9000, scoped, tag = 'internal scratch']
  %s0 = inlined_call_operand.vmem [shape: bf16[256,512], index: 0, kind: input, shape index: {}]
  %s1 = inlined_call_operand.vmem [shape: bf16[512,128], index: 1, kind: input, shape index: {}]
  %s2 = inlined_call_operand.vmem [shape: f32[1,128], index: 2, kind: input, shape index: {}]
  %s3 = inlined_call_operand.vmem [shape: bf16[256,128], index: 3, kind: output, shape index: {}]
  %s4 = sld [smem:[#allocation0]]
  $region22: #{discriminator_forward.3} parent=0
    _
  %s6 = ssub.s32 1, %s4
  %s7 = scalar_select 0, %s6, %s4
  // Predicated region
  $region2: #{discriminator_forward.3} parent=0 // pred_check
    _
  $region3: #{discriminator_forward.3} parent=0 // pred_check_branch
    %9 = sbr.rel (0) target = $region5
  $region4: #{discriminator_forward.3} parent=0 // pred_region
    _
  $region5: #{discriminator_forward.3} parent=0 // pred_fallthru
    _
  // Predicated region
  $region6: #{discriminator_forward.3} parent=0 // pred_check
    _
  $region7: #{discriminator_forward.3} parent=0 // pred_check_branch
    %11 = sbr.rel (0) target = $region9
  $region8: #{discriminator_forward.3} parent=0 // pred_region
    _
  $region9: #{discriminator_forward.3} parent=0 // pred_fallthru
    _
  // Predicated region
  $region10: #{discriminator_forward.3} parent=0 // pred_check
    _
  $region11: #{discriminator_forward.3} parent=0 // pred_check_branch
    %13 = sbr.rel (0) target = $region13
  $region12: #{discriminator_forward.3} parent=0 // pred_region
    _
  $region13: #{discriminator_forward.3} parent=0 // pred_fallthru
    _
  %v14 = vld [vmem:[%s0] sm:$0xff]
  %v15 = vld [vmem:[%s0 + $0x8] sm:$0xff]
  %v16 = vld [vmem:[%s0 + $0x10] sm:$0xff]
  %v17 = vld [vmem:[%s0 + $0x18] sm:$0xff]
  %v18 = vld [vmem:[%s0 + $0x20] sm:$0xff]
  %v19 = vld [vmem:[%s0 + $0x28] sm:$0xff]
  %v20 = vld [vmem:[%s0 + $0x30] sm:$0xff]
  %v21 = vld [vmem:[%s0 + $0x38] sm:$0xff]
  %v22 = vld [vmem:[%s0 + $0x40] sm:$0xff]
  %v23 = vld [vmem:[%s0 + $0x48] sm:$0xff]
  %v24 = vld [vmem:[%s0 + $0x50] sm:$0xff]
  %v25 = vld [vmem:[%s0 + $0x58] sm:$0xff]
  %v26 = vld [vmem:[%s0 + $0x60] sm:$0xff]
  %v27 = vld [vmem:[%s0 + $0x68] sm:$0xff]
  %v28 = vld [vmem:[%s0 + $0x70] sm:$0xff]
  %v29 = vld [vmem:[%s0 + $0x78] sm:$0xff]
  %v30 = vld [vmem:[%s0 + $0x80] sm:$0xff]
  %v31 = vld [vmem:[%s0 + $0x88] sm:$0xff]
  %v32 = vld [vmem:[%s0 + $0x90] sm:$0xff]
  %v33 = vld [vmem:[%s0 + $0x98] sm:$0xff]
  %v34 = vld [vmem:[%s0 + $0xa0] sm:$0xff]
  %v35 = vld [vmem:[%s0 + $0xa8] sm:$0xff]
  %v36 = vld [vmem:[%s0 + $0xb0] sm:$0xff]
  %v37 = vld [vmem:[%s0 + $0xb8] sm:$0xff]
  %v38 = vld [vmem:[%s0 + $0xc0] sm:$0xff]
  %v39 = vld [vmem:[%s0 + $0xc8] sm:$0xff]
  %v40 = vld [vmem:[%s0 + $0xd0] sm:$0xff]
  %v41 = vld [vmem:[%s0 + $0xd8] sm:$0xff]
  %v42 = vld [vmem:[%s0 + $0xe0] sm:$0xff]
  %v43 = vld [vmem:[%s0 + $0xe8] sm:$0xff]
  %v44 = vld [vmem:[%s0 + $0xf0] sm:$0xff]
  %v45 = vld [vmem:[%s0 + $0xf8] sm:$0xff]
  %v46 = vld [vmem:[%s0 + $0x100] sm:$0xff]
  %v47 = vld [vmem:[%s0 + $0x108] sm:$0xff]
  %v48 = vld [vmem:[%s0 + $0x110] sm:$0xff]
  %v49 = vld [vmem:[%s0 + $0x118] sm:$0xff]
  %v50 = vld [vmem:[%s0 + $0x120] sm:$0xff]
  %v51 = vld [vmem:[%s0 + $0x128] sm:$0xff]
  %v52 = vld [vmem:[%s0 + $0x130] sm:$0xff]
  %v53 = vld [vmem:[%s0 + $0x138] sm:$0xff]
  %v54 = vld [vmem:[%s0 + $0x140] sm:$0xff]
  %v55 = vld [vmem:[%s0 + $0x148] sm:$0xff]
  %v56 = vld [vmem:[%s0 + $0x150] sm:$0xff]
  %v57 = vld [vmem:[%s0 + $0x158] sm:$0xff]
  %v58 = vld [vmem:[%s0 + $0x160] sm:$0xff]
  %v59 = vld [vmem:[%s0 + $0x168] sm:$0xff]
  %v60 = vld [vmem:[%s0 + $0x170] sm:$0xff]
  %v61 = vld [vmem:[%s0 + $0x178] sm:$0xff]
  %v62 = vld [vmem:[%s0 + $0x180] sm:$0xff]
  %v63 = vld [vmem:[%s0 + $0x188] sm:$0xff]
  %v64 = vld [vmem:[%s0 + $0x190] sm:$0xff]
  %v65 = vld [vmem:[%s0 + $0x198] sm:$0xff]
  %v66 = vld [vmem:[%s0 + $0x1a0] sm:$0xff]
  %v67 = vld [vmem:[%s0 + $0x1a8] sm:$0xff]
  %v68 = vld [vmem:[%s0 + $0x1b0] sm:$0xff]
  %v69 = vld [vmem:[%s0 + $0x1b8] sm:$0xff]
  %v70 = vld [vmem:[%s0 + $0x1c0] sm:$0xff]
  %v71 = vld [vmem:[%s0 + $0x1c8] sm:$0xff]
  %v72 = vld [vmem:[%s0 + $0x1d0] sm:$0xff]
  %v73 = vld [vmem:[%s0 + $0x1d8] sm:$0xff]
  %v74 = vld [vmem:[%s0 + $0x1e0] sm:$0xff]
  %v75 = vld [vmem:[%s0 + $0x1e8] sm:$0xff]
  %v76 = vld [vmem:[%s0 + $0x1f0] sm:$0xff]
  %v77 = vld [vmem:[%s0 + $0x1f8] sm:$0xff]
  %v78 = vld [vmem:[%s1] sm:$0xf]
  %v79 = vld [vmem:[%s1 + $0x4] sm:$0xf]
  %v80 = vld [vmem:[%s1 + $0x8] sm:$0xf]
  %v81 = vld [vmem:[%s1 + $0xc] sm:$0xf]
  %v82 = vld [vmem:[%s1 + $0x10] sm:$0xf]
  %v83 = vld [vmem:[%s1 + $0x14] sm:$0xf]
  %v84 = vld [vmem:[%s1 + $0x18] sm:$0xf]
  %v85 = vld [vmem:[%s1 + $0x1c] sm:$0xf]
  %v86 = vld [vmem:[%s1 + $0x20] sm:$0xf]
  %v87 = vld [vmem:[%s1 + $0x24] sm:$0xf]
  %v88 = vld [vmem:[%s1 + $0x28] sm:$0xf]
  %v89 = vld [vmem:[%s1 + $0x2c] sm:$0xf]
  %v90 = vld [vmem:[%s1 + $0x30] sm:$0xf]
  %v91 = vld [vmem:[%s1 + $0x34] sm:$0xf]
  %v92 = vld [vmem:[%s1 + $0x38] sm:$0xf]
  %v93 = vld [vmem:[%s1 + $0x3c] sm:$0xf]
  %v94 = vld [vmem:[%s1 + $0x40] sm:$0xf]
  %v95 = vld [vmem:[%s1 + $0x44] sm:$0xf]
  %v96 = vld [vmem:[%s1 + $0x48] sm:$0xf]
  %v97 = vld [vmem:[%s1 + $0x4c] sm:$0xf]
  %v98 = vld [vmem:[%s1 + $0x50] sm:$0xf]
  %v99 = vld [vmem:[%s1 + $0x54] sm:$0xf]
  %v100 = vld [vmem:[%s1 + $0x58] sm:$0xf]
  %v101 = vld [vmem:[%s1 + $0x5c] sm:$0xf]
  %v102 = vld [vmem:[%s1 + $0x60] sm:$0xf]
  %v103 = vld [vmem:[%s1 + $0x64] sm:$0xf]
  %v104 = vld [vmem:[%s1 + $0x68] sm:$0xf]
  %v105 = vld [vmem:[%s1 + $0x6c] sm:$0xf]
  %v106 = vld [vmem:[%s1 + $0x70] sm:$0xf]
  %v107 = vld [vmem:[%s1 + $0x74] sm:$0xf]
  %v108 = vld [vmem:[%s1 + $0x78] sm:$0xf]
  %v109 = vld [vmem:[%s1 + $0x7c] sm:$0xf]
  %v110 = vld [vmem:[%s1 + $0x80] sm:$0xf]
  %v111 = vld [vmem:[%s1 + $0x84] sm:$0xf]
  %v112 = vld [vmem:[%s1 + $0x88] sm:$0xf]
  %v113 = vld [vmem:[%s1 + $0x8c] sm:$0xf]
  %v114 = vld [vmem:[%s1 + $0x90] sm:$0xf]
  %v115 = vld [vmem:[%s1 + $0x94] sm:$0xf]
  %v116 = vld [vmem:[%s1 + $0x98] sm:$0xf]
  %v117 = vld [vmem:[%s1 + $0x9c] sm:$0xf]
  %v118 = vld [vmem:[%s1 + $0xa0] sm:$0xf]
  %v119 = vld [vmem:[%s1 + $0xa4] sm:$0xf]
  %v120 = vld [vmem:[%s1 + $0xa8] sm:$0xf]
  %v121 = vld [vmem:[%s1 + $0xac] sm:$0xf]
  %v122 = vld [vmem:[%s1 + $0xb0] sm:$0xf]
  %v123 = vld [vmem:[%s1 + $0xb4] sm:$0xf]
  %v124 = vld [vmem:[%s1 + $0xb8] sm:$0xf]
  %v125 = vld [vmem:[%s1 + $0xbc] sm:$0xf]
  %v126 = vld [vmem:[%s1 + $0xc0] sm:$0xf]
  %v127 = vld [vmem:[%s1 + $0xc4] sm:$0xf]
  %v128 = vld [vmem:[%s1 + $0xc8] sm:$0xf]
  %v129 = vld [vmem:[%s1 + $0xcc] sm:$0xf]
  %v130 = vld [vmem:[%s1 + $0xd0] sm:$0xf]
  %v131 = vld [vmem:[%s1 + $0xd4] sm:$0xf]
  %v132 = vld [vmem:[%s1 + $0xd8] sm:$0xf]
  %v133 = vld [vmem:[%s1 + $0xdc] sm:$0xf]
  %v134 = vld [vmem:[%s1 + $0xe0] sm:$0xf]
  %v135 = vld [vmem:[%s1 + $0xe4] sm:$0xf]
  %v136 = vld [vmem:[%s1 + $0xe8] sm:$0xf]
  %v137 = vld [vmem:[%s1 + $0xec] sm:$0xf]
  %v138 = vld [vmem:[%s1 + $0xf0] sm:$0xf]
  %v139 = vld [vmem:[%s1 + $0xf4] sm:$0xf]
  %v140 = vld [vmem:[%s1 + $0xf8] sm:$0xf]
  %v141 = vld [vmem:[%s1 + $0xfc] sm:$0xf]
  %v142 = vld [vmem:[%s2] sm:$0x1]
  %v144 = vperm.slane %v142, 0
  %v210 = vunpack.c.l.b16 %v14
  %v211 = vunpack.c.h.b16 %v14
  %v212 = vunpack.c.l.b16 %v15
  %v213 = vunpack.c.h.b16 %v15
  %v214 = vunpack.c.l.b16 %v16
  %v215 = vunpack.c.h.b16 %v16
  %v216 = vunpack.c.l.b16 %v17
  %v217 = vunpack.c.h.b16 %v17
  %v218 = vunpack.c.l.b16 %v18
  %v219 = vunpack.c.h.b16 %v18
  %v220 = vunpack.c.l.b16 %v19
  %v221 = vunpack.c.h.b16 %v19
  %v222 = vunpack.c.l.b16 %v20
  %v223 = vunpack.c.h.b16 %v20
  %v224 = vunpack.c.l.b16 %v21
  %v225 = vunpack.c.h.b16 %v21
  %v226 = vunpack.c.l.b16 %v22
  %v227 = vunpack.c.h.b16 %v22
  %v228 = vunpack.c.l.b16 %v23
  %v229 = vunpack.c.h.b16 %v23
  %v230 = vunpack.c.l.b16 %v24
  %v231 = vunpack.c.h.b16 %v24
  %v232 = vunpack.c.l.b16 %v25
  %v233 = vunpack.c.h.b16 %v25
  %v234 = vunpack.c.l.b16 %v26
  %v235 = vunpack.c.h.b16 %v26
  %v236 = vunpack.c.l.b16 %v27
  %v237 = vunpack.c.h.b16 %v27
  %v238 = vunpack.c.l.b16 %v28
  %v239 = vunpack.c.h.b16 %v28
  %v240 = vunpack.c.l.b16 %v29
  %v241 = vunpack.c.h.b16 %v29
  %v242 = vunpack.c.l.b16 %v30
  %v243 = vunpack.c.h.b16 %v30
  %v244 = vunpack.c.l.b16 %v31
  %v245 = vunpack.c.h.b16 %v31
  %v246 = vunpack.c.l.b16 %v32
  %v247 = vunpack.c.h.b16 %v32
  %v248 = vunpack.c.l.b16 %v33
  %v249 = vunpack.c.h.b16 %v33
  %v250 = vunpack.c.l.b16 %v34
  %v251 = vunpack.c.h.b16 %v34
  %v252 = vunpack.c.l.b16 %v35
  %v253 = vunpack.c.h.b16 %v35
  %v254 = vunpack.c.l.b16 %v36
  %v255 = vunpack.c.h.b16 %v36
  %v256 = vunpack.c.l.b16 %v37
  %v257 = vunpack.c.h.b16 %v37
  %v258 = vunpack.c.l.b16 %v38
  %v259 = vunpack.c.h.b16 %v38
  %v260 = vunpack.c.l.b16 %v39
  %v261 = vunpack.c.h.b16 %v39
  %v262 = vunpack.c.l.b16 %v40
  %v263 = vunpack.c.h.b16 %v40
  %v264 = vunpack.c.l.b16 %v41
  %v265 = vunpack.c.h.b16 %v41
  %v266 = vunpack.c.l.b16 %v42
  %v267 = vunpack.c.h.b16 %v42
  %v268 = vunpack.c.l.b16 %v43
  %v269 = vunpack.c.h.b16 %v43
  %v270 = vunpack.c.l.b16 %v44
  %v271 = vunpack.c.h.b16 %v44
  %v272 = vunpack.c.l.b16 %v45
  %v273 = vunpack.c.h.b16 %v45
  %v274 = vunpack.c.l.b16 %v46
  %v275 = vunpack.c.h.b16 %v46
  %v276 = vunpack.c.l.b16 %v47
  %v277 = vunpack.c.h.b16 %v47
  %v278 = vunpack.c.l.b16 %v48
  %v279 = vunpack.c.h.b16 %v48
  %v280 = vunpack.c.l.b16 %v49
  %v281 = vunpack.c.h.b16 %v49
  %v282 = vunpack.c.l.b16 %v50
  %v283 = vunpack.c.h.b16 %v50
  %v284 = vunpack.c.l.b16 %v51
  %v285 = vunpack.c.h.b16 %v51
  %v286 = vunpack.c.l.b16 %v52
  %v287 = vunpack.c.h.b16 %v52
  %v288 = vunpack.c.l.b16 %v53
  %v289 = vunpack.c.h.b16 %v53
  %v290 = vunpack.c.l.b16 %v54
  %v291 = vunpack.c.h.b16 %v54
  %v292 = vunpack.c.l.b16 %v55
  %v293 = vunpack.c.h.b16 %v55
  %v294 = vunpack.c.l.b16 %v56
  %v295 = vunpack.c.h.b16 %v56
  %v296 = vunpack.c.l.b16 %v57
  %v297 = vunpack.c.h.b16 %v57
  %v298 = vunpack.c.l.b16 %v58
  %v299 = vunpack.c.h.b16 %v58
  %v300 = vunpack.c.l.b16 %v59
  %v301 = vunpack.c.h.b16 %v59
  %v302 = vunpack.c.l.b16 %v60
  %v303 = vunpack.c.h.b16 %v60
  %v304 = vunpack.c.l.b16 %v61
  %v305 = vunpack.c.h.b16 %v61
  %v306 = vunpack.c.l.b16 %v62
  %v307 = vunpack.c.h.b16 %v62
  %v308 = vunpack.c.l.b16 %v63
  %v309 = vunpack.c.h.b16 %v63
  %v310 = vunpack.c.l.b16 %v64
  %v311 = vunpack.c.h.b16 %v64
  %v312 = vunpack.c.l.b16 %v65
  %v313 = vunpack.c.h.b16 %v65
  %v314 = vunpack.c.l.b16 %v66
  %v315 = vunpack.c.h.b16 %v66
  %v316 = vunpack.c.l.b16 %v67
  %v317 = vunpack.c.h.b16 %v67
  %v318 = vunpack.c.l.b16 %v68
  %v319 = vunpack.c.h.b16 %v68
  %v320 = vunpack.c.l.b16 %v69
  %v321 = vunpack.c.h.b16 %v69
  %v322 = vunpack.c.l.b16 %v70
  %v323 = vunpack.c.h.b16 %v70
  %v324 = vunpack.c.l.b16 %v71
  %v325 = vunpack.c.h.b16 %v71
  %v326 = vunpack.c.l.b16 %v72
  %v327 = vunpack.c.h.b16 %v72
  %v328 = vunpack.c.l.b16 %v73
  %v329 = vunpack.c.h.b16 %v73
  %v330 = vunpack.c.l.b16 %v74
  %v331 = vunpack.c.h.b16 %v74
  %v332 = vunpack.c.l.b16 %v75
  %v333 = vunpack.c.h.b16 %v75
  %v334 = vunpack.c.l.b16 %v76
  %v335 = vunpack.c.h.b16 %v76
  %v336 = vunpack.c.l.b16 %v77
  %v337 = vunpack.c.h.b16 %v77
  %v338 = vpack.c.b16 %v214, %v210
  %v339 = vpack.c.b16 %v215, %v211
  %v340 = vpack.c.b16 %v216, %v212
  %v341 = vpack.c.b16 %v217, %v213
  %v342 = vpack.c.b16 %v222, %v218
  %v343 = vpack.c.b16 %v223, %v219
  %v344 = vpack.c.b16 %v224, %v220
  %v345 = vpack.c.b16 %v225, %v221
  %v346 = vpack.c.b16 %v230, %v226
  %v347 = vpack.c.b16 %v231, %v227
  %v348 = vpack.c.b16 %v232, %v228
  %v349 = vpack.c.b16 %v233, %v229
  %v350 = vpack.c.b16 %v238, %v234
  %v351 = vpack.c.b16 %v239, %v235
  %v352 = vpack.c.b16 %v240, %v236
  %v353 = vpack.c.b16 %v241, %v237
  %v354 = vpack.c.b16 %v246, %v242
  %v355 = vpack.c.b16 %v247, %v243
  %v356 = vpack.c.b16 %v248, %v244
  %v357 = vpack.c.b16 %v249, %v245
  %v358 = vpack.c.b16 %v254, %v250
  %v359 = vpack.c.b16 %v255, %v251
  %v360 = vpack.c.b16 %v256, %v252
  %v361 = vpack.c.b16 %v257, %v253
  %v362 = vpack.c.b16 %v262, %v258
  %v363 = vpack.c.b16 %v263, %v259
  %v364 = vpack.c.b16 %v264, %v260
  %v365 = vpack.c.b16 %v265, %v261
  %v366 = vpack.c.b16 %v270, %v266
  %v367 = vpack.c.b16 %v271, %v267
  %v368 = vpack.c.b16 %v272, %v268
  %v369 = vpack.c.b16 %v273, %v269
  %v370 = vpack.c.b16 %v278, %v274
  %v371 = vpack.c.b16 %v279, %v275
  %v372 = vpack.c.b16 %v280, %v276
  %v373 = vpack.c.b16 %v281, %v277
  %v374 = vpack.c.b16 %v286, %v282
  %v375 = vpack.c.b16 %v287, %v283
  %v376 = vpack.c.b16 %v288, %v284
  %v377 = vpack.c.b16 %v289, %v285
  %v378 = vpack.c.b16 %v294, %v290
  %v379 = vpack.c.b16 %v295, %v291
  %v380 = vpack.c.b16 %v296, %v292
  %v381 = vpack.c.b16 %v297, %v293
  %v382 = vpack.c.b16 %v302, %v298
  %v383 = vpack.c.b16 %v303, %v299
  %v384 = vpack.c.b16 %v304, %v300
  %v385 = vpack.c.b16 %v305, %v301
  %v386 = vpack.c.b16 %v310, %v306
  %v387 = vpack.c.b16 %v311, %v307
  %v388 = vpack.c.b16 %v312, %v308
  %v389 = vpack.c.b16 %v313, %v309
  %v390 = vpack.c.b16 %v318, %v314
  %v391 = vpack.c.b16 %v319, %v315
  %v392 = vpack.c.b16 %v320, %v316
  %v393 = vpack.c.b16 %v321, %v317
  %v394 = vpack.c.b16 %v326, %v322
  %v395 = vpack.c.b16 %v327, %v323
  %v396 = vpack.c.b16 %v328, %v324
  %v397 = vpack.c.b16 %v329, %v325
  %v398 = vpack.c.b16 %v334, %v330
  %v399 = vpack.c.b16 %v335, %v331
  %v400 = vpack.c.b16 %v336, %v332
  %v401 = vpack.c.b16 %v337, %v333
  %v530 = vunpack.c.l.b16 %v78
  %v531 = vunpack.c.l.b16 %v79
  %v532 = vunpack.c.l.b16 %v80
  %v533 = vunpack.c.l.b16 %v81
  %v534 = vunpack.c.l.b16 %v82
  %v535 = vunpack.c.l.b16 %v83
  %v536 = vunpack.c.l.b16 %v84
  %v537 = vunpack.c.l.b16 %v85
  %v538 = vunpack.c.l.b16 %v86
  %v539 = vunpack.c.l.b16 %v87
  %v540 = vunpack.c.l.b16 %v88
  %v541 = vunpack.c.l.b16 %v89
  %v542 = vunpack.c.l.b16 %v90
  %v543 = vunpack.c.l.b16 %v91
  %v544 = vunpack.c.l.b16 %v92
  %v545 = vunpack.c.l.b16 %v93
  %v546 = vunpack.c.l.b16 %v94
  %v547 = vunpack.c.l.b16 %v95
  %v548 = vunpack.c.l.b16 %v96
  %v549 = vunpack.c.l.b16 %v97
  %v550 = vunpack.c.l.b16 %v98
  %v551 = vunpack.c.l.b16 %v99
  %v552 = vunpack.c.l.b16 %v100
  %v553 = vunpack.c.l.b16 %v101
  %v554 = vunpack.c.l.b16 %v102
  %v555 = vunpack.c.l.b16 %v103
  %v556 = vunpack.c.l.b16 %v104
  %v557 = vunpack.c.l.b16 %v105
  %v558 = vunpack.c.l.b16 %v106
  %v559 = vunpack.c.l.b16 %v107
  %v560 = vunpack.c.l.b16 %v108
  %v561 = vunpack.c.l.b16 %v109
  %v562 = vunpack.c.l.b16 %v110
  %v563 = vunpack.c.l.b16 %v111
  %v564 = vunpack.c.l.b16 %v112
  %v565 = vunpack.c.l.b16 %v113
  %v566 = vunpack.c.l.b16 %v114
  %v567 = vunpack.c.l.b16 %v115
  %v568 = vunpack.c.l.b16 %v116
  %v569 = vunpack.c.l.b16 %v117
  %v570 = vunpack.c.l.b16 %v118
  %v571 = vunpack.c.l.b16 %v119
  %v572 = vunpack.c.l.b16 %v120
  %v573 = vunpack.c.l.b16 %v121
  %v574 = vunpack.c.l.b16 %v122
  %v575 = vunpack.c.l.b16 %v123
  %v576 = vunpack.c.l.b16 %v124
  %v577 = vunpack.c.l.b16 %v125
  %v578 = vunpack.c.l.b16 %v126
  %v579 = vunpack.c.l.b16 %v127
  %v580 = vunpack.c.l.b16 %v128
  %v581 = vunpack.c.l.b16 %v129
  %v582 = vunpack.c.l.b16 %v130
  %v583 = vunpack.c.l.b16 %v131
  %v584 = vunpack.c.l.b16 %v132
  %v585 = vunpack.c.l.b16 %v133
  %v586 = vunpack.c.l.b16 %v134
  %v587 = vunpack.c.l.b16 %v135
  %v588 = vunpack.c.l.b16 %v136
  %v589 = vunpack.c.l.b16 %v137
  %v590 = vunpack.c.l.b16 %v138
  %v591 = vunpack.c.l.b16 %v139
  %v592 = vunpack.c.l.b16 %v140
  %v593 = vunpack.c.l.b16 %v141
  %v594 = vpack.c.b16 %v531, %v530
  %v595 = vpack.c.b16 %v533, %v532
  %v596 = vpack.c.b16 %v535, %v534
  %v597 = vpack.c.b16 %v537, %v536
  %v598 = vpack.c.b16 %v539, %v538
  %v599 = vpack.c.b16 %v541, %v540
  %v600 = vpack.c.b16 %v543, %v542
  %v601 = vpack.c.b16 %v545, %v544
  %v602 = vpack.c.b16 %v547, %v546
  %v603 = vpack.c.b16 %v549, %v548
  %v604 = vpack.c.b16 %v551, %v550
  %v605 = vpack.c.b16 %v553, %v552
  %v606 = vpack.c.b16 %v555, %v554
  %v607 = vpack.c.b16 %v557, %v556
  %v608 = vpack.c.b16 %v559, %v558
  %v609 = vpack.c.b16 %v561, %v560
  %v610 = vpack.c.b16 %v563, %v562
  %v611 = vpack.c.b16 %v565, %v564
  %v612 = vpack.c.b16 %v567, %v566
  %v613 = vpack.c.b16 %v569, %v568
  %v614 = vpack.c.b16 %v571, %v570
  %v615 = vpack.c.b16 %v573, %v572
  %v616 = vpack.c.b16 %v575, %v574
  %v617 = vpack.c.b16 %v577, %v576
  %v618 = vpack.c.b16 %v579, %v578
  %v619 = vpack.c.b16 %v581, %v580
  %v620 = vpack.c.b16 %v583, %v582
  %v621 = vpack.c.b16 %v585, %v584
  %v622 = vpack.c.b16 %v587, %v586
  %v623 = vpack.c.b16 %v589, %v588
  %v624 = vpack.c.b16 %v591, %v590
  %v625 = vpack.c.b16 %v593, %v592
  %658 = vmatpush.bf16.msra.mxu0 %v601
  %659 = vmatpush.bf16.msra.mxu0 %v600
  %660 = vmatpush.bf16.msra.mxu0 %v599
  %661 = vmatpush.bf16.msra.mxu0 %v598
  %662 = vmatpush.bf16.msra.mxu0 %v597
  %663 = vmatpush.bf16.msra.mxu0 %v596
  %664 = vmatpush.bf16.msra.mxu0 %v595
  %665 = vmatpush.bf16.msra.mxu0 %v594
  %666 = vmatmul.bf16.gmra.mxu0 %v338
  %v667 = vpop.f32.mrf.mxu0
  %v668 = vadd.f32 %v144, %v667
  %v669 = vpop.f32.mrf.mxu0
  %v670 = vadd.f32 %v144, %v669
  %671 = vmatmul.bf16.gmra.mxu0 %v342
  %v672 = vpop.f32.mrf.mxu0
  %v673 = vadd.f32 %v144, %v672
  %v674 = vpop.f32.mrf.mxu0
  %v675 = vadd.f32 %v144, %v674
  %676 = vmatmul.bf16.gmra.mxu0 %v346
  %v677 = vpop.f32.mrf.mxu0
  %v678 = vadd.f32 %v144, %v677
  %v679 = vpop.f32.mrf.mxu0
  %v680 = vadd.f32 %v144, %v679
  %681 = vmatmul.bf16.gmra.mxu0 %v350
  %v682 = vpop.f32.mrf.mxu0
  %v683 = vadd.f32 %v144, %v682
  %v684 = vpop.f32.mrf.mxu0
  %v685 = vadd.f32 %v144, %v684
  %686 = vmatmul.bf16.gmra.mxu0 %v354
  %v687 = vpop.f32.mrf.mxu0
  %v688 = vadd.f32 %v144, %v687
  %v689 = vpop.f32.mrf.mxu0
  %v690 = vadd.f32 %v144, %v689
  %691 = vmatmul.bf16.gmra.mxu0 %v358
  %v692 = vpop.f32.mrf.mxu0
  %v693 = vadd.f32 %v144, %v692
  %v694 = vpop.f32.mrf.mxu0
  %v695 = vadd.f32 %v144, %v694
  %696 = vmatmul.bf16.gmra.mxu0 %v362
  %v697 = vpop.f32.mrf.mxu0
  %v698 = vadd.f32 %v144, %v697
  %v699 = vpop.f32.mrf.mxu0
  %v700 = vadd.f32 %v144, %v699
  %701 = vmatmul.bf16.gmra.mxu0 %v366
  %v702 = vpop.f32.mrf.mxu0
  %v703 = vadd.f32 %v144, %v702
  %v704 = vpop.f32.mrf.mxu0
  %v705 = vadd.f32 %v144, %v704
  %706 = vmatmul.bf16.gmra.mxu0 %v370
  %v707 = vpop.f32.mrf.mxu0
  %v708 = vadd.f32 %v144, %v707
  %v709 = vpop.f32.mrf.mxu0
  %v710 = vadd.f32 %v144, %v709
  %711 = vmatmul.bf16.gmra.mxu0 %v374
  %v712 = vpop.f32.mrf.mxu0
  %v713 = vadd.f32 %v144, %v712
  %v714 = vpop.f32.mrf.mxu0
  %v715 = vadd.f32 %v144, %v714
  %716 = vmatmul.bf16.gmra.mxu0 %v378
  %v717 = vpop.f32.mrf.mxu0
  %v718 = vadd.f32 %v144, %v717
  %v719 = vpop.f32.mrf.mxu0
  %v720 = vadd.f32 %v144, %v719
  %721 = vmatmul.bf16.gmra.mxu0 %v382
  %v722 = vpop.f32.mrf.mxu0
  %v723 = vadd.f32 %v144, %v722
  %v724 = vpop.f32.mrf.mxu0
  %v725 = vadd.f32 %v144, %v724
  %726 = vmatmul.bf16.gmra.mxu0 %v386
  %v727 = vpop.f32.mrf.mxu0
  %v728 = vadd.f32 %v144, %v727
  %v729 = vpop.f32.mrf.mxu0
  %v730 = vadd.f32 %v144, %v729
  %731 = vmatmul.bf16.gmra.mxu0 %v390
  %v732 = vpop.f32.mrf.mxu0
  %v733 = vadd.f32 %v144, %v732
  %v734 = vpop.f32.mrf.mxu0
  %v735 = vadd.f32 %v144, %v734
  %736 = vmatmul.bf16.gmra.mxu0 %v394
  %v737 = vpop.f32.mrf.mxu0
  %v738 = vadd.f32 %v144, %v737
  %v739 = vpop.f32.mrf.mxu0
  %v740 = vadd.f32 %v144, %v739
  %741 = vmatmul.bf16.gmra.mxu0 %v398
  %v742 = vpop.f32.mrf.mxu0
  %v743 = vadd.f32 %v144, %v742
  %v744 = vpop.f32.mrf.mxu0
  %v745 = vadd.f32 %v144, %v744
  %746 = vdwg.mxu0
  %747 = vmatpush.bf16.msra.mxu0 %v609
  %748 = vmatpush.bf16.msra.mxu0 %v608
  %749 = vmatpush.bf16.msra.mxu0 %v607
  %750 = vmatpush.bf16.msra.mxu0 %v606
  %751 = vmatpush.bf16.msra.mxu0 %v605
  %752 = vmatpush.bf16.msra.mxu0 %v604
  %753 = vmatpush.bf16.msra.mxu0 %v603
  %754 = vmatpush.bf16.msra.mxu0 %v602
  %755 = vmatmul.bf16.gmra.mxu0 %v339
  %v756 = vpop.f32.mrf.mxu0
  %v757 = vadd.f32 %v668, %v756
  %v758 = vpop.f32.mrf.mxu0
  %v759 = vadd.f32 %v670, %v758
  %760 = vmatmul.bf16.gmra.mxu0 %v343
  %v761 = vpop.f32.mrf.mxu0
  %v762 = vadd.f32 %v673, %v761
  %v763 = vpop.f32.mrf.mxu0
  %v764 = vadd.f32 %v675, %v763
  %765 = vmatmul.bf16.gmra.mxu0 %v347
  %v766 = vpop.f32.mrf.mxu0
  %v767 = vadd.f32 %v678, %v766
  %v768 = vpop.f32.mrf.mxu0
  %v769 = vadd.f32 %v680, %v768
  %770 = vmatmul.bf16.gmra.mxu0 %v351
  %v771 = vpop.f32.mrf.mxu0
  %v772 = vadd.f32 %v683, %v771
  %v773 = vpop.f32.mrf.mxu0
  %v774 = vadd.f32 %v685, %v773
  %775 = vmatmul.bf16.gmra.mxu0 %v355
  %v776 = vpop.f32.mrf.mxu0
  %v777 = vadd.f32 %v688, %v776
  %v778 = vpop.f32.mrf.mxu0
  %v779 = vadd.f32 %v690, %v778
  %780 = vmatmul.bf16.gmra.mxu0 %v359
  %v781 = vpop.f32.mrf.mxu0
  %v782 = vadd.f32 %v693, %v781
  %v783 = vpop.f32.mrf.mxu0
  %v784 = vadd.f32 %v695, %v783
  %785 = vmatmul.bf16.gmra.mxu0 %v363
  %v786 = vpop.f32.mrf.mxu0
  %v787 = vadd.f32 %v698, %v786
  %v788 = vpop.f32.mrf.mxu0
  %v789 = vadd.f32 %v700, %v788
  %790 = vmatmul.bf16.gmra.mxu0 %v367
  %v791 = vpop.f32.mrf.mxu0
  %v792 = vadd.f32 %v703, %v791
  %v793 = vpop.f32.mrf.mxu0
  %v794 = vadd.f32 %v705, %v793
  %795 = vmatmul.bf16.gmra.mxu0 %v371
  %v796 = vpop.f32.mrf.mxu0
  %v797 = vadd.f32 %v708, %v796
  %v798 = vpop.f32.mrf.mxu0
  %v799 = vadd.f32 %v710, %v798
  %800 = vmatmul.bf16.gmra.mxu0 %v375
  %v801 = vpop.f32.mrf.mxu0
  %v802 = vadd.f32 %v713, %v801
  %v803 = vpop.f32.mrf.mxu0
  %v804 = vadd.f32 %v715, %v803
  %805 = vmatmul.bf16.gmra.mxu0 %v379
  %v806 = vpop.f32.mrf.mxu0
  %v807 = vadd.f32 %v718, %v806
  %v808 = vpop.f32.mrf.mxu0
  %v809 = vadd.f32 %v720, %v808
  %810 = vmatmul.bf16.gmra.mxu0 %v383
  %v811 = vpop.f32.mrf.mxu0
  %v812 = vadd.f32 %v723, %v811
  %v813 = vpop.f32.mrf.mxu0
  %v814 = vadd.f32 %v725, %v813
  %815 = vmatmul.bf16.gmra.mxu0 %v387
  %v816 = vpop.f32.mrf.mxu0
  %v817 = vadd.f32 %v728, %v816
  %v818 = vpop.f32.mrf.mxu0
  %v819 = vadd.f32 %v730, %v818
  %820 = vmatmul.bf16.gmra.mxu0 %v391
  %v821 = vpop.f32.mrf.mxu0
  %v822 = vadd.f32 %v733, %v821
  %v823 = vpop.f32.mrf.mxu0
  %v824 = vadd.f32 %v735, %v823
  %825 = vmatmul.bf16.gmra.mxu0 %v395
  %v826 = vpop.f32.mrf.mxu0
  %v827 = vadd.f32 %v738, %v826
  %v828 = vpop.f32.mrf.mxu0
  %v829 = vadd.f32 %v740, %v828
  %830 = vmatmul.bf16.gmra.mxu0 %v399
  %v831 = vpop.f32.mrf.mxu0
  %v832 = vadd.f32 %v743, %v831
  %v833 = vpop.f32.mrf.mxu0
  %v834 = vadd.f32 %v745, %v833
  %835 = vdwg.mxu0
  %836 = vmatpush.bf16.msra.mxu0 %v617
  %837 = vmatpush.bf16.msra.mxu0 %v616
  %838 = vmatpush.bf16.msra.mxu0 %v615
  %839 = vmatpush.bf16.msra.mxu0 %v614
  %840 = vmatpush.bf16.msra.mxu0 %v613
  %841 = vmatpush.bf16.msra.mxu0 %v612
  %842 = vmatpush.bf16.msra.mxu0 %v611
  %843 = vmatpush.bf16.msra.mxu0 %v610
  %844 = vmatmul.bf16.gmra.mxu0 %v340
  %v845 = vpop.f32.mrf.mxu0
  %v846 = vadd.f32 %v757, %v845
  %v847 = vpop.f32.mrf.mxu0
  %v848 = vadd.f32 %v759, %v847
  %849 = vmatmul.bf16.gmra.mxu0 %v344
  %v850 = vpop.f32.mrf.mxu0
  %v851 = vadd.f32 %v762, %v850
  %v852 = vpop.f32.mrf.mxu0
  %v853 = vadd.f32 %v764, %v852
  %854 = vmatmul.bf16.gmra.mxu0 %v348
  %v855 = vpop.f32.mrf.mxu0
  %v856 = vadd.f32 %v767, %v855
  %v857 = vpop.f32.mrf.mxu0
  %v858 = vadd.f32 %v769, %v857
  %859 = vmatmul.bf16.gmra.mxu0 %v352
  %v860 = vpop.f32.mrf.mxu0
  %v861 = vadd.f32 %v772, %v860
  %v862 = vpop.f32.mrf.mxu0
  %v863 = vadd.f32 %v774, %v862
  %864 = vmatmul.bf16.gmra.mxu0 %v356
  %v865 = vpop.f32.mrf.mxu0
  %v866 = vadd.f32 %v777, %v865
  %v867 = vpop.f32.mrf.mxu0
  %v868 = vadd.f32 %v779, %v867
  %869 = vmatmul.bf16.gmra.mxu0 %v360
  %v870 = vpop.f32.mrf.mxu0
  %v871 = vadd.f32 %v782, %v870
  %v872 = vpop.f32.mrf.mxu0
  %v873 = vadd.f32 %v784, %v872
  %874 = vmatmul.bf16.gmra.mxu0 %v364
  %v875 = vpop.f32.mrf.mxu0
  %v876 = vadd.f32 %v787, %v875
  %v877 = vpop.f32.mrf.mxu0
  %v878 = vadd.f32 %v789, %v877
  %879 = vmatmul.bf16.gmra.mxu0 %v368
  %v880 = vpop.f32.mrf.mxu0
  %v881 = vadd.f32 %v792, %v880
  %v882 = vpop.f32.mrf.mxu0
  %v883 = vadd.f32 %v794, %v882
  %884 = vmatmul.bf16.gmra.mxu0 %v372
  %v885 = vpop.f32.mrf.mxu0
  %v886 = vadd.f32 %v797, %v885
  %v887 = vpop.f32.mrf.mxu0
  %v888 = vadd.f32 %v799, %v887
  %889 = vmatmul.bf16.gmra.mxu0 %v376
  %v890 = vpop.f32.mrf.mxu0
  %v891 = vadd.f32 %v802, %v890
  %v892 = vpop.f32.mrf.mxu0
  %v893 = vadd.f32 %v804, %v892
  %894 = vmatmul.bf16.gmra.mxu0 %v380
  %v895 = vpop.f32.mrf.mxu0
  %v896 = vadd.f32 %v807, %v895
  %v897 = vpop.f32.mrf.mxu0
  %v898 = vadd.f32 %v809, %v897
  %899 = vmatmul.bf16.gmra.mxu0 %v384
  %v900 = vpop.f32.mrf.mxu0
  %v901 = vadd.f32 %v812, %v900
  %v902 = vpop.f32.mrf.mxu0
  %v903 = vadd.f32 %v814, %v902
  %904 = vmatmul.bf16.gmra.mxu0 %v388
  %v905 = vpop.f32.mrf.mxu0
  %v906 = vadd.f32 %v817, %v905
  %v907 = vpop.f32.mrf.mxu0
  %v908 = vadd.f32 %v819, %v907
  %909 = vmatmul.bf16.gmra.mxu0 %v392
  %v910 = vpop.f32.mrf.mxu0
  %v911 = vadd.f32 %v822, %v910
  %v912 = vpop.f32.mrf.mxu0
  %v913 = vadd.f32 %v824, %v912
  %914 = vmatmul.bf16.gmra.mxu0 %v396
  %v915 = vpop.f32.mrf.mxu0
  %v916 = vadd.f32 %v827, %v915
  %v917 = vpop.f32.mrf.mxu0
  %v918 = vadd.f32 %v829, %v917
  %919 = vmatmul.bf16.gmra.mxu0 %v400
  %v920 = vpop.f32.mrf.mxu0
  %v921 = vadd.f32 %v832, %v920
  %v922 = vpop.f32.mrf.mxu0
  %v923 = vadd.f32 %v834, %v922
  %924 = vdwg.mxu0
  %925 = vmatpush.bf16.msra.mxu0 %v625
  %926 = vmatpush.bf16.msra.mxu0 %v624
  %927 = vmatpush.bf16.msra.mxu0 %v623
  %928 = vmatpush.bf16.msra.mxu0 %v622
  %929 = vmatpush.bf16.msra.mxu0 %v621
  %930 = vmatpush.bf16.msra.mxu0 %v620
  %931 = vmatpush.bf16.msra.mxu0 %v619
  %932 = vmatpush.bf16.msra.mxu0 %v618
  %933 = vmatmul.bf16.gmra.mxu0 %v341
  %v934 = vpop.f32.mrf.mxu0
  %v935 = vadd.f32 %v846, %v934
  %v936 = vpop.f32.mrf.mxu0
  %v937 = vadd.f32 %v848, %v936
  %938 = vmatmul.bf16.gmra.mxu0 %v345
  %v939 = vpop.f32.mrf.mxu0
  %v940 = vadd.f32 %v851, %v939
  %v941 = vpop.f32.mrf.mxu0
  %v942 = vadd.f32 %v853, %v941
  %943 = vmatmul.bf16.gmra.mxu0 %v349
  %v944 = vpop.f32.mrf.mxu0
  %v945 = vadd.f32 %v856, %v944
  %v946 = vpop.f32.mrf.mxu0
  %v947 = vadd.f32 %v858, %v946
  %948 = vmatmul.bf16.gmra.mxu0 %v353
  %v949 = vpop.f32.mrf.mxu0
  %v950 = vadd.f32 %v861, %v949
  %v951 = vpop.f32.mrf.mxu0
  %v952 = vadd.f32 %v863, %v951
  %953 = vmatmul.bf16.gmra.mxu0 %v357
  %v954 = vpop.f32.mrf.mxu0
  %v955 = vadd.f32 %v866, %v954
  %v956 = vpop.f32.mrf.mxu0
  %v957 = vadd.f32 %v868, %v956
  %958 = vmatmul.bf16.gmra.mxu0 %v361
  %v959 = vpop.f32.mrf.mxu0
  %v960 = vadd.f32 %v871, %v959
  %v961 = vpop.f32.mrf.mxu0
  %v962 = vadd.f32 %v873, %v961
  %963 = vmatmul.bf16.gmra.mxu0 %v365
  %v964 = vpop.f32.mrf.mxu0
  %v965 = vadd.f32 %v876, %v964
  %v966 = vpop.f32.mrf.mxu0
  %v967 = vadd.f32 %v878, %v966
  %968 = vmatmul.bf16.gmra.mxu0 %v369
  %v969 = vpop.f32.mrf.mxu0
  %v970 = vadd.f32 %v881, %v969
  %v971 = vpop.f32.mrf.mxu0
  %v972 = vadd.f32 %v883, %v971
  %973 = vmatmul.bf16.gmra.mxu0 %v373
  %v974 = vpop.f32.mrf.mxu0
  %v975 = vadd.f32 %v886, %v974
  %v976 = vpop.f32.mrf.mxu0
  %v977 = vadd.f32 %v888, %v976
  %978 = vmatmul.bf16.gmra.mxu0 %v377
  %v979 = vpop.f32.mrf.mxu0
  %v980 = vadd.f32 %v891, %v979
  %v981 = vpop.f32.mrf.mxu0
  %v982 = vadd.f32 %v893, %v981
  %983 = vmatmul.bf16.gmra.mxu0 %v381
  %v984 = vpop.f32.mrf.mxu0
  %v985 = vadd.f32 %v896, %v984
  %v986 = vpop.f32.mrf.mxu0
  %v987 = vadd.f32 %v898, %v986
  %988 = vmatmul.bf16.gmra.mxu0 %v385
  %v989 = vpop.f32.mrf.mxu0
  %v990 = vadd.f32 %v901, %v989
  %v991 = vpop.f32.mrf.mxu0
  %v992 = vadd.f32 %v903, %v991
  %993 = vmatmul.bf16.gmra.mxu0 %v389
  %v994 = vpop.f32.mrf.mxu0
  %v995 = vadd.f32 %v906, %v994
  %v996 = vpop.f32.mrf.mxu0
  %v997 = vadd.f32 %v908, %v996
  %998 = vmatmul.bf16.gmra.mxu0 %v393
  %v999 = vpop.f32.mrf.mxu0
  %v1000 = vadd.f32 %v911, %v999
  %v1001 = vpop.f32.mrf.mxu0
  %v1002 = vadd.f32 %v913, %v1001
  %1003 = vmatmul.bf16.gmra.mxu0 %v397
  %v1004 = vpop.f32.mrf.mxu0
  %v1005 = vadd.f32 %v916, %v1004
  %v1006 = vpop.f32.mrf.mxu0
  %v1007 = vadd.f32 %v918, %v1006
  %1008 = vmatmul.bf16.gmra.mxu0 %v401
  %v1009 = vpop.f32.mrf.mxu0
  %v1010 = vadd.f32 %v921, %v1009
  %v1011 = vpop.f32.mrf.mxu0
  %v1012 = vadd.f32 %v923, %v1011
  %1013 = vdwg.mxu0
  %vm1014 = vcmp.ge.f32.partialorder %v935, 0.0
  %vm1015 = vcmp.ge.f32.partialorder %v937, 0.0
  %vm1016 = vcmp.ge.f32.partialorder %v940, 0.0
  %vm1017 = vcmp.ge.f32.partialorder %v942, 0.0
  %vm1018 = vcmp.ge.f32.partialorder %v945, 0.0
  %vm1019 = vcmp.ge.f32.partialorder %v947, 0.0
  %vm1020 = vcmp.ge.f32.partialorder %v950, 0.0
  %vm1021 = vcmp.ge.f32.partialorder %v952, 0.0
  %vm1022 = vcmp.ge.f32.partialorder %v955, 0.0
  %vm1023 = vcmp.ge.f32.partialorder %v957, 0.0
  %vm1024 = vcmp.ge.f32.partialorder %v960, 0.0
  %vm1025 = vcmp.ge.f32.partialorder %v962, 0.0
  %vm1026 = vcmp.ge.f32.partialorder %v965, 0.0
  %vm1027 = vcmp.ge.f32.partialorder %v967, 0.0
  %vm1028 = vcmp.ge.f32.partialorder %v970, 0.0
  %vm1029 = vcmp.ge.f32.partialorder %v972, 0.0
  %vm1030 = vcmp.ge.f32.partialorder %v975, 0.0
  %vm1031 = vcmp.ge.f32.partialorder %v977, 0.0
  %vm1032 = vcmp.ge.f32.partialorder %v980, 0.0
  %vm1033 = vcmp.ge.f32.partialorder %v982, 0.0
  %vm1034 = vcmp.ge.f32.partialorder %v985, 0.0
  %vm1035 = vcmp.ge.f32.partialorder %v987, 0.0
  %vm1036 = vcmp.ge.f32.partialorder %v990, 0.0
  %vm1037 = vcmp.ge.f32.partialorder %v992, 0.0
  %vm1038 = vcmp.ge.f32.partialorder %v995, 0.0
  %vm1039 = vcmp.ge.f32.partialorder %v997, 0.0
  %vm1040 = vcmp.ge.f32.partialorder %v1000, 0.0
  %vm1041 = vcmp.ge.f32.partialorder %v1002, 0.0
  %vm1042 = vcmp.ge.f32.partialorder %v1005, 0.0
  %vm1043 = vcmp.ge.f32.partialorder %v1007, 0.0
  %vm1044 = vcmp.ge.f32.partialorder %v1010, 0.0
  %vm1045 = vcmp.ge.f32.partialorder %v1012, 0.0
  %v1046 = vmul.f32 %v935, 0.2
  %v1047 = vmul.f32 %v937, 0.2
  %v1048 = vmul.f32 %v940, 0.2
  %v1049 = vmul.f32 %v942, 0.2
  %v1050 = vmul.f32 %v945, 0.2
  %v1051 = vmul.f32 %v947, 0.2
  %v1052 = vmul.f32 %v950, 0.2
  %v1053 = vmul.f32 %v952, 0.2
  %v1054 = vmul.f32 %v955, 0.2
  %v1055 = vmul.f32 %v957, 0.2
  %v1056 = vmul.f32 %v960, 0.2
  %v1057 = vmul.f32 %v962, 0.2
  %v1058 = vmul.f32 %v965, 0.2
  %v1059 = vmul.f32 %v967, 0.2
  %v1060 = vmul.f32 %v970, 0.2
  %v1061 = vmul.f32 %v972, 0.2
  %v1062 = vmul.f32 %v975, 0.2
  %v1063 = vmul.f32 %v977, 0.2
  %v1064 = vmul.f32 %v980, 0.2
  %v1065 = vmul.f32 %v982, 0.2
  %v1066 = vmul.f32 %v985, 0.2
  %v1067 = vmul.f32 %v987, 0.2
  %v1068 = vmul.f32 %v990, 0.2
  %v1069 = vmul.f32 %v992, 0.2
  %v1070 = vmul.f32 %v995, 0.2
  %v1071 = vmul.f32 %v997, 0.2
  %v1072 = vmul.f32 %v1000, 0.2
  %v1073 = vmul.f32 %v1002, 0.2
  %v1074 = vmul.f32 %v1005, 0.2
  %v1075 = vmul.f32 %v1007, 0.2
  %v1076 = vmul.f32 %v1010, 0.2
  %v1077 = vmul.f32 %v1012, 0.2
  %v1078 = vsel %vm1014, %v935, %v1046
  %v1079 = vsel %vm1015, %v937, %v1047
  %v1080 = vsel %vm1016, %v940, %v1048
  %v1081 = vsel %vm1017, %v942, %v1049
  %v1082 = vsel %vm1018, %v945, %v1050
  %v1083 = vsel %vm1019, %v947, %v1051
  %v1084 = vsel %vm1020, %v950, %v1052
  %v1085 = vsel %vm1021, %v952, %v1053
  %v1086 = vsel %vm1022, %v955, %v1054
  %v1087 = vsel %vm1023, %v957, %v1055
  %v1088 = vsel %vm1024, %v960, %v1056
  %v1089 = vsel %vm1025, %v962, %v1057
  %v1090 = vsel %vm1026, %v965, %v1058
  %v1091 = vsel %vm1027, %v967, %v1059
  %v1092 = vsel %vm1028, %v970, %v1060
  %v1093 = vsel %vm1029, %v972, %v1061
  %v1094 = vsel %vm1030, %v975, %v1062
  %v1095 = vsel %vm1031, %v977, %v1063
  %v1096 = vsel %vm1032, %v980, %v1064
  %v1097 = vsel %vm1033, %v982, %v1065
  %v1098 = vsel %vm1034, %v985, %v1066
  %v1099 = vsel %vm1035, %v987, %v1067
  %v1100 = vsel %vm1036, %v990, %v1068
  %v1101 = vsel %vm1037, %v992, %v1069
  %v1102 = vsel %vm1038, %v995, %v1070
  %v1103 = vsel %vm1039, %v997, %v1071
  %v1104 = vsel %vm1040, %v1000, %v1072
  %v1105 = vsel %vm1041, %v1002, %v1073
  %v1106 = vsel %vm1042, %v1005, %v1074
  %v1107 = vsel %vm1043, %v1007, %v1075
  %v1108 = vsel %vm1044, %v1010, %v1076
  %v1109 = vsel %vm1045, %v1012, %v1077
  %v1110 = vpack.c.bf16 %v1078, %v1078
  %v1111 = vpack.c.bf16 %v1079, %v1079
  %v1112 = vpack.c.bf16 %v1080, %v1080
  %v1113 = vpack.c.bf16 %v1081, %v1081
  %v1114 = vpack.c.bf16 %v1082, %v1082
  %v1115 = vpack.c.bf16 %v1083, %v1083
  %v1116 = vpack.c.bf16 %v1084, %v1084
  %v1117 = vpack.c.bf16 %v1085, %v1085
  %v1118 = vpack.c.bf16 %v1086, %v1086
  %v1119 = vpack.c.bf16 %v1087, %v1087
  %v1120 = vpack.c.bf16 %v1088, %v1088
  %v1121 = vpack.c.bf16 %v1089, %v1089
  %v1122 = vpack.c.bf16 %v1090, %v1090
  %v1123 = vpack.c.bf16 %v1091, %v1091
  %v1124 = vpack.c.bf16 %v1092, %v1092
  %v1125 = vpack.c.bf16 %v1093, %v1093
  %v1126 = vpack.c.bf16 %v1094, %v1094
  %v1127 = vpack.c.bf16 %v1095, %v1095
  %v1128 = vpack.c.bf16 %v1096, %v1096
  %v1129 = vpack.c.bf16 %v1097, %v1097
  %v1130 = vpack.c.bf16 %v1098, %v1098
  %v1131 = vpack.c.bf16 %v1099, %v1099
  %v1132 = vpack.c.bf16 %v1100, %v1100
  %v1133 = vpack.c.bf16 %v1101, %v1101
  %v1134 = vpack.c.bf16 %v1102, %v1102
  %v1135 = vpack.c.bf16 %v1103, %v1103
  %v1136 = vpack.c.bf16 %v1104, %v1104
  %v1137 = vpack.c.bf16 %v1105, %v1105
  %v1138 = vpack.c.bf16 %v1106, %v1106
  %v1139 = vpack.c.bf16 %v1107, %v1107
  %v1140 = vpack.c.bf16 %v1108, %v1108
  %v1141 = vpack.c.bf16 %v1109, %v1109
  %1142 = vst [vmem:[%s3] sm:$0xf] %v1110
  %1143 = vst [vmem:[%s3 + $0x4] sm:$0xf] %v1111
  %1144 = vst [vmem:[%s3 + $0x8] sm:$0xf] %v1112
  %1145 = vst [vmem:[%s3 + $0xc] sm:$0xf] %v1113
  %1146 = vst [vmem:[%s3 + $0x10] sm:$0xf] %v1114
  %1147 = vst [vmem:[%s3 + $0x14] sm:$0xf] %v1115
  %1148 = vst [vmem:[%s3 + $0x18] sm:$0xf] %v1116
  %1149 = vst [vmem:[%s3 + $0x1c] sm:$0xf] %v1117
  %1150 = vst [vmem:[%s3 + $0x20] sm:$0xf] %v1118
  %1151 = vst [vmem:[%s3 + $0x24] sm:$0xf] %v1119
  %1152 = vst [vmem:[%s3 + $0x28] sm:$0xf] %v1120
  %1153 = vst [vmem:[%s3 + $0x2c] sm:$0xf] %v1121
  %1154 = vst [vmem:[%s3 + $0x30] sm:$0xf] %v1122
  %1155 = vst [vmem:[%s3 + $0x34] sm:$0xf] %v1123
  %1156 = vst [vmem:[%s3 + $0x38] sm:$0xf] %v1124
  %1157 = vst [vmem:[%s3 + $0x3c] sm:$0xf] %v1125
  %1158 = vst [vmem:[%s3 + $0x40] sm:$0xf] %v1126
  %1159 = vst [vmem:[%s3 + $0x44] sm:$0xf] %v1127
  %1160 = vst [vmem:[%s3 + $0x48] sm:$0xf] %v1128
  %1161 = vst [vmem:[%s3 + $0x4c] sm:$0xf] %v1129
  %1162 = vst [vmem:[%s3 + $0x50] sm:$0xf] %v1130
  %1163 = vst [vmem:[%s3 + $0x54] sm:$0xf] %v1131
  %1164 = vst [vmem:[%s3 + $0x58] sm:$0xf] %v1132
  %1165 = vst [vmem:[%s3 + $0x5c] sm:$0xf] %v1133
  %1166 = vst [vmem:[%s3 + $0x60] sm:$0xf] %v1134
  %1167 = vst [vmem:[%s3 + $0x64] sm:$0xf] %v1135
  %1168 = vst [vmem:[%s3 + $0x68] sm:$0xf] %v1136
  %1169 = vst [vmem:[%s3 + $0x6c] sm:$0xf] %v1137
  %1170 = vst [vmem:[%s3 + $0x70] sm:$0xf] %v1138
  %1171 = vst [vmem:[%s3 + $0x74] sm:$0xf] %v1139
  %1172 = vst [vmem:[%s3 + $0x78] sm:$0xf] %v1140
  %1173 = vst [vmem:[%s3 + $0x7c] sm:$0xf] %v1141
  // Predicated region
  $region14: #{discriminator_forward.3} parent=0 // pred_check
    _
  $region15: #{discriminator_forward.3} parent=0 // pred_check_branch
    %1175 = sbr.rel (0) target = $region17
  $region16: #{discriminator_forward.3} parent=0 // pred_region
    _
  $region17: #{discriminator_forward.3} parent=0 // pred_fallthru
    _
  // Predicated region
  $region18: #{discriminator_forward.3} parent=0 // pred_check
    _
  $region19: #{discriminator_forward.3} parent=0 // pred_check_branch
    %1177 = sbr.rel (0) target = $region21
  $region20: #{discriminator_forward.3} parent=0 // pred_region
    _
  $region21: #{discriminator_forward.3} parent=0 // pred_fallthru
    _

// kernel: discriminator_forward.4
$region0: #{discriminator_forward.4}
  #allocation0 [shape = 'u32[]', space=smem, size = 0x4, offset = 0x4, fixed_abs, tag = 'smem constant byte address 0x4 - core index']
  #allocation1 [shape = 'u32[72,128]{1,0:T(1,128)}', space=vmem, size = 0x9000, scoped, tag = 'internal scratch']
  #allocation2 [shape = 'f32[256,32]{1,0:T(8,128)}', space=vmem, size = 0x20000, scoped, tag = 'scratch operand']
  %s0 = inlined_call_operand.vmem [shape: bf16[256,1024], index: 0, kind: input, shape index: {}]
  %s1 = inlined_call_operand.vmem [shape: bf16[1024,32], index: 1, kind: input, shape index: {}]
  %s2 = inlined_call_operand.vmem [shape: f32[1,32], index: 2, kind: input, shape index: {}]
  %s3 = inlined_call_operand.vmem [shape: f32[1,32], index: 3, kind: input, shape index: {}]
  %s4 = inlined_call_operand.vmem [shape: bf16[256,32], index: 4, kind: output, shape index: {}]
  %s5 = sld [smem:[#allocation0]]
  $region80: #{discriminator_forward.4} parent=0
    _
  %s7 = ssub.s32 1, %s5
  %s8 = scalar_select 0, %s7, %s5
  $region1: #{discriminator_forward.4} parent=0
    #allocation3 [shape = 'u8[524288]{0}', space=vmem, size = 0x80000, scoped, tag = 'input window, operand 0']
    loop: start=0, step=1, limit=4
    $region2: #{discriminator_forward.4} parent=1 // loop_pre_header
      _
    $region3: #{discriminator_forward.4} parent=1 // loop_header
      %s10 = sphi 0, %s14
      %p11 = scmp.ge.s32.totalorder %s10, 4
      %s20 = sphi 0, %s22
      %s23 = sphi 0, %s20
      %s24 = sphi 0, %s23
      %s40 = sphi 0, %s24
      %s46 = sphi 0, %s48
      %s49 = sphi 0, %s46
      %s50 = sphi 0, %s49
      %s66 = sphi 0, %s50
      %s70 = sphi 0, %s70
      %s72 = sphi 0, %s70
      %s73 = sphi 0, %s72
      %s87 = sphi 0, %s73
      %s91 = sphi 0, %s91
      %s93 = sphi 0, %s91
      %s94 = sphi 0, %s93
      %s108 = sphi 0, %s94
      %s112 = sphi 0, %s112
      %s114 = sphi 0, %s112
      %s115 = sphi 0, %s114
      %s129 = sphi 0, %s115
    $region4: #{discriminator_forward.4} parent=1 // loop_header_branch
      %13 = sbr.rel (%p11) target = $region8
    $region5: #{discriminator_forward.4} parent=1 // loop_body
      %s15 = ssub.s32 %s10, 1
      %s16 = ssub.s32 %s10, 2
      %s17 = sadd.s32 %s10, 1
      %s18 = ssub.s32 %s10, %s17
      %p19 = scmp.eq.s32.totalorder %s18, 0
      %s21 = sadd.s32 %s20, 1
      %s22 = scalar_select %p19, %s20, %s21
      %p25 = pneg %p19
      %p26 = scmp.eq.s32.totalorder %s10, 1
      %p27 = por %p25, %p26
      %p28 = scmp.ne.s32.totalorder %s20, %s23
      %p29 = scmp.eq.s32.totalorder %s10, 0
      %p30 = por %p28, %p29
      %p31 = scmp.ne.s32.totalorder %s20, %s23
      %p32 = scmp.eq.s32.totalorder %s15, 1
      %p33 = por %p31, %p32
      %p34 = scmp.ne.s32.totalorder %s23, %s24
      %p35 = scmp.eq.s32.totalorder %s15, 0
      %p36 = por %p34, %p35
      %p37 = scmp.ne.s32.totalorder %s23, %s24
      %p38 = scmp.eq.s32.totalorder %s16, 1
      %p39 = por %p37, %p38
      %p41 = scmp.ne.s32.totalorder %s24, %s40
      %p42 = scmp.eq.s32.totalorder %s16, 0
      %p43 = por %p41, %p42
      %s44 = ssub.s32 %s10, %s17
      %p45 = scmp.eq.s32.totalorder %s44, 0
      %s47 = sadd.s32 %s46, 1
      %s48 = scalar_select %p45, %s46, %s47
      %p51 = pneg %p45
      %p52 = scmp.eq.s32.totalorder %s10, 1
      %p53 = por %p51, %p52
      %p54 = scmp.ne.s32.totalorder %s46, %s49
      %p55 = scmp.eq.s32.totalorder %s10, 0
      %p56 = por %p54, %p55
      %p57 = scmp.ne.s32.totalorder %s46, %s49
      %p58 = scmp.eq.s32.totalorder %s15, 1
      %p59 = por %p57, %p58
      %p60 = scmp.ne.s32.totalorder %s49, %s50
      %p61 = scmp.eq.s32.totalorder %s15, 0
      %p62 = por %p60, %p61
      %p63 = scmp.ne.s32.totalorder %s49, %s50
      %p64 = scmp.eq.s32.totalorder %s16, 1
      %p65 = por %p63, %p64
      %p67 = scmp.ne.s32.totalorder %s50, %s66
      %p68 = scmp.eq.s32.totalorder %s16, 0
      %p69 = por %p67, %p68
      %s71 = sadd.s32 %s70, 1
      %p74 = scmp.eq.s32.totalorder %s10, 1
      %p75 = scmp.ne.s32.totalorder %s70, %s72
      %p76 = scmp.eq.s32.totalorder %s10, 0
      %p77 = por %p75, %p76
      %p78 = scmp.ne.s32.totalorder %s70, %s72
      %p79 = scmp.eq.s32.totalorder %s15, 1
      %p80 = por %p78, %p79
      %p81 = scmp.ne.s32.totalorder %s72, %s73
      %p82 = scmp.eq.s32.totalorder %s15, 0
      %p83 = por %p81, %p82
      %p84 = scmp.ne.s32.totalorder %s72, %s73
      %p85 = scmp.eq.s32.totalorder %s16, 1
      %p86 = por %p84, %p85
      %p88 = scmp.ne.s32.totalorder %s73, %s87
      %p89 = scmp.eq.s32.totalorder %s16, 0
      %p90 = por %p88, %p89
      %s92 = sadd.s32 %s91, 1
      %p95 = scmp.eq.s32.totalorder %s10, 1
      %p96 = scmp.ne.s32.totalorder %s91, %s93
      %p97 = scmp.eq.s32.totalorder %s10, 0
      %p98 = por %p96, %p97
      %p99 = scmp.ne.s32.totalorder %s91, %s93
      %p100 = scmp.eq.s32.totalorder %s15, 1
      %p101 = por %p99, %p100
      %p102 = scmp.ne.s32.totalorder %s93, %s94
      %p103 = scmp.eq.s32.totalorder %s15, 0
      %p104 = por %p102, %p103
      %p105 = scmp.ne.s32.totalorder %s93, %s94
      %p106 = scmp.eq.s32.totalorder %s16, 1
      %p107 = por %p105, %p106
      %p109 = scmp.ne.s32.totalorder %s94, %s108
      %p110 = scmp.eq.s32.totalorder %s16, 0
      %p111 = por %p109, %p110
      %s113 = sadd.s32 %s112, 1
      %p116 = scmp.eq.s32.totalorder %s10, 1
      %p117 = scmp.ne.s32.totalorder %s112, %s114
      %p118 = scmp.eq.s32.totalorder %s10, 0
      %p119 = por %p117, %p118
      %p120 = scmp.ne.s32.totalorder %s112, %s114
      %p121 = scmp.eq.s32.totalorder %s15, 1
      %p122 = por %p120, %p121
      %p123 = scmp.ne.s32.totalorder %s114, %s115
      %p124 = scmp.eq.s32.totalorder %s15, 0
      %p125 = por %p123, %p124
      %p126 = scmp.ne.s32.totalorder %s114, %s115
      %p127 = scmp.eq.s32.totalorder %s16, 1
      %p128 = por %p126, %p127
      %p130 = scmp.ne.s32.totalorder %s115, %s129
      %p131 = scmp.eq.s32.totalorder %s16, 0
      %p132 = por %p130, %p131
      %p133 = scmp.le.s32.totalorder 1, %s10
      %p134 = scmp.lt.s32.totalorder %s10, 3
      %p135 = pnand %p133, %p134
      %p136 = pneg %p135
      // Predicated region
      $region9: #{discriminator_forward.4} parent=5 // pred_check
        _
      $region10: #{discriminator_forward.4} parent=5 // pred_check_branch
        %138 = sbr.rel (%p135) target = $region12
      $region11: #{discriminator_forward.4} parent=5 // pred_region
        %s139 = ssub.s32 %s10, 1
        // Predicated region
        $region13: #{discriminator_forward.4} parent=11 // pred_check
          %p140 = pneg %p83
        $region14: #{discriminator_forward.4} parent=11 // pred_check_branch
          %142 = sbr.rel (%p140) target = $region16
        $region15: #{discriminator_forward.4} parent=11 // pred_region
          _
        $region16: #{discriminator_forward.4} parent=11 // pred_fallthru
          _
        // Predicated region
        $region17: #{discriminator_forward.4} parent=11 // pred_check
          %p143 = pneg %p104
        $region18: #{discriminator_forward.4} parent=11 // pred_check_branch
          %145 = sbr.rel (%p143) target = $region20
        $region19: #{discriminator_forward.4} parent=11 // pred_region
          _
        $region20: #{discriminator_forward.4} parent=11 // pred_fallthru
          _
      $region12: #{discriminator_forward.4} parent=5 // pred_fallthru
        _
      %p146 = scmp.lt.s32.totalorder %s10, 2
      // Predicated region
      $region21: #{discriminator_forward.4} parent=5 // pred_check
        %p147 = pneg %p146
      $region22: #{discriminator_forward.4} parent=5 // pred_check_branch
        %149 = sbr.rel (%p147) target = $region24
      $region23: #{discriminator_forward.4} parent=5 // pred_region
        // Predicated region
        $region25: #{discriminator_forward.4} parent=23 // pred_check
          %p150 = pneg %p30
        $region26: #{discriminator_forward.4} parent=23 // pred_check_branch
          %152 = sbr.rel (%p150) target = $region28
        $region27: #{discriminator_forward.4} parent=23 // pred_region
          %s153 = sand.u32 %s20, 1
          %s154 = sand.u32 %s20, 1
          %s155 = smul.addr %s154, 512
          %s156 = scalar_lea.vmem [#allocation3], %s155
          %s157 = smul.u32 4, %s10
          %s158 = smul.addr %s157, 4
          %s159 = scalar_lea.vmem %s0, %s158
          // Predicated region
          $region29: #{discriminator_forward.4} parent=27 // pred_check
            _
          $region30: #{discriminator_forward.4} parent=27 // pred_check_branch
            %161 = sbr.rel (0) target = $region32
          $region31: #{discriminator_forward.4} parent=27 // pred_region
            // Predicated region
            $region33: #{discriminator_forward.4} parent=31 // pred_check
              _
            $region34: #{discriminator_forward.4} parent=31 // pred_check_branch
              %163 = sbr.rel (0) target = $region36
            $region35: #{discriminator_forward.4} parent=31 // pred_region
              loop: start=0, step=1, limit=1
              $region37: #{discriminator_forward.4} parent=35 // loop_pre_header
                _
              $region38: #{discriminator_forward.4} parent=35 // loop_header
                %s165 = sphi 0, %s169
                %p166 = scmp.ge.s32.totalorder %s165, 1
                %s170 = sphi %s159, %s159
                %s171 = sphi %s156, %s156
              $region39: #{discriminator_forward.4} parent=35 // loop_header_branch
                %168 = sbr.rel (%p166) target = $region43
              $region40: #{discriminator_forward.4} parent=35 // loop_body
                %v172 = vld [vmem:[%s170] sm:$0xff]
                %173 = vst [vmem:[%s171] sm:$0xff] %v172
                %v174 = vld [vmem:[%s170 + $0x8] sm:$0xff]
                %175 = vst [vmem:[%s171 + $0x8] sm:$0xff] %v174
                %v176 = vld [vmem:[%s170 + $0x20] sm:$0xff]
                %177 = vst [vmem:[%s171 + $0x10] sm:$0xff] %v176
                %v178 = vld [vmem:[%s170 + $0x28] sm:$0xff]
                %179 = vst [vmem:[%s171 + $0x18] sm:$0xff] %v178
                %v180 = vld [vmem:[%s170 + $0x40] sm:$0xff]
                %181 = vst [vmem:[%s171 + $0x20] sm:$0xff] %v180
                %v182 = vld [vmem:[%s170 + $0x48] sm:$0xff]
                %183 = vst [vmem:[%s171 + $0x28] sm:$0xff] %v182
                %v184 = vld [vmem:[%s170 + $0x60] sm:$0xff]
                %185 = vst [vmem:[%s171 + $0x30] sm:$0xff] %v184
                %v186 = vld [vmem:[%s170 + $0x68] sm:$0xff]
                %187 = vst [vmem:[%s171 + $0x38] sm:$0xff] %v186
                %v188 = vld [vmem:[%s170 + $0x80] sm:$0xff]
                %189 = vst [vmem:[%s171 + $0x40] sm:$0xff] %v188
                %v190 = vld [vmem:[%s170 + $0x88] sm:$0xff]
                %191 = vst [vmem:[%s171 + $0x48] sm:$0xff] %v190
                %v192 = vld [vmem:[%s170 + $0xa0] sm:$0xff]
                %193 = vst [vmem:[%s171 + $0x50] sm:$0xff] %v192
                %v194 = vld [vmem:[%s170 + $0xa8] sm:$0xff]
                %195 = vst [vmem:[%s171 + $0x58] sm:$0xff] %v194
                %v196 = vld [vmem:[%s170 + $0xc0] sm:$0xff]
                %197 = vst [vmem:[%s171 + $0x60] sm:$0xff] %v196
                %v198 = vld [vmem:[%s170 + $0xc8] sm:$0xff]
                %199 = vst [vmem:[%s171 + $0x68] sm:$0xff] %v198
                %v200 = vld [vmem:[%s170 + $0xe0] sm:$0xff]
                %201 = vst [vmem:[%s171 + $0x70] sm:$0xff] %v200
                %v202 = vld [vmem:[%s170 + $0xe8] sm:$0xff]
                %203 = vst [vmem:[%s171 + $0x78] sm:$0xff] %v202
                %v204 = vld [vmem:[%s170 + $0x100] sm:$0xff]
                %205 = vst [vmem:[%s171 + $0x80] sm:$0xff] %v204
                %v206 = vld [vmem:[%s170 + $0x108] sm:$0xff]
                %207 = vst [vmem:[%s171 + $0x88] sm:$0xff] %v206
                %v208 = vld [vmem:[%s170 + $0x120] sm:$0xff]
                %209 = vst [vmem:[%s171 + $0x90] sm:$0xff] %v208
                %v210 = vld [vmem:[%s170 + $0x128] sm:$0xff]
                %211 = vst [vmem:[%s171 + $0x98] sm:$0xff] %v210
                %v212 = vld [vmem:[%s170 + $0x140] sm:$0xff]
                %213 = vst [vmem:[%s171 + $0xa0] sm:$0xff] %v212
                %v214 = vld [vmem:[%s170 + $0x148] sm:$0xff]
                %215 = vst [vmem:[%s171 + $0xa8] sm:$0xff] %v214
                %v216 = vld [vmem:[%s170 + $0x160] sm:$0xff]
                %217 = vst [vmem:[%s171 + $0xb0] sm:$0xff] %v216
                %v218 = vld [vmem:[%s170 + $0x168] sm:$0xff]
                %219 = vst [vmem:[%s171 + $0xb8] sm:$0xff] %v218
                %v220 = vld [vmem:[%s170 + $0x180] sm:$0xff]
                %221 = vst [vmem:[%s171 + $0xc0] sm:$0xff] %v220
                %v222 = vld [vmem:[%s170 + $0x188] sm:$0xff]
                %223 = vst [vmem:[%s171 + $0xc8] sm:$0xff] %v222
                %v224 = vld [vmem:[%s170 + $0x1a0] sm:$0xff]
                %225 = vst [vmem:[%s171 + $0xd0] sm:$0xff] %v224
                %v226 = vld [vmem:[%s170 + $0x1a8] sm:$0xff]
                %227 = vst [vmem:[%s171 + $0xd8] sm:$0xff] %v226
                %v228 = vld [vmem:[%s170 + $0x1c0] sm:$0xff]
                %229 = vst [vmem:[%s171 + $0xe0] sm:$0xff] %v228
                %v230 = vld [vmem:[%s170 + $0x1c8] sm:$0xff]
                %231 = vst [vmem:[%s171 + $0xe8] sm:$0xff] %v230
                %v232 = vld [vmem:[%s170 + $0x1e0] sm:$0xff]
                %233 = vst [vmem:[%s171 + $0xf0] sm:$0xff] %v232
                %v234 = vld [vmem:[%s170 + $0x1e8] sm:$0xff]
                %235 = vst [vmem:[%s171 + $0xf8] sm:$0xff] %v234
                %v236 = vld [vmem:[%s170 + $0x200] sm:$0xff]
                %237 = vst [vmem:[%s171 + $0x100] sm:$0xff] %v236
                %v238 = vld [vmem:[%s170 + $0x208] sm:$0xff]
                %239 = vst [vmem:[%s171 + $0x108] sm:$0xff] %v238
                %v240 = vld [vmem:[%s170 + $0x220] sm:$0xff]
                %241 = vst [vmem:[%s171 + $0x110] sm:$0xff] %v240
                %v242 = vld [vmem:[%s170 + $0x228] sm:$0xff]
                %243 = vst [vmem:[%s171 + $0x118] sm:$0xff] %v242
                %v244 = vld [vmem:[%s170 + $0x240] sm:$0xff]
                %245 = vst [vmem:[%s171 + $0x120] sm:$0xff] %v244
                %v246 = vld [vmem:[%s170 + $0x248] sm:$0xff]
                %247 = vst [vmem:[%s171 + $0x128] sm:$0xff] %v246
                %v248 = vld [vmem:[%s170 + $0x260] sm:$0xff]
                %249 = vst [vmem:[%s171 + $0x130] sm:$0xff] %v248
                %v250 = vld [vmem:[%s170 + $0x268] sm:$0xff]
                %251 = vst [vmem:[%s171 + $0x138] sm:$0xff] %v250
                %v252 = vld [vmem:[%s170 + $0x280] sm:$0xff]
                %253 = vst [vmem:[%s171 + $0x140] sm:$0xff] %v252
                %v254 = vld [vmem:[%s170 + $0x288] sm:$0xff]
                %255 = vst [vmem:[%s171 + $0x148] sm:$0xff] %v254
                %v256 = vld [vmem:[%s170 + $0x2a0] sm:$0xff]
                %257 = vst [vmem:[%s171 + $0x150] sm:$0xff] %v256
                %v258 = vld [vmem:[%s170 + $0x2a8] sm:$0xff]
                %259 = vst [vmem:[%s171 + $0x158] sm:$0xff] %v258
                %v260 = vld [vmem:[%s170 + $0x2c0] sm:$0xff]
                %261 = vst [vmem:[%s171 + $0x160] sm:$0xff] %v260
                %v262 = vld [vmem:[%s170 + $0x2c8] sm:$0xff]
                %263 = vst [vmem:[%s171 + $0x168] sm:$0xff] %v262
                %v264 = vld [vmem:[%s170 + $0x2e0] sm:$0xff]
                %265 = vst [vmem:[%s171 + $0x170] sm:$0xff] %v264
                %v266 = vld [vmem:[%s170 + $0x2e8] sm:$0xff]
                %267 = vst [vmem:[%s171 + $0x178] sm:$0xff] %v266
                %v268 = vld [vmem:[%s170 + $0x300] sm:$0xff]
                %269 = vst [vmem:[%s171 + $0x180] sm:$0xff] %v268
                %v270 = vld [vmem:[%s170 + $0x308] sm:$0xff]
                %271 = vst [vmem:[%s171 + $0x188] sm:$0xff] %v270
                %v272 = vld [vmem:[%s170 + $0x320] sm:$0xff]
                %273 = vst [vmem:[%s171 + $0x190] sm:$0xff] %v272
                %v274 = vld [vmem:[%s170 + $0x328] sm:$0xff]
                %275 = vst [vmem:[%s171 + $0x198] sm:$0xff] %v274
                %v276 = vld [vmem:[%s170 + $0x340] sm:$0xff]
                %277 = vst [vmem:[%s171 + $0x1a0] sm:$0xff] %v276
                %v278 = vld [vmem:[%s170 + $0x348] sm:$0xff]
                %279 = vst [vmem:[%s171 + $0x1a8] sm:$0xff] %v278
                %v280 = vld [vmem:[%s170 + $0x360] sm:$0xff]
                %281 = vst [vmem:[%s171 + $0x1b0] sm:$0xff] %v280
                %v282 = vld [vmem:[%s170 + $0x368] sm:$0xff]
                %283 = vst [vmem:[%s171 + $0x1b8] sm:$0xff] %v282
                %v284 = vld [vmem:[%s170 + $0x380] sm:$0xff]
                %285 = vst [vmem:[%s171 + $0x1c0] sm:$0xff] %v284
                %v286 = vld [vmem:[%s170 + $0x388] sm:$0xff]
                %287 = vst [vmem:[%s171 + $0x1c8] sm:$0xff] %v286
                %v288 = vld [vmem:[%s170 + $0x3a0] sm:$0xff]
                %289 = vst [vmem:[%s171 + $0x1d0] sm:$0xff] %v288
                %v290 = vld [vmem:[%s170 + $0x3a8] sm:$0xff]
                %291 = vst [vmem:[%s171 + $0x1d8] sm:$0xff] %v290
                %v292 = vld [vmem:[%s170 + $0x3c0] sm:$0xff]
                %293 = vst [vmem:[%s171 + $0x1e0] sm:$0xff] %v292
                %v294 = vld [vmem:[%s170 + $0x3c8] sm:$0xff]
                %295 = vst [vmem:[%s171 + $0x1e8] sm:$0xff] %v294
                %v296 = vld [vmem:[%s170 + $0x3e0] sm:$0xff]
                %297 = vst [vmem:[%s171 + $0x1f0] sm:$0xff] %v296
                %v298 = vld [vmem:[%s170 + $0x3e8] sm:$0xff]
                %299 = vst [vmem:[%s171 + $0x1f8] sm:$0xff] %v298
              $region41: #{discriminator_forward.4} parent=35 // loop_footer
                %s169 = sadd.s32 1, %s165
              $region42: #{discriminator_forward.4} parent=35 // loop_footer_branch
                %164 = sbr.rel target = $region38
              $region43: #{discriminator_forward.4} parent=35 // loop_exit
                _
            $region36: #{discriminator_forward.4} parent=31 // pred_fallthru
              _
            // Predicated region
            $region44: #{discriminator_forward.4} parent=31 // pred_check
              _
            $region45: #{discriminator_forward.4} parent=31 // pred_check_branch
              %301 = sbr.rel target = $region47
            $region46: #{discriminator_forward.4} parent=31 // pred_region
              _
            $region47: #{discriminator_forward.4} parent=31 // pred_fallthru
              _
          $region32: #{discriminator_forward.4} parent=27 // pred_fallthru
            _
          %302 = vnop
        $region28: #{discriminator_forward.4} parent=23 // pred_fallthru
          _
        // Predicated region
        $region48: #{discriminator_forward.4} parent=23 // pred_check
          %p303 = pneg %p56
        $region49: #{discriminator_forward.4} parent=23 // pred_check_branch
          %305 = sbr.rel (%p303) target = $region51
        $region50: #{discriminator_forward.4} parent=23 // pred_region
          %s306 = smul.u32 64, %s10
          %p307 = scmp.lt.s32.totalorder %s306, 127
          %s308 = scalar_select %p307, %s306, 127
          %s309 = smul.addr %s308, 4
          %s310 = scalar_lea.vmem %s1, %s309
          %s311 = smul.u32 64, %s10
        $region51: #{discriminator_forward.4} parent=23 // pred_fallthru
          _
      $region24: #{discriminator_forward.4} parent=5 // pred_fallthru
        _
      %p312 = scmp.le.s32.totalorder 1, %s10
      %p313 = scmp.lt.s32.totalorder %s10, 3
      %p314 = pnand %p312, %p313
      %p315 = pneg %p314
      // Predicated region
      $region52: #{discriminator_forward.4} parent=5 // pred_check
        _
      $region53: #{discriminator_forward.4} parent=5 // pred_check_branch
        %317 = sbr.rel (%p314) target = $region55
      $region54: #{discriminator_forward.4} parent=5 // pred_region
        %s318 = ssub.s32 %s10, 1
        %s319 = sand.u32 %s23, 1
        %s320 = sand.u32 %s23, 1
        %s321 = smul.addr %s320, 512
        %s322 = scalar_lea.vmem [#allocation3], %s321
        // Predicated region
        $region56: #{discriminator_forward.4} parent=54 // pred_check
          %p323 = pneg %p36
        $region57: #{discriminator_forward.4} parent=54 // pred_check_branch
          %325 = sbr.rel (%p323) target = $region59
        $region58: #{discriminator_forward.4} parent=54 // pred_region
          _
        $region59: #{discriminator_forward.4} parent=54 // pred_fallthru
          _
        %s326 = sand.u32 %s23, 1
        %s327 = sand.u32 %s23, 1
        %s328 = smul.addr %s327, 512
        %s329 = scalar_lea.vmem [#allocation3], %s328
        %p330 = pneg %p36
        %p331 = pneg %p33
        %s332 = smul.u32 64, %s15
        %p333 = scmp.lt.s32.totalorder %s332, 127
        %s334 = scalar_select %p333, %s332, 127
        %s335 = smul.addr %s334, 4
        %s336 = scalar_lea.vmem %s1, %s335
        %p337 = pneg %p62
        %p338 = pneg %p59
        %p339 = pneg %p83
        %p340 = pneg %p80
        %p341 = pneg %p104
        %p342 = pneg %p101
        %p343 = pneg %p125
        %p344 = pneg %p122
        %s345 = smul.u32 4, %s15
        %s346 = smul.u32 64, %s15
        %p347 = scmp.lt.s32.totalorder %s346, 127
        %s348 = scalar_select %p347, %s346, 127
        %s349 = smul.addr %s348, 4
        %s350 = scalar_lea.vmem %s1, %s349
        %s351 = smul.u32 64, %s15
        %p352 = scmp.eq.s32.totalorder %s15, 0
        // Predicated region
        $region60: #{discriminator_forward.4} parent=54 // pred_check
          %p353 = pneg %p352
        $region61: #{discriminator_forward.4} parent=54 // pred_check_branch
          %355 = sbr.rel (%p353) target = $region63
        $region62: #{discriminator_forward.4} parent=54 // pred_region
          %vm356 = vcmask 261120
          %357 = vst.msk [vmem:[#allocation2] sm:$0xff] %vm356, 0.0
          %358 = vst.msk [vmem:[#allocation2 + $0x8] sm:$0xff] %vm356, 0.0
          %359 = vst.msk [vmem:[#allocation2 + $0x10] sm:$0xff] %vm356, 0.0
          %360 = vst.msk [vmem:[#allocation2 + $0x18] sm:$0xff] %vm356, 0.0
          %361 = vst.msk [vmem:[#allocation2 + $0x20] sm:$0xff] %vm356, 0.0
          %362 = vst.msk [vmem:[#allocation2 + $0x28] sm:$0xff] %vm356, 0.0
          %363 = vst.msk [vmem:[#allocation2 + $0x30] sm:$0xff] %vm356, 0.0
          %364 = vst.msk [vmem:[#allocation2 + $0x38] sm:$0xff] %vm356, 0.0
          %365 = vst.msk [vmem:[#allocation2 + $0x40] sm:$0xff] %vm356, 0.0
          %366 = vst.msk [vmem:[#allocation2 + $0x48] sm:$0xff] %vm356, 0.0
          %367 = vst.msk [vmem:[#allocation2 + $0x50] sm:$0xff] %vm356, 0.0
          %368 = vst.msk [vmem:[#allocation2 + $0x58] sm:$0xff] %vm356, 0.0
          %369 = vst.msk [vmem:[#allocation2 + $0x60] sm:$0xff] %vm356, 0.0
          %370 = vst.msk [vmem:[#allocation2 + $0x68] sm:$0xff] %vm356, 0.0
          %371 = vst.msk [vmem:[#allocation2 + $0x70] sm:$0xff] %vm356, 0.0
          %372 = vst.msk [vmem:[#allocation2 + $0x78] sm:$0xff] %vm356, 0.0
          %373 = vst.msk [vmem:[#allocation2 + $0x80] sm:$0xff] %vm356, 0.0
          %374 = vst.msk [vmem:[#allocation2 + $0x88] sm:$0xff] %vm356, 0.0
          %375 = vst.msk [vmem:[#allocation2 + $0x90] sm:$0xff] %vm356, 0.0
          %376 = vst.msk [vmem:[#allocation2 + $0x98] sm:$0xff] %vm356, 0.0
          %377 = vst.msk [vmem:[#allocation2 + $0xa0] sm:$0xff] %vm356, 0.0
          %378 = vst.msk [vmem:[#allocation2 + $0xa8] sm:$0xff] %vm356, 0.0
          %379 = vst.msk [vmem:[#allocation2 + $0xb0] sm:$0xff] %vm356, 0.0
          %380 = vst.msk [vmem:[#allocation2 + $0xb8] sm:$0xff] %vm356, 0.0
          %381 = vst.msk [vmem:[#allocation2 + $0xc0] sm:$0xff] %vm356, 0.0
          %382 = vst.msk [vmem:[#allocation2 + $0xc8] sm:$0xff] %vm356, 0.0
          %383 = vst.msk [vmem:[#allocation2 + $0xd0] sm:$0xff] %vm356, 0.0
          %384 = vst.msk [vmem:[#allocation2 + $0xd8] sm:$0xff] %vm356, 0.0
          %385 = vst.msk [vmem:[#allocation2 + $0xe0] sm:$0xff] %vm356, 0.0
          %386 = vst.msk [vmem:[#allocation2 + $0xe8] sm:$0xff] %vm356, 0.0
          %387 = vst.msk [vmem:[#allocation2 + $0xf0] sm:$0xff] %vm356, 0.0
          %388 = vst.msk [vmem:[#allocation2 + $0xf8] sm:$0xff] %vm356, 0.0
        $region63: #{discriminator_forward.4} parent=54 // pred_fallthru
          _
        %v389 = vld [vmem:[#allocation2] sm:$0xff]
        %v390 = vld [vmem:[#allocation2 + $0x8] sm:$0xff]
        %v391 = vld [vmem:[#allocation2 + $0x10] sm:$0xff]
        %v392 = vld [vmem:[#allocation2 + $0x18] sm:$0xff]
        %v393 = vld [vmem:[#allocation2 + $0x20] sm:$0xff]
        %v394 = vld [vmem:[#allocation2 + $0x28] sm:$0xff]
        %v395 = vld [vmem:[#allocation2 + $0x30] sm:$0xff]
        %v396 = vld [vmem:[#allocation2 + $0x38] sm:$0xff]
        %v397 = vld [vmem:[#allocation2 + $0x40] sm:$0xff]
        %v398 = vld [vmem:[#allocation2 + $0x48] sm:$0xff]
        %v399 = vld [vmem:[#allocation2 + $0x50] sm:$0xff]
        %v400 = vld [vmem:[#allocation2 + $0x58] sm:$0xff]
        %v401 = vld [vmem:[#allocation2 + $0x60] sm:$0xff]
        %v402 = vld [vmem:[#allocation2 + $0x68] sm:$0xff]
        %v403 = vld [vmem:[#allocation2 + $0x70] sm:$0xff]
        %v404 = vld [vmem:[#allocation2 + $0x78] sm:$0xff]
        %v405 = vld [vmem:[#allocation2 + $0x80] sm:$0xff]
        %v406 = vld [vmem:[#allocation2 + $0x88] sm:$0xff]
        %v407 = vld [vmem:[#allocation2 + $0x90] sm:$0xff]
        %v408 = vld [vmem:[#allocation2 + $0x98] sm:$0xff]
        %v409 = vld [vmem:[#allocation2 + $0xa0] sm:$0xff]
        %v410 = vld [vmem:[#allocation2 + $0xa8] sm:$0xff]
        %v411 = vld [vmem:[#allocation2 + $0xb0] sm:$0xff]
        %v412 = vld [vmem:[#allocation2 + $0xb8] sm:$0xff]
        %v413 = vld [vmem:[#allocation2 + $0xc0] sm:$0xff]
        %v414 = vld [vmem:[#allocation2 + $0xc8] sm:$0xff]
        %v415 = vld [vmem:[#allocation2 + $0xd0] sm:$0xff]
        %v416 = vld [vmem:[#allocation2 + $0xd8] sm:$0xff]
        %v417 = vld [vmem:[#allocation2 + $0xe0] sm:$0xff]
        %v418 = vld [vmem:[#allocation2 + $0xe8] sm:$0xff]
        %v419 = vld [vmem:[#allocation2 + $0xf0] sm:$0xff]
        %v420 = vld [vmem:[#allocation2 + $0xf8] sm:$0xff]
        %v421 = vld [vmem:[%s322] sm:$0xff]
        %v422 = vld [vmem:[%s322 + $0x8] sm:$0xff]
        %v423 = vld [vmem:[%s322 + $0x10] sm:$0xff]
        %v424 = vld [vmem:[%s322 + $0x18] sm:$0xff]
        %v425 = vld [vmem:[%s322 + $0x20] sm:$0xff]
        %v426 = vld [vmem:[%s322 + $0x28] sm:$0xff]
        %v427 = vld [vmem:[%s322 + $0x30] sm:$0xff]
        %v428 = vld [vmem:[%s322 + $0x38] sm:$0xff]
        %v429 = vld [vmem:[%s322 + $0x40] sm:$0xff]
        %v430 = vld [vmem:[%s322 + $0x48] sm:$0xff]
        %v431 = vld [vmem:[%s322 + $0x50] sm:$0xff]
        %v432 = vld [vmem:[%s322 + $0x58] sm:$0xff]
        %v433 = vld [vmem:[%s322 + $0x60] sm:$0xff]
        %v434 = vld [vmem:[%s322 + $0x68] sm:$0xff]
        %v435 = vld [vmem:[%s322 + $0x70] sm:$0xff]
        %v436 = vld [vmem:[%s322 + $0x78] sm:$0xff]
        %v437 = vld [vmem:[%s322 + $0x80] sm:$0xff]
        %v438 = vld [vmem:[%s322 + $0x88] sm:$0xff]
        %v439 = vld [vmem:[%s322 + $0x90] sm:$0xff]
        %v440 = vld [vmem:[%s322 + $0x98] sm:$0xff]
        %v441 = vld [vmem:[%s322 + $0xa0] sm:$0xff]
        %v442 = vld [vmem:[%s322 + $0xa8] sm:$0xff]
        %v443 = vld [vmem:[%s322 + $0xb0] sm:$0xff]
        %v444 = vld [vmem:[%s322 + $0xb8] sm:$0xff]
        %v445 = vld [vmem:[%s322 + $0xc0] sm:$0xff]
        %v446 = vld [vmem:[%s322 + $0xc8] sm:$0xff]
        %v447 = vld [vmem:[%s322 + $0xd0] sm:$0xff]
        %v448 = vld [vmem:[%s322 + $0xd8] sm:$0xff]
        %v449 = vld [vmem:[%s322 + $0xe0] sm:$0xff]
        %v450 = vld [vmem:[%s322 + $0xe8] sm:$0xff]
        %v451 = vld [vmem:[%s322 + $0xf0] sm:$0xff]
        %v452 = vld [vmem:[%s322 + $0xf8] sm:$0xff]
        %v453 = vld [vmem:[%s322 + $0x100] sm:$0xff]
        %v454 = vld [vmem:[%s322 + $0x108] sm:$0xff]
        %v455 = vld [vmem:[%s322 + $0x110] sm:$0xff]
        %v456 = vld [vmem:[%s322 + $0x118] sm:$0xff]
        %v457 = vld [vmem:[%s322 + $0x120] sm:$0xff]
        %v458 = vld [vmem:[%s322 + $0x128] sm:$0xff]
        %v459 = vld [vmem:[%s322 + $0x130] sm:$0xff]
        %v460 = vld [vmem:[%s322 + $0x138] sm:$0xff]
        %v461 = vld [vmem:[%s322 + $0x140] sm:$0xff]
        %v462 = vld [vmem:[%s322 + $0x148] sm:$0xff]
        %v463 = vld [vmem:[%s322 + $0x150] sm:$0xff]
        %v464 = vld [vmem:[%s322 + $0x158] sm:$0xff]
        %v465 = vld [vmem:[%s322 + $0x160] sm:$0xff]
        %v466 = vld [vmem:[%s322 + $0x168] sm:$0xff]
        %v467 = vld [vmem:[%s322 + $0x170] sm:$0xff]
        %v468 = vld [vmem:[%s322 + $0x178] sm:$0xff]
        %v469 = vld [vmem:[%s322 + $0x180] sm:$0xff]
        %v470 = vld [vmem:[%s322 + $0x188] sm:$0xff]
        %v471 = vld [vmem:[%s322 + $0x190] sm:$0xff]
        %v472 = vld [vmem:[%s322 + $0x198] sm:$0xff]
        %v473 = vld [vmem:[%s322 + $0x1a0] sm:$0xff]
        %v474 = vld [vmem:[%s322 + $0x1a8] sm:$0xff]
        %v475 = vld [vmem:[%s322 + $0x1b0] sm:$0xff]
        %v476 = vld [vmem:[%s322 + $0x1b8] sm:$0xff]
        %v477 = vld [vmem:[%s322 + $0x1c0] sm:$0xff]
        %v478 = vld [vmem:[%s322 + $0x1c8] sm:$0xff]
        %v479 = vld [vmem:[%s322 + $0x1d0] sm:$0xff]
        %v480 = vld [vmem:[%s322 + $0x1d8] sm:$0xff]
        %v481 = vld [vmem:[%s322 + $0x1e0] sm:$0xff]
        %v482 = vld [vmem:[%s322 + $0x1e8] sm:$0xff]
        %v483 = vld [vmem:[%s322 + $0x1f0] sm:$0xff]
        %v484 = vld [vmem:[%s322 + $0x1f8] sm:$0xff]
        %v485 = vld [vmem:[%s350] sm:$0xf]
        %v486 = vld [vmem:[%s350 + $0x4] sm:$0xf]
        %v487 = vld [vmem:[%s350 + $0x8] sm:$0xf]
        %v488 = vld [vmem:[%s350 + $0xc] sm:$0xf]
        %v489 = vld [vmem:[%s350 + $0x10] sm:$0xf]
        %v490 = vld [vmem:[%s350 + $0x14] sm:$0xf]
        %v491 = vld [vmem:[%s350 + $0x18] sm:$0xf]
        %v492 = vld [vmem:[%s350 + $0x1c] sm:$0xf]
        %v493 = vld [vmem:[%s350 + $0x20] sm:$0xf]
        %v494 = vld [vmem:[%s350 + $0x24] sm:$0xf]
        %v495 = vld [vmem:[%s350 + $0x28] sm:$0xf]
        %v496 = vld [vmem:[%s350 + $0x2c] sm:$0xf]
        %v497 = vld [vmem:[%s350 + $0x30] sm:$0xf]
        %v498 = vld [vmem:[%s350 + $0x34] sm:$0xf]
        %v499 = vld [vmem:[%s350 + $0x38] sm:$0xf]
        %v500 = vld [vmem:[%s350 + $0x3c] sm:$0xf]
        %v501 = vld [vmem:[%s350 + $0x40] sm:$0xf]
        %v502 = vld [vmem:[%s350 + $0x44] sm:$0xf]
        %v503 = vld [vmem:[%s350 + $0x48] sm:$0xf]
        %v504 = vld [vmem:[%s350 + $0x4c] sm:$0xf]
        %v505 = vld [vmem:[%s350 + $0x50] sm:$0xf]
        %v506 = vld [vmem:[%s350 + $0x54] sm:$0xf]
        %v507 = vld [vmem:[%s350 + $0x58] sm:$0xf]
        %v508 = vld [vmem:[%s350 + $0x5c] sm:$0xf]
        %v509 = vld [vmem:[%s350 + $0x60] sm:$0xf]
        %v510 = vld [vmem:[%s350 + $0x64] sm:$0xf]
        %v511 = vld [vmem:[%s350 + $0x68] sm:$0xf]
        %v512 = vld [vmem:[%s350 + $0x6c] sm:$0xf]
        %v513 = vld [vmem:[%s350 + $0x70] sm:$0xf]
        %v514 = vld [vmem:[%s350 + $0x74] sm:$0xf]
        %v515 = vld [vmem:[%s350 + $0x78] sm:$0xf]
        %v516 = vld [vmem:[%s350 + $0x7c] sm:$0xf]
        %v517 = vld [vmem:[%s350 + $0x80] sm:$0xf]
        %v518 = vld [vmem:[%s350 + $0x84] sm:$0xf]
        %v519 = vld [vmem:[%s350 + $0x88] sm:$0xf]
        %v520 = vld [vmem:[%s350 + $0x8c] sm:$0xf]
        %v521 = vld [vmem:[%s350 + $0x90] sm:$0xf]
        %v522 = vld [vmem:[%s350 + $0x94] sm:$0xf]
        %v523 = vld [vmem:[%s350 + $0x98] sm:$0xf]
        %v524 = vld [vmem:[%s350 + $0x9c] sm:$0xf]
        %v525 = vld [vmem:[%s350 + $0xa0] sm:$0xf]
        %v526 = vld [vmem:[%s350 + $0xa4] sm:$0xf]
        %v527 = vld [vmem:[%s350 + $0xa8] sm:$0xf]
        %v528 = vld [vmem:[%s350 + $0xac] sm:$0xf]
        %v529 = vld [vmem:[%s350 + $0xb0] sm:$0xf]
        %v530 = vld [vmem:[%s350 + $0xb4] sm:$0xf]
        %v531 = vld [vmem:[%s350 + $0xb8] sm:$0xf]
        %v532 = vld [vmem:[%s350 + $0xbc] sm:$0xf]
        %v533 = vld [vmem:[%s350 + $0xc0] sm:$0xf]
        %v534 = vld [vmem:[%s350 + $0xc4] sm:$0xf]
        %v535 = vld [vmem:[%s350 + $0xc8] sm:$0xf]
        %v536 = vld [vmem:[%s350 + $0xcc] sm:$0xf]
        %v537 = vld [vmem:[%s350 + $0xd0] sm:$0xf]
        %v538 = vld [vmem:[%s350 + $0xd4] sm:$0xf]
        %v539 = vld [vmem:[%s350 + $0xd8] sm:$0xf]
        %v540 = vld [vmem:[%s350 + $0xdc] sm:$0xf]
        %v541 = vld [vmem:[%s350 + $0xe0] sm:$0xf]
        %v542 = vld [vmem:[%s350 + $0xe4] sm:$0xf]
        %v543 = vld [vmem:[%s350 + $0xe8] sm:$0xf]
        %v544 = vld [vmem:[%s350 + $0xec] sm:$0xf]
        %v545 = vld [vmem:[%s350 + $0xf0] sm:$0xf]
        %v546 = vld [vmem:[%s350 + $0xf4] sm:$0xf]
        %v547 = vld [vmem:[%s350 + $0xf8] sm:$0xf]
        %v548 = vld [vmem:[%s350 + $0xfc] sm:$0xf]
        %v613 = vunpack.c.l.b16 %v421
        %v614 = vunpack.c.h.b16 %v421
        %v615 = vunpack.c.l.b16 %v422
        %v616 = vunpack.c.h.b16 %v422
        %v617 = vunpack.c.l.b16 %v423
        %v618 = vunpack.c.h.b16 %v423
        %v619 = vunpack.c.l.b16 %v424
        %v620 = vunpack.c.h.b16 %v424
        %v621 = vunpack.c.l.b16 %v425
        %v622 = vunpack.c.h.b16 %v425
        %v623 = vunpack.c.l.b16 %v426
        %v624 = vunpack.c.h.b16 %v426
        %v625 = vunpack.c.l.b16 %v427
        %v626 = vunpack.c.h.b16 %v427
        %v627 = vunpack.c.l.b16 %v428
        %v628 = vunpack.c.h.b16 %v428
        %v629 = vunpack.c.l.b16 %v429
        %v630 = vunpack.c.h.b16 %v429
        %v631 = vunpack.c.l.b16 %v430
        %v632 = vunpack.c.h.b16 %v430
        %v633 = vunpack.c.l.b16 %v431
        %v634 = vunpack.c.h.b16 %v431
        %v635 = vunpack.c.l.b16 %v432
        %v636 = vunpack.c.h.b16 %v432
        %v637 = vunpack.c.l.b16 %v433
        %v638 = vunpack.c.h.b16 %v433
        %v639 = vunpack.c.l.b16 %v434
        %v640 = vunpack.c.h.b16 %v434
        %v641 = vunpack.c.l.b16 %v435
        %v642 = vunpack.c.h.b16 %v435
        %v643 = vunpack.c.l.b16 %v436
        %v644 = vunpack.c.h.b16 %v436
        %v645 = vunpack.c.l.b16 %v437
        %v646 = vunpack.c.h.b16 %v437
        %v647 = vunpack.c.l.b16 %v438
        %v648 = vunpack.c.h.b16 %v438
        %v649 = vunpack.c.l.b16 %v439
        %v650 = vunpack.c.h.b16 %v439
        %v651 = vunpack.c.l.b16 %v440
        %v652 = vunpack.c.h.b16 %v440
        %v653 = vunpack.c.l.b16 %v441
        %v654 = vunpack.c.h.b16 %v441
        %v655 = vunpack.c.l.b16 %v442
        %v656 = vunpack.c.h.b16 %v442
        %v657 = vunpack.c.l.b16 %v443
        %v658 = vunpack.c.h.b16 %v443
        %v659 = vunpack.c.l.b16 %v444
        %v660 = vunpack.c.h.b16 %v444
        %v661 = vunpack.c.l.b16 %v445
        %v662 = vunpack.c.h.b16 %v445
        %v663 = vunpack.c.l.b16 %v446
        %v664 = vunpack.c.h.b16 %v446
        %v665 = vunpack.c.l.b16 %v447
        %v666 = vunpack.c.h.b16 %v447
        %v667 = vunpack.c.l.b16 %v448
        %v668 = vunpack.c.h.b16 %v448
        %v669 = vunpack.c.l.b16 %v449
        %v670 = vunpack.c.h.b16 %v449
        %v671 = vunpack.c.l.b16 %v450
        %v672 = vunpack.c.h.b16 %v450
        %v673 = vunpack.c.l.b16 %v451
        %v674 = vunpack.c.h.b16 %v451
        %v675 = vunpack.c.l.b16 %v452
        %v676 = vunpack.c.h.b16 %v452
        %v677 = vunpack.c.l.b16 %v453
        %v678 = vunpack.c.h.b16 %v453
        %v679 = vunpack.c.l.b16 %v454
        %v680 = vunpack.c.h.b16 %v454
        %v681 = vunpack.c.l.b16 %v455
        %v682 = vunpack.c.h.b16 %v455
        %v683 = vunpack.c.l.b16 %v456
        %v684 = vunpack.c.h.b16 %v456
        %v685 = vunpack.c.l.b16 %v457
        %v686 = vunpack.c.h.b16 %v457
        %v687 = vunpack.c.l.b16 %v458
        %v688 = vunpack.c.h.b16 %v458
        %v689 = vunpack.c.l.b16 %v459
        %v690 = vunpack.c.h.b16 %v459
        %v691 = vunpack.c.l.b16 %v460
        %v692 = vunpack.c.h.b16 %v460
        %v693 = vunpack.c.l.b16 %v461
        %v694 = vunpack.c.h.b16 %v461
        %v695 = vunpack.c.l.b16 %v462
        %v696 = vunpack.c.h.b16 %v462
        %v697 = vunpack.c.l.b16 %v463
        %v698 = vunpack.c.h.b16 %v463
        %v699 = vunpack.c.l.b16 %v464
        %v700 = vunpack.c.h.b16 %v464
        %v701 = vunpack.c.l.b16 %v465
        %v702 = vunpack.c.h.b16 %v465
        %v703 = vunpack.c.l.b16 %v466
        %v704 = vunpack.c.h.b16 %v466
        %v705 = vunpack.c.l.b16 %v467
        %v706 = vunpack.c.h.b16 %v467
        %v707 = vunpack.c.l.b16 %v468
        %v708 = vunpack.c.h.b16 %v468
        %v709 = vunpack.c.l.b16 %v469
        %v710 = vunpack.c.h.b16 %v469
        %v711 = vunpack.c.l.b16 %v470
        %v712 = vunpack.c.h.b16 %v470
        %v713 = vunpack.c.l.b16 %v471
        %v714 = vunpack.c.h.b16 %v471
        %v715 = vunpack.c.l.b16 %v472
        %v716 = vunpack.c.h.b16 %v472
        %v717 = vunpack.c.l.b16 %v473
        %v718 = vunpack.c.h.b16 %v473
        %v719 = vunpack.c.l.b16 %v474
        %v720 = vunpack.c.h.b16 %v474
        %v721 = vunpack.c.l.b16 %v475
        %v722 = vunpack.c.h.b16 %v475
        %v723 = vunpack.c.l.b16 %v476
        %v724 = vunpack.c.h.b16 %v476
        %v725 = vunpack.c.l.b16 %v477
        %v726 = vunpack.c.h.b16 %v477
        %v727 = vunpack.c.l.b16 %v478
        %v728 = vunpack.c.h.b16 %v478
        %v729 = vunpack.c.l.b16 %v479
        %v730 = vunpack.c.h.b16 %v479
        %v731 = vunpack.c.l.b16 %v480
        %v732 = vunpack.c.h.b16 %v480
        %v733 = vunpack.c.l.b16 %v481
        %v734 = vunpack.c.h.b16 %v481
        %v735 = vunpack.c.l.b16 %v482
        %v736 = vunpack.c.h.b16 %v482
        %v737 = vunpack.c.l.b16 %v483
        %v738 = vunpack.c.h.b16 %v483
        %v739 = vunpack.c.l.b16 %v484
        %v740 = vunpack.c.h.b16 %v484
        %v741 = vpack.c.b16 %v617, %v613
        %v742 = vpack.c.b16 %v618, %v614
        %v743 = vpack.c.b16 %v619, %v615
        %v744 = vpack.c.b16 %v620, %v616
        %v745 = vpack.c.b16 %v625, %v621
        %v746 = vpack.c.b16 %v626, %v622
        %v747 = vpack.c.b16 %v627, %v623
        %v748 = vpack.c.b16 %v628, %v624
        %v749 = vpack.c.b16 %v633, %v629
        %v750 = vpack.c.b16 %v634, %v630
        %v751 = vpack.c.b16 %v635, %v631
        %v752 = vpack.c.b16 %v636, %v632
        %v753 = vpack.c.b16 %v641, %v637
        %v754 = vpack.c.b16 %v642, %v638
        %v755 = vpack.c.b16 %v643, %v639
        %v756 = vpack.c.b16 %v644, %v640
        %v757 = vpack.c.b16 %v649, %v645
        %v758 = vpack.c.b16 %v650, %v646
        %v759 = vpack.c.b16 %v651, %v647
        %v760 = vpack.c.b16 %v652, %v648
        %v761 = vpack.c.b16 %v657, %v653
        %v762 = vpack.c.b16 %v658, %v654
        %v763 = vpack.c.b16 %v659, %v655
        %v764 = vpack.c.b16 %v660, %v656
        %v765 = vpack.c.b16 %v665, %v661
        %v766 = vpack.c.b16 %v666, %v662
        %v767 = vpack.c.b16 %v667, %v663
        %v768 = vpack.c.b16 %v668, %v664
        %v769 = vpack.c.b16 %v673, %v669
        %v770 = vpack.c.b16 %v674, %v670
        %v771 = vpack.c.b16 %v675, %v671
        %v772 = vpack.c.b16 %v676, %v672
        %v773 = vpack.c.b16 %v681, %v677
        %v774 = vpack.c.b16 %v682, %v678
        %v775 = vpack.c.b16 %v683, %v679
        %v776 = vpack.c.b16 %v684, %v680
        %v777 = vpack.c.b16 %v689, %v685
        %v778 = vpack.c.b16 %v690, %v686
        %v779 = vpack.c.b16 %v691, %v687
        %v780 = vpack.c.b16 %v692, %v688
        %v781 = vpack.c.b16 %v697, %v693
        %v782 = vpack.c.b16 %v698, %v694
        %v783 = vpack.c.b16 %v699, %v695
        %v784 = vpack.c.b16 %v700, %v696
        %v785 = vpack.c.b16 %v705, %v701
        %v786 = vpack.c.b16 %v706, %v702
        %v787 = vpack.c.b16 %v707, %v703
        %v788 = vpack.c.b16 %v708, %v704
        %v789 = vpack.c.b16 %v713, %v709
        %v790 = vpack.c.b16 %v714, %v710
        %v791 = vpack.c.b16 %v715, %v711
        %v792 = vpack.c.b16 %v716, %v712
        %v793 = vpack.c.b16 %v721, %v717
        %v794 = vpack.c.b16 %v722, %v718
        %v795 = vpack.c.b16 %v723, %v719
        %v796 = vpack.c.b16 %v724, %v720
        %v797 = vpack.c.b16 %v729, %v725
        %v798 = vpack.c.b16 %v730, %v726
        %v799 = vpack.c.b16 %v731, %v727
        %v800 = vpack.c.b16 %v732, %v728
        %v801 = vpack.c.b16 %v737, %v733
        %v802 = vpack.c.b16 %v738, %v734
        %v803 = vpack.c.b16 %v739, %v735
        %v804 = vpack.c.b16 %v740, %v736
        %v933 = vunpack.c.l.b16 %v485
        %v934 = vunpack.c.l.b16 %v486
        %v935 = vunpack.c.l.b16 %v487
        %v936 = vunpack.c.l.b16 %v488
        %v937 = vunpack.c.l.b16 %v489
        %v938 = vunpack.c.l.b16 %v490
        %v939 = vunpack.c.l.b16 %v491
        %v940 = vunpack.c.l.b16 %v492
        %v941 = vunpack.c.l.b16 %v493
        %v942 = vunpack.c.l.b16 %v494
        %v943 = vunpack.c.l.b16 %v495
        %v944 = vunpack.c.l.b16 %v496
        %v945 = vunpack.c.l.b16 %v497
        %v946 = vunpack.c.l.b16 %v498
        %v947 = vunpack.c.l.b16 %v499
        %v948 = vunpack.c.l.b16 %v500
        %v949 = vunpack.c.l.b16 %v501
        %v950 = vunpack.c.l.b16 %v502
        %v951 = vunpack.c.l.b16 %v503
        %v952 = vunpack.c.l.b16 %v504
        %v953 = vunpack.c.l.b16 %v505
        %v954 = vunpack.c.l.b16 %v506
        %v955 = vunpack.c.l.b16 %v507
        %v956 = vunpack.c.l.b16 %v508
        %v957 = vunpack.c.l.b16 %v509
        %v958 = vunpack.c.l.b16 %v510
        %v959 = vunpack.c.l.b16 %v511
        %v960 = vunpack.c.l.b16 %v512
        %v961 = vunpack.c.l.b16 %v513
        %v962 = vunpack.c.l.b16 %v514
        %v963 = vunpack.c.l.b16 %v515
        %v964 = vunpack.c.l.b16 %v516
        %v965 = vunpack.c.l.b16 %v517
        %v966 = vunpack.c.l.b16 %v518
        %v967 = vunpack.c.l.b16 %v519
        %v968 = vunpack.c.l.b16 %v520
        %v969 = vunpack.c.l.b16 %v521
        %v970 = vunpack.c.l.b16 %v522
        %v971 = vunpack.c.l.b16 %v523
        %v972 = vunpack.c.l.b16 %v524
        %v973 = vunpack.c.l.b16 %v525
        %v974 = vunpack.c.l.b16 %v526
        %v975 = vunpack.c.l.b16 %v527
        %v976 = vunpack.c.l.b16 %v528
        %v977 = vunpack.c.l.b16 %v529
        %v978 = vunpack.c.l.b16 %v530
        %v979 = vunpack.c.l.b16 %v531
        %v980 = vunpack.c.l.b16 %v532
        %v981 = vunpack.c.l.b16 %v533
        %v982 = vunpack.c.l.b16 %v534
        %v983 = vunpack.c.l.b16 %v535
        %v984 = vunpack.c.l.b16 %v536
        %v985 = vunpack.c.l.b16 %v537
        %v986 = vunpack.c.l.b16 %v538
        %v987 = vunpack.c.l.b16 %v539
        %v988 = vunpack.c.l.b16 %v540
        %v989 = vunpack.c.l.b16 %v541
        %v990 = vunpack.c.l.b16 %v542
        %v991 = vunpack.c.l.b16 %v543
        %v992 = vunpack.c.l.b16 %v544
        %v993 = vunpack.c.l.b16 %v545
        %v994 = vunpack.c.l.b16 %v546
        %v995 = vunpack.c.l.b16 %v547
        %v996 = vunpack.c.l.b16 %v548
        %v997 = vpack.c.b16 %v934, %v933
        %v998 = vpack.c.b16 %v936, %v935
        %v999 = vpack.c.b16 %v938, %v937
        %v1000 = vpack.c.b16 %v940, %v939
        %v1001 = vpack.c.b16 %v942, %v941
        %v1002 = vpack.c.b16 %v944, %v943
        %v1003 = vpack.c.b16 %v946, %v945
        %v1004 = vpack.c.b16 %v948, %v947
        %v1005 = vpack.c.b16 %v950, %v949
        %v1006 = vpack.c.b16 %v952, %v951
        %v1007 = vpack.c.b16 %v954, %v953
        %v1008 = vpack.c.b16 %v956, %v955
        %v1009 = vpack.c.b16 %v958, %v957
        %v1010 = vpack.c.b16 %v960, %v959
        %v1011 = vpack.c.b16 %v962, %v961
        %v1012 = vpack.c.b16 %v964, %v963
        %v1013 = vpack.c.b16 %v966, %v965
        %v1014 = vpack.c.b16 %v968, %v967
        %v1015 = vpack.c.b16 %v970, %v969
        %v1016 = vpack.c.b16 %v972, %v971
        %v1017 = vpack.c.b16 %v974, %v973
        %v1018 = vpack.c.b16 %v976, %v975
        %v1019 = vpack.c.b16 %v978, %v977
        %v1020 = vpack.c.b16 %v980, %v979
        %v1021 = vpack.c.b16 %v982, %v981
        %v1022 = vpack.c.b16 %v984, %v983
        %v1023 = vpack.c.b16 %v986, %v985
        %v1024 = vpack.c.b16 %v988, %v987
        %v1025 = vpack.c.b16 %v990, %v989
        %v1026 = vpack.c.b16 %v992, %v991
        %v1027 = vpack.c.b16 %v994, %v993
        %v1028 = vpack.c.b16 %v996, %v995
        %1061 = vmatpush.bf16.msra.mxu0 %v1004
        %1062 = vmatpush.bf16.msra.mxu0 %v1003
        %1063 = vmatpush.bf16.msra.mxu0 %v1002
        %1064 = vmatpush.bf16.msra.mxu0 %v1001
        %1065 = vmatpush.bf16.msra.mxu0 %v1000
        %1066 = vmatpush.bf16.msra.mxu0 %v999
        %1067 = vmatpush.bf16.msra.mxu0 %v998
        %1068 = vmatpush.bf16.msra.mxu0 %v997
        %1069 = vmatmul.bf16.gmra.mxu0 %v741
        %v1070 = vpop.f32.mrf.mxu0
        %v1071 = vadd.f32 0.0, %v1070
        %v1072 = vpop.f32.mrf.mxu0
        %v1073 = vadd.f32 0.0, %v1072
        %1074 = vmatmul.bf16.gmra.mxu0 %v745
        %v1075 = vpop.f32.mrf.mxu0
        %v1076 = vadd.f32 0.0, %v1075
        %v1077 = vpop.f32.mrf.mxu0
        %v1078 = vadd.f32 0.0, %v1077
        %1079 = vmatmul.bf16.gmra.mxu0 %v749
        %v1080 = vpop.f32.mrf.mxu0
        %v1081 = vadd.f32 0.0, %v1080
        %v1082 = vpop.f32.mrf.mxu0
        %v1083 = vadd.f32 0.0, %v1082
        %1084 = vmatmul.bf16.gmra.mxu0 %v753
        %v1085 = vpop.f32.mrf.mxu0
        %v1086 = vadd.f32 0.0, %v1085
        %v1087 = vpop.f32.mrf.mxu0
        %v1088 = vadd.f32 0.0, %v1087
        %1089 = vmatmul.bf16.gmra.mxu0 %v757
        %v1090 = vpop.f32.mrf.mxu0
        %v1091 = vadd.f32 0.0, %v1090
        %v1092 = vpop.f32.mrf.mxu0
        %v1093 = vadd.f32 0.0, %v1092
        %1094 = vmatmul.bf16.gmra.mxu0 %v761
        %v1095 = vpop.f32.mrf.mxu0
        %v1096 = vadd.f32 0.0, %v1095
        %v1097 = vpop.f32.mrf.mxu0
        %v1098 = vadd.f32 0.0, %v1097
        %1099 = vmatmul.bf16.gmra.mxu0 %v765
        %v1100 = vpop.f32.mrf.mxu0
        %v1101 = vadd.f32 0.0, %v1100
        %v1102 = vpop.f32.mrf.mxu0
        %v1103 = vadd.f32 0.0, %v1102
        %1104 = vmatmul.bf16.gmra.mxu0 %v769
        %v1105 = vpop.f32.mrf.mxu0
        %v1106 = vadd.f32 0.0, %v1105
        %v1107 = vpop.f32.mrf.mxu0
        %v1108 = vadd.f32 0.0, %v1107
        %1109 = vmatmul.bf16.gmra.mxu0 %v773
        %v1110 = vpop.f32.mrf.mxu0
        %v1111 = vadd.f32 0.0, %v1110
        %v1112 = vpop.f32.mrf.mxu0
        %v1113 = vadd.f32 0.0, %v1112
        %1114 = vmatmul.bf16.gmra.mxu0 %v777
        %v1115 = vpop.f32.mrf.mxu0
        %v1116 = vadd.f32 0.0, %v1115
        %v1117 = vpop.f32.mrf.mxu0
        %v1118 = vadd.f32 0.0, %v1117
        %1119 = vmatmul.bf16.gmra.mxu0 %v781
        %v1120 = vpop.f32.mrf.mxu0
        %v1121 = vadd.f32 0.0, %v1120
        %v1122 = vpop.f32.mrf.mxu0
        %v1123 = vadd.f32 0.0, %v1122
        %1124 = vmatmul.bf16.gmra.mxu0 %v785
        %v1125 = vpop.f32.mrf.mxu0
        %v1126 = vadd.f32 0.0, %v1125
        %v1127 = vpop.f32.mrf.mxu0
        %v1128 = vadd.f32 0.0, %v1127
        %1129 = vmatmul.bf16.gmra.mxu0 %v789
        %v1130 = vpop.f32.mrf.mxu0
        %v1131 = vadd.f32 0.0, %v1130
        %v1132 = vpop.f32.mrf.mxu0
        %v1133 = vadd.f32 0.0, %v1132
        %1134 = vmatmul.bf16.gmra.mxu0 %v793
        %v1135 = vpop.f32.mrf.mxu0
        %v1136 = vadd.f32 0.0, %v1135
        %v1137 = vpop.f32.mrf.mxu0
        %v1138 = vadd.f32 0.0, %v1137
        %1139 = vmatmul.bf16.gmra.mxu0 %v797
        %v1140 = vpop.f32.mrf.mxu0
        %v1141 = vadd.f32 0.0, %v1140
        %v1142 = vpop.f32.mrf.mxu0
        %v1143 = vadd.f32 0.0, %v1142
        %1144 = vmatmul.bf16.gmra.mxu0 %v801
        %v1145 = vpop.f32.mrf.mxu0
        %v1146 = vadd.f32 0.0, %v1145
        %v1147 = vpop.f32.mrf.mxu0
        %v1148 = vadd.f32 0.0, %v1147
        %1149 = vdwg.mxu0
        %1150 = vmatpush.bf16.msra.mxu0 %v1012
        %1151 = vmatpush.bf16.msra.mxu0 %v1011
        %1152 = vmatpush.bf16.msra.mxu0 %v1010
        %1153 = vmatpush.bf16.msra.mxu0 %v1009
        %1154 = vmatpush.bf16.msra.mxu0 %v1008
        %1155 = vmatpush.bf16.msra.mxu0 %v1007
        %1156 = vmatpush.bf16.msra.mxu0 %v1006
        %1157 = vmatpush.bf16.msra.mxu0 %v1005
        %1158 = vmatmul.bf16.gmra.mxu0 %v742
        %v1159 = vpop.f32.mrf.mxu0
        %v1160 = vadd.f32 %v1071, %v1159
        %v1161 = vpop.f32.mrf.mxu0
        %v1162 = vadd.f32 %v1073, %v1161
        %1163 = vmatmul.bf16.gmra.mxu0 %v746
        %v1164 = vpop.f32.mrf.mxu0
        %v1165 = vadd.f32 %v1076, %v1164
        %v1166 = vpop.f32.mrf.mxu0
        %v1167 = vadd.f32 %v1078, %v1166
        %1168 = vmatmul.bf16.gmra.mxu0 %v750
        %v1169 = vpop.f32.mrf.mxu0
        %v1170 = vadd.f32 %v1081, %v1169
        %v1171 = vpop.f32.mrf.mxu0
        %v1172 = vadd.f32 %v1083, %v1171
        %1173 = vmatmul.bf16.gmra.mxu0 %v754
        %v1174 = vpop.f32.mrf.mxu0
        %v1175 = vadd.f32 %v1086, %v1174
        %v1176 = vpop.f32.mrf.mxu0
        %v1177 = vadd.f32 %v1088, %v1176
        %1178 = vmatmul.bf16.gmra.mxu0 %v758
        %v1179 = vpop.f32.mrf.mxu0
        %v1180 = vadd.f32 %v1091, %v1179
        %v1181 = vpop.f32.mrf.mxu0
        %v1182 = vadd.f32 %v1093, %v1181
        %1183 = vmatmul.bf16.gmra.mxu0 %v762
        %v1184 = vpop.f32.mrf.mxu0
        %v1185 = vadd.f32 %v1096, %v1184
        %v1186 = vpop.f32.mrf.mxu0
        %v1187 = vadd.f32 %v1098, %v1186
        %1188 = vmatmul.bf16.gmra.mxu0 %v766
        %v1189 = vpop.f32.mrf.mxu0
        %v1190 = vadd.f32 %v1101, %v1189
        %v1191 = vpop.f32.mrf.mxu0
        %v1192 = vadd.f32 %v1103, %v1191
        %1193 = vmatmul.bf16.gmra.mxu0 %v770
        %v1194 = vpop.f32.mrf.mxu0
        %v1195 = vadd.f32 %v1106, %v1194
        %v1196 = vpop.f32.mrf.mxu0
        %v1197 = vadd.f32 %v1108, %v1196
        %1198 = vmatmul.bf16.gmra.mxu0 %v774
        %v1199 = vpop.f32.mrf.mxu0
        %v1200 = vadd.f32 %v1111, %v1199
        %v1201 = vpop.f32.mrf.mxu0
        %v1202 = vadd.f32 %v1113, %v1201
        %1203 = vmatmul.bf16.gmra.mxu0 %v778
        %v1204 = vpop.f32.mrf.mxu0
        %v1205 = vadd.f32 %v1116, %v1204
        %v1206 = vpop.f32.mrf.mxu0
        %v1207 = vadd.f32 %v1118, %v1206
        %1208 = vmatmul.bf16.gmra.mxu0 %v782
        %v1209 = vpop.f32.mrf.mxu0
        %v1210 = vadd.f32 %v1121, %v1209
        %v1211 = vpop.f32.mrf.mxu0
        %v1212 = vadd.f32 %v1123, %v1211
        %1213 = vmatmul.bf16.gmra.mxu0 %v786
        %v1214 = vpop.f32.mrf.mxu0
        %v1215 = vadd.f32 %v1126, %v1214
        %v1216 = vpop.f32.mrf.mxu0
        %v1217 = vadd.f32 %v1128, %v1216
        %1218 = vmatmul.bf16.gmra.mxu0 %v790
        %v1219 = vpop.f32.mrf.mxu0
        %v1220 = vadd.f32 %v1131, %v1219
        %v1221 = vpop.f32.mrf.mxu0
        %v1222 = vadd.f32 %v1133, %v1221
        %1223 = vmatmul.bf16.gmra.mxu0 %v794
        %v1224 = vpop.f32.mrf.mxu0
        %v1225 = vadd.f32 %v1136, %v1224
        %v1226 = vpop.f32.mrf.mxu0
        %v1227 = vadd.f32 %v1138, %v1226
        %1228 = vmatmul.bf16.gmra.mxu0 %v798
        %v1229 = vpop.f32.mrf.mxu0
        %v1230 = vadd.f32 %v1141, %v1229
        %v1231 = vpop.f32.mrf.mxu0
        %v1232 = vadd.f32 %v1143, %v1231
        %1233 = vmatmul.bf16.gmra.mxu0 %v802
        %v1234 = vpop.f32.mrf.mxu0
        %v1235 = vadd.f32 %v1146, %v1234
        %v1236 = vpop.f32.mrf.mxu0
        %v1237 = vadd.f32 %v1148, %v1236
        %1238 = vdwg.mxu0
        %1239 = vmatpush.bf16.msra.mxu0 %v1020
        %1240 = vmatpush.bf16.msra.mxu0 %v1019
        %1241 = vmatpush.bf16.msra.mxu0 %v1018
        %1242 = vmatpush.bf16.msra.mxu0 %v1017
        %1243 = vmatpush.bf16.msra.mxu0 %v1016
        %1244 = vmatpush.bf16.msra.mxu0 %v1015
        %1245 = vmatpush.bf16.msra.mxu0 %v1014
        %1246 = vmatpush.bf16.msra.mxu0 %v1013
        %1247 = vmatmul.bf16.gmra.mxu0 %v743
        %v1248 = vpop.f32.mrf.mxu0
        %v1249 = vadd.f32 %v1160, %v1248
        %v1250 = vpop.f32.mrf.mxu0
        %v1251 = vadd.f32 %v1162, %v1250
        %1252 = vmatmul.bf16.gmra.mxu0 %v747
        %v1253 = vpop.f32.mrf.mxu0
        %v1254 = vadd.f32 %v1165, %v1253
        %v1255 = vpop.f32.mrf.mxu0
        %v1256 = vadd.f32 %v1167, %v1255
        %1257 = vmatmul.bf16.gmra.mxu0 %v751
        %v1258 = vpop.f32.mrf.mxu0
        %v1259 = vadd.f32 %v1170, %v1258
        %v1260 = vpop.f32.mrf.mxu0
        %v1261 = vadd.f32 %v1172, %v1260
        %1262 = vmatmul.bf16.gmra.mxu0 %v755
        %v1263 = vpop.f32.mrf.mxu0
        %v1264 = vadd.f32 %v1175, %v1263
        %v1265 = vpop.f32.mrf.mxu0
        %v1266 = vadd.f32 %v1177, %v1265
        %1267 = vmatmul.bf16.gmra.mxu0 %v759
        %v1268 = vpop.f32.mrf.mxu0
        %v1269 = vadd.f32 %v1180, %v1268
        %v1270 = vpop.f32.mrf.mxu0
        %v1271 = vadd.f32 %v1182, %v1270
        %1272 = vmatmul.bf16.gmra.mxu0 %v763
        %v1273 = vpop.f32.mrf.mxu0
        %v1274 = vadd.f32 %v1185, %v1273
        %v1275 = vpop.f32.mrf.mxu0
        %v1276 = vadd.f32 %v1187, %v1275
        %1277 = vmatmul.bf16.gmra.mxu0 %v767
        %v1278 = vpop.f32.mrf.mxu0
        %v1279 = vadd.f32 %v1190, %v1278
        %v1280 = vpop.f32.mrf.mxu0
        %v1281 = vadd.f32 %v1192, %v1280
        %1282 = vmatmul.bf16.gmra.mxu0 %v771
        %v1283 = vpop.f32.mrf.mxu0
        %v1284 = vadd.f32 %v1195, %v1283
        %v1285 = vpop.f32.mrf.mxu0
        %v1286 = vadd.f32 %v1197, %v1285
        %1287 = vmatmul.bf16.gmra.mxu0 %v775
        %v1288 = vpop.f32.mrf.mxu0
        %v1289 = vadd.f32 %v1200, %v1288
        %v1290 = vpop.f32.mrf.mxu0
        %v1291 = vadd.f32 %v1202, %v1290
        %1292 = vmatmul.bf16.gmra.mxu0 %v779
        %v1293 = vpop.f32.mrf.mxu0
        %v1294 = vadd.f32 %v1205, %v1293
        %v1295 = vpop.f32.mrf.mxu0
        %v1296 = vadd.f32 %v1207, %v1295
        %1297 = vmatmul.bf16.gmra.mxu0 %v783
        %v1298 = vpop.f32.mrf.mxu0
        %v1299 = vadd.f32 %v1210, %v1298
        %v1300 = vpop.f32.mrf.mxu0
        %v1301 = vadd.f32 %v1212, %v1300
        %1302 = vmatmul.bf16.gmra.mxu0 %v787
        %v1303 = vpop.f32.mrf.mxu0
        %v1304 = vadd.f32 %v1215, %v1303
        %v1305 = vpop.f32.mrf.mxu0
        %v1306 = vadd.f32 %v1217, %v1305
        %1307 = vmatmul.bf16.gmra.mxu0 %v791
        %v1308 = vpop.f32.mrf.mxu0
        %v1309 = vadd.f32 %v1220, %v1308
        %v1310 = vpop.f32.mrf.mxu0
        %v1311 = vadd.f32 %v1222, %v1310
        %1312 = vmatmul.bf16.gmra.mxu0 %v795
        %v1313 = vpop.f32.mrf.mxu0
        %v1314 = vadd.f32 %v1225, %v1313
        %v1315 = vpop.f32.mrf.mxu0
        %v1316 = vadd.f32 %v1227, %v1315
        %1317 = vmatmul.bf16.gmra.mxu0 %v799
        %v1318 = vpop.f32.mrf.mxu0
        %v1319 = vadd.f32 %v1230, %v1318
        %v1320 = vpop.f32.mrf.mxu0
        %v1321 = vadd.f32 %v1232, %v1320
        %1322 = vmatmul.bf16.gmra.mxu0 %v803
        %v1323 = vpop.f32.mrf.mxu0
        %v1324 = vadd.f32 %v1235, %v1323
        %v1325 = vpop.f32.mrf.mxu0
        %v1326 = vadd.f32 %v1237, %v1325
        %1327 = vdwg.mxu0
        %1328 = vmatpush.bf16.msra.mxu0 %v1028
        %1329 = vmatpush.bf16.msra.mxu0 %v1027
        %1330 = vmatpush.bf16.msra.mxu0 %v1026
        %1331 = vmatpush.bf16.msra.mxu0 %v1025
        %1332 = vmatpush.bf16.msra.mxu0 %v1024
        %1333 = vmatpush.bf16.msra.mxu0 %v1023
        %1334 = vmatpush.bf16.msra.mxu0 %v1022
        %1335 = vmatpush.bf16.msra.mxu0 %v1021
        %1336 = vmatmul.bf16.gmra.mxu0 %v744
        %v1337 = vpop.f32.mrf.mxu0
        %v1338 = vadd.f32 %v1249, %v1337
        %v1339 = vpop.f32.mrf.mxu0
        %v1340 = vadd.f32 %v1251, %v1339
        %1341 = vmatmul.bf16.gmra.mxu0 %v748
        %v1342 = vpop.f32.mrf.mxu0
        %v1343 = vadd.f32 %v1254, %v1342
        %v1344 = vpop.f32.mrf.mxu0
        %v1345 = vadd.f32 %v1256, %v1344
        %1346 = vmatmul.bf16.gmra.mxu0 %v752
        %v1347 = vpop.f32.mrf.mxu0
        %v1348 = vadd.f32 %v1259, %v1347
        %v1349 = vpop.f32.mrf.mxu0
        %v1350 = vadd.f32 %v1261, %v1349
        %1351 = vmatmul.bf16.gmra.mxu0 %v756
        %v1352 = vpop.f32.mrf.mxu0
        %v1353 = vadd.f32 %v1264, %v1352
        %v1354 = vpop.f32.mrf.mxu0
        %v1355 = vadd.f32 %v1266, %v1354
        %1356 = vmatmul.bf16.gmra.mxu0 %v760
        %v1357 = vpop.f32.mrf.mxu0
        %v1358 = vadd.f32 %v1269, %v1357
        %v1359 = vpop.f32.mrf.mxu0
        %v1360 = vadd.f32 %v1271, %v1359
        %1361 = vmatmul.bf16.gmra.mxu0 %v764
        %v1362 = vpop.f32.mrf.mxu0
        %v1363 = vadd.f32 %v1274, %v1362
        %v1364 = vpop.f32.mrf.mxu0
        %v1365 = vadd.f32 %v1276, %v1364
        %1366 = vmatmul.bf16.gmra.mxu0 %v768
        %v1367 = vpop.f32.mrf.mxu0
        %v1368 = vadd.f32 %v1279, %v1367
        %v1369 = vpop.f32.mrf.mxu0
        %v1370 = vadd.f32 %v1281, %v1369
        %1371 = vmatmul.bf16.gmra.mxu0 %v772
        %v1372 = vpop.f32.mrf.mxu0
        %v1373 = vadd.f32 %v1284, %v1372
        %v1374 = vpop.f32.mrf.mxu0
        %v1375 = vadd.f32 %v1286, %v1374
        %1376 = vmatmul.bf16.gmra.mxu0 %v776
        %v1377 = vpop.f32.mrf.mxu0
        %v1378 = vadd.f32 %v1289, %v1377
        %v1379 = vpop.f32.mrf.mxu0
        %v1380 = vadd.f32 %v1291, %v1379
        %1381 = vmatmul.bf16.gmra.mxu0 %v780
        %v1382 = vpop.f32.mrf.mxu0
        %v1383 = vadd.f32 %v1294, %v1382
        %v1384 = vpop.f32.mrf.mxu0
        %v1385 = vadd.f32 %v1296, %v1384
        %1386 = vmatmul.bf16.gmra.mxu0 %v784
        %v1387 = vpop.f32.mrf.mxu0
        %v1388 = vadd.f32 %v1299, %v1387
        %v1389 = vpop.f32.mrf.mxu0
        %v1390 = vadd.f32 %v1301, %v1389
        %1391 = vmatmul.bf16.gmra.mxu0 %v788
        %v1392 = vpop.f32.mrf.mxu0
        %v1393 = vadd.f32 %v1304, %v1392
        %v1394 = vpop.f32.mrf.mxu0
        %v1395 = vadd.f32 %v1306, %v1394
        %1396 = vmatmul.bf16.gmra.mxu0 %v792
        %v1397 = vpop.f32.mrf.mxu0
        %v1398 = vadd.f32 %v1309, %v1397
        %v1399 = vpop.f32.mrf.mxu0
        %v1400 = vadd.f32 %v1311, %v1399
        %1401 = vmatmul.bf16.gmra.mxu0 %v796
        %v1402 = vpop.f32.mrf.mxu0
        %v1403 = vadd.f32 %v1314, %v1402
        %v1404 = vpop.f32.mrf.mxu0
        %v1405 = vadd.f32 %v1316, %v1404
        %1406 = vmatmul.bf16.gmra.mxu0 %v800
        %v1407 = vpop.f32.mrf.mxu0
        %v1408 = vadd.f32 %v1319, %v1407
        %v1409 = vpop.f32.mrf.mxu0
        %v1410 = vadd.f32 %v1321, %v1409
        %1411 = vmatmul.bf16.gmra.mxu0 %v804
        %v1412 = vpop.f32.mrf.mxu0
        %v1413 = vadd.f32 %v1324, %v1412
        %v1414 = vpop.f32.mrf.mxu0
        %v1415 = vadd.f32 %v1326, %v1414
        %1416 = vdwg.mxu0
        %v1417 = vadd.f32 %v389, %v1338
        %v1418 = vadd.f32 %v390, %v1340
        %v1419 = vadd.f32 %v391, %v1343
        %v1420 = vadd.f32 %v392, %v1345
        %v1421 = vadd.f32 %v393, %v1348
        %v1422 = vadd.f32 %v394, %v1350
        %v1423 = vadd.f32 %v395, %v1353
        %v1424 = vadd.f32 %v396, %v1355
        %v1425 = vadd.f32 %v397, %v1358
        %v1426 = vadd.f32 %v398, %v1360
        %v1427 = vadd.f32 %v399, %v1363
        %v1428 = vadd.f32 %v400, %v1365
        %v1429 = vadd.f32 %v401, %v1368
        %v1430 = vadd.f32 %v402, %v1370
        %v1431 = vadd.f32 %v403, %v1373
        %v1432 = vadd.f32 %v404, %v1375
        %v1433 = vadd.f32 %v405, %v1378
        %v1434 = vadd.f32 %v406, %v1380
        %v1435 = vadd.f32 %v407, %v1383
        %v1436 = vadd.f32 %v408, %v1385
        %v1437 = vadd.f32 %v409, %v1388
        %v1438 = vadd.f32 %v410, %v1390
        %v1439 = vadd.f32 %v411, %v1393
        %v1440 = vadd.f32 %v412, %v1395
        %v1441 = vadd.f32 %v413, %v1398
        %v1442 = vadd.f32 %v414, %v1400
        %v1443 = vadd.f32 %v415, %v1403
        %v1444 = vadd.f32 %v416, %v1405
        %v1445 = vadd.f32 %v417, %v1408
        %v1446 = vadd.f32 %v418, %v1410
        %v1447 = vadd.f32 %v419, %v1413
        %v1448 = vadd.f32 %v420, %v1415
        %vm1449 = vcmask 261120
        %1450 = vst.msk [vmem:[#allocation2] sm:$0xff] %vm1449, %v1417
        %1451 = vst.msk [vmem:[#allocation2 + $0x8] sm:$0xff] %vm1449, %v1418
        %1452 = vst.msk [vmem:[#allocation2 + $0x10] sm:$0xff] %vm1449, %v1419
        %1453 = vst.msk [vmem:[#allocation2 + $0x18] sm:$0xff] %vm1449, %v1420
        %1454 = vst.msk [vmem:[#allocation2 + $0x20] sm:$0xff] %vm1449, %v1421
        %1455 = vst.msk [vmem:[#allocation2 + $0x28] sm:$0xff] %vm1449, %v1422
        %1456 = vst.msk [vmem:[#allocation2 + $0x30] sm:$0xff] %vm1449, %v1423
        %1457 = vst.msk [vmem:[#allocation2 + $0x38] sm:$0xff] %vm1449, %v1424
        %1458 = vst.msk [vmem:[#allocation2 + $0x40] sm:$0xff] %vm1449, %v1425
        %1459 = vst.msk [vmem:[#allocation2 + $0x48] sm:$0xff] %vm1449, %v1426
        %1460 = vst.msk [vmem:[#allocation2 + $0x50] sm:$0xff] %vm1449, %v1427
        %1461 = vst.msk [vmem:[#allocation2 + $0x58] sm:$0xff] %vm1449, %v1428
        %1462 = vst.msk [vmem:[#allocation2 + $0x60] sm:$0xff] %vm1449, %v1429
        %1463 = vst.msk [vmem:[#allocation2 + $0x68] sm:$0xff] %vm1449, %v1430
        %1464 = vst.msk [vmem:[#allocation2 + $0x70] sm:$0xff] %vm1449, %v1431
        %1465 = vst.msk [vmem:[#allocation2 + $0x78] sm:$0xff] %vm1449, %v1432
        %1466 = vst.msk [vmem:[#allocation2 + $0x80] sm:$0xff] %vm1449, %v1433
        %1467 = vst.msk [vmem:[#allocation2 + $0x88] sm:$0xff] %vm1449, %v1434
        %1468 = vst.msk [vmem:[#allocation2 + $0x90] sm:$0xff] %vm1449, %v1435
        %1469 = vst.msk [vmem:[#allocation2 + $0x98] sm:$0xff] %vm1449, %v1436
        %1470 = vst.msk [vmem:[#allocation2 + $0xa0] sm:$0xff] %vm1449, %v1437
        %1471 = vst.msk [vmem:[#allocation2 + $0xa8] sm:$0xff] %vm1449, %v1438
        %1472 = vst.msk [vmem:[#allocation2 + $0xb0] sm:$0xff] %vm1449, %v1439
        %1473 = vst.msk [vmem:[#allocation2 + $0xb8] sm:$0xff] %vm1449, %v1440
        %1474 = vst.msk [vmem:[#allocation2 + $0xc0] sm:$0xff] %vm1449, %v1441
        %1475 = vst.msk [vmem:[#allocation2 + $0xc8] sm:$0xff] %vm1449, %v1442
        %1476 = vst.msk [vmem:[#allocation2 + $0xd0] sm:$0xff] %vm1449, %v1443
        %1477 = vst.msk [vmem:[#allocation2 + $0xd8] sm:$0xff] %vm1449, %v1444
        %1478 = vst.msk [vmem:[#allocation2 + $0xe0] sm:$0xff] %vm1449, %v1445
        %1479 = vst.msk [vmem:[#allocation2 + $0xe8] sm:$0xff] %vm1449, %v1446
        %1480 = vst.msk [vmem:[#allocation2 + $0xf0] sm:$0xff] %vm1449, %v1447
        %1481 = vst.msk [vmem:[#allocation2 + $0xf8] sm:$0xff] %vm1449, %v1448
        %p1482 = scmp.eq.s32.totalorder %s15, 1
        // Predicated region
        $region64: #{discriminator_forward.4} parent=54 // pred_check
          %p1483 = pneg %p1482
        $region65: #{discriminator_forward.4} parent=54 // pred_check_branch
          %1485 = sbr.rel (%p1483) target = $region67
        $region66: #{discriminator_forward.4} parent=54 // pred_region
          %v1486 = vld [vmem:[#allocation2] sm:$0xff]
          %v1487 = vld [vmem:[#allocation2 + $0x8] sm:$0xff]
          %v1488 = vld [vmem:[#allocation2 + $0x10] sm:$0xff]
          %v1489 = vld [vmem:[#allocation2 + $0x18] sm:$0xff]
          %v1490 = vld [vmem:[#allocation2 + $0x20] sm:$0xff]
          %v1491 = vld [vmem:[#allocation2 + $0x28] sm:$0xff]
          %v1492 = vld [vmem:[#allocation2 + $0x30] sm:$0xff]
          %v1493 = vld [vmem:[#allocation2 + $0x38] sm:$0xff]
          %v1494 = vld [vmem:[#allocation2 + $0x40] sm:$0xff]
          %v1495 = vld [vmem:[#allocation2 + $0x48] sm:$0xff]
          %v1496 = vld [vmem:[#allocation2 + $0x50] sm:$0xff]
          %v1497 = vld [vmem:[#allocation2 + $0x58] sm:$0xff]
          %v1498 = vld [vmem:[#allocation2 + $0x60] sm:$0xff]
          %v1499 = vld [vmem:[#allocation2 + $0x68] sm:$0xff]
          %v1500 = vld [vmem:[#allocation2 + $0x70] sm:$0xff]
          %v1501 = vld [vmem:[#allocation2 + $0x78] sm:$0xff]
          %v1502 = vld [vmem:[#allocation2 + $0x80] sm:$0xff]
          %v1503 = vld [vmem:[#allocation2 + $0x88] sm:$0xff]
          %v1504 = vld [vmem:[#allocation2 + $0x90] sm:$0xff]
          %v1505 = vld [vmem:[#allocation2 + $0x98] sm:$0xff]
          %v1506 = vld [vmem:[#allocation2 + $0xa0] sm:$0xff]
          %v1507 = vld [vmem:[#allocation2 + $0xa8] sm:$0xff]
          %v1508 = vld [vmem:[#allocation2 + $0xb0] sm:$0xff]
          %v1509 = vld [vmem:[#allocation2 + $0xb8] sm:$0xff]
          %v1510 = vld [vmem:[#allocation2 + $0xc0] sm:$0xff]
          %v1511 = vld [vmem:[#allocation2 + $0xc8] sm:$0xff]
          %v1512 = vld [vmem:[#allocation2 + $0xd0] sm:$0xff]
          %v1513 = vld [vmem:[#allocation2 + $0xd8] sm:$0xff]
          %v1514 = vld [vmem:[#allocation2 + $0xe0] sm:$0xff]
          %v1515 = vld [vmem:[#allocation2 + $0xe8] sm:$0xff]
          %v1516 = vld [vmem:[#allocation2 + $0xf0] sm:$0xff]
          %v1517 = vld [vmem:[#allocation2 + $0xf8] sm:$0xff]
          %v1518 = vsel %vm1449, %v1486, 0.0
          %v1519 = vsel %vm1449, %v1487, 0.0
          %v1520 = vadd.f32 %v1518, %v1519
          %v1521 = vsel %vm1449, %v1488, 0.0
          %v1522 = vadd.f32 %v1520, %v1521
          %v1523 = vsel %vm1449, %v1489, 0.0
          %v1524 = vadd.f32 %v1522, %v1523
          %v1525 = vsel %vm1449, %v1490, 0.0
          %v1526 = vadd.f32 %v1524, %v1525
          %v1527 = vsel %vm1449, %v1491, 0.0
          %v1528 = vadd.f32 %v1526, %v1527
          %v1529 = vsel %vm1449, %v1492, 0.0
          %v1530 = vadd.f32 %v1528, %v1529
          %v1531 = vsel %vm1449, %v1493, 0.0
          %v1532 = vadd.f32 %v1530, %v1531
          %v1533 = vsel %vm1449, %v1494, 0.0
          %v1534 = vadd.f32 %v1532, %v1533
          %v1535 = vsel %vm1449, %v1495, 0.0
          %v1536 = vadd.f32 %v1534, %v1535
          %v1537 = vsel %vm1449, %v1496, 0.0
          %v1538 = vadd.f32 %v1536, %v1537
          %v1539 = vsel %vm1449, %v1497, 0.0
          %v1540 = vadd.f32 %v1538, %v1539
          %v1541 = vsel %vm1449, %v1498, 0.0
          %v1542 = vadd.f32 %v1540, %v1541
          %v1543 = vsel %vm1449, %v1499, 0.0
          %v1544 = vadd.f32 %v1542, %v1543
          %v1545 = vsel %vm1449, %v1500, 0.0
          %v1546 = vadd.f32 %v1544, %v1545
          %v1547 = vsel %vm1449, %v1501, 0.0
          %v1548 = vadd.f32 %v1546, %v1547
          %v1549 = vsel %vm1449, %v1502, 0.0
          %v1550 = vadd.f32 %v1548, %v1549
          %v1551 = vsel %vm1449, %v1503, 0.0
          %v1552 = vadd.f32 %v1550, %v1551
          %v1553 = vsel %vm1449, %v1504, 0.0
          %v1554 = vadd.f32 %v1552, %v1553
          %v1555 = vsel %vm1449, %v1505, 0.0
          %v1556 = vadd.f32 %v1554, %v1555
          %v1557 = vsel %vm1449, %v1506, 0.0
          %v1558 = vadd.f32 %v1556, %v1557
          %v1559 = vsel %vm1449, %v1507, 0.0
          %v1560 = vadd.f32 %v1558, %v1559
          %v1561 = vsel %vm1449, %v1508, 0.0
          %v1562 = vadd.f32 %v1560, %v1561
          %v1563 = vsel %vm1449, %v1509, 0.0
          %v1564 = vadd.f32 %v1562, %v1563
          %v1565 = vsel %vm1449, %v1510, 0.0
          %v1566 = vadd.f32 %v1564, %v1565
          %v1567 = vsel %vm1449, %v1511, 0.0
          %v1568 = vadd.f32 %v1566, %v1567
          %v1569 = vsel %vm1449, %v1512, 0.0
          %v1570 = vadd.f32 %v1568, %v1569
          %v1571 = vsel %vm1449, %v1513, 0.0
          %v1572 = vadd.f32 %v1570, %v1571
          %v1573 = vsel %vm1449, %v1514, 0.0
          %v1574 = vadd.f32 %v1572, %v1573
          %v1575 = vsel %vm1449, %v1515, 0.0
          %v1576 = vadd.f32 %v1574, %v1575
          %v1577 = vsel %vm1449, %v1516, 0.0
          %v1578 = vadd.f32 %v1576, %v1577
          %v1579 = vsel %vm1449, %v1517, 0.0
          %v1580 = vadd.f32 %v1578, %v1579
          %v1581 = vrot.slane %v1580, 4
          %v1582 = vadd.f32 %v1580, %v1581
          %v1583 = vrot.slane %v1582, 2
          %v1584 = vadd.f32 %v1582, %v1583
          %v1585 = vrot.slane %v1584, 1
          %v1586 = vadd.f32 %v1584, %v1585
          %v1587 = vrcp.pop 256.0
          %v1588 = vmul.f32 256.0, %v1587
          %v1589 = vsub.f32 1.0, %v1588
          %v1590 = vmul.f32 %v1587, %v1589
          %v1591 = vadd.f32 %v1587, %v1590
          %vm1592 = vweird.f32 %v1587
          %v1593 = vsel %vm1592, %v1587, %v1591
          %v1594 = vmul.f32 %v1586, %v1593
          %v1595 = vsub.f32 %v1486, %v1594
          %v1596 = vsub.f32 %v1487, %v1594
          %v1597 = vsub.f32 %v1488, %v1594
          %v1598 = vsub.f32 %v1489, %v1594
          %v1599 = vsub.f32 %v1490, %v1594
          %v1600 = vsub.f32 %v1491, %v1594
          %v1601 = vsub.f32 %v1492, %v1594
          %v1602 = vsub.f32 %v1493, %v1594
          %v1603 = vsub.f32 %v1494, %v1594
          %v1604 = vsub.f32 %v1495, %v1594
          %v1605 = vsub.f32 %v1496, %v1594
          %v1606 = vsub.f32 %v1497, %v1594
          %v1607 = vsub.f32 %v1498, %v1594
          %v1608 = vsub.f32 %v1499, %v1594
          %v1609 = vsub.f32 %v1500, %v1594
          %v1610 = vsub.f32 %v1501, %v1594
          %v1611 = vsub.f32 %v1502, %v1594
          %v1612 = vsub.f32 %v1503, %v1594
          %v1613 = vsub.f32 %v1504, %v1594
          %v1614 = vsub.f32 %v1505, %v1594
          %v1615 = vsub.f32 %v1506, %v1594
          %v1616 = vsub.f32 %v1507, %v1594
          %v1617 = vsub.f32 %v1508, %v1594
          %v1618 = vsub.f32 %v1509, %v1594
          %v1619 = vsub.f32 %v1510, %v1594
          %v1620 = vsub.f32 %v1511, %v1594
          %v1621 = vsub.f32 %v1512, %v1594
          %v1622 = vsub.f32 %v1513, %v1594
          %v1623 = vsub.f32 %v1514, %v1594
          %v1624 = vsub.f32 %v1515, %v1594
          %v1625 = vsub.f32 %v1516, %v1594
          %v1626 = vsub.f32 %v1517, %v1594
          %v1627 = vmul.f32 %v1595, %v1595
          %v1628 = vmul.f32 %v1596, %v1596
          %v1629 = vmul.f32 %v1597, %v1597
          %v1630 = vmul.f32 %v1598, %v1598
          %v1631 = vmul.f32 %v1599, %v1599
          %v1632 = vmul.f32 %v1600, %v1600
          %v1633 = vmul.f32 %v1601, %v1601
          %v1634 = vmul.f32 %v1602, %v1602
          %v1635 = vmul.f32 %v1603, %v1603
          %v1636 = vmul.f32 %v1604, %v1604
          %v1637 = vmul.f32 %v1605, %v1605
          %v1638 = vmul.f32 %v1606, %v1606
          %v1639 = vmul.f32 %v1607, %v1607
          %v1640 = vmul.f32 %v1608, %v1608
          %v1641 = vmul.f32 %v1609, %v1609
          %v1642 = vmul.f32 %v1610, %v1610
          %v1643 = vmul.f32 %v1611, %v1611
          %v1644 = vmul.f32 %v1612, %v1612
          %v1645 = vmul.f32 %v1613, %v1613
          %v1646 = vmul.f32 %v1614, %v1614
          %v1647 = vmul.f32 %v1615, %v1615
          %v1648 = vmul.f32 %v1616, %v1616
          %v1649 = vmul.f32 %v1617, %v1617
          %v1650 = vmul.f32 %v1618, %v1618
          %v1651 = vmul.f32 %v1619, %v1619
          %v1652 = vmul.f32 %v1620, %v1620
          %v1653 = vmul.f32 %v1621, %v1621
          %v1654 = vmul.f32 %v1622, %v1622
          %v1655 = vmul.f32 %v1623, %v1623
          %v1656 = vmul.f32 %v1624, %v1624
          %v1657 = vmul.f32 %v1625, %v1625
          %v1658 = vmul.f32 %v1626, %v1626
          %v1659 = vsel %vm1449, %v1627, 0.0
          %v1660 = vsel %vm1449, %v1628, 0.0
          %v1661 = vadd.f32 %v1659, %v1660
          %v1662 = vsel %vm1449, %v1629, 0.0
          %v1663 = vadd.f32 %v1661, %v1662
          %v1664 = vsel %vm1449, %v1630, 0.0
          %v1665 = vadd.f32 %v1663, %v1664
          %v1666 = vsel %vm1449, %v1631, 0.0
          %v1667 = vadd.f32 %v1665, %v1666
          %v1668 = vsel %vm1449, %v1632, 0.0
          %v1669 = vadd.f32 %v1667, %v1668
          %v1670 = vsel %vm1449, %v1633, 0.0
          %v1671 = vadd.f32 %v1669, %v1670
          %v1672 = vsel %vm1449, %v1634, 0.0
          %v1673 = vadd.f32 %v1671, %v1672
          %v1674 = vsel %vm1449, %v1635, 0.0
          %v1675 = vadd.f32 %v1673, %v1674
          %v1676 = vsel %vm1449, %v1636, 0.0
          %v1677 = vadd.f32 %v1675, %v1676
          %v1678 = vsel %vm1449, %v1637, 0.0
          %v1679 = vadd.f32 %v1677, %v1678
          %v1680 = vsel %vm1449, %v1638, 0.0
          %v1681 = vadd.f32 %v1679, %v1680
          %v1682 = vsel %vm1449, %v1639, 0.0
          %v1683 = vadd.f32 %v1681, %v1682
          %v1684 = vsel %vm1449, %v1640, 0.0
          %v1685 = vadd.f32 %v1683, %v1684
          %v1686 = vsel %vm1449, %v1641, 0.0
          %v1687 = vadd.f32 %v1685, %v1686
          %v1688 = vsel %vm1449, %v1642, 0.0
          %v1689 = vadd.f32 %v1687, %v1688
          %v1690 = vsel %vm1449, %v1643, 0.0
          %v1691 = vadd.f32 %v1689, %v1690
          %v1692 = vsel %vm1449, %v1644, 0.0
          %v1693 = vadd.f32 %v1691, %v1692
          %v1694 = vsel %vm1449, %v1645, 0.0
          %v1695 = vadd.f32 %v1693, %v1694
          %v1696 = vsel %vm1449, %v1646, 0.0
          %v1697 = vadd.f32 %v1695, %v1696
          %v1698 = vsel %vm1449, %v1647, 0.0
          %v1699 = vadd.f32 %v1697, %v1698
          %v1700 = vsel %vm1449, %v1648, 0.0
          %v1701 = vadd.f32 %v1699, %v1700
          %v1702 = vsel %vm1449, %v1649, 0.0
          %v1703 = vadd.f32 %v1701, %v1702
          %v1704 = vsel %vm1449, %v1650, 0.0
          %v1705 = vadd.f32 %v1703, %v1704
          %v1706 = vsel %vm1449, %v1651, 0.0
          %v1707 = vadd.f32 %v1705, %v1706
          %v1708 = vsel %vm1449, %v1652, 0.0
          %v1709 = vadd.f32 %v1707, %v1708
          %v1710 = vsel %vm1449, %v1653, 0.0
          %v1711 = vadd.f32 %v1709, %v1710
          %v1712 = vsel %vm1449, %v1654, 0.0
          %v1713 = vadd.f32 %v1711, %v1712
          %v1714 = vsel %vm1449, %v1655, 0.0
          %v1715 = vadd.f32 %v1713, %v1714
          %v1716 = vsel %vm1449, %v1656, 0.0
          %v1717 = vadd.f32 %v1715, %v1716
          %v1718 = vsel %vm1449, %v1657, 0.0
          %v1719 = vadd.f32 %v1717, %v1718
          %v1720 = vsel %vm1449, %v1658, 0.0
          %v1721 = vadd.f32 %v1719, %v1720
          %v1722 = vrot.slane %v1721, 4
          %v1723 = vadd.f32 %v1721, %v1722
          %v1724 = vrot.slane %v1723, 2
          %v1725 = vadd.f32 %v1723, %v1724
          %v1726 = vrot.slane %v1725, 1
          %v1727 = vadd.f32 %v1725, %v1726
          %v1728 = vmul.f32 %v1727, %v1593
          %v1729 = vadd.f32 %v1728, 1e-05
          %v1730 = vrsqrt.pop %v1729
          %v1731 = vmul.f32 %v1730, %v1729
          %v1732 = vmul.f32 %v1731, %v1730
          %v1733 = vmul.f32 0.5, %v1732
          %v1734 = vsub.f32 1.5, %v1733
          %v1735 = vmul.f32 %v1730, %v1734
          %vm1736 = vweird.f32 %v1729
          %vm1737 = vweird.f32 %v1730
          %vm1738 = vmor %vm1736, %vm1737
          %v1739 = vsel %vm1738, %v1730, %v1735
          %v1740 = vmul.f32 %v1595, %v1739
          %v1741 = vmul.f32 %v1596, %v1739
          %v1742 = vmul.f32 %v1597, %v1739
          %v1743 = vmul.f32 %v1598, %v1739
          %v1744 = vmul.f32 %v1599, %v1739
          %v1745 = vmul.f32 %v1600, %v1739
          %v1746 = vmul.f32 %v1601, %v1739
          %v1747 = vmul.f32 %v1602, %v1739
          %v1748 = vmul.f32 %v1603, %v1739
          %v1749 = vmul.f32 %v1604, %v1739
          %v1750 = vmul.f32 %v1605, %v1739
          %v1751 = vmul.f32 %v1606, %v1739
          %v1752 = vmul.f32 %v1607, %v1739
          %v1753 = vmul.f32 %v1608, %v1739
          %v1754 = vmul.f32 %v1609, %v1739
          %v1755 = vmul.f32 %v1610, %v1739
          %v1756 = vmul.f32 %v1611, %v1739
          %v1757 = vmul.f32 %v1612, %v1739
          %v1758 = vmul.f32 %v1613, %v1739
          %v1759 = vmul.f32 %v1614, %v1739
          %v1760 = vmul.f32 %v1615, %v1739
          %v1761 = vmul.f32 %v1616, %v1739
          %v1762 = vmul.f32 %v1617, %v1739
          %v1763 = vmul.f32 %v1618, %v1739
          %v1764 = vmul.f32 %v1619, %v1739
          %v1765 = vmul.f32 %v1620, %v1739
          %v1766 = vmul.f32 %v1621, %v1739
          %v1767 = vmul.f32 %v1622, %v1739
          %v1768 = vmul.f32 %v1623, %v1739
          %v1769 = vmul.f32 %v1624, %v1739
          %v1770 = vmul.f32 %v1625, %v1739
          %v1771 = vmul.f32 %v1626, %v1739
          %v1772 = vld [vmem:[%s2] sm:$0x1]
          %v1774 = vperm.slane %v1772, 0
          %v1776 = vmul.f32 %v1740, %v1774
          %v1777 = vmul.f32 %v1741, %v1774
          %v1778 = vmul.f32 %v1742, %v1774
          %v1779 = vmul.f32 %v1743, %v1774
          %v1780 = vmul.f32 %v1744, %v1774
          %v1781 = vmul.f32 %v1745, %v1774
          %v1782 = vmul.f32 %v1746, %v1774
          %v1783 = vmul.f32 %v1747, %v1774
          %v1784 = vmul.f32 %v1748, %v1774
          %v1785 = vmul.f32 %v1749, %v1774
          %v1786 = vmul.f32 %v1750, %v1774
          %v1787 = vmul.f32 %v1751, %v1774
          %v1788 = vmul.f32 %v1752, %v1774
          %v1789 = vmul.f32 %v1753, %v1774
          %v1790 = vmul.f32 %v1754, %v1774
          %v1791 = vmul.f32 %v1755, %v1774
          %v1792 = vmul.f32 %v1756, %v1774
          %v1793 = vmul.f32 %v1757, %v1774
          %v1794 = vmul.f32 %v1758, %v1774
          %v1795 = vmul.f32 %v1759, %v1774
          %v1796 = vmul.f32 %v1760, %v1774
          %v1797 = vmul.f32 %v1761, %v1774
          %v1798 = vmul.f32 %v1762, %v1774
          %v1799 = vmul.f32 %v1763, %v1774
          %v1800 = vmul.f32 %v1764, %v1774
          %v1801 = vmul.f32 %v1765, %v1774
          %v1802 = vmul.f32 %v1766, %v1774
          %v1803 = vmul.f32 %v1767, %v1774
          %v1804 = vmul.f32 %v1768, %v1774
          %v1805 = vmul.f32 %v1769, %v1774
          %v1806 = vmul.f32 %v1770, %v1774
          %v1807 = vmul.f32 %v1771, %v1774
          %v1808 = vld [vmem:[%s3] sm:$0x1]
          %v1810 = vperm.slane %v1808, 0
          %v1812 = vadd.f32 %v1776, %v1810
          %v1813 = vadd.f32 %v1777, %v1810
          %v1814 = vadd.f32 %v1778, %v1810
          %v1815 = vadd.f32 %v1779, %v1810
          %v1816 = vadd.f32 %v1780, %v1810
          %v1817 = vadd.f32 %v1781, %v1810
          %v1818 = vadd.f32 %v1782, %v1810
          %v1819 = vadd.f32 %v1783, %v1810
          %v1820 = vadd.f32 %v1784, %v1810
          %v1821 = vadd.f32 %v1785, %v1810
          %v1822 = vadd.f32 %v1786, %v1810
          %v1823 = vadd.f32 %v1787, %v1810
          %v1824 = vadd.f32 %v1788, %v1810
          %v1825 = vadd.f32 %v1789, %v1810
          %v1826 = vadd.f32 %v1790, %v1810
          %v1827 = vadd.f32 %v1791, %v1810
          %v1828 = vadd.f32 %v1792, %v1810
          %v1829 = vadd.f32 %v1793, %v1810
          %v1830 = vadd.f32 %v1794, %v1810
          %v1831 = vadd.f32 %v1795, %v1810
          %v1832 = vadd.f32 %v1796, %v1810
          %v1833 = vadd.f32 %v1797, %v1810
          %v1834 = vadd.f32 %v1798, %v1810
          %v1835 = vadd.f32 %v1799, %v1810
          %v1836 = vadd.f32 %v1800, %v1810
          %v1837 = vadd.f32 %v1801, %v1810
          %v1838 = vadd.f32 %v1802, %v1810
          %v1839 = vadd.f32 %v1803, %v1810
          %v1840 = vadd.f32 %v1804, %v1810
          %v1841 = vadd.f32 %v1805, %v1810
          %v1842 = vadd.f32 %v1806, %v1810
          %v1843 = vadd.f32 %v1807, %v1810
          %vm1844 = vcmp.ge.f32.partialorder %v1812, 0.0
          %vm1845 = vcmp.ge.f32.partialorder %v1813, 0.0
          %vm1846 = vcmp.ge.f32.partialorder %v1814, 0.0
          %vm1847 = vcmp.ge.f32.partialorder %v1815, 0.0
          %vm1848 = vcmp.ge.f32.partialorder %v1816, 0.0
          %vm1849 = vcmp.ge.f32.partialorder %v1817, 0.0
          %vm1850 = vcmp.ge.f32.partialorder %v1818, 0.0
          %vm1851 = vcmp.ge.f32.partialorder %v1819, 0.0
          %vm1852 = vcmp.ge.f32.partialorder %v1820, 0.0
          %vm1853 = vcmp.ge.f32.partialorder %v1821, 0.0
          %vm1854 = vcmp.ge.f32.partialorder %v1822, 0.0
          %vm1855 = vcmp.ge.f32.partialorder %v1823, 0.0
          %vm1856 = vcmp.ge.f32.partialorder %v1824, 0.0
          %vm1857 = vcmp.ge.f32.partialorder %v1825, 0.0
          %vm1858 = vcmp.ge.f32.partialorder %v1826, 0.0
          %vm1859 = vcmp.ge.f32.partialorder %v1827, 0.0
          %vm1860 = vcmp.ge.f32.partialorder %v1828, 0.0
          %vm1861 = vcmp.ge.f32.partialorder %v1829, 0.0
          %vm1862 = vcmp.ge.f32.partialorder %v1830, 0.0
          %vm1863 = vcmp.ge.f32.partialorder %v1831, 0.0
          %vm1864 = vcmp.ge.f32.partialorder %v1832, 0.0
          %vm1865 = vcmp.ge.f32.partialorder %v1833, 0.0
          %vm1866 = vcmp.ge.f32.partialorder %v1834, 0.0
          %vm1867 = vcmp.ge.f32.partialorder %v1835, 0.0
          %vm1868 = vcmp.ge.f32.partialorder %v1836, 0.0
          %vm1869 = vcmp.ge.f32.partialorder %v1837, 0.0
          %vm1870 = vcmp.ge.f32.partialorder %v1838, 0.0
          %vm1871 = vcmp.ge.f32.partialorder %v1839, 0.0
          %vm1872 = vcmp.ge.f32.partialorder %v1840, 0.0
          %vm1873 = vcmp.ge.f32.partialorder %v1841, 0.0
          %vm1874 = vcmp.ge.f32.partialorder %v1842, 0.0
          %vm1875 = vcmp.ge.f32.partialorder %v1843, 0.0
          %v1876 = vmul.f32 %v1812, 0.2
          %v1877 = vmul.f32 %v1813, 0.2
          %v1878 = vmul.f32 %v1814, 0.2
          %v1879 = vmul.f32 %v1815, 0.2
          %v1880 = vmul.f32 %v1816, 0.2
          %v1881 = vmul.f32 %v1817, 0.2
          %v1882 = vmul.f32 %v1818, 0.2
          %v1883 = vmul.f32 %v1819, 0.2
          %v1884 = vmul.f32 %v1820, 0.2
          %v1885 = vmul.f32 %v1821, 0.2
          %v1886 = vmul.f32 %v1822, 0.2
          %v1887 = vmul.f32 %v1823, 0.2
          %v1888 = vmul.f32 %v1824, 0.2
          %v1889 = vmul.f32 %v1825, 0.2
          %v1890 = vmul.f32 %v1826, 0.2
          %v1891 = vmul.f32 %v1827, 0.2
          %v1892 = vmul.f32 %v1828, 0.2
          %v1893 = vmul.f32 %v1829, 0.2
          %v1894 = vmul.f32 %v1830, 0.2
          %v1895 = vmul.f32 %v1831, 0.2
          %v1896 = vmul.f32 %v1832, 0.2
          %v1897 = vmul.f32 %v1833, 0.2
          %v1898 = vmul.f32 %v1834, 0.2
          %v1899 = vmul.f32 %v1835, 0.2
          %v1900 = vmul.f32 %v1836, 0.2
          %v1901 = vmul.f32 %v1837, 0.2
          %v1902 = vmul.f32 %v1838, 0.2
          %v1903 = vmul.f32 %v1839, 0.2
          %v1904 = vmul.f32 %v1840, 0.2
          %v1905 = vmul.f32 %v1841, 0.2
          %v1906 = vmul.f32 %v1842, 0.2
          %v1907 = vmul.f32 %v1843, 0.2
          %v1908 = vsel %vm1844, %v1812, %v1876
          %v1909 = vsel %vm1845, %v1813, %v1877
          %v1910 = vsel %vm1846, %v1814, %v1878
          %v1911 = vsel %vm1847, %v1815, %v1879
          %v1912 = vsel %vm1848, %v1816, %v1880
          %v1913 = vsel %vm1849, %v1817, %v1881
          %v1914 = vsel %vm1850, %v1818, %v1882
          %v1915 = vsel %vm1851, %v1819, %v1883
          %v1916 = vsel %vm1852, %v1820, %v1884
          %v1917 = vsel %vm1853, %v1821, %v1885
          %v1918 = vsel %vm1854, %v1822, %v1886
          %v1919 = vsel %vm1855, %v1823, %v1887
          %v1920 = vsel %vm1856, %v1824, %v1888
          %v1921 = vsel %vm1857, %v1825, %v1889
          %v1922 = vsel %vm1858, %v1826, %v1890
          %v1923 = vsel %vm1859, %v1827, %v1891
          %v1924 = vsel %vm1860, %v1828, %v1892
          %v1925 = vsel %vm1861, %v1829, %v1893
          %v1926 = vsel %vm1862, %v1830, %v1894
          %v1927 = vsel %vm1863, %v1831, %v1895
          %v1928 = vsel %vm1864, %v1832, %v1896
          %v1929 = vsel %vm1865, %v1833, %v1897
          %v1930 = vsel %vm1866, %v1834, %v1898
          %v1931 = vsel %vm1867, %v1835, %v1899
          %v1932 = vsel %vm1868, %v1836, %v1900
          %v1933 = vsel %vm1869, %v1837, %v1901
          %v1934 = vsel %vm1870, %v1838, %v1902
          %v1935 = vsel %vm1871, %v1839, %v1903
          %v1936 = vsel %vm1872, %v1840, %v1904
          %v1937 = vsel %vm1873, %v1841, %v1905
          %v1938 = vsel %vm1874, %v1842, %v1906
          %v1939 = vsel %vm1875, %v1843, %v1907
          %v1940 = vpack.c.bf16 %v1908, %v1908
          %v1941 = vpack.c.bf16 %v1909, %v1909
          %v1942 = vpack.c.bf16 %v1910, %v1910
          %v1943 = vpack.c.bf16 %v1911, %v1911
          %v1944 = vpack.c.bf16 %v1912, %v1912
          %v1945 = vpack.c.bf16 %v1913, %v1913
          %v1946 = vpack.c.bf16 %v1914, %v1914
          %v1947 = vpack.c.bf16 %v1915, %v1915
          %v1948 = vpack.c.bf16 %v1916, %v1916
          %v1949 = vpack.c.bf16 %v1917, %v1917
          %v1950 = vpack.c.bf16 %v1918, %v1918
          %v1951 = vpack.c.bf16 %v1919, %v1919
          %v1952 = vpack.c.bf16 %v1920, %v1920
          %v1953 = vpack.c.bf16 %v1921, %v1921
          %v1954 = vpack.c.bf16 %v1922, %v1922
          %v1955 = vpack.c.bf16 %v1923, %v1923
          %v1956 = vpack.c.bf16 %v1924, %v1924
          %v1957 = vpack.c.bf16 %v1925, %v1925
          %v1958 = vpack.c.bf16 %v1926, %v1926
          %v1959 = vpack.c.bf16 %v1927, %v1927
          %v1960 = vpack.c.bf16 %v1928, %v1928
          %v1961 = vpack.c.bf16 %v1929, %v1929
          %v1962 = vpack.c.bf16 %v1930, %v1930
          %v1963 = vpack.c.bf16 %v1931, %v1931
          %v1964 = vpack.c.bf16 %v1932, %v1932
          %v1965 = vpack.c.bf16 %v1933, %v1933
          %v1966 = vpack.c.bf16 %v1934, %v1934
          %v1967 = vpack.c.bf16 %v1935, %v1935
          %v1968 = vpack.c.bf16 %v1936, %v1936
          %v1969 = vpack.c.bf16 %v1937, %v1937
          %v1970 = vpack.c.bf16 %v1938, %v1938
          %v1971 = vpack.c.bf16 %v1939, %v1939
          %vm1972 = vcmask 257024
          %1973 = vst.msk [vmem:[%s4] sm:$0xf] %vm1972, %v1940
          %1974 = vst.msk [vmem:[%s4 + $0x4] sm:$0xf] %vm1972, %v1941
          %1975 = vst.msk [vmem:[%s4 + $0x8] sm:$0xf] %vm1972, %v1942
          %1976 = vst.msk [vmem:[%s4 + $0xc] sm:$0xf] %vm1972, %v1943
          %1977 = vst.msk [vmem:[%s4 + $0x10] sm:$0xf] %vm1972, %v1944
          %1978 = vst.msk [vmem:[%s4 + $0x14] sm:$0xf] %vm1972, %v1945
          %1979 = vst.msk [vmem:[%s4 + $0x18] sm:$0xf] %vm1972, %v1946
          %1980 = vst.msk [vmem:[%s4 + $0x1c] sm:$0xf] %vm1972, %v1947
          %1981 = vst.msk [vmem:[%s4 + $0x20] sm:$0xf] %vm1972, %v1948
          %1982 = vst.msk [vmem:[%s4 + $0x24] sm:$0xf] %vm1972, %v1949
          %1983 = vst.msk [vmem:[%s4 + $0x28] sm:$0xf] %vm1972, %v1950
          %1984 = vst.msk [vmem:[%s4 + $0x2c] sm:$0xf] %vm1972, %v1951
          %1985 = vst.msk [vmem:[%s4 + $0x30] sm:$0xf] %vm1972, %v1952
          %1986 = vst.msk [vmem:[%s4 + $0x34] sm:$0xf] %vm1972, %v1953
          %1987 = vst.msk [vmem:[%s4 + $0x38] sm:$0xf] %vm1972, %v1954
          %1988 = vst.msk [vmem:[%s4 + $0x3c] sm:$0xf] %vm1972, %v1955
          %1989 = vst.msk [vmem:[%s4 + $0x40] sm:$0xf] %vm1972, %v1956
          %1990 = vst.msk [vmem:[%s4 + $0x44] sm:$0xf] %vm1972, %v1957
          %1991 = vst.msk [vmem:[%s4 + $0x48] sm:$0xf] %vm1972, %v1958
          %1992 = vst.msk [vmem:[%s4 + $0x4c] sm:$0xf] %vm1972, %v1959
          %1993 = vst.msk [vmem:[%s4 + $0x50] sm:$0xf] %vm1972, %v1960
          %1994 = vst.msk [vmem:[%s4 + $0x54] sm:$0xf] %vm1972, %v1961
          %1995 = vst.msk [vmem:[%s4 + $0x58] sm:$0xf] %vm1972, %v1962
          %1996 = vst.msk [vmem:[%s4 + $0x5c] sm:$0xf] %vm1972, %v1963
          %1997 = vst.msk [vmem:[%s4 + $0x60] sm:$0xf] %vm1972, %v1964
          %1998 = vst.msk [vmem:[%s4 + $0x64] sm:$0xf] %vm1972, %v1965
          %1999 = vst.msk [vmem:[%s4 + $0x68] sm:$0xf] %vm1972, %v1966
          %2000 = vst.msk [vmem:[%s4 + $0x6c] sm:$0xf] %vm1972, %v1967
          %2001 = vst.msk [vmem:[%s4 + $0x70] sm:$0xf] %vm1972, %v1968
          %2002 = vst.msk [vmem:[%s4 + $0x74] sm:$0xf] %vm1972, %v1969
          %2003 = vst.msk [vmem:[%s4 + $0x78] sm:$0xf] %vm1972, %v1970
          %2004 = vst.msk [vmem:[%s4 + $0x7c] sm:$0xf] %vm1972, %v1971
        $region67: #{discriminator_forward.4} parent=54 // pred_fallthru
          _
        // Predicated region
        $region68: #{discriminator_forward.4} parent=54 // pred_check
          %p2005 = pneg %p122
        $region69: #{discriminator_forward.4} parent=54 // pred_check_branch
          %2007 = sbr.rel (%p2005) target = $region71
        $region70: #{discriminator_forward.4} parent=54 // pred_region
          _
        $region71: #{discriminator_forward.4} parent=54 // pred_fallthru
          _
        // Predicated region
        $region72: #{discriminator_forward.4} parent=54 // pred_check
          %p2008 = pneg %p122
        $region73: #{discriminator_forward.4} parent=54 // pred_check_branch
          %2010 = sbr.rel (%p2008) target = $region75
        $region74: #{discriminator_forward.4} parent=54 // pred_region
          _
        $region75: #{discriminator_forward.4} parent=54 // pred_fallthru
          _
      $region55: #{discriminator_forward.4} parent=5 // pred_fallthru
        _
      %p2011 = scmp.le.s32.totalorder 2, %s10
      // Predicated region
      $region76: #{discriminator_forward.4} parent=5 // pred_check
        %p2012 = pneg %p2011
      $region77: #{discriminator_forward.4} parent=5 // pred_check_branch
        %2014 = sbr.rel (%p2012) target = $region79
      $region78: #{discriminator_forward.4} parent=5 // pred_region
        %s2015 = ssub.s32 %s10, 2
      $region79: #{discriminator_forward.4} parent=5 // pred_fallthru
        _
    $region6: #{discriminator_forward.4} parent=1 // loop_footer
      %s14 = sadd.s32 1, %s10
    $region7: #{discriminator_forward.4} parent=1 // loop_footer_branch
      %9 = sbr.rel target = $region3
    $region8: #{discriminator_forward.4} parent=1 // loop_exit
      _

// kernel: discriminator_forward.5
$region0: #{discriminator_forward.5}
  #allocation0 [shape = 'u32[]', space=smem, size = 0x4, offset = 0x4, fixed_abs, tag = 'smem constant byte address 0x4 - core index']
  #allocation1 [shape = 'u32[72,128]{1,0:T(1,128)}', space=vmem, size = 0x9000, scoped, tag = 'internal scratch']
  #allocation2 [shape = 'f32[4,512]{1,0:T(4,128)}', space=vmem, size = 0x2000, scoped, tag = 'scratch operand']
  #allocation3 [shape = 'bf16[4,512]{1,0:T(4,128)(2,1)}', space=vmem, size = 0x1000, scoped, tag = 'scratch operand']
  #allocation4 [shape = 'f32[1,1]{1,0:T(1,128)S(1)}', space=vmem, size = 0x200, scoped, tag = 'scoped memory for discriminator_forward.5']
  %s0 = inlined_call_operand.vmem [shape: bf16[32,2048], index: 0, kind: input, shape index: {}]
  %s1 = inlined_call_operand.vmem [shape: bf16[2048,64], index: 1, kind: input, shape index: {}]
  %s2 = inlined_call_operand.vmem [shape: f32[1,64], index: 2, kind: input, shape index: {}]
  %s3 = inlined_call_operand.vmem [shape: f32[1,64], index: 3, kind: input, shape index: {}]
  %s4 = inlined_call_operand.vmem [shape: bf16[512,128], index: 4, kind: input, shape index: {}]
  %s5 = inlined_call_operand.vmem [shape: f32[1,128], index: 5, kind: input, shape index: {}]
  %s6 = inlined_call_operand.vmem [shape: f32[1,128], index: 6, kind: input, shape index: {}]
  %s7 = inlined_call_operand.vmem [shape: f32[1,128], index: 7, kind: input, shape index: {}]
  %s8 = inlined_call_operand.<no memory space> [shape: f32[1,1], index: 8, kind: input, shape index: {}]
  %s9 = inlined_call_operand.vmem [shape: f32[4,1], index: 9, kind: output, shape index: {}]
  %s10 = sld [smem:[#allocation0]]
  $region46: #{discriminator_forward.5} parent=0
    _
  %s12 = ssub.s32 1, %s10
  %s13 = scalar_select 0, %s12, %s10
  %v14 = vstv %s8
  %15 = vst [vmem:[#allocation4] sm:$0x1] %v14
  // Predicated region
  $region2: #{discriminator_forward.5} parent=0 // pred_check
    _
  $region3: #{discriminator_forward.5} parent=0 // pred_check_branch
    %17 = sbr.rel (0) target = $region5
  $region4: #{discriminator_forward.5} parent=0 // pred_region
    _
  $region5: #{discriminator_forward.5} parent=0 // pred_fallthru
    _
  // Predicated region
  $region6: #{discriminator_forward.5} parent=0 // pred_check
    _
  $region7: #{discriminator_forward.5} parent=0 // pred_check_branch
    %19 = sbr.rel (0) target = $region9
  $region8: #{discriminator_forward.5} parent=0 // pred_region
    _
  $region9: #{discriminator_forward.5} parent=0 // pred_fallthru
    _
  // Predicated region
  $region10: #{discriminator_forward.5} parent=0 // pred_check
    _
  $region11: #{discriminator_forward.5} parent=0 // pred_check_branch
    %21 = sbr.rel (0) target = $region13
  $region12: #{discriminator_forward.5} parent=0 // pred_region
    _
  $region13: #{discriminator_forward.5} parent=0 // pred_fallthru
    _
  // Predicated region
  $region14: #{discriminator_forward.5} parent=0 // pred_check
    _
  $region15: #{discriminator_forward.5} parent=0 // pred_check_branch
    %23 = sbr.rel (0) target = $region17
  $region16: #{discriminator_forward.5} parent=0 // pred_region
    _
  $region17: #{discriminator_forward.5} parent=0 // pred_fallthru
    _
  // Predicated region
  $region18: #{discriminator_forward.5} parent=0 // pred_check
    _
  $region19: #{discriminator_forward.5} parent=0 // pred_check_branch
    %25 = sbr.rel (0) target = $region21
  $region20: #{discriminator_forward.5} parent=0 // pred_region
    _
  $region21: #{discriminator_forward.5} parent=0 // pred_fallthru
    _
  // Predicated region
  $region22: #{discriminator_forward.5} parent=0 // pred_check
    _
  $region23: #{discriminator_forward.5} parent=0 // pred_check_branch
    %27 = sbr.rel (0) target = $region25
  $region24: #{discriminator_forward.5} parent=0 // pred_region
    _
  $region25: #{discriminator_forward.5} parent=0 // pred_fallthru
    _
  // Predicated region
  $region26: #{discriminator_forward.5} parent=0 // pred_check
    _
  $region27: #{discriminator_forward.5} parent=0 // pred_check_branch
    %29 = sbr.rel (0) target = $region29
  $region28: #{discriminator_forward.5} parent=0 // pred_region
    _
  $region29: #{discriminator_forward.5} parent=0 // pred_fallthru
    _
  // Predicated region
  $region30: #{discriminator_forward.5} parent=0 // pred_check
    _
  $region31: #{discriminator_forward.5} parent=0 // pred_check_branch
    %31 = sbr.rel (0) target = $region33
  $region32: #{discriminator_forward.5} parent=0 // pred_region
    _
  $region33: #{discriminator_forward.5} parent=0 // pred_fallthru
    _
  // Predicated region
  $region34: #{discriminator_forward.5} parent=0 // pred_check
    _
  $region35: #{discriminator_forward.5} parent=0 // pred_check_branch
    %33 = sbr.rel (0) target = $region37
  $region36: #{discriminator_forward.5} parent=0 // pred_region
    _
  $region37: #{discriminator_forward.5} parent=0 // pred_fallthru
    _
  %v34 = vld [vmem:[%s0] sm:$0x33]
  %v35 = vld [vmem:[%s0 + $0x8] sm:$0x33]
  %v36 = vld [vmem:[%s0 + $0x10] sm:$0x33]
  %v37 = vld [vmem:[%s0 + $0x18] sm:$0x33]
  %v38 = vld [vmem:[%s0 + $0x20] sm:$0x33]
  %v39 = vld [vmem:[%s0 + $0x28] sm:$0x33]
  %v40 = vld [vmem:[%s0 + $0x30] sm:$0x33]
  %v41 = vld [vmem:[%s0 + $0x38] sm:$0x33]
  %v42 = vld [vmem:[%s1] sm:$0xf]
  %v43 = vld [vmem:[%s1 + $0x4] sm:$0xf]
  %v44 = vld [vmem:[%s1 + $0x8] sm:$0xf]
  %v45 = vld [vmem:[%s1 + $0xc] sm:$0xf]
  %v46 = vld [vmem:[%s1 + $0x10] sm:$0xf]
  %v47 = vld [vmem:[%s1 + $0x14] sm:$0xf]
  %v48 = vld [vmem:[%s1 + $0x18] sm:$0xf]
  %v49 = vld [vmem:[%s1 + $0x1c] sm:$0xf]
  %v50 = vld [vmem:[%s1 + $0x20] sm:$0xf]
  %v51 = vld [vmem:[%s1 + $0x24] sm:$0xf]
  %v52 = vld [vmem:[%s1 + $0x28] sm:$0xf]
  %v53 = vld [vmem:[%s1 + $0x2c] sm:$0xf]
  %v54 = vld [vmem:[%s1 + $0x30] sm:$0xf]
  %v55 = vld [vmem:[%s1 + $0x34] sm:$0xf]
  %v56 = vld [vmem:[%s1 + $0x38] sm:$0xf]
  %v57 = vld [vmem:[%s1 + $0x3c] sm:$0xf]
  %v58 = vld [vmem:[%s1 + $0x40] sm:$0xf]
  %v59 = vld [vmem:[%s1 + $0x44] sm:$0xf]
  %v60 = vld [vmem:[%s1 + $0x48] sm:$0xf]
  %v61 = vld [vmem:[%s1 + $0x4c] sm:$0xf]
  %v62 = vld [vmem:[%s1 + $0x50] sm:$0xf]
  %v63 = vld [vmem:[%s1 + $0x54] sm:$0xf]
  %v64 = vld [vmem:[%s1 + $0x58] sm:$0xf]
  %v65 = vld [vmem:[%s1 + $0x5c] sm:$0xf]
  %v66 = vld [vmem:[%s1 + $0x60] sm:$0xf]
  %v67 = vld [vmem:[%s1 + $0x64] sm:$0xf]
  %v68 = vld [vmem:[%s1 + $0x68] sm:$0xf]
  %v69 = vld [vmem:[%s1 + $0x6c] sm:$0xf]
  %v70 = vld [vmem:[%s1 + $0x70] sm:$0xf]
  %v71 = vld [vmem:[%s1 + $0x74] sm:$0xf]
  %v72 = vld [vmem:[%s1 + $0x78] sm:$0xf]
  %v73 = vld [vmem:[%s1 + $0x7c] sm:$0xf]
  %v74 = vld [vmem:[%s1 + $0x80] sm:$0xf]
  %v75 = vld [vmem:[%s1 + $0x84] sm:$0xf]
  %v76 = vld [vmem:[%s1 + $0x88] sm:$0xf]
  %v77 = vld [vmem:[%s1 + $0x8c] sm:$0xf]
  %v78 = vld [vmem:[%s1 + $0x90] sm:$0xf]
  %v79 = vld [vmem:[%s1 + $0x94] sm:$0xf]
  %v80 = vld [vmem:[%s1 + $0x98] sm:$0xf]
  %v81 = vld [vmem:[%s1 + $0x9c] sm:$0xf]
  %v82 = vld [vmem:[%s1 + $0xa0] sm:$0xf]
  %v83 = vld [vmem:[%s1 + $0xa4] sm:$0xf]
  %v84 = vld [vmem:[%s1 + $0xa8] sm:$0xf]
  %v85 = vld [vmem:[%s1 + $0xac] sm:$0xf]
  %v86 = vld [vmem:[%s1 + $0xb0] sm:$0xf]
  %v87 = vld [vmem:[%s1 + $0xb4] sm:$0xf]
  %v88 = vld [vmem:[%s1 + $0xb8] sm:$0xf]
  %v89 = vld [vmem:[%s1 + $0xbc] sm:$0xf]
  %v90 = vld [vmem:[%s1 + $0xc0] sm:$0xf]
  %v91 = vld [vmem:[%s1 + $0xc4] sm:$0xf]
  %v92 = vld [vmem:[%s1 + $0xc8] sm:$0xf]
  %v93 = vld [vmem:[%s1 + $0xcc] sm:$0xf]
  %v94 = vld [vmem:[%s1 + $0xd0] sm:$0xf]
  %v95 = vld [vmem:[%s1 + $0xd4] sm:$0xf]
  %v96 = vld [vmem:[%s1 + $0xd8] sm:$0xf]
  %v97 = vld [vmem:[%s1 + $0xdc] sm:$0xf]
  %v98 = vld [vmem:[%s1 + $0xe0] sm:$0xf]
  %v99 = vld [vmem:[%s1 + $0xe4] sm:$0xf]
  %v100 = vld [vmem:[%s1 + $0xe8] sm:$0xf]
  %v101 = vld [vmem:[%s1 + $0xec] sm:$0xf]
  %v102 = vld [vmem:[%s1 + $0xf0] sm:$0xf]
  %v103 = vld [vmem:[%s1 + $0xf4] sm:$0xf]
  %v104 = vld [vmem:[%s1 + $0xf8] sm:$0xf]
  %v105 = vld [vmem:[%s1 + $0xfc] sm:$0xf]
  %v106 = vld [vmem:[%s1 + $0x100] sm:$0xf]
  %v107 = vld [vmem:[%s1 + $0x104] sm:$0xf]
  %v108 = vld [vmem:[%s1 + $0x108] sm:$0xf]
  %v109 = vld [vmem:[%s1 + $0x10c] sm:$0xf]
  %v110 = vld [vmem:[%s1 + $0x110] sm:$0xf]
  %v111 = vld [vmem:[%s1 + $0x114] sm:$0xf]
  %v112 = vld [vmem:[%s1 + $0x118] sm:$0xf]
  %v113 = vld [vmem:[%s1 + $0x11c] sm:$0xf]
  %v114 = vld [vmem:[%s1 + $0x120] sm:$0xf]
  %v115 = vld [vmem:[%s1 + $0x124] sm:$0xf]
  %v116 = vld [vmem:[%s1 + $0x128] sm:$0xf]
  %v117 = vld [vmem:[%s1 + $0x12c] sm:$0xf]
  %v118 = vld [vmem:[%s1 + $0x130] sm:$0xf]
  %v119 = vld [vmem:[%s1 + $0x134] sm:$0xf]
  %v120 = vld [vmem:[%s1 + $0x138] sm:$0xf]
  %v121 = vld [vmem:[%s1 + $0x13c] sm:$0xf]
  %v122 = vld [vmem:[%s1 + $0x140] sm:$0xf]
  %v123 = vld [vmem:[%s1 + $0x144] sm:$0xf]
  %v124 = vld [vmem:[%s1 + $0x148] sm:$0xf]
  %v125 = vld [vmem:[%s1 + $0x14c] sm:$0xf]
  %v126 = vld [vmem:[%s1 + $0x150] sm:$0xf]
  %v127 = vld [vmem:[%s1 + $0x154] sm:$0xf]
  %v128 = vld [vmem:[%s1 + $0x158] sm:$0xf]
  %v129 = vld [vmem:[%s1 + $0x15c] sm:$0xf]
  %v130 = vld [vmem:[%s1 + $0x160] sm:$0xf]
  %v131 = vld [vmem:[%s1 + $0x164] sm:$0xf]
  %v132 = vld [vmem:[%s1 + $0x168] sm:$0xf]
  %v133 = vld [vmem:[%s1 + $0x16c] sm:$0xf]
  %v134 = vld [vmem:[%s1 + $0x170] sm:$0xf]
  %v135 = vld [vmem:[%s1 + $0x174] sm:$0xf]
  %v136 = vld [vmem:[%s1 + $0x178] sm:$0xf]
  %v137 = vld [vmem:[%s1 + $0x17c] sm:$0xf]
  %v138 = vld [vmem:[%s1 + $0x180] sm:$0xf]
  %v139 = vld [vmem:[%s1 + $0x184] sm:$0xf]
  %v140 = vld [vmem:[%s1 + $0x188] sm:$0xf]
  %v141 = vld [vmem:[%s1 + $0x18c] sm:$0xf]
  %v142 = vld [vmem:[%s1 + $0x190] sm:$0xf]
  %v143 = vld [vmem:[%s1 + $0x194] sm:$0xf]
  %v144 = vld [vmem:[%s1 + $0x198] sm:$0xf]
  %v145 = vld [vmem:[%s1 + $0x19c] sm:$0xf]
  %v146 = vld [vmem:[%s1 + $0x1a0] sm:$0xf]
  %v147 = vld [vmem:[%s1 + $0x1a4] sm:$0xf]
  %v148 = vld [vmem:[%s1 + $0x1a8] sm:$0xf]
  %v149 = vld [vmem:[%s1 + $0x1ac] sm:$0xf]
  %v150 = vld [vmem:[%s1 + $0x1b0] sm:$0xf]
  %v151 = vld [vmem:[%s1 + $0x1b4] sm:$0xf]
  %v152 = vld [vmem:[%s1 + $0x1b8] sm:$0xf]
  %v153 = vld [vmem:[%s1 + $0x1bc] sm:$0xf]
  %v154 = vld [vmem:[%s1 + $0x1c0] sm:$0xf]
  %v155 = vld [vmem:[%s1 + $0x1c4] sm:$0xf]
  %v156 = vld [vmem:[%s1 + $0x1c8] sm:$0xf]
  %v157 = vld [vmem:[%s1 + $0x1cc] sm:$0xf]
  %v158 = vld [vmem:[%s1 + $0x1d0] sm:$0xf]
  %v159 = vld [vmem:[%s1 + $0x1d4] sm:$0xf]
  %v160 = vld [vmem:[%s1 + $0x1d8] sm:$0xf]
  %v161 = vld [vmem:[%s1 + $0x1dc] sm:$0xf]
  %v162 = vld [vmem:[%s1 + $0x1e0] sm:$0xf]
  %v163 = vld [vmem:[%s1 + $0x1e4] sm:$0xf]
  %v164 = vld [vmem:[%s1 + $0x1e8] sm:$0xf]
  %v165 = vld [vmem:[%s1 + $0x1ec] sm:$0xf]
  %v166 = vld [vmem:[%s1 + $0x1f0] sm:$0xf]
  %v167 = vld [vmem:[%s1 + $0x1f4] sm:$0xf]
  %v168 = vld [vmem:[%s1 + $0x1f8] sm:$0xf]
  %v169 = vld [vmem:[%s1 + $0x1fc] sm:$0xf]
  %v170 = vld [vmem:[%s1 + $0x200] sm:$0xf]
  %v171 = vld [vmem:[%s1 + $0x204] sm:$0xf]
  %v172 = vld [vmem:[%s1 + $0x208] sm:$0xf]
  %v173 = vld [vmem:[%s1 + $0x20c] sm:$0xf]
  %v174 = vld [vmem:[%s1 + $0x210] sm:$0xf]
  %v175 = vld [vmem:[%s1 + $0x214] sm:$0xf]
  %v176 = vld [vmem:[%s1 + $0x218] sm:$0xf]
  %v177 = vld [vmem:[%s1 + $0x21c] sm:$0xf]
  %v178 = vld [vmem:[%s1 + $0x220] sm:$0xf]
  %v179 = vld [vmem:[%s1 + $0x224] sm:$0xf]
  %v180 = vld [vmem:[%s1 + $0x228] sm:$0xf]
  %v181 = vld [vmem:[%s1 + $0x22c] sm:$0xf]
  %v182 = vld [vmem:[%s1 + $0x230] sm:$0xf]
  %v183 = vld [vmem:[%s1 + $0x234] sm:$0xf]
  %v184 = vld [vmem:[%s1 + $0x238] sm:$0xf]
  %v185 = vld [vmem:[%s1 + $0x23c] sm:$0xf]
  %v186 = vld [vmem:[%s1 + $0x240] sm:$0xf]
  %v187 = vld [vmem:[%s1 + $0x244] sm:$0xf]
  %v188 = vld [vmem:[%s1 + $0x248] sm:$0xf]
  %v189 = vld [vmem:[%s1 + $0x24c] sm:$0xf]
  %v190 = vld [vmem:[%s1 + $0x250] sm:$0xf]
  %v191 = vld [vmem:[%s1 + $0x254] sm:$0xf]
  %v192 = vld [vmem:[%s1 + $0x258] sm:$0xf]
  %v193 = vld [vmem:[%s1 + $0x25c] sm:$0xf]
  %v194 = vld [vmem:[%s1 + $0x260] sm:$0xf]
  %v195 = vld [vmem:[%s1 + $0x264] sm:$0xf]
  %v196 = vld [vmem:[%s1 + $0x268] sm:$0xf]
  %v197 = vld [vmem:[%s1 + $0x26c] sm:$0xf]
  %v198 = vld [vmem:[%s1 + $0x270] sm:$0xf]
  %v199 = vld [vmem:[%s1 + $0x274] sm:$0xf]
  %v200 = vld [vmem:[%s1 + $0x278] sm:$0xf]
  %v201 = vld [vmem:[%s1 + $0x27c] sm:$0xf]
  %v202 = vld [vmem:[%s1 + $0x280] sm:$0xf]
  %v203 = vld [vmem:[%s1 + $0x284] sm:$0xf]
  %v204 = vld [vmem:[%s1 + $0x288] sm:$0xf]
  %v205 = vld [vmem:[%s1 + $0x28c] sm:$0xf]
  %v206 = vld [vmem:[%s1 + $0x290] sm:$0xf]
  %v207 = vld [vmem:[%s1 + $0x294] sm:$0xf]
  %v208 = vld [vmem:[%s1 + $0x298] sm:$0xf]
  %v209 = vld [vmem:[%s1 + $0x29c] sm:$0xf]
  %v210 = vld [vmem:[%s1 + $0x2a0] sm:$0xf]
  %v211 = vld [vmem:[%s1 + $0x2a4] sm:$0xf]
  %v212 = vld [vmem:[%s1 + $0x2a8] sm:$0xf]
  %v213 = vld [vmem:[%s1 + $0x2ac] sm:$0xf]
  %v214 = vld [vmem:[%s1 + $0x2b0] sm:$0xf]
  %v215 = vld [vmem:[%s1 + $0x2b4] sm:$0xf]
  %v216 = vld [vmem:[%s1 + $0x2b8] sm:$0xf]
  %v217 = vld [vmem:[%s1 + $0x2bc] sm:$0xf]
  %v218 = vld [vmem:[%s1 + $0x2c0] sm:$0xf]
  %v219 = vld [vmem:[%s1 + $0x2c4] sm:$0xf]
  %v220 = vld [vmem:[%s1 + $0x2c8] sm:$0xf]
  %v221 = vld [vmem:[%s1 + $0x2cc] sm:$0xf]
  %v222 = vld [vmem:[%s1 + $0x2d0] sm:$0xf]
  %v223 = vld [vmem:[%s1 + $0x2d4] sm:$0xf]
  %v224 = vld [vmem:[%s1 + $0x2d8] sm:$0xf]
  %v225 = vld [vmem:[%s1 + $0x2dc] sm:$0xf]
  %v226 = vld [vmem:[%s1 + $0x2e0] sm:$0xf]
  %v227 = vld [vmem:[%s1 + $0x2e4] sm:$0xf]
  %v228 = vld [vmem:[%s1 + $0x2e8] sm:$0xf]
  %v229 = vld [vmem:[%s1 + $0x2ec] sm:$0xf]
  %v230 = vld [vmem:[%s1 + $0x2f0] sm:$0xf]
  %v231 = vld [vmem:[%s1 + $0x2f4] sm:$0xf]
  %v232 = vld [vmem:[%s1 + $0x2f8] sm:$0xf]
  %v233 = vld [vmem:[%s1 + $0x2fc] sm:$0xf]
  %v234 = vld [vmem:[%s1 + $0x300] sm:$0xf]
  %v235 = vld [vmem:[%s1 + $0x304] sm:$0xf]
  %v236 = vld [vmem:[%s1 + $0x308] sm:$0xf]
  %v237 = vld [vmem:[%s1 + $0x30c] sm:$0xf]
  %v238 = vld [vmem:[%s1 + $0x310] sm:$0xf]
  %v239 = vld [vmem:[%s1 + $0x314] sm:$0xf]
  %v240 = vld [vmem:[%s1 + $0x318] sm:$0xf]
  %v241 = vld [vmem:[%s1 + $0x31c] sm:$0xf]
  %v242 = vld [vmem:[%s1 + $0x320] sm:$0xf]
  %v243 = vld [vmem:[%s1 + $0x324] sm:$0xf]
  %v244 = vld [vmem:[%s1 + $0x328] sm:$0xf]
  %v245 = vld [vmem:[%s1 + $0x32c] sm:$0xf]
  %v246 = vld [vmem:[%s1 + $0x330] sm:$0xf]
  %v247 = vld [vmem:[%s1 + $0x334] sm:$0xf]
  %v248 = vld [vmem:[%s1 + $0x338] sm:$0xf]
  %v249 = vld [vmem:[%s1 + $0x33c] sm:$0xf]
  %v250 = vld [vmem:[%s1 + $0x340] sm:$0xf]
  %v251 = vld [vmem:[%s1 + $0x344] sm:$0xf]
  %v252 = vld [vmem:[%s1 + $0x348] sm:$0xf]
  %v253 = vld [vmem:[%s1 + $0x34c] sm:$0xf]
  %v254 = vld [vmem:[%s1 + $0x350] sm:$0xf]
  %v255 = vld [vmem:[%s1 + $0x354] sm:$0xf]
  %v256 = vld [vmem:[%s1 + $0x358] sm:$0xf]
  %v257 = vld [vmem:[%s1 + $0x35c] sm:$0xf]
  %v258 = vld [vmem:[%s1 + $0x360] sm:$0xf]
  %v259 = vld [vmem:[%s1 + $0x364] sm:$0xf]
  %v260 = vld [vmem:[%s1 + $0x368] sm:$0xf]
  %v261 = vld [vmem:[%s1 + $0x36c] sm:$0xf]
  %v262 = vld [vmem:[%s1 + $0x370] sm:$0xf]
  %v263 = vld [vmem:[%s1 + $0x374] sm:$0xf]
  %v264 = vld [vmem:[%s1 + $0x378] sm:$0xf]
  %v265 = vld [vmem:[%s1 + $0x37c] sm:$0xf]
  %v266 = vld [vmem:[%s1 + $0x380] sm:$0xf]
  %v267 = vld [vmem:[%s1 + $0x384] sm:$0xf]
  %v268 = vld [vmem:[%s1 + $0x388] sm:$0xf]
  %v269 = vld [vmem:[%s1 + $0x38c] sm:$0xf]
  %v270 = vld [vmem:[%s1 + $0x390] sm:$0xf]
  %v271 = vld [vmem:[%s1 + $0x394] sm:$0xf]
  %v272 = vld [vmem:[%s1 + $0x398] sm:$0xf]
  %v273 = vld [vmem:[%s1 + $0x39c] sm:$0xf]
  %v274 = vld [vmem:[%s1 + $0x3a0] sm:$0xf]
  %v275 = vld [vmem:[%s1 + $0x3a4] sm:$0xf]
  %v276 = vld [vmem:[%s1 + $0x3a8] sm:$0xf]
  %v277 = vld [vmem:[%s1 + $0x3ac] sm:$0xf]
  %v278 = vld [vmem:[%s1 + $0x3b0] sm:$0xf]
  %v279 = vld [vmem:[%s1 + $0x3b4] sm:$0xf]
  %v280 = vld [vmem:[%s1 + $0x3b8] sm:$0xf]
  %v281 = vld [vmem:[%s1 + $0x3bc] sm:$0xf]
  %v282 = vld [vmem:[%s1 + $0x3c0] sm:$0xf]
  %v283 = vld [vmem:[%s1 + $0x3c4] sm:$0xf]
  %v284 = vld [vmem:[%s1 + $0x3c8] sm:$0xf]
  %v285 = vld [vmem:[%s1 + $0x3cc] sm:$0xf]
  %v286 = vld [vmem:[%s1 + $0x3d0] sm:$0xf]
  %v287 = vld [vmem:[%s1 + $0x3d4] sm:$0xf]
  %v288 = vld [vmem:[%s1 + $0x3d8] sm:$0xf]
  %v289 = vld [vmem:[%s1 + $0x3dc] sm:$0xf]
  %v290 = vld [vmem:[%s1 + $0x3e0] sm:$0xf]
  %v291 = vld [vmem:[%s1 + $0x3e4] sm:$0xf]
  %v292 = vld [vmem:[%s1 + $0x3e8] sm:$0xf]
  %v293 = vld [vmem:[%s1 + $0x3ec] sm:$0xf]
  %v294 = vld [vmem:[%s1 + $0x3f0] sm:$0xf]
  %v295 = vld [vmem:[%s1 + $0x3f4] sm:$0xf]
  %v296 = vld [vmem:[%s1 + $0x3f8] sm:$0xf]
  %v297 = vld [vmem:[%s1 + $0x3fc] sm:$0xf]
  %v306 = vunpack.c.l.b16 %v34
  %v307 = vunpack.c.h.b16 %v34
  %v308 = vunpack.c.l.b16 %v35
  %v309 = vunpack.c.h.b16 %v35
  %v310 = vunpack.c.l.b16 %v36
  %v311 = vunpack.c.h.b16 %v36
  %v312 = vunpack.c.l.b16 %v37
  %v313 = vunpack.c.h.b16 %v37
  %v314 = vunpack.c.l.b16 %v38
  %v315 = vunpack.c.h.b16 %v38
  %v316 = vunpack.c.l.b16 %v39
  %v317 = vunpack.c.h.b16 %v39
  %v318 = vunpack.c.l.b16 %v40
  %v319 = vunpack.c.h.b16 %v40
  %v320 = vunpack.c.l.b16 %v41
  %v321 = vunpack.c.h.b16 %v41
  %v322 = vpack.c.b16 %v306, %v306
  %v323 = vpack.c.b16 %v307, %v307
  %v324 = vpack.c.b16 %v308, %v308
  %v325 = vpack.c.b16 %v309, %v309
  %v326 = vpack.c.b16 %v310, %v310
  %v327 = vpack.c.b16 %v311, %v311
  %v328 = vpack.c.b16 %v312, %v312
  %v329 = vpack.c.b16 %v313, %v313
  %v330 = vpack.c.b16 %v314, %v314
  %v331 = vpack.c.b16 %v315, %v315
  %v332 = vpack.c.b16 %v316, %v316
  %v333 = vpack.c.b16 %v317, %v317
  %v334 = vpack.c.b16 %v318, %v318
  %v335 = vpack.c.b16 %v319, %v319
  %v336 = vpack.c.b16 %v320, %v320
  %v337 = vpack.c.b16 %v321, %v321
  %v610 = vunpack.c.l.b16 %v42
  %v611 = vunpack.c.l.b16 %v43
  %v612 = vunpack.c.l.b16 %v44
  %v613 = vunpack.c.l.b16 %v45
  %v614 = vunpack.c.l.b16 %v46
  %v615 = vunpack.c.l.b16 %v47
  %v616 = vunpack.c.l.b16 %v48
  %v617 = vunpack.c.l.b16 %v49
  %v618 = vunpack.c.l.b16 %v50
  %v619 = vunpack.c.l.b16 %v51
  %v620 = vunpack.c.l.b16 %v52
  %v621 = vunpack.c.l.b16 %v53
  %v622 = vunpack.c.l.b16 %v54
  %v623 = vunpack.c.l.b16 %v55
  %v624 = vunpack.c.l.b16 %v56
  %v625 = vunpack.c.l.b16 %v57
  %v626 = vunpack.c.l.b16 %v58
  %v627 = vunpack.c.l.b16 %v59
  %v628 = vunpack.c.l.b16 %v60
  %v629 = vunpack.c.l.b16 %v61
  %v630 = vunpack.c.l.b16 %v62
  %v631 = vunpack.c.l.b16 %v63
  %v632 = vunpack.c.l.b16 %v64
  %v633 = vunpack.c.l.b16 %v65
  %v634 = vunpack.c.l.b16 %v66
  %v635 = vunpack.c.l.b16 %v67
  %v636 = vunpack.c.l.b16 %v68
  %v637 = vunpack.c.l.b16 %v69
  %v638 = vunpack.c.l.b16 %v70
  %v639 = vunpack.c.l.b16 %v71
  %v640 = vunpack.c.l.b16 %v72
  %v641 = vunpack.c.l.b16 %v73
  %v642 = vunpack.c.l.b16 %v74
  %v643 = vunpack.c.l.b16 %v75
  %v644 = vunpack.c.l.b16 %v76
  %v645 = vunpack.c.l.b16 %v77
  %v646 = vunpack.c.l.b16 %v78
  %v647 = vunpack.c.l.b16 %v79
  %v648 = vunpack.c.l.b16 %v80
  %v649 = vunpack.c.l.b16 %v81
  %v650 = vunpack.c.l.b16 %v82
  %v651 = vunpack.c.l.b16 %v83
  %v652 = vunpack.c.l.b16 %v84
  %v653 = vunpack.c.l.b16 %v85
  %v654 = vunpack.c.l.b16 %v86
  %v655 = vunpack.c.l.b16 %v87
  %v656 = vunpack.c.l.b16 %v88
  %v657 = vunpack.c.l.b16 %v89
  %v658 = vunpack.c.l.b16 %v90
  %v659 = vunpack.c.l.b16 %v91
  %v660 = vunpack.c.l.b16 %v92
  %v661 = vunpack.c.l.b16 %v93
  %v662 = vunpack.c.l.b16 %v94
  %v663 = vunpack.c.l.b16 %v95
  %v664 = vunpack.c.l.b16 %v96
  %v665 = vunpack.c.l.b16 %v97
  %v666 = vunpack.c.l.b16 %v98
  %v667 = vunpack.c.l.b16 %v99
  %v668 = vunpack.c.l.b16 %v100
  %v669 = vunpack.c.l.b16 %v101
  %v670 = vunpack.c.l.b16 %v102
  %v671 = vunpack.c.l.b16 %v103
  %v672 = vunpack.c.l.b16 %v104
  %v673 = vunpack.c.l.b16 %v105
  %v674 = vunpack.c.l.b16 %v106
  %v675 = vunpack.c.l.b16 %v107
  %v676 = vunpack.c.l.b16 %v108
  %v677 = vunpack.c.l.b16 %v109
  %v678 = vunpack.c.l.b16 %v110
  %v679 = vunpack.c.l.b16 %v111
  %v680 = vunpack.c.l.b16 %v112
  %v681 = vunpack.c.l.b16 %v113
  %v682 = vunpack.c.l.b16 %v114
  %v683 = vunpack.c.l.b16 %v115
  %v684 = vunpack.c.l.b16 %v116
  %v685 = vunpack.c.l.b16 %v117
  %v686 = vunpack.c.l.b16 %v118
  %v687 = vunpack.c.l.b16 %v119
  %v688 = vunpack.c.l.b16 %v120
  %v689 = vunpack.c.l.b16 %v121
  %v690 = vunpack.c.l.b16 %v122
  %v691 = vunpack.c.l.b16 %v123
  %v692 = vunpack.c.l.b16 %v124
  %v693 = vunpack.c.l.b16 %v125
  %v694 = vunpack.c.l.b16 %v126
  %v695 = vunpack.c.l.b16 %v127
  %v696 = vunpack.c.l.b16 %v128
  %v697 = vunpack.c.l.b16 %v129
  %v698 = vunpack.c.l.b16 %v130
  %v699 = vunpack.c.l.b16 %v131
  %v700 = vunpack.c.l.b16 %v132
  %v701 = vunpack.c.l.b16 %v133
  %v702 = vunpack.c.l.b16 %v134
  %v703 = vunpack.c.l.b16 %v135
  %v704 = vunpack.c.l.b16 %v136
  %v705 = vunpack.c.l.b16 %v137
  %v706 = vunpack.c.l.b16 %v138
  %v707 = vunpack.c.l.b16 %v139
  %v708 = vunpack.c.l.b16 %v140
  %v709 = vunpack.c.l.b16 %v141
  %v710 = vunpack.c.l.b16 %v142
  %v711 = vunpack.c.l.b16 %v143
  %v712 = vunpack.c.l.b16 %v144
  %v713 = vunpack.c.l.b16 %v145
  %v714 = vunpack.c.l.b16 %v146
  %v715 = vunpack.c.l.b16 %v147
  %v716 = vunpack.c.l.b16 %v148
  %v717 = vunpack.c.l.b16 %v149
  %v718 = vunpack.c.l.b16 %v150
  %v719 = vunpack.c.l.b16 %v151
  %v720 = vunpack.c.l.b16 %v152
  %v721 = vunpack.c.l.b16 %v153
  %v722 = vunpack.c.l.b16 %v154
  %v723 = vunpack.c.l.b16 %v155
  %v724 = vunpack.c.l.b16 %v156
  %v725 = vunpack.c.l.b16 %v157
  %v726 = vunpack.c.l.b16 %v158
  %v727 = vunpack.c.l.b16 %v159
  %v728 = vunpack.c.l.b16 %v160
  %v729 = vunpack.c.l.b16 %v161
  %v730 = vunpack.c.l.b16 %v162
  %v731 = vunpack.c.l.b16 %v163
  %v732 = vunpack.c.l.b16 %v164
  %v733 = vunpack.c.l.b16 %v165
  %v734 = vunpack.c.l.b16 %v166
  %v735 = vunpack.c.l.b16 %v167
  %v736 = vunpack.c.l.b16 %v168
  %v737 = vunpack.c.l.b16 %v169
  %v738 = vunpack.c.l.b16 %v170
  %v739 = vunpack.c.l.b16 %v171
  %v740 = vunpack.c.l.b16 %v172
  %v741 = vunpack.c.l.b16 %v173
  %v742 = vunpack.c.l.b16 %v174
  %v743 = vunpack.c.l.b16 %v175
  %v744 = vunpack.c.l.b16 %v176
  %v745 = vunpack.c.l.b16 %v177
  %v746 = vunpack.c.l.b16 %v178
  %v747 = vunpack.c.l.b16 %v179
  %v748 = vunpack.c.l.b16 %v180
  %v749 = vunpack.c.l.b16 %v181
  %v750 = vunpack.c.l.b16 %v182
  %v751 = vunpack.c.l.b16 %v183
  %v752 = vunpack.c.l.b16 %v184
  %v753 = vunpack.c.l.b16 %v185
  %v754 = vunpack.c.l.b16 %v186
  %v755 = vunpack.c.l.b16 %v187
  %v756 = vunpack.c.l.b16 %v188
  %v757 = vunpack.c.l.b16 %v189
  %v758 = vunpack.c.l.b16 %v190
  %v759 = vunpack.c.l.b16 %v191
  %v760 = vunpack.c.l.b16 %v192
  %v761 = vunpack.c.l.b16 %v193
  %v762 = vunpack.c.l.b16 %v194
  %v763 = vunpack.c.l.b16 %v195
  %v764 = vunpack.c.l.b16 %v196
  %v765 = vunpack.c.l.b16 %v197
  %v766 = vunpack.c.l.b16 %v198
  %v767 = vunpack.c.l.b16 %v199
  %v768 = vunpack.c.l.b16 %v200
  %v769 = vunpack.c.l.b16 %v201
  %v770 = vunpack.c.l.b16 %v202
  %v771 = vunpack.c.l.b16 %v203
  %v772 = vunpack.c.l.b16 %v204
  %v773 = vunpack.c.l.b16 %v205
  %v774 = vunpack.c.l.b16 %v206
  %v775 = vunpack.c.l.b16 %v207
  %v776 = vunpack.c.l.b16 %v208
  %v777 = vunpack.c.l.b16 %v209
  %v778 = vunpack.c.l.b16 %v210
  %v779 = vunpack.c.l.b16 %v211
  %v780 = vunpack.c.l.b16 %v212
  %v781 = vunpack.c.l.b16 %v213
  %v782 = vunpack.c.l.b16 %v214
  %v783 = vunpack.c.l.b16 %v215
  %v784 = vunpack.c.l.b16 %v216
  %v785 = vunpack.c.l.b16 %v217
  %v786 = vunpack.c.l.b16 %v218
  %v787 = vunpack.c.l.b16 %v219
  %v788 = vunpack.c.l.b16 %v220
  %v789 = vunpack.c.l.b16 %v221
  %v790 = vunpack.c.l.b16 %v222
  %v791 = vunpack.c.l.b16 %v223
  %v792 = vunpack.c.l.b16 %v224
  %v793 = vunpack.c.l.b16 %v225
  %v794 = vunpack.c.l.b16 %v226
  %v795 = vunpack.c.l.b16 %v227
  %v796 = vunpack.c.l.b16 %v228
  %v797 = vunpack.c.l.b16 %v229
  %v798 = vunpack.c.l.b16 %v230
  %v799 = vunpack.c.l.b16 %v231
  %v800 = vunpack.c.l.b16 %v232
  %v801 = vunpack.c.l.b16 %v233
  %v802 = vunpack.c.l.b16 %v234
  %v803 = vunpack.c.l.b16 %v235
  %v804 = vunpack.c.l.b16 %v236
  %v805 = vunpack.c.l.b16 %v237
  %v806 = vunpack.c.l.b16 %v238
  %v807 = vunpack.c.l.b16 %v239
  %v808 = vunpack.c.l.b16 %v240
  %v809 = vunpack.c.l.b16 %v241
  %v810 = vunpack.c.l.b16 %v242
  %v811 = vunpack.c.l.b16 %v243
  %v812 = vunpack.c.l.b16 %v244
  %v813 = vunpack.c.l.b16 %v245
  %v814 = vunpack.c.l.b16 %v246
  %v815 = vunpack.c.l.b16 %v247
  %v816 = vunpack.c.l.b16 %v248
  %v817 = vunpack.c.l.b16 %v249
  %v818 = vunpack.c.l.b16 %v250
  %v819 = vunpack.c.l.b16 %v251
  %v820 = vunpack.c.l.b16 %v252
  %v821 = vunpack.c.l.b16 %v253
  %v822 = vunpack.c.l.b16 %v254
  %v823 = vunpack.c.l.b16 %v255
  %v824 = vunpack.c.l.b16 %v256
  %v825 = vunpack.c.l.b16 %v257
  %v826 = vunpack.c.l.b16 %v258
  %v827 = vunpack.c.l.b16 %v259
  %v828 = vunpack.c.l.b16 %v260
  %v829 = vunpack.c.l.b16 %v261
  %v830 = vunpack.c.l.b16 %v262
  %v831 = vunpack.c.l.b16 %v263
  %v832 = vunpack.c.l.b16 %v264
  %v833 = vunpack.c.l.b16 %v265
  %v834 = vunpack.c.l.b16 %v266
  %v835 = vunpack.c.l.b16 %v267
  %v836 = vunpack.c.l.b16 %v268
  %v837 = vunpack.c.l.b16 %v269
  %v838 = vunpack.c.l.b16 %v270
  %v839 = vunpack.c.l.b16 %v271
  %v840 = vunpack.c.l.b16 %v272
  %v841 = vunpack.c.l.b16 %v273
  %v842 = vunpack.c.l.b16 %v274
  %v843 = vunpack.c.l.b16 %v275
  %v844 = vunpack.c.l.b16 %v276
  %v845 = vunpack.c.l.b16 %v277
  %v846 = vunpack.c.l.b16 %v278
  %v847 = vunpack.c.l.b16 %v279
  %v848 = vunpack.c.l.b16 %v280
  %v849 = vunpack.c.l.b16 %v281
  %v850 = vunpack.c.l.b16 %v282
  %v851 = vunpack.c.l.b16 %v283
  %v852 = vunpack.c.l.b16 %v284
  %v853 = vunpack.c.l.b16 %v285
  %v854 = vunpack.c.l.b16 %v286
  %v855 = vunpack.c.l.b16 %v287
  %v856 = vunpack.c.l.b16 %v288
  %v857 = vunpack.c.l.b16 %v289
  %v858 = vunpack.c.l.b16 %v290
  %v859 = vunpack.c.l.b16 %v291
  %v860 = vunpack.c.l.b16 %v292
  %v861 = vunpack.c.l.b16 %v293
  %v862 = vunpack.c.l.b16 %v294
  %v863 = vunpack.c.l.b16 %v295
  %v864 = vunpack.c.l.b16 %v296
  %v865 = vunpack.c.l.b16 %v297
  %v866 = vpack.c.b16 %v611, %v610
  %v867 = vpack.c.b16 %v613, %v612
  %v868 = vpack.c.b16 %v615, %v614
  %v869 = vpack.c.b16 %v617, %v616
  %v870 = vpack.c.b16 %v619, %v618
  %v871 = vpack.c.b16 %v621, %v620
  %v872 = vpack.c.b16 %v623, %v622
  %v873 = vpack.c.b16 %v625, %v624
  %v874 = vpack.c.b16 %v627, %v626
  %v875 = vpack.c.b16 %v629, %v628
  %v876 = vpack.c.b16 %v631, %v630
  %v877 = vpack.c.b16 %v633, %v632
  %v878 = vpack.c.b16 %v635, %v634
  %v879 = vpack.c.b16 %v637, %v636
  %v880 = vpack.c.b16 %v639, %v638
  %v881 = vpack.c.b16 %v641, %v640
  %v882 = vpack.c.b16 %v643, %v642
  %v883 = vpack.c.b16 %v645, %v644
  %v884 = vpack.c.b16 %v647, %v646
  %v885 = vpack.c.b16 %v649, %v648
  %v886 = vpack.c.b16 %v651, %v650
  %v887 = vpack.c.b16 %v653, %v652
  %v888 = vpack.c.b16 %v655, %v654
  %v889 = vpack.c.b16 %v657, %v656
  %v890 = vpack.c.b16 %v659, %v658
  %v891 = vpack.c.b16 %v661, %v660
  %v892 = vpack.c.b16 %v663, %v662
  %v893 = vpack.c.b16 %v665, %v664
  %v894 = vpack.c.b16 %v667, %v666
  %v895 = vpack.c.b16 %v669, %v668
  %v896 = vpack.c.b16 %v671, %v670
  %v897 = vpack.c.b16 %v673, %v672
  %v898 = vpack.c.b16 %v675, %v674
  %v899 = vpack.c.b16 %v677, %v676
  %v900 = vpack.c.b16 %v679, %v678
  %v901 = vpack.c.b16 %v681, %v680
  %v902 = vpack.c.b16 %v683, %v682
  %v903 = vpack.c.b16 %v685, %v684
  %v904 = vpack.c.b16 %v687, %v686
  %v905 = vpack.c.b16 %v689, %v688
  %v906 = vpack.c.b16 %v691, %v690
  %v907 = vpack.c.b16 %v693, %v692
  %v908 = vpack.c.b16 %v695, %v694
  %v909 = vpack.c.b16 %v697, %v696
  %v910 = vpack.c.b16 %v699, %v698
  %v911 = vpack.c.b16 %v701, %v700
  %v912 = vpack.c.b16 %v703, %v702
  %v913 = vpack.c.b16 %v705, %v704
  %v914 = vpack.c.b16 %v707, %v706
  %v915 = vpack.c.b16 %v709, %v708
  %v916 = vpack.c.b16 %v711, %v710
  %v917 = vpack.c.b16 %v713, %v712
  %v918 = vpack.c.b16 %v715, %v714
  %v919 = vpack.c.b16 %v717, %v716
  %v920 = vpack.c.b16 %v719, %v718
  %v921 = vpack.c.b16 %v721, %v720
  %v922 = vpack.c.b16 %v723, %v722
  %v923 = vpack.c.b16 %v725, %v724
  %v924 = vpack.c.b16 %v727, %v726
  %v925 = vpack.c.b16 %v729, %v728
  %v926 = vpack.c.b16 %v731, %v730
  %v927 = vpack.c.b16 %v733, %v732
  %v928 = vpack.c.b16 %v735, %v734
  %v929 = vpack.c.b16 %v737, %v736
  %v930 = vpack.c.b16 %v739, %v738
  %v931 = vpack.c.b16 %v741, %v740
  %v932 = vpack.c.b16 %v743, %v742
  %v933 = vpack.c.b16 %v745, %v744
  %v934 = vpack.c.b16 %v747, %v746
  %v935 = vpack.c.b16 %v749, %v748
  %v936 = vpack.c.b16 %v751, %v750
  %v937 = vpack.c.b16 %v753, %v752
  %v938 = vpack.c.b16 %v755, %v754
  %v939 = vpack.c.b16 %v757, %v756
  %v940 = vpack.c.b16 %v759, %v758
  %v941 = vpack.c.b16 %v761, %v760
  %v942 = vpack.c.b16 %v763, %v762
  %v943 = vpack.c.b16 %v765, %v764
  %v944 = vpack.c.b16 %v767, %v766
  %v945 = vpack.c.b16 %v769, %v768
  %v946 = vpack.c.b16 %v771, %v770
  %v947 = vpack.c.b16 %v773, %v772
  %v948 = vpack.c.b16 %v775, %v774
  %v949 = vpack.c.b16 %v777, %v776
  %v950 = vpack.c.b16 %v779, %v778
  %v951 = vpack.c.b16 %v781, %v780
  %v952 = vpack.c.b16 %v783, %v782
  %v953 = vpack.c.b16 %v785, %v784
  %v954 = vpack.c.b16 %v787, %v786
  %v955 = vpack.c.b16 %v789, %v788
  %v956 = vpack.c.b16 %v791, %v790
  %v957 = vpack.c.b16 %v793, %v792
  %v958 = vpack.c.b16 %v795, %v794
  %v959 = vpack.c.b16 %v797, %v796
  %v960 = vpack.c.b16 %v799, %v798
  %v961 = vpack.c.b16 %v801, %v800
  %v962 = vpack.c.b16 %v803, %v802
  %v963 = vpack.c.b16 %v805, %v804
  %v964 = vpack.c.b16 %v807, %v806
  %v965 = vpack.c.b16 %v809, %v808
  %v966 = vpack.c.b16 %v811, %v810
  %v967 = vpack.c.b16 %v813, %v812
  %v968 = vpack.c.b16 %v815, %v814
  %v969 = vpack.c.b16 %v817, %v816
  %v970 = vpack.c.b16 %v819, %v818
  %v971 = vpack.c.b16 %v821, %v820
  %v972 = vpack.c.b16 %v823, %v822
  %v973 = vpack.c.b16 %v825, %v824
  %v974 = vpack.c.b16 %v827, %v826
  %v975 = vpack.c.b16 %v829, %v828
  %v976 = vpack.c.b16 %v831, %v830
  %v977 = vpack.c.b16 %v833, %v832
  %v978 = vpack.c.b16 %v835, %v834
  %v979 = vpack.c.b16 %v837, %v836
  %v980 = vpack.c.b16 %v839, %v838
  %v981 = vpack.c.b16 %v841, %v840
  %v982 = vpack.c.b16 %v843, %v842
  %v983 = vpack.c.b16 %v845, %v844
  %v984 = vpack.c.b16 %v847, %v846
  %v985 = vpack.c.b16 %v849, %v848
  %v986 = vpack.c.b16 %v851, %v850
  %v987 = vpack.c.b16 %v853, %v852
  %v988 = vpack.c.b16 %v855, %v854
  %v989 = vpack.c.b16 %v857, %v856
  %v990 = vpack.c.b16 %v859, %v858
  %v991 = vpack.c.b16 %v861, %v860
  %v992 = vpack.c.b16 %v863, %v862
  %v993 = vpack.c.b16 %v865, %v864
  %1122 = vmatpush.bf16.msra.mxu0 %v873
  %1123 = vmatpush.bf16.msra.mxu0 %v872
  %1124 = vmatpush.bf16.msra.mxu0 %v871
  %1125 = vmatpush.bf16.msra.mxu0 %v870
  %1126 = vmatpush.bf16.msra.mxu0 %v869
  %1127 = vmatpush.bf16.msra.mxu0 %v868
  %1128 = vmatpush.bf16.msra.mxu0 %v867
  %1129 = vmatpush.bf16.msra.mxu0 %v866
  %1130 = vmatmul.bf16.gmra.mxu0 %v322
  %v1131 = vpop.f32.mrf.mxu0
  %v1132 = vadd.f32 0.0, %v1131
  %v1133 = vpop.f32.mrf.mxu0
  %1134 = vdwg.mxu0
  %1135 = vmatpush.bf16.msra.mxu0 %v881
  %1136 = vmatpush.bf16.msra.mxu0 %v880
  %1137 = vmatpush.bf16.msra.mxu0 %v879
  %1138 = vmatpush.bf16.msra.mxu0 %v878
  %1139 = vmatpush.bf16.msra.mxu0 %v877
  %1140 = vmatpush.bf16.msra.mxu0 %v876
  %1141 = vmatpush.bf16.msra.mxu0 %v875
  %1142 = vmatpush.bf16.msra.mxu0 %v874
  %1143 = vmatmul.bf16.gmra.mxu0 %v323
  %v1144 = vpop.f32.mrf.mxu0
  %v1145 = vadd.f32 %v1132, %v1144
  %v1146 = vpop.f32.mrf.mxu0
  %1147 = vdwg.mxu0
  %1148 = vmatpush.bf16.msra.mxu0 %v889
  %1149 = vmatpush.bf16.msra.mxu0 %v888
  %1150 = vmatpush.bf16.msra.mxu0 %v887
  %1151 = vmatpush.bf16.msra.mxu0 %v886
  %1152 = vmatpush.bf16.msra.mxu0 %v885
  %1153 = vmatpush.bf16.msra.mxu0 %v884
  %1154 = vmatpush.bf16.msra.mxu0 %v883
  %1155 = vmatpush.bf16.msra.mxu0 %v882
  %1156 = vmatmul.bf16.gmra.mxu0 %v324
  %v1157 = vpop.f32.mrf.mxu0
  %v1158 = vadd.f32 %v1145, %v1157
  %v1159 = vpop.f32.mrf.mxu0
  %1160 = vdwg.mxu0
  %1161 = vmatpush.bf16.msra.mxu0 %v897
  %1162 = vmatpush.bf16.msra.mxu0 %v896
  %1163 = vmatpush.bf16.msra.mxu0 %v895
  %1164 = vmatpush.bf16.msra.mxu0 %v894
  %1165 = vmatpush.bf16.msra.mxu0 %v893
  %1166 = vmatpush.bf16.msra.mxu0 %v892
  %1167 = vmatpush.bf16.msra.mxu0 %v891
  %1168 = vmatpush.bf16.msra.mxu0 %v890
  %1169 = vmatmul.bf16.gmra.mxu0 %v325
  %v1170 = vpop.f32.mrf.mxu0
  %v1171 = vadd.f32 %v1158, %v1170
  %v1172 = vpop.f32.mrf.mxu0
  %1173 = vdwg.mxu0
  %1174 = vmatpush.bf16.msra.mxu0 %v905
  %1175 = vmatpush.bf16.msra.mxu0 %v904
  %1176 = vmatpush.bf16.msra.mxu0 %v903
  %1177 = vmatpush.bf16.msra.mxu0 %v902
  %1178 = vmatpush.bf16.msra.mxu0 %v901
  %1179 = vmatpush.bf16.msra.mxu0 %v900
  %1180 = vmatpush.bf16.msra.mxu0 %v899
  %1181 = vmatpush.bf16.msra.mxu0 %v898
  %1182 = vmatmul.bf16.gmra.mxu0 %v326
  %v1183 = vpop.f32.mrf.mxu0
  %v1184 = vadd.f32 %v1171, %v1183
  %v1185 = vpop.f32.mrf.mxu0
  %1186 = vdwg.mxu0
  %1187 = vmatpush.bf16.msra.mxu0 %v913
  %1188 = vmatpush.bf16.msra.mxu0 %v912
  %1189 = vmatpush.bf16.msra.mxu0 %v911
  %1190 = vmatpush.bf16.msra.mxu0 %v910
  %1191 = vmatpush.bf16.msra.mxu0 %v909
  %1192 = vmatpush.bf16.msra.mxu0 %v908
  %1193 = vmatpush.bf16.msra.mxu0 %v907
  %1194 = vmatpush.bf16.msra.mxu0 %v906
  %1195 = vmatmul.bf16.gmra.mxu0 %v327
  %v1196 = vpop.f32.mrf.mxu0
  %v1197 = vadd.f32 %v1184, %v1196
  %v1198 = vpop.f32.mrf.mxu0
  %1199 = vdwg.mxu0
  %1200 = vmatpush.bf16.msra.mxu0 %v921
  %1201 = vmatpush.bf16.msra.mxu0 %v920
  %1202 = vmatpush.bf16.msra.mxu0 %v919
  %1203 = vmatpush.bf16.msra.mxu0 %v918
  %1204 = vmatpush.bf16.msra.mxu0 %v917
  %1205 = vmatpush.bf16.msra.mxu0 %v916
  %1206 = vmatpush.bf16.msra.mxu0 %v915
  %1207 = vmatpush.bf16.msra.mxu0 %v914
  %1208 = vmatmul.bf16.gmra.mxu0 %v328
  %v1209 = vpop.f32.mrf.mxu0
  %v1210 = vadd.f32 %v1197, %v1209
  %v1211 = vpop.f32.mrf.mxu0
  %1212 = vdwg.mxu0
  %1213 = vmatpush.bf16.msra.mxu0 %v929
  %1214 = vmatpush.bf16.msra.mxu0 %v928
  %1215 = vmatpush.bf16.msra.mxu0 %v927
  %1216 = vmatpush.bf16.msra.mxu0 %v926
  %1217 = vmatpush.bf16.msra.mxu0 %v925
  %1218 = vmatpush.bf16.msra.mxu0 %v924
  %1219 = vmatpush.bf16.msra.mxu0 %v923
  %1220 = vmatpush.bf16.msra.mxu0 %v922
  %1221 = vmatmul.bf16.gmra.mxu0 %v329
  %v1222 = vpop.f32.mrf.mxu0
  %v1223 = vadd.f32 %v1210, %v1222
  %v1224 = vpop.f32.mrf.mxu0
  %1225 = vdwg.mxu0
  %1226 = vmatpush.bf16.msra.mxu0 %v937
  %1227 = vmatpush.bf16.msra.mxu0 %v936
  %1228 = vmatpush.bf16.msra.mxu0 %v935
  %1229 = vmatpush.bf16.msra.mxu0 %v934
  %1230 = vmatpush.bf16.msra.mxu0 %v933
  %1231 = vmatpush.bf16.msra.mxu0 %v932
  %1232 = vmatpush.bf16.msra.mxu0 %v931
  %1233 = vmatpush.bf16.msra.mxu0 %v930
  %1234 = vmatmul.bf16.gmra.mxu0 %v330
  %v1235 = vpop.f32.mrf.mxu0
  %v1236 = vadd.f32 %v1223, %v1235
  %v1237 = vpop.f32.mrf.mxu0
  %1238 = vdwg.mxu0
  %1239 = vmatpush.bf16.msra.mxu0 %v945
  %1240 = vmatpush.bf16.msra.mxu0 %v944
  %1241 = vmatpush.bf16.msra.mxu0 %v943
  %1242 = vmatpush.bf16.msra.mxu0 %v942
  %1243 = vmatpush.bf16.msra.mxu0 %v941
  %1244 = vmatpush.bf16.msra.mxu0 %v940
  %1245 = vmatpush.bf16.msra.mxu0 %v939
  %1246 = vmatpush.bf16.msra.mxu0 %v938
  %1247 = vmatmul.bf16.gmra.mxu0 %v331
  %v1248 = vpop.f32.mrf.mxu0
  %v1249 = vadd.f32 %v1236, %v1248
  %v1250 = vpop.f32.mrf.mxu0
  %1251 = vdwg.mxu0
  %1252 = vmatpush.bf16.msra.mxu0 %v953
  %1253 = vmatpush.bf16.msra.mxu0 %v952
  %1254 = vmatpush.bf16.msra.mxu0 %v951
  %1255 = vmatpush.bf16.msra.mxu0 %v950
  %1256 = vmatpush.bf16.msra.mxu0 %v949
  %1257 = vmatpush.bf16.msra.mxu0 %v948
  %1258 = vmatpush.bf16.msra.mxu0 %v947
  %1259 = vmatpush.bf16.msra.mxu0 %v946
  %1260 = vmatmul.bf16.gmra.mxu0 %v332
  %v1261 = vpop.f32.mrf.mxu0
  %v1262 = vadd.f32 %v1249, %v1261
  %v1263 = vpop.f32.mrf.mxu0
  %1264 = vdwg.mxu0
  %1265 = vmatpush.bf16.msra.mxu0 %v961
  %1266 = vmatpush.bf16.msra.mxu0 %v960
  %1267 = vmatpush.bf16.msra.mxu0 %v959
  %1268 = vmatpush.bf16.msra.mxu0 %v958
  %1269 = vmatpush.bf16.msra.mxu0 %v957
  %1270 = vmatpush.bf16.msra.mxu0 %v956
  %1271 = vmatpush.bf16.msra.mxu0 %v955
  %1272 = vmatpush.bf16.msra.mxu0 %v954
  %1273 = vmatmul.bf16.gmra.mxu0 %v333
  %v1274 = vpop.f32.mrf.mxu0
  %v1275 = vadd.f32 %v1262, %v1274
  %v1276 = vpop.f32.mrf.mxu0
  %1277 = vdwg.mxu0
  %1278 = vmatpush.bf16.msra.mxu0 %v969
  %1279 = vmatpush.bf16.msra.mxu0 %v968
  %1280 = vmatpush.bf16.msra.mxu0 %v967
  %1281 = vmatpush.bf16.msra.mxu0 %v966
  %1282 = vmatpush.bf16.msra.mxu0 %v965
  %1283 = vmatpush.bf16.msra.mxu0 %v964
  %1284 = vmatpush.bf16.msra.mxu0 %v963
  %1285 = vmatpush.bf16.msra.mxu0 %v962
  %1286 = vmatmul.bf16.gmra.mxu0 %v334
  %v1287 = vpop.f32.mrf.mxu0
  %v1288 = vadd.f32 %v1275, %v1287
  %v1289 = vpop.f32.mrf.mxu0
  %1290 = vdwg.mxu0
  %1291 = vmatpush.bf16.msra.mxu0 %v977
  %1292 = vmatpush.bf16.msra.mxu0 %v976
  %1293 = vmatpush.bf16.msra.mxu0 %v975
  %1294 = vmatpush.bf16.msra.mxu0 %v974
  %1295 = vmatpush.bf16.msra.mxu0 %v973
  %1296 = vmatpush.bf16.msra.mxu0 %v972
  %1297 = vmatpush.bf16.msra.mxu0 %v971
  %1298 = vmatpush.bf16.msra.mxu0 %v970
  %1299 = vmatmul.bf16.gmra.mxu0 %v335
  %v1300 = vpop.f32.mrf.mxu0
  %v1301 = vadd.f32 %v1288, %v1300
  %v1302 = vpop.f32.mrf.mxu0
  %1303 = vdwg.mxu0
  %1304 = vmatpush.bf16.msra.mxu0 %v985
  %1305 = vmatpush.bf16.msra.mxu0 %v984
  %1306 = vmatpush.bf16.msra.mxu0 %v983
  %1307 = vmatpush.bf16.msra.mxu0 %v982
  %1308 = vmatpush.bf16.msra.mxu0 %v981
  %1309 = vmatpush.bf16.msra.mxu0 %v980
  %1310 = vmatpush.bf16.msra.mxu0 %v979
  %1311 = vmatpush.bf16.msra.mxu0 %v978
  %1312 = vmatmul.bf16.gmra.mxu0 %v336
  %v1313 = vpop.f32.mrf.mxu0
  %v1314 = vadd.f32 %v1301, %v1313
  %v1315 = vpop.f32.mrf.mxu0
  %1316 = vdwg.mxu0
  %1317 = vmatpush.bf16.msra.mxu0 %v993
  %1318 = vmatpush.bf16.msra.mxu0 %v992
  %1319 = vmatpush.bf16.msra.mxu0 %v991
  %1320 = vmatpush.bf16.msra.mxu0 %v990
  %1321 = vmatpush.bf16.msra.mxu0 %v989
  %1322 = vmatpush.bf16.msra.mxu0 %v988
  %1323 = vmatpush.bf16.msra.mxu0 %v987
  %1324 = vmatpush.bf16.msra.mxu0 %v986
  %1325 = vmatmul.bf16.gmra.mxu0 %v337
  %v1326 = vpop.f32.mrf.mxu0
  %v1327 = vadd.f32 %v1314, %v1326
  %v1328 = vpop.f32.mrf.mxu0
  %1329 = vdwg.mxu0
  %vm1330 = vcmask 519168
  %1331 = vst.msk [vmem:[#allocation2] sm:$0xf] %vm1330, %v1327
  %v1332 = vsel %vm1330, %v1327, 0.0
  %v1333 = vrot.slane %v1332, 4
  %v1334 = vadd.f32 %v1332, %v1333
  %v1335 = vrot.slane %v1334, 2
  %v1336 = vadd.f32 %v1334, %v1335
  %v1337 = vrot.slane %v1336, 1
  %v1338 = vadd.f32 %v1336, %v1337
  %v1339 = vadd.f32 %v1338, 0.0
  %v1340 = vmul.f32 %v1327, %v1327
  %v1341 = vsel %vm1330, %v1340, 0.0
  %v1342 = vrot.slane %v1341, 4
  %v1343 = vadd.f32 %v1341, %v1342
  %v1344 = vrot.slane %v1343, 2
  %v1345 = vadd.f32 %v1343, %v1344
  %v1346 = vrot.slane %v1345, 1
  %v1347 = vadd.f32 %v1345, %v1346
  %v1348 = vadd.f32 %v1347, 0.0
  %v1349 = vld [vmem:[%s0] sm:$0xcc]
  %v1350 = vld [vmem:[%s0 + $0x8] sm:$0xcc]
  %v1351 = vld [vmem:[%s0 + $0x10] sm:$0xcc]
  %v1352 = vld [vmem:[%s0 + $0x18] sm:$0xcc]
  %v1353 = vld [vmem:[%s0 + $0x20] sm:$0xcc]
  %v1354 = vld [vmem:[%s0 + $0x28] sm:$0xcc]
  %v1355 = vld [vmem:[%s0 + $0x30] sm:$0xcc]
  %v1356 = vld [vmem:[%s0 + $0x38] sm:$0xcc]
  %v1357 = vld [vmem:[%s1] sm:$0xf]
  %v1358 = vld [vmem:[%s1 + $0x4] sm:$0xf]
  %v1359 = vld [vmem:[%s1 + $0x8] sm:$0xf]
  %v1360 = vld [vmem:[%s1 + $0xc] sm:$0xf]
  %v1361 = vld [vmem:[%s1 + $0x10] sm:$0xf]
  %v1362 = vld [vmem:[%s1 + $0x14] sm:$0xf]
  %v1363 = vld [vmem:[%s1 + $0x18] sm:$0xf]
  %v1364 = vld [vmem:[%s1 + $0x1c] sm:$0xf]
  %v1365 = vld [vmem:[%s1 + $0x20] sm:$0xf]
  %v1366 = vld [vmem:[%s1 + $0x24] sm:$0xf]
  %v1367 = vld [vmem:[%s1 + $0x28] sm:$0xf]
  %v1368 = vld [vmem:[%s1 + $0x2c] sm:$0xf]
  %v1369 = vld [vmem:[%s1 + $0x30] sm:$0xf]
  %v1370 = vld [vmem:[%s1 + $0x34] sm:$0xf]
  %v1371 = vld [vmem:[%s1 + $0x38] sm:$0xf]
  %v1372 = vld [vmem:[%s1 + $0x3c] sm:$0xf]
  %v1373 = vld [vmem:[%s1 + $0x40] sm:$0xf]
  %v1374 = vld [vmem:[%s1 + $0x44] sm:$0xf]
  %v1375 = vld [vmem:[%s1 + $0x48] sm:$0xf]
  %v1376 = vld [vmem:[%s1 + $0x4c] sm:$0xf]
  %v1377 = vld [vmem:[%s1 + $0x50] sm:$0xf]
  %v1378 = vld [vmem:[%s1 + $0x54] sm:$0xf]
  %v1379 = vld [vmem:[%s1 + $0x58] sm:$0xf]
  %v1380 = vld [vmem:[%s1 + $0x5c] sm:$0xf]
  %v1381 = vld [vmem:[%s1 + $0x60] sm:$0xf]
  %v1382 = vld [vmem:[%s1 + $0x64] sm:$0xf]
  %v1383 = vld [vmem:[%s1 + $0x68] sm:$0xf]
  %v1384 = vld [vmem:[%s1 + $0x6c] sm:$0xf]
  %v1385 = vld [vmem:[%s1 + $0x70] sm:$0xf]
  %v1386 = vld [vmem:[%s1 + $0x74] sm:$0xf]
  %v1387 = vld [vmem:[%s1 + $0x78] sm:$0xf]
  %v1388 = vld [vmem:[%s1 + $0x7c] sm:$0xf]
  %v1389 = vld [vmem:[%s1 + $0x80] sm:$0xf]
  %v1390 = vld [vmem:[%s1 + $0x84] sm:$0xf]
  %v1391 = vld [vmem:[%s1 + $0x88] sm:$0xf]
  %v1392 = vld [vmem:[%s1 + $0x8c] sm:$0xf]
  %v1393 = vld [vmem:[%s1 + $0x90] sm:$0xf]
  %v1394 = vld [vmem:[%s1 + $0x94] sm:$0xf]
  %v1395 = vld [vmem:[%s1 + $0x98] sm:$0xf]
  %v1396 = vld [vmem:[%s1 + $0x9c] sm:$0xf]
  %v1397 = vld [vmem:[%s1 + $0xa0] sm:$0xf]
  %v1398 = vld [vmem:[%s1 + $0xa4] sm:$0xf]
  %v1399 = vld [vmem:[%s1 + $0xa8] sm:$0xf]
  %v1400 = vld [vmem:[%s1 + $0xac] sm:$0xf]
  %v1401 = vld [vmem:[%s1 + $0xb0] sm:$0xf]
  %v1402 = vld [vmem:[%s1 + $0xb4] sm:$0xf]
  %v1403 = vld [vmem:[%s1 + $0xb8] sm:$0xf]
  %v1404 = vld [vmem:[%s1 + $0xbc] sm:$0xf]
  %v1405 = vld [vmem:[%s1 + $0xc0] sm:$0xf]
  %v1406 = vld [vmem:[%s1 + $0xc4] sm:$0xf]
  %v1407 = vld [vmem:[%s1 + $0xc8] sm:$0xf]
  %v1408 = vld [vmem:[%s1 + $0xcc] sm:$0xf]
  %v1409 = vld [vmem:[%s1 + $0xd0] sm:$0xf]
  %v1410 = vld [vmem:[%s1 + $0xd4] sm:$0xf]
  %v1411 = vld [vmem:[%s1 + $0xd8] sm:$0xf]
  %v1412 = vld [vmem:[%s1 + $0xdc] sm:$0xf]
  %v1413 = vld [vmem:[%s1 + $0xe0] sm:$0xf]
  %v1414 = vld [vmem:[%s1 + $0xe4] sm:$0xf]
  %v1415 = vld [vmem:[%s1 + $0xe8] sm:$0xf]
  %v1416 = vld [vmem:[%s1 + $0xec] sm:$0xf]
  %v1417 = vld [vmem:[%s1 + $0xf0] sm:$0xf]
  %v1418 = vld [vmem:[%s1 + $0xf4] sm:$0xf]
  %v1419 = vld [vmem:[%s1 + $0xf8] sm:$0xf]
  %v1420 = vld [vmem:[%s1 + $0xfc] sm:$0xf]
  %v1421 = vld [vmem:[%s1 + $0x100] sm:$0xf]
  %v1422 = vld [vmem:[%s1 + $0x104] sm:$0xf]
  %v1423 = vld [vmem:[%s1 + $0x108] sm:$0xf]
  %v1424 = vld [vmem:[%s1 + $0x10c] sm:$0xf]
  %v1425 = vld [vmem:[%s1 + $0x110] sm:$0xf]
  %v1426 = vld [vmem:[%s1 + $0x114] sm:$0xf]
  %v1427 = vld [vmem:[%s1 + $0x118] sm:$0xf]
  %v1428 = vld [vmem:[%s1 + $0x11c] sm:$0xf]
  %v1429 = vld [vmem:[%s1 + $0x120] sm:$0xf]
  %v1430 = vld [vmem:[%s1 + $0x124] sm:$0xf]
  %v1431 = vld [vmem:[%s1 + $0x128] sm:$0xf]
  %v1432 = vld [vmem:[%s1 + $0x12c] sm:$0xf]
  %v1433 = vld [vmem:[%s1 + $0x130] sm:$0xf]
  %v1434 = vld [vmem:[%s1 + $0x134] sm:$0xf]
  %v1435 = vld [vmem:[%s1 + $0x138] sm:$0xf]
  %v1436 = vld [vmem:[%s1 + $0x13c] sm:$0xf]
  %v1437 = vld [vmem:[%s1 + $0x140] sm:$0xf]
  %v1438 = vld [vmem:[%s1 + $0x144] sm:$0xf]
  %v1439 = vld [vmem:[%s1 + $0x148] sm:$0xf]
  %v1440 = vld [vmem:[%s1 + $0x14c] sm:$0xf]
  %v1441 = vld [vmem:[%s1 + $0x150] sm:$0xf]
  %v1442 = vld [vmem:[%s1 + $0x154] sm:$0xf]
  %v1443 = vld [vmem:[%s1 + $0x158] sm:$0xf]
  %v1444 = vld [vmem:[%s1 + $0x15c] sm:$0xf]
  %v1445 = vld [vmem:[%s1 + $0x160] sm:$0xf]
  %v1446 = vld [vmem:[%s1 + $0x164] sm:$0xf]
  %v1447 = vld [vmem:[%s1 + $0x168] sm:$0xf]
  %v1448 = vld [vmem:[%s1 + $0x16c] sm:$0xf]
  %v1449 = vld [vmem:[%s1 + $0x170] sm:$0xf]
  %v1450 = vld [vmem:[%s1 + $0x174] sm:$0xf]
  %v1451 = vld [vmem:[%s1 + $0x178] sm:$0xf]
  %v1452 = vld [vmem:[%s1 + $0x17c] sm:$0xf]
  %v1453 = vld [vmem:[%s1 + $0x180] sm:$0xf]
  %v1454 = vld [vmem:[%s1 + $0x184] sm:$0xf]
  %v1455 = vld [vmem:[%s1 + $0x188] sm:$0xf]
  %v1456 = vld [vmem:[%s1 + $0x18c] sm:$0xf]
  %v1457 = vld [vmem:[%s1 + $0x190] sm:$0xf]
  %v1458 = vld [vmem:[%s1 + $0x194] sm:$0xf]
  %v1459 = vld [vmem:[%s1 + $0x198] sm:$0xf]
  %v1460 = vld [vmem:[%s1 + $0x19c] sm:$0xf]
  %v1461 = vld [vmem:[%s1 + $0x1a0] sm:$0xf]
  %v1462 = vld [vmem:[%s1 + $0x1a4] sm:$0xf]
  %v1463 = vld [vmem:[%s1 + $0x1a8] sm:$0xf]
  %v1464 = vld [vmem:[%s1 + $0x1ac] sm:$0xf]
  %v1465 = vld [vmem:[%s1 + $0x1b0] sm:$0xf]
  %v1466 = vld [vmem:[%s1 + $0x1b4] sm:$0xf]
  %v1467 = vld [vmem:[%s1 + $0x1b8] sm:$0xf]
  %v1468 = vld [vmem:[%s1 + $0x1bc] sm:$0xf]
  %v1469 = vld [vmem:[%s1 + $0x1c0] sm:$0xf]
  %v1470 = vld [vmem:[%s1 + $0x1c4] sm:$0xf]
  %v1471 = vld [vmem:[%s1 + $0x1c8] sm:$0xf]
  %v1472 = vld [vmem:[%s1 + $0x1cc] sm:$0xf]
  %v1473 = vld [vmem:[%s1 + $0x1d0] sm:$0xf]
  %v1474 = vld [vmem:[%s1 + $0x1d4] sm:$0xf]
  %v1475 = vld [vmem:[%s1 + $0x1d8] sm:$0xf]
  %v1476 = vld [vmem:[%s1 + $0x1dc] sm:$0xf]
  %v1477 = vld [vmem:[%s1 + $0x1e0] sm:$0xf]
  %v1478 = vld [vmem:[%s1 + $0x1e4] sm:$0xf]
  %v1479 = vld [vmem:[%s1 + $0x1e8] sm:$0xf]
  %v1480 = vld [vmem:[%s1 + $0x1ec] sm:$0xf]
  %v1481 = vld [vmem:[%s1 + $0x1f0] sm:$0xf]
  %v1482 = vld [vmem:[%s1 + $0x1f4] sm:$0xf]
  %v1483 = vld [vmem:[%s1 + $0x1f8] sm:$0xf]
  %v1484 = vld [vmem:[%s1 + $0x1fc] sm:$0xf]
  %v1485 = vld [vmem:[%s1 + $0x200] sm:$0xf]
  %v1486 = vld [vmem:[%s1 + $0x204] sm:$0xf]
  %v1487 = vld [vmem:[%s1 + $0x208] sm:$0xf]
  %v1488 = vld [vmem:[%s1 + $0x20c] sm:$0xf]
  %v1489 = vld [vmem:[%s1 + $0x210] sm:$0xf]
  %v1490 = vld [vmem:[%s1 + $0x214] sm:$0xf]
  %v1491 = vld [vmem:[%s1 + $0x218] sm:$0xf]
  %v1492 = vld [vmem:[%s1 + $0x21c] sm:$0xf]
  %v1493 = vld [vmem:[%s1 + $0x220] sm:$0xf]
  %v1494 = vld [vmem:[%s1 + $0x224] sm:$0xf]
  %v1495 = vld [vmem:[%s1 + $0x228] sm:$0xf]
  %v1496 = vld [vmem:[%s1 + $0x22c] sm:$0xf]
  %v1497 = vld [vmem:[%s1 + $0x230] sm:$0xf]
  %v1498 = vld [vmem:[%s1 + $0x234] sm:$0xf]
  %v1499 = vld [vmem:[%s1 + $0x238] sm:$0xf]
  %v1500 = vld [vmem:[%s1 + $0x23c] sm:$0xf]
  %v1501 = vld [vmem:[%s1 + $0x240] sm:$0xf]
  %v1502 = vld [vmem:[%s1 + $0x244] sm:$0xf]
  %v1503 = vld [vmem:[%s1 + $0x248] sm:$0xf]
  %v1504 = vld [vmem:[%s1 + $0x24c] sm:$0xf]
  %v1505 = vld [vmem:[%s1 + $0x250] sm:$0xf]
  %v1506 = vld [vmem:[%s1 + $0x254] sm:$0xf]
  %v1507 = vld [vmem:[%s1 + $0x258] sm:$0xf]
  %v1508 = vld [vmem:[%s1 + $0x25c] sm:$0xf]
  %v1509 = vld [vmem:[%s1 + $0x260] sm:$0xf]
  %v1510 = vld [vmem:[%s1 + $0x264] sm:$0xf]
  %v1511 = vld [vmem:[%s1 + $0x268] sm:$0xf]
  %v1512 = vld [vmem:[%s1 + $0x26c] sm:$0xf]
  %v1513 = vld [vmem:[%s1 + $0x270] sm:$0xf]
  %v1514 = vld [vmem:[%s1 + $0x274] sm:$0xf]
  %v1515 = vld [vmem:[%s1 + $0x278] sm:$0xf]
  %v1516 = vld [vmem:[%s1 + $0x27c] sm:$0xf]
  %v1517 = vld [vmem:[%s1 + $0x280] sm:$0xf]
  %v1518 = vld [vmem:[%s1 + $0x284] sm:$0xf]
  %v1519 = vld [vmem:[%s1 + $0x288] sm:$0xf]
  %v1520 = vld [vmem:[%s1 + $0x28c] sm:$0xf]
  %v1521 = vld [vmem:[%s1 + $0x290] sm:$0xf]
  %v1522 = vld [vmem:[%s1 + $0x294] sm:$0xf]
  %v1523 = vld [vmem:[%s1 + $0x298] sm:$0xf]
  %v1524 = vld [vmem:[%s1 + $0x29c] sm:$0xf]
  %v1525 = vld [vmem:[%s1 + $0x2a0] sm:$0xf]
  %v1526 = vld [vmem:[%s1 + $0x2a4] sm:$0xf]
  %v1527 = vld [vmem:[%s1 + $0x2a8] sm:$0xf]
  %v1528 = vld [vmem:[%s1 + $0x2ac] sm:$0xf]
  %v1529 = vld [vmem:[%s1 + $0x2b0] sm:$0xf]
  %v1530 = vld [vmem:[%s1 + $0x2b4] sm:$0xf]
  %v1531 = vld [vmem:[%s1 + $0x2b8] sm:$0xf]
  %v1532 = vld [vmem:[%s1 + $0x2bc] sm:$0xf]
  %v1533 = vld [vmem:[%s1 + $0x2c0] sm:$0xf]
  %v1534 = vld [vmem:[%s1 + $0x2c4] sm:$0xf]
  %v1535 = vld [vmem:[%s1 + $0x2c8] sm:$0xf]
  %v1536 = vld [vmem:[%s1 + $0x2cc] sm:$0xf]
  %v1537 = vld [vmem:[%s1 + $0x2d0] sm:$0xf]
  %v1538 = vld [vmem:[%s1 + $0x2d4] sm:$0xf]
  %v1539 = vld [vmem:[%s1 + $0x2d8] sm:$0xf]
  %v1540 = vld [vmem:[%s1 + $0x2dc] sm:$0xf]
  %v1541 = vld [vmem:[%s1 + $0x2e0] sm:$0xf]
  %v1542 = vld [vmem:[%s1 + $0x2e4] sm:$0xf]
  %v1543 = vld [vmem:[%s1 + $0x2e8] sm:$0xf]
  %v1544 = vld [vmem:[%s1 + $0x2ec] sm:$0xf]
  %v1545 = vld [vmem:[%s1 + $0x2f0] sm:$0xf]
  %v1546 = vld [vmem:[%s1 + $0x2f4] sm:$0xf]
  %v1547 = vld [vmem:[%s1 + $0x2f8] sm:$0xf]
  %v1548 = vld [vmem:[%s1 + $0x2fc] sm:$0xf]
  %v1549 = vld [vmem:[%s1 + $0x300] sm:$0xf]
  %v1550 = vld [vmem:[%s1 + $0x304] sm:$0xf]
  %v1551 = vld [vmem:[%s1 + $0x308] sm:$0xf]
  %v1552 = vld [vmem:[%s1 + $0x30c] sm:$0xf]
  %v1553 = vld [vmem:[%s1 + $0x310] sm:$0xf]
  %v1554 = vld [vmem:[%s1 + $0x314] sm:$0xf]
  %v1555 = vld [vmem:[%s1 + $0x318] sm:$0xf]
  %v1556 = vld [vmem:[%s1 + $0x31c] sm:$0xf]
  %v1557 = vld [vmem:[%s1 + $0x320] sm:$0xf]
  %v1558 = vld [vmem:[%s1 + $0x324] sm:$0xf]
  %v1559 = vld [vmem:[%s1 + $0x328] sm:$0xf]
  %v1560 = vld [vmem:[%s1 + $0x32c] sm:$0xf]
  %v1561 = vld [vmem:[%s1 + $0x330] sm:$0xf]
  %v1562 = vld [vmem:[%s1 + $0x334] sm:$0xf]
  %v1563 = vld [vmem:[%s1 + $0x338] sm:$0xf]
  %v1564 = vld [vmem:[%s1 + $0x33c] sm:$0xf]
  %v1565 = vld [vmem:[%s1 + $0x340] sm:$0xf]
  %v1566 = vld [vmem:[%s1 + $0x344] sm:$0xf]
  %v1567 = vld [vmem:[%s1 + $0x348] sm:$0xf]
  %v1568 = vld [vmem:[%s1 + $0x34c] sm:$0xf]
  %v1569 = vld [vmem:[%s1 + $0x350] sm:$0xf]
  %v1570 = vld [vmem:[%s1 + $0x354] sm:$0xf]
  %v1571 = vld [vmem:[%s1 + $0x358] sm:$0xf]
  %v1572 = vld [vmem:[%s1 + $0x35c] sm:$0xf]
  %v1573 = vld [vmem:[%s1 + $0x360] sm:$0xf]
  %v1574 = vld [vmem:[%s1 + $0x364] sm:$0xf]
  %v1575 = vld [vmem:[%s1 + $0x368] sm:$0xf]
  %v1576 = vld [vmem:[%s1 + $0x36c] sm:$0xf]
  %v1577 = vld [vmem:[%s1 + $0x370] sm:$0xf]
  %v1578 = vld [vmem:[%s1 + $0x374] sm:$0xf]
  %v1579 = vld [vmem:[%s1 + $0x378] sm:$0xf]
  %v1580 = vld [vmem:[%s1 + $0x37c] sm:$0xf]
  %v1581 = vld [vmem:[%s1 + $0x380] sm:$0xf]
  %v1582 = vld [vmem:[%s1 + $0x384] sm:$0xf]
  %v1583 = vld [vmem:[%s1 + $0x388] sm:$0xf]
  %v1584 = vld [vmem:[%s1 + $0x38c] sm:$0xf]
  %v1585 = vld [vmem:[%s1 + $0x390] sm:$0xf]
  %v1586 = vld [vmem:[%s1 + $0x394] sm:$0xf]
  %v1587 = vld [vmem:[%s1 + $0x398] sm:$0xf]
  %v1588 = vld [vmem:[%s1 + $0x39c] sm:$0xf]
  %v1589 = vld [vmem:[%s1 + $0x3a0] sm:$0xf]
  %v1590 = vld [vmem:[%s1 + $0x3a4] sm:$0xf]
  %v1591 = vld [vmem:[%s1 + $0x3a8] sm:$0xf]
  %v1592 = vld [vmem:[%s1 + $0x3ac] sm:$0xf]
  %v1593 = vld [vmem:[%s1 + $0x3b0] sm:$0xf]
  %v1594 = vld [vmem:[%s1 + $0x3b4] sm:$0xf]
  %v1595 = vld [vmem:[%s1 + $0x3b8] sm:$0xf]
  %v1596 = vld [vmem:[%s1 + $0x3bc] sm:$0xf]
  %v1597 = vld [vmem:[%s1 + $0x3c0] sm:$0xf]
  %v1598 = vld [vmem:[%s1 + $0x3c4] sm:$0xf]
  %v1599 = vld [vmem:[%s1 + $0x3c8] sm:$0xf]
  %v1600 = vld [vmem:[%s1 + $0x3cc] sm:$0xf]
  %v1601 = vld [vmem:[%s1 + $0x3d0] sm:$0xf]
  %v1602 = vld [vmem:[%s1 + $0x3d4] sm:$0xf]
  %v1603 = vld [vmem:[%s1 + $0x3d8] sm:$0xf]
  %v1604 = vld [vmem:[%s1 + $0x3dc] sm:$0xf]
  %v1605 = vld [vmem:[%s1 + $0x3e0] sm:$0xf]
  %v1606 = vld [vmem:[%s1 + $0x3e4] sm:$0xf]
  %v1607 = vld [vmem:[%s1 + $0x3e8] sm:$0xf]
  %v1608 = vld [vmem:[%s1 + $0x3ec] sm:$0xf]
  %v1609 = vld [vmem:[%s1 + $0x3f0] sm:$0xf]
  %v1610 = vld [vmem:[%s1 + $0x3f4] sm:$0xf]
  %v1611 = vld [vmem:[%s1 + $0x3f8] sm:$0xf]
  %v1612 = vld [vmem:[%s1 + $0x3fc] sm:$0xf]
  %v1621 = vunpack.c.l.b16 %v1349
  %v1622 = vunpack.c.h.b16 %v1349
  %v1623 = vunpack.c.l.b16 %v1350
  %v1624 = vunpack.c.h.b16 %v1350
  %v1625 = vunpack.c.l.b16 %v1351
  %v1626 = vunpack.c.h.b16 %v1351
  %v1627 = vunpack.c.l.b16 %v1352
  %v1628 = vunpack.c.h.b16 %v1352
  %v1629 = vunpack.c.l.b16 %v1353
  %v1630 = vunpack.c.h.b16 %v1353
  %v1631 = vunpack.c.l.b16 %v1354
  %v1632 = vunpack.c.h.b16 %v1354
  %v1633 = vunpack.c.l.b16 %v1355
  %v1634 = vunpack.c.h.b16 %v1355
  %v1635 = vunpack.c.l.b16 %v1356
  %v1636 = vunpack.c.h.b16 %v1356
  %v1637 = vpack.c.b16 %v1621, %v1621
  %v1638 = vpack.c.b16 %v1622, %v1622
  %v1639 = vpack.c.b16 %v1623, %v1623
  %v1640 = vpack.c.b16 %v1624, %v1624
  %v1641 = vpack.c.b16 %v1625, %v1625
  %v1642 = vpack.c.b16 %v1626, %v1626
  %v1643 = vpack.c.b16 %v1627, %v1627
  %v1644 = vpack.c.b16 %v1628, %v1628
  %v1645 = vpack.c.b16 %v1629, %v1629
  %v1646 = vpack.c.b16 %v1630, %v1630
  %v1647 = vpack.c.b16 %v1631, %v1631
  %v1648 = vpack.c.b16 %v1632, %v1632
  %v1649 = vpack.c.b16 %v1633, %v1633
  %v1650 = vpack.c.b16 %v1634, %v1634
  %v1651 = vpack.c.b16 %v1635, %v1635
  %v1652 = vpack.c.b16 %v1636, %v1636
  %v1653 = vrot.slane %v1637, 2
  %v1654 = vrot.slane %v1638, 2
  %v1655 = vrot.slane %v1639, 2
  %v1656 = vrot.slane %v1640, 2
  %v1657 = vrot.slane %v1641, 2
  %v1658 = vrot.slane %v1642, 2
  %v1659 = vrot.slane %v1643, 2
  %v1660 = vrot.slane %v1644, 2
  %v1661 = vrot.slane %v1645, 2
  %v1662 = vrot.slane %v1646, 2
  %v1663 = vrot.slane %v1647, 2
  %v1664 = vrot.slane %v1648, 2
  %v1665 = vrot.slane %v1649, 2
  %v1666 = vrot.slane %v1650, 2
  %v1667 = vrot.slane %v1651, 2
  %v1668 = vrot.slane %v1652, 2
  %v1941 = vunpack.c.l.b16 %v1357
  %v1942 = vunpack.c.l.b16 %v1358
  %v1943 = vunpack.c.l.b16 %v1359
  %v1944 = vunpack.c.l.b16 %v1360
  %v1945 = vunpack.c.l.b16 %v1361
  %v1946 = vunpack.c.l.b16 %v1362
  %v1947 = vunpack.c.l.b16 %v1363
  %v1948 = vunpack.c.l.b16 %v1364
  %v1949 = vunpack.c.l.b16 %v1365
  %v1950 = vunpack.c.l.b16 %v1366
  %v1951 = vunpack.c.l.b16 %v1367
  %v1952 = vunpack.c.l.b16 %v1368
  %v1953 = vunpack.c.l.b16 %v1369
  %v1954 = vunpack.c.l.b16 %v1370
  %v1955 = vunpack.c.l.b16 %v1371
  %v1956 = vunpack.c.l.b16 %v1372
  %v1957 = vunpack.c.l.b16 %v1373
  %v1958 = vunpack.c.l.b16 %v1374
  %v1959 = vunpack.c.l.b16 %v1375
  %v1960 = vunpack.c.l.b16 %v1376
  %v1961 = vunpack.c.l.b16 %v1377
  %v1962 = vunpack.c.l.b16 %v1378
  %v1963 = vunpack.c.l.b16 %v1379
  %v1964 = vunpack.c.l.b16 %v1380
  %v1965 = vunpack.c.l.b16 %v1381
  %v1966 = vunpack.c.l.b16 %v1382
  %v1967 = vunpack.c.l.b16 %v1383
  %v1968 = vunpack.c.l.b16 %v1384
  %v1969 = vunpack.c.l.b16 %v1385
  %v1970 = vunpack.c.l.b16 %v1386
  %v1971 = vunpack.c.l.b16 %v1387
  %v1972 = vunpack.c.l.b16 %v1388
  %v1973 = vunpack.c.l.b16 %v1389
  %v1974 = vunpack.c.l.b16 %v1390
  %v1975 = vunpack.c.l.b16 %v1391
  %v1976 = vunpack.c.l.b16 %v1392
  %v1977 = vunpack.c.l.b16 %v1393
  %v1978 = vunpack.c.l.b16 %v1394
  %v1979 = vunpack.c.l.b16 %v1395
  %v1980 = vunpack.c.l.b16 %v1396
  %v1981 = vunpack.c.l.b16 %v1397
  %v1982 = vunpack.c.l.b16 %v1398
  %v1983 = vunpack.c.l.b16 %v1399
  %v1984 = vunpack.c.l.b16 %v1400
  %v1985 = vunpack.c.l.b16 %v1401
  %v1986 = vunpack.c.l.b16 %v1402
  %v1987 = vunpack.c.l.b16 %v1403
  %v1988 = vunpack.c.l.b16 %v1404
  %v1989 = vunpack.c.l.b16 %v1405
  %v1990 = vunpack.c.l.b16 %v1406
  %v1991 = vunpack.c.l.b16 %v1407
  %v1992 = vunpack.c.l.b16 %v1408
  %v1993 = vunpack.c.l.b16 %v1409
  %v1994 = vunpack.c.l.b16 %v1410
  %v1995 = vunpack.c.l.b16 %v1411
  %v1996 = vunpack.c.l.b16 %v1412
  %v1997 = vunpack.c.l.b16 %v1413
  %v1998 = vunpack.c.l.b16 %v1414
  %v1999 = vunpack.c.l.b16 %v1415
  %v2000 = vunpack.c.l.b16 %v1416
  %v2001 = vunpack.c.l.b16 %v1417
  %v2002 = vunpack.c.l.b16 %v1418
  %v2003 = vunpack.c.l.b16 %v1419
  %v2004 = vunpack.c.l.b16 %v1420
  %v2005 = vunpack.c.l.b16 %v1421
  %v2006 = vunpack.c.l.b16 %v1422
  %v2007 = vunpack.c.l.b16 %v1423
  %v2008 = vunpack.c.l.b16 %v1424
  %v2009 = vunpack.c.l.b16 %v1425
  %v2010 = vunpack.c.l.b16 %v1426
  %v2011 = vunpack.c.l.b16 %v1427
  %v2012 = vunpack.c.l.b16 %v1428
  %v2013 = vunpack.c.l.b16 %v1429
  %v2014 = vunpack.c.l.b16 %v1430
  %v2015 = vunpack.c.l.b16 %v1431
  %v2016 = vunpack.c.l.b16 %v1432
  %v2017 = vunpack.c.l.b16 %v1433
  %v2018 = vunpack.c.l.b16 %v1434
  %v2019 = vunpack.c.l.b16 %v1435
  %v2020 = vunpack.c.l.b16 %v1436
  %v2021 = vunpack.c.l.b16 %v1437
  %v2022 = vunpack.c.l.b16 %v1438
  %v2023 = vunpack.c.l.b16 %v1439
  %v2024 = vunpack.c.l.b16 %v1440
  %v2025 = vunpack.c.l.b16 %v1441
  %v2026 = vunpack.c.l.b16 %v1442
  %v2027 = vunpack.c.l.b16 %v1443
  %v2028 = vunpack.c.l.b16 %v1444
  %v2029 = vunpack.c.l.b16 %v1445
  %v2030 = vunpack.c.l.b16 %v1446
  %v2031 = vunpack.c.l.b16 %v1447
  %v2032 = vunpack.c.l.b16 %v1448
  %v2033 = vunpack.c.l.b16 %v1449
  %v2034 = vunpack.c.l.b16 %v1450
  %v2035 = vunpack.c.l.b16 %v1451
  %v2036 = vunpack.c.l.b16 %v1452
  %v2037 = vunpack.c.l.b16 %v1453
  %v2038 = vunpack.c.l.b16 %v1454
  %v2039 = vunpack.c.l.b16 %v1455
  %v2040 = vunpack.c.l.b16 %v1456
  %v2041 = vunpack.c.l.b16 %v1457
  %v2042 = vunpack.c.l.b16 %v1458
  %v2043 = vunpack.c.l.b16 %v1459
  %v2044 = vunpack.c.l.b16 %v1460
  %v2045 = vunpack.c.l.b16 %v1461
  %v2046 = vunpack.c.l.b16 %v1462
  %v2047 = vunpack.c.l.b16 %v1463
  %v2048 = vunpack.c.l.b16 %v1464
  %v2049 = vunpack.c.l.b16 %v1465
  %v2050 = vunpack.c.l.b16 %v1466
  %v2051 = vunpack.c.l.b16 %v1467
  %v2052 = vunpack.c.l.b16 %v1468
  %v2053 = vunpack.c.l.b16 %v1469
  %v2054 = vunpack.c.l.b16 %v1470
  %v2055 = vunpack.c.l.b16 %v1471
  %v2056 = vunpack.c.l.b16 %v1472
  %v2057 = vunpack.c.l.b16 %v1473
  %v2058 = vunpack.c.l.b16 %v1474
  %v2059 = vunpack.c.l.b16 %v1475
  %v2060 = vunpack.c.l.b16 %v1476
  %v2061 = vunpack.c.l.b16 %v1477
  %v2062 = vunpack.c.l.b16 %v1478
  %v2063 = vunpack.c.l.b16 %v1479
  %v2064 = vunpack.c.l.b16 %v1480
  %v2065 = vunpack.c.l.b16 %v1481
  %v2066 = vunpack.c.l.b16 %v1482
  %v2067 = vunpack.c.l.b16 %v1483
  %v2068 = vunpack.c.l.b16 %v1484
  %v2069 = vunpack.c.l.b16 %v1485
  %v2070 = vunpack.c.l.b16 %v1486
  %v2071 = vunpack.c.l.b16 %v1487
  %v2072 = vunpack.c.l.b16 %v1488
  %v2073 = vunpack.c.l.b16 %v1489
  %v2074 = vunpack.c.l.b16 %v1490
  %v2075 = vunpack.c.l.b16 %v1491
  %v2076 = vunpack.c.l.b16 %v1492
  %v2077 = vunpack.c.l.b16 %v1493
  %v2078 = vunpack.c.l.b16 %v1494
  %v2079 = vunpack.c.l.b16 %v1495
  %v2080 = vunpack.c.l.b16 %v1496
  %v2081 = vunpack.c.l.b16 %v1497
  %v2082 = vunpack.c.l.b16 %v1498
  %v2083 = vunpack.c.l.b16 %v1499
  %v2084 = vunpack.c.l.b16 %v1500
  %v2085 = vunpack.c.l.b16 %v1501
  %v2086 = vunpack.c.l.b16 %v1502
  %v2087 = vunpack.c.l.b16 %v1503
  %v2088 = vunpack.c.l.b16 %v1504
  %v2089 = vunpack.c.l.b16 %v1505
  %v2090 = vunpack.c.l.b16 %v1506
  %v2091 = vunpack.c.l.b16 %v1507
  %v2092 = vunpack.c.l.b16 %v1508
  %v2093 = vunpack.c.l.b16 %v1509
  %v2094 = vunpack.c.l.b16 %v1510
  %v2095 = vunpack.c.l.b16 %v1511
  %v2096 = vunpack.c.l.b16 %v1512
  %v2097 = vunpack.c.l.b16 %v1513
  %v2098 = vunpack.c.l.b16 %v1514
  %v2099 = vunpack.c.l.b16 %v1515
  %v2100 = vunpack.c.l.b16 %v1516
  %v2101 = vunpack.c.l.b16 %v1517
  %v2102 = vunpack.c.l.b16 %v1518
  %v2103 = vunpack.c.l.b16 %v1519
  %v2104 = vunpack.c.l.b16 %v1520
  %v2105 = vunpack.c.l.b16 %v1521
  %v2106 = vunpack.c.l.b16 %v1522
  %v2107 = vunpack.c.l.b16 %v1523
  %v2108 = vunpack.c.l.b16 %v1524
  %v2109 = vunpack.c.l.b16 %v1525
  %v2110 = vunpack.c.l.b16 %v1526
  %v2111 = vunpack.c.l.b16 %v1527
  %v2112 = vunpack.c.l.b16 %v1528
  %v2113 = vunpack.c.l.b16 %v1529
  %v2114 = vunpack.c.l.b16 %v1530
  %v2115 = vunpack.c.l.b16 %v1531
  %v2116 = vunpack.c.l.b16 %v1532
  %v2117 = vunpack.c.l.b16 %v1533
  %v2118 = vunpack.c.l.b16 %v1534
  %v2119 = vunpack.c.l.b16 %v1535
  %v2120 = vunpack.c.l.b16 %v1536
  %v2121 = vunpack.c.l.b16 %v1537
  %v2122 = vunpack.c.l.b16 %v1538
  %v2123 = vunpack.c.l.b16 %v1539
  %v2124 = vunpack.c.l.b16 %v1540
  %v2125 = vunpack.c.l.b16 %v1541
  %v2126 = vunpack.c.l.b16 %v1542
  %v2127 = vunpack.c.l.b16 %v1543
  %v2128 = vunpack.c.l.b16 %v1544
  %v2129 = vunpack.c.l.b16 %v1545
  %v2130 = vunpack.c.l.b16 %v1546
  %v2131 = vunpack.c.l.b16 %v1547
  %v2132 = vunpack.c.l.b16 %v1548
  %v2133 = vunpack.c.l.b16 %v1549
  %v2134 = vunpack.c.l.b16 %v1550
  %v2135 = vunpack.c.l.b16 %v1551
  %v2136 = vunpack.c.l.b16 %v1552
  %v2137 = vunpack.c.l.b16 %v1553
  %v2138 = vunpack.c.l.b16 %v1554
  %v2139 = vunpack.c.l.b16 %v1555
  %v2140 = vunpack.c.l.b16 %v1556
  %v2141 = vunpack.c.l.b16 %v1557
  %v2142 = vunpack.c.l.b16 %v1558
  %v2143 = vunpack.c.l.b16 %v1559
  %v2144 = vunpack.c.l.b16 %v1560
  %v2145 = vunpack.c.l.b16 %v1561
  %v2146 = vunpack.c.l.b16 %v1562
  %v2147 = vunpack.c.l.b16 %v1563
  %v2148 = vunpack.c.l.b16 %v1564
  %v2149 = vunpack.c.l.b16 %v1565
  %v2150 = vunpack.c.l.b16 %v1566
  %v2151 = vunpack.c.l.b16 %v1567
  %v2152 = vunpack.c.l.b16 %v1568
  %v2153 = vunpack.c.l.b16 %v1569
  %v2154 = vunpack.c.l.b16 %v1570
  %v2155 = vunpack.c.l.b16 %v1571
  %v2156 = vunpack.c.l.b16 %v1572
  %v2157 = vunpack.c.l.b16 %v1573
  %v2158 = vunpack.c.l.b16 %v1574
  %v2159 = vunpack.c.l.b16 %v1575
  %v2160 = vunpack.c.l.b16 %v1576
  %v2161 = vunpack.c.l.b16 %v1577
  %v2162 = vunpack.c.l.b16 %v1578
  %v2163 = vunpack.c.l.b16 %v1579
  %v2164 = vunpack.c.l.b16 %v1580
  %v2165 = vunpack.c.l.b16 %v1581
  %v2166 = vunpack.c.l.b16 %v1582
  %v2167 = vunpack.c.l.b16 %v1583
  %v2168 = vunpack.c.l.b16 %v1584
  %v2169 = vunpack.c.l.b16 %v1585
  %v2170 = vunpack.c.l.b16 %v1586
  %v2171 = vunpack.c.l.b16 %v1587
  %v2172 = vunpack.c.l.b16 %v1588
  %v2173 = vunpack.c.l.b16 %v1589
  %v2174 = vunpack.c.l.b16 %v1590
  %v2175 = vunpack.c.l.b16 %v1591
  %v2176 = vunpack.c.l.b16 %v1592
  %v2177 = vunpack.c.l.b16 %v1593
  %v2178 = vunpack.c.l.b16 %v1594
  %v2179 = vunpack.c.l.b16 %v1595
  %v2180 = vunpack.c.l.b16 %v1596
  %v2181 = vunpack.c.l.b16 %v1597
  %v2182 = vunpack.c.l.b16 %v1598
  %v2183 = vunpack.c.l.b16 %v1599
  %v2184 = vunpack.c.l.b16 %v1600
  %v2185 = vunpack.c.l.b16 %v1601
  %v2186 = vunpack.c.l.b16 %v1602
  %v2187 = vunpack.c.l.b16 %v1603
  %v2188 = vunpack.c.l.b16 %v1604
  %v2189 = vunpack.c.l.b16 %v1605
  %v2190 = vunpack.c.l.b16 %v1606
  %v2191 = vunpack.c.l.b16 %v1607
  %v2192 = vunpack.c.l.b16 %v1608
  %v2193 = vunpack.c.l.b16 %v1609
  %v2194 = vunpack.c.l.b16 %v1610
  %v2195 = vunpack.c.l.b16 %v1611
  %v2196 = vunpack.c.l.b16 %v1612
  %v2197 = vpack.c.b16 %v1942, %v1941
  %v2198 = vpack.c.b16 %v1944, %v1943
  %v2199 = vpack.c.b16 %v1946, %v1945
  %v2200 = vpack.c.b16 %v1948, %v1947
  %v2201 = vpack.c.b16 %v1950, %v1949
  %v2202 = vpack.c.b16 %v1952, %v1951
  %v2203 = vpack.c.b16 %v1954, %v1953
  %v2204 = vpack.c.b16 %v1956, %v1955
  %v2205 = vpack.c.b16 %v1958, %v1957
  %v2206 = vpack.c.b16 %v1960, %v1959
  %v2207 = vpack.c.b16 %v1962, %v1961
  %v2208 = vpack.c.b16 %v1964, %v1963
  %v2209 = vpack.c.b16 %v1966, %v1965
  %v2210 = vpack.c.b16 %v1968, %v1967
  %v2211 = vpack.c.b16 %v1970, %v1969
  %v2212 = vpack.c.b16 %v1972, %v1971
  %v2213 = vpack.c.b16 %v1974, %v1973
  %v2214 = vpack.c.b16 %v1976, %v1975
  %v2215 = vpack.c.b16 %v1978, %v1977
  %v2216 = vpack.c.b16 %v1980, %v1979
  %v2217 = vpack.c.b16 %v1982, %v1981
  %v2218 = vpack.c.b16 %v1984, %v1983
  %v2219 = vpack.c.b16 %v1986, %v1985
  %v2220 = vpack.c.b16 %v1988, %v1987
  %v2221 = vpack.c.b16 %v1990, %v1989
  %v2222 = vpack.c.b16 %v1992, %v1991
  %v2223 = vpack.c.b16 %v1994, %v1993
  %v2224 = vpack.c.b16 %v1996, %v1995
  %v2225 = vpack.c.b16 %v1998, %v1997
  %v2226 = vpack.c.b16 %v2000, %v1999
  %v2227 = vpack.c.b16 %v2002, %v2001
  %v2228 = vpack.c.b16 %v2004, %v2003
  %v2229 = vpack.c.b16 %v2006, %v2005
  %v2230 = vpack.c.b16 %v2008, %v2007
  %v2231 = vpack.c.b16 %v2010, %v2009
  %v2232 = vpack.c.b16 %v2012, %v2011
  %v2233 = vpack.c.b16 %v2014, %v2013
  %v2234 = vpack.c.b16 %v2016, %v2015
  %v2235 = vpack.c.b16 %v2018, %v2017
  %v2236 = vpack.c.b16 %v2020, %v2019
  %v2237 = vpack.c.b16 %v2022, %v2021
  %v2238 = vpack.c.b16 %v2024, %v2023
  %v2239 = vpack.c.b16 %v2026, %v2025
  %v2240 = vpack.c.b16 %v2028, %v2027
  %v2241 = vpack.c.b16 %v2030, %v2029
  %v2242 = vpack.c.b16 %v2032, %v2031
  %v2243 = vpack.c.b16 %v2034, %v2033
  %v2244 = vpack.c.b16 %v2036, %v2035
  %v2245 = vpack.c.b16 %v2038, %v2037
  %v2246 = vpack.c.b16 %v2040, %v2039
  %v2247 = vpack.c.b16 %v2042, %v2041
  %v2248 = vpack.c.b16 %v2044, %v2043
  %v2249 = vpack.c.b16 %v2046, %v2045
  %v2250 = vpack.c.b16 %v2048, %v2047
  %v2251 = vpack.c.b16 %v2050, %v2049
  %v2252 = vpack.c.b16 %v2052, %v2051
  %v2253 = vpack.c.b16 %v2054, %v2053
  %v2254 = vpack.c.b16 %v2056, %v2055
  %v2255 = vpack.c.b16 %v2058, %v2057
  %v2256 = vpack.c.b16 %v2060, %v2059
  %v2257 = vpack.c.b16 %v2062, %v2061
  %v2258 = vpack.c.b16 %v2064, %v2063
  %v2259 = vpack.c.b16 %v2066, %v2065
  %v2260 = vpack.c.b16 %v2068, %v2067
  %v2261 = vpack.c.b16 %v2070, %v2069
  %v2262 = vpack.c.b16 %v2072, %v2071
  %v2263 = vpack.c.b16 %v2074, %v2073
  %v2264 = vpack.c.b16 %v2076, %v2075
  %v2265 = vpack.c.b16 %v2078, %v2077
  %v2266 = vpack.c.b16 %v2080, %v2079
  %v2267 = vpack.c.b16 %v2082, %v2081
  %v2268 = vpack.c.b16 %v2084, %v2083
  %v2269 = vpack.c.b16 %v2086, %v2085
  %v2270 = vpack.c.b16 %v2088, %v2087
  %v2271 = vpack.c.b16 %v2090, %v2089
  %v2272 = vpack.c.b16 %v2092, %v2091
  %v2273 = vpack.c.b16 %v2094, %v2093
  %v2274 = vpack.c.b16 %v2096, %v2095
  %v2275 = vpack.c.b16 %v2098, %v2097
  %v2276 = vpack.c.b16 %v2100, %v2099
  %v2277 = vpack.c.b16 %v2102, %v2101
  %v2278 = vpack.c.b16 %v2104, %v2103
  %v2279 = vpack.c.b16 %v2106, %v2105
  %v2280 = vpack.c.b16 %v2108, %v2107
  %v2281 = vpack.c.b16 %v2110, %v2109
  %v2282 = vpack.c.b16 %v2112, %v2111
  %v2283 = vpack.c.b16 %v2114, %v2113
  %v2284 = vpack.c.b16 %v2116, %v2115
  %v2285 = vpack.c.b16 %v2118, %v2117
  %v2286 = vpack.c.b16 %v2120, %v2119
  %v2287 = vpack.c.b16 %v2122, %v2121
  %v2288 = vpack.c.b16 %v2124, %v2123
  %v2289 = vpack.c.b16 %v2126, %v2125
  %v2290 = vpack.c.b16 %v2128, %v2127
  %v2291 = vpack.c.b16 %v2130, %v2129
  %v2292 = vpack.c.b16 %v2132, %v2131
  %v2293 = vpack.c.b16 %v2134, %v2133
  %v2294 = vpack.c.b16 %v2136, %v2135
  %v2295 = vpack.c.b16 %v2138, %v2137
  %v2296 = vpack.c.b16 %v2140, %v2139
  %v2297 = vpack.c.b16 %v2142, %v2141
  %v2298 = vpack.c.b16 %v2144, %v2143
  %v2299 = vpack.c.b16 %v2146, %v2145
  %v2300 = vpack.c.b16 %v2148, %v2147
  %v2301 = vpack.c.b16 %v2150, %v2149
  %v2302 = vpack.c.b16 %v2152, %v2151
  %v2303 = vpack.c.b16 %v2154, %v2153
  %v2304 = vpack.c.b16 %v2156, %v2155
  %v2305 = vpack.c.b16 %v2158, %v2157
  %v2306 = vpack.c.b16 %v2160, %v2159
  %v2307 = vpack.c.b16 %v2162, %v2161
  %v2308 = vpack.c.b16 %v2164, %v2163
  %v2309 = vpack.c.b16 %v2166, %v2165
  %v2310 = vpack.c.b16 %v2168, %v2167
  %v2311 = vpack.c.b16 %v2170, %v2169
  %v2312 = vpack.c.b16 %v2172, %v2171
  %v2313 = vpack.c.b16 %v2174, %v2173
  %v2314 = vpack.c.b16 %v2176, %v2175
  %v2315 = vpack.c.b16 %v2178, %v2177
  %v2316 = vpack.c.b16 %v2180, %v2179
  %v2317 = vpack.c.b16 %v2182, %v2181
  %v2318 = vpack.c.b16 %v2184, %v2183
  %v2319 = vpack.c.b16 %v2186, %v2185
  %v2320 = vpack.c.b16 %v2188, %v2187
  %v2321 = vpack.c.b16 %v2190, %v2189
  %v2322 = vpack.c.b16 %v2192, %v2191
  %v2323 = vpack.c.b16 %v2194, %v2193
  %v2324 = vpack.c.b16 %v2196, %v2195
  %2453 = vmatpush.bf16.msra.mxu0 %v2204
  %2454 = vmatpush.bf16.msra.mxu0 %v2203
  %2455 = vmatpush.bf16.msra.mxu0 %v2202
  %2456 = vmatpush.bf16.msra.mxu0 %v2201
  %2457 = vmatpush.bf16.msra.mxu0 %v2200
  %2458 = vmatpush.bf16.msra.mxu0 %v2199
  %2459 = vmatpush.bf16.msra.mxu0 %v2198
  %2460 = vmatpush.bf16.msra.mxu0 %v2197
  %2461 = vmatmul.bf16.gmra.mxu0 %v1653
  %v2462 = vpop.f32.mrf.mxu0
  %v2463 = vadd.f32 0.0, %v2462
  %v2464 = vpop.f32.mrf.mxu0
  %2465 = vdwg.mxu0
  %2466 = vmatpush.bf16.msra.mxu0 %v2212
  %2467 = vmatpush.bf16.msra.mxu0 %v2211
  %2468 = vmatpush.bf16.msra.mxu0 %v2210
  %2469 = vmatpush.bf16.msra.mxu0 %v2209
  %2470 = vmatpush.bf16.msra.mxu0 %v2208
  %2471 = vmatpush.bf16.msra.mxu0 %v2207
  %2472 = vmatpush.bf16.msra.mxu0 %v2206
  %2473 = vmatpush.bf16.msra.mxu0 %v2205
  %2474 = vmatmul.bf16.gmra.mxu0 %v1654
  %v2475 = vpop.f32.mrf.mxu0
  %v2476 = vadd.f32 %v2463, %v2475
  %v2477 = vpop.f32.mrf.mxu0
  %2478 = vdwg.mxu0
  %2479 = vmatpush.bf16.msra.mxu0 %v2220
  %2480 = vmatpush.bf16.msra.mxu0 %v2219
  %2481 = vmatpush.bf16.msra.mxu0 %v2218
  %2482 = vmatpush.bf16.msra.mxu0 %v2217
  %2483 = vmatpush.bf16.msra.mxu0 %v2216
  %2484 = vmatpush.bf16.msra.mxu0 %v2215
  %2485 = vmatpush.bf16.msra.mxu0 %v2214
  %2486 = vmatpush.bf16.msra.mxu0 %v2213
  %2487 = vmatmul.bf16.gmra.mxu0 %v1655
  %v2488 = vpop.f32.mrf.mxu0
  %v2489 = vadd.f32 %v2476, %v2488
  %v2490 = vpop.f32.mrf.mxu0
  %2491 = vdwg.mxu0
  %2492 = vmatpush.bf16.msra.mxu0 %v2228
  %2493 = vmatpush.bf16.msra.mxu0 %v2227
  %2494 = vmatpush.bf16.msra.mxu0 %v2226
  %2495 = vmatpush.bf16.msra.mxu0 %v2225
  %2496 = vmatpush.bf16.msra.mxu0 %v2224
  %2497 = vmatpush.bf16.msra.mxu0 %v2223
  %2498 = vmatpush.bf16.msra.mxu0 %v2222
  %2499 = vmatpush.bf16.msra.mxu0 %v2221
  %2500 = vmatmul.bf16.gmra.mxu0 %v1656
  %v2501 = vpop.f32.mrf.mxu0
  %v2502 = vadd.f32 %v2489, %v2501
  %v2503 = vpop.f32.mrf.mxu0
  %2504 = vdwg.mxu0
  %2505 = vmatpush.bf16.msra.mxu0 %v2236
  %2506 = vmatpush.bf16.msra.mxu0 %v2235
  %2507 = vmatpush.bf16.msra.mxu0 %v2234
  %2508 = vmatpush.bf16.msra.mxu0 %v2233
  %2509 = vmatpush.bf16.msra.mxu0 %v2232
  %2510 = vmatpush.bf16.msra.mxu0 %v2231
  %2511 = vmatpush.bf16.msra.mxu0 %v2230
  %2512 = vmatpush.bf16.msra.mxu0 %v2229
  %2513 = vmatmul.bf16.gmra.mxu0 %v1657
  %v2514 = vpop.f32.mrf.mxu0
  %v2515 = vadd.f32 %v2502, %v2514
  %v2516 = vpop.f32.mrf.mxu0
  %2517 = vdwg.mxu0
  %2518 = vmatpush.bf16.msra.mxu0 %v2244
  %2519 = vmatpush.bf16.msra.mxu0 %v2243
  %2520 = vmatpush.bf16.msra.mxu0 %v2242
  %2521 = vmatpush.bf16.msra.mxu0 %v2241
  %2522 = vmatpush.bf16.msra.mxu0 %v2240
  %2523 = vmatpush.bf16.msra.mxu0 %v2239
  %2524 = vmatpush.bf16.msra.mxu0 %v2238
  %2525 = vmatpush.bf16.msra.mxu0 %v2237
  %2526 = vmatmul.bf16.gmra.mxu0 %v1658
  %v2527 = vpop.f32.mrf.mxu0
  %v2528 = vadd.f32 %v2515, %v2527
  %v2529 = vpop.f32.mrf.mxu0
  %2530 = vdwg.mxu0
  %2531 = vmatpush.bf16.msra.mxu0 %v2252
  %2532 = vmatpush.bf16.msra.mxu0 %v2251
  %2533 = vmatpush.bf16.msra.mxu0 %v2250
  %2534 = vmatpush.bf16.msra.mxu0 %v2249
  %2535 = vmatpush.bf16.msra.mxu0 %v2248
  %2536 = vmatpush.bf16.msra.mxu0 %v2247
  %2537 = vmatpush.bf16.msra.mxu0 %v2246
  %2538 = vmatpush.bf16.msra.mxu0 %v2245
  %2539 = vmatmul.bf16.gmra.mxu0 %v1659
  %v2540 = vpop.f32.mrf.mxu0
  %v2541 = vadd.f32 %v2528, %v2540
  %v2542 = vpop.f32.mrf.mxu0
  %2543 = vdwg.mxu0
  %2544 = vmatpush.bf16.msra.mxu0 %v2260
  %2545 = vmatpush.bf16.msra.mxu0 %v2259
  %2546 = vmatpush.bf16.msra.mxu0 %v2258
  %2547 = vmatpush.bf16.msra.mxu0 %v2257
  %2548 = vmatpush.bf16.msra.mxu0 %v2256
  %2549 = vmatpush.bf16.msra.mxu0 %v2255
  %2550 = vmatpush.bf16.msra.mxu0 %v2254
  %2551 = vmatpush.bf16.msra.mxu0 %v2253
  %2552 = vmatmul.bf16.gmra.mxu0 %v1660
  %v2553 = vpop.f32.mrf.mxu0
  %v2554 = vadd.f32 %v2541, %v2553
  %v2555 = vpop.f32.mrf.mxu0
  %2556 = vdwg.mxu0
  %2557 = vmatpush.bf16.msra.mxu0 %v2268
  %2558 = vmatpush.bf16.msra.mxu0 %v2267
  %2559 = vmatpush.bf16.msra.mxu0 %v2266
  %2560 = vmatpush.bf16.msra.mxu0 %v2265
  %2561 = vmatpush.bf16.msra.mxu0 %v2264
  %2562 = vmatpush.bf16.msra.mxu0 %v2263
  %2563 = vmatpush.bf16.msra.mxu0 %v2262
  %2564 = vmatpush.bf16.msra.mxu0 %v2261
  %2565 = vmatmul.bf16.gmra.mxu0 %v1661
  %v2566 = vpop.f32.mrf.mxu0
  %v2567 = vadd.f32 %v2554, %v2566
  %v2568 = vpop.f32.mrf.mxu0
  %2569 = vdwg.mxu0
  %2570 = vmatpush.bf16.msra.mxu0 %v2276
  %2571 = vmatpush.bf16.msra.mxu0 %v2275
  %2572 = vmatpush.bf16.msra.mxu0 %v2274
  %2573 = vmatpush.bf16.msra.mxu0 %v2273
  %2574 = vmatpush.bf16.msra.mxu0 %v2272
  %2575 = vmatpush.bf16.msra.mxu0 %v2271
  %2576 = vmatpush.bf16.msra.mxu0 %v2270
  %2577 = vmatpush.bf16.msra.mxu0 %v2269
  %2578 = vmatmul.bf16.gmra.mxu0 %v1662
  %v2579 = vpop.f32.mrf.mxu0
  %v2580 = vadd.f32 %v2567, %v2579
  %v2581 = vpop.f32.mrf.mxu0
  %2582 = vdwg.mxu0
  %2583 = vmatpush.bf16.msra.mxu0 %v2284
  %2584 = vmatpush.bf16.msra.mxu0 %v2283
  %2585 = vmatpush.bf16.msra.mxu0 %v2282
  %2586 = vmatpush.bf16.msra.mxu0 %v2281
  %2587 = vmatpush.bf16.msra.mxu0 %v2280
  %2588 = vmatpush.bf16.msra.mxu0 %v2279
  %2589 = vmatpush.bf16.msra.mxu0 %v2278
  %2590 = vmatpush.bf16.msra.mxu0 %v2277
  %2591 = vmatmul.bf16.gmra.mxu0 %v1663
  %v2592 = vpop.f32.mrf.mxu0
  %v2593 = vadd.f32 %v2580, %v2592
  %v2594 = vpop.f32.mrf.mxu0
  %2595 = vdwg.mxu0
  %2596 = vmatpush.bf16.msra.mxu0 %v2292
  %2597 = vmatpush.bf16.msra.mxu0 %v2291
  %2598 = vmatpush.bf16.msra.mxu0 %v2290
  %2599 = vmatpush.bf16.msra.mxu0 %v2289
  %2600 = vmatpush.bf16.msra.mxu0 %v2288
  %2601 = vmatpush.bf16.msra.mxu0 %v2287
  %2602 = vmatpush.bf16.msra.mxu0 %v2286
  %2603 = vmatpush.bf16.msra.mxu0 %v2285
  %2604 = vmatmul.bf16.gmra.mxu0 %v1664
  %v2605 = vpop.f32.mrf.mxu0
  %v2606 = vadd.f32 %v2593, %v2605
  %v2607 = vpop.f32.mrf.mxu0
  %2608 = vdwg.mxu0
  %2609 = vmatpush.bf16.msra.mxu0 %v2300
  %2610 = vmatpush.bf16.msra.mxu0 %v2299
  %2611 = vmatpush.bf16.msra.mxu0 %v2298
  %2612 = vmatpush.bf16.msra.mxu0 %v2297
  %2613 = vmatpush.bf16.msra.mxu0 %v2296
  %2614 = vmatpush.bf16.msra.mxu0 %v2295
  %2615 = vmatpush.bf16.msra.mxu0 %v2294
  %2616 = vmatpush.bf16.msra.mxu0 %v2293
  %2617 = vmatmul.bf16.gmra.mxu0 %v1665
  %v2618 = vpop.f32.mrf.mxu0
  %v2619 = vadd.f32 %v2606, %v2618
  %v2620 = vpop.f32.mrf.mxu0
  %2621 = vdwg.mxu0
  %2622 = vmatpush.bf16.msra.mxu0 %v2308
  %2623 = vmatpush.bf16.msra.mxu0 %v2307
  %2624 = vmatpush.bf16.msra.mxu0 %v2306
  %2625 = vmatpush.bf16.msra.mxu0 %v2305
  %2626 = vmatpush.bf16.msra.mxu0 %v2304
  %2627 = vmatpush.bf16.msra.mxu0 %v2303
  %2628 = vmatpush.bf16.msra.mxu0 %v2302
  %2629 = vmatpush.bf16.msra.mxu0 %v2301
  %2630 = vmatmul.bf16.gmra.mxu0 %v1666
  %v2631 = vpop.f32.mrf.mxu0
  %v2632 = vadd.f32 %v2619, %v2631
  %v2633 = vpop.f32.mrf.mxu0
  %2634 = vdwg.mxu0
  %2635 = vmatpush.bf16.msra.mxu0 %v2316
  %2636 = vmatpush.bf16.msra.mxu0 %v2315
  %2637 = vmatpush.bf16.msra.mxu0 %v2314
  %2638 = vmatpush.bf16.msra.mxu0 %v2313
  %2639 = vmatpush.bf16.msra.mxu0 %v2312
  %2640 = vmatpush.bf16.msra.mxu0 %v2311
  %2641 = vmatpush.bf16.msra.mxu0 %v2310
  %2642 = vmatpush.bf16.msra.mxu0 %v2309
  %2643 = vmatmul.bf16.gmra.mxu0 %v1667
  %v2644 = vpop.f32.mrf.mxu0
  %v2645 = vadd.f32 %v2632, %v2644
  %v2646 = vpop.f32.mrf.mxu0
  %2647 = vdwg.mxu0
  %2648 = vmatpush.bf16.msra.mxu0 %v2324
  %2649 = vmatpush.bf16.msra.mxu0 %v2323
  %2650 = vmatpush.bf16.msra.mxu0 %v2322
  %2651 = vmatpush.bf16.msra.mxu0 %v2321
  %2652 = vmatpush.bf16.msra.mxu0 %v2320
  %2653 = vmatpush.bf16.msra.mxu0 %v2319
  %2654 = vmatpush.bf16.msra.mxu0 %v2318
  %2655 = vmatpush.bf16.msra.mxu0 %v2317
  %2656 = vmatmul.bf16.gmra.mxu0 %v1668
  %v2657 = vpop.f32.mrf.mxu0
  %v2658 = vadd.f32 %v2645, %v2657
  %v2659 = vpop.f32.mrf.mxu0
  %2660 = vdwg.mxu0
  %2662 = vrot.lane.b32.xlu0 %v2658, 64
  %v2663 = vpop.permute.xlu0 %2662
  %vm2665 = vcmask 1043968
  %2666 = vst.msk [vmem:[#allocation2] sm:$0xf] %vm2665, %v2663
  %v2667 = vsel %vm1330, %v2658, 0.0
  %v2668 = vrot.slane %v2667, 4
  %v2669 = vadd.f32 %v2667, %v2668
  %v2670 = vrot.slane %v2669, 2
  %v2671 = vadd.f32 %v2669, %v2670
  %v2672 = vrot.slane %v2671, 1
  %v2673 = vadd.f32 %v2671, %v2672
  %v2674 = vadd.f32 %v1339, %v2673
  %v2675 = vmul.f32 %v2658, %v2658
  %v2676 = vsel %vm1330, %v2675, 0.0
  %v2677 = vrot.slane %v2676, 4
  %v2678 = vadd.f32 %v2676, %v2677
  %v2679 = vrot.slane %v2678, 2
  %v2680 = vadd.f32 %v2678, %v2679
  %v2681 = vrot.slane %v2680, 1
  %v2682 = vadd.f32 %v2680, %v2681
  %v2683 = vadd.f32 %v1348, %v2682
  %v2684 = vld [vmem:[%s0 + $0x40] sm:$0x33]
  %v2685 = vld [vmem:[%s0 + $0x48] sm:$0x33]
  %v2686 = vld [vmem:[%s0 + $0x50] sm:$0x33]
  %v2687 = vld [vmem:[%s0 + $0x58] sm:$0x33]
  %v2688 = vld [vmem:[%s0 + $0x60] sm:$0x33]
  %v2689 = vld [vmem:[%s0 + $0x68] sm:$0x33]
  %v2690 = vld [vmem:[%s0 + $0x70] sm:$0x33]
  %v2691 = vld [vmem:[%s0 + $0x78] sm:$0x33]
  %v2692 = vld [vmem:[%s1] sm:$0xf]
  %v2693 = vld [vmem:[%s1 + $0x4] sm:$0xf]
  %v2694 = vld [vmem:[%s1 + $0x8] sm:$0xf]
  %v2695 = vld [vmem:[%s1 + $0xc] sm:$0xf]
  %v2696 = vld [vmem:[%s1 + $0x10] sm:$0xf]
  %v2697 = vld [vmem:[%s1 + $0x14] sm:$0xf]
  %v2698 = vld [vmem:[%s1 + $0x18] sm:$0xf]
  %v2699 = vld [vmem:[%s1 + $0x1c] sm:$0xf]
  %v2700 = vld [vmem:[%s1 + $0x20] sm:$0xf]
  %v2701 = vld [vmem:[%s1 + $0x24] sm:$0xf]
  %v2702 = vld [vmem:[%s1 + $0x28] sm:$0xf]
  %v2703 = vld [vmem:[%s1 + $0x2c] sm:$0xf]
  %v2704 = vld [vmem:[%s1 + $0x30] sm:$0xf]
  %v2705 = vld [vmem:[%s1 + $0x34] sm:$0xf]
  %v2706 = vld [vmem:[%s1 + $0x38] sm:$0xf]
  %v2707 = vld [vmem:[%s1 + $0x3c] sm:$0xf]
  %v2708 = vld [vmem:[%s1 + $0x40] sm:$0xf]
  %v2709 = vld [vmem:[%s1 + $0x44] sm:$0xf]
  %v2710 = vld [vmem:[%s1 + $0x48] sm:$0xf]
  %v2711 = vld [vmem:[%s1 + $0x4c] sm:$0xf]
  %v2712 = vld [vmem:[%s1 + $0x50] sm:$0xf]
  %v2713 = vld [vmem:[%s1 + $0x54] sm:$0xf]
  %v2714 = vld [vmem:[%s1 + $0x58] sm:$0xf]
  %v2715 = vld [vmem:[%s1 + $0x5c] sm:$0xf]
  %v2716 = vld [vmem:[%s1 + $0x60] sm:$0xf]
  %v2717 = vld [vmem:[%s1 + $0x64] sm:$0xf]
  %v2718 = vld [vmem:[%s1 + $0x68] sm:$0xf]
  %v2719 = vld [vmem:[%s1 + $0x6c] sm:$0xf]
  %v2720 = vld [vmem:[%s1 + $0x70] sm:$0xf]
  %v2721 = vld [vmem:[%s1 + $0x74] sm:$0xf]
  %v2722 = vld [vmem:[%s1 + $0x78] sm:$0xf]
  %v2723 = vld [vmem:[%s1 + $0x7c] sm:$0xf]
  %v2724 = vld [vmem:[%s1 + $0x80] sm:$0xf]
  %v2725 = vld [vmem:[%s1 + $0x84] sm:$0xf]
  %v2726 = vld [vmem:[%s1 + $0x88] sm:$0xf]
  %v2727 = vld [vmem:[%s1 + $0x8c] sm:$0xf]
  %v2728 = vld [vmem:[%s1 + $0x90] sm:$0xf]
  %v2729 = vld [vmem:[%s1 + $0x94] sm:$0xf]
  %v2730 = vld [vmem:[%s1 + $0x98] sm:$0xf]
  %v2731 = vld [vmem:[%s1 + $0x9c] sm:$0xf]
  %v2732 = vld [vmem:[%s1 + $0xa0] sm:$0xf]
  %v2733 = vld [vmem:[%s1 + $0xa4] sm:$0xf]
  %v2734 = vld [vmem:[%s1 + $0xa8] sm:$0xf]
  %v2735 = vld [vmem:[%s1 + $0xac] sm:$0xf]
  %v2736 = vld [vmem:[%s1 + $0xb0] sm:$0xf]
  %v2737 = vld [vmem:[%s1 + $0xb4] sm:$0xf]
  %v2738 = vld [vmem:[%s1 + $0xb8] sm:$0xf]
  %v2739 = vld [vmem:[%s1 + $0xbc] sm:$0xf]
  %v2740 = vld [vmem:[%s1 + $0xc0] sm:$0xf]
  %v2741 = vld [vmem:[%s1 + $0xc4] sm:$0xf]
  %v2742 = vld [vmem:[%s1 + $0xc8] sm:$0xf]
  %v2743 = vld [vmem:[%s1 + $0xcc] sm:$0xf]
  %v2744 = vld [vmem:[%s1 + $0xd0] sm:$0xf]
  %v2745 = vld [vmem:[%s1 + $0xd4] sm:$0xf]
  %v2746 = vld [vmem:[%s1 + $0xd8] sm:$0xf]
  %v2747 = vld [vmem:[%s1 + $0xdc] sm:$0xf]
  %v2748 = vld [vmem:[%s1 + $0xe0] sm:$0xf]
  %v2749 = vld [vmem:[%s1 + $0xe4] sm:$0xf]
  %v2750 = vld [vmem:[%s1 + $0xe8] sm:$0xf]
  %v2751 = vld [vmem:[%s1 + $0xec] sm:$0xf]
  %v2752 = vld [vmem:[%s1 + $0xf0] sm:$0xf]
  %v2753 = vld [vmem:[%s1 + $0xf4] sm:$0xf]
  %v2754 = vld [vmem:[%s1 + $0xf8] sm:$0xf]
  %v2755 = vld [vmem:[%s1 + $0xfc] sm:$0xf]
  %v2756 = vld [vmem:[%s1 + $0x100] sm:$0xf]
  %v2757 = vld [vmem:[%s1 + $0x104] sm:$0xf]
  %v2758 = vld [vmem:[%s1 + $0x108] sm:$0xf]
  %v2759 = vld [vmem:[%s1 + $0x10c] sm:$0xf]
  %v2760 = vld [vmem:[%s1 + $0x110] sm:$0xf]
  %v2761 = vld [vmem:[%s1 + $0x114] sm:$0xf]
  %v2762 = vld [vmem:[%s1 + $0x118] sm:$0xf]
  %v2763 = vld [vmem:[%s1 + $0x11c] sm:$0xf]
  %v2764 = vld [vmem:[%s1 + $0x120] sm:$0xf]
  %v2765 = vld [vmem:[%s1 + $0x124] sm:$0xf]
  %v2766 = vld [vmem:[%s1 + $0x128] sm:$0xf]
  %v2767 = vld [vmem:[%s1 + $0x12c] sm:$0xf]
  %v2768 = vld [vmem:[%s1 + $0x130] sm:$0xf]
  %v2769 = vld [vmem:[%s1 + $0x134] sm:$0xf]
  %v2770 = vld [vmem:[%s1 + $0x138] sm:$0xf]
  %v2771 = vld [vmem:[%s1 + $0x13c] sm:$0xf]
  %v2772 = vld [vmem:[%s1 + $0x140] sm:$0xf]
  %v2773 = vld [vmem:[%s1 + $0x144] sm:$0xf]
  %v2774 = vld [vmem:[%s1 + $0x148] sm:$0xf]
  %v2775 = vld [vmem:[%s1 + $0x14c] sm:$0xf]
  %v2776 = vld [vmem:[%s1 + $0x150] sm:$0xf]
  %v2777 = vld [vmem:[%s1 + $0x154] sm:$0xf]
  %v2778 = vld [vmem:[%s1 + $0x158] sm:$0xf]
  %v2779 = vld [vmem:[%s1 + $0x15c] sm:$0xf]
  %v2780 = vld [vmem:[%s1 + $0x160] sm:$0xf]
  %v2781 = vld [vmem:[%s1 + $0x164] sm:$0xf]
  %v2782 = vld [vmem:[%s1 + $0x168] sm:$0xf]
  %v2783 = vld [vmem:[%s1 + $0x16c] sm:$0xf]
  %v2784 = vld [vmem:[%s1 + $0x170] sm:$0xf]
  %v2785 = vld [vmem:[%s1 + $0x174] sm:$0xf]
  %v2786 = vld [vmem:[%s1 + $0x178] sm:$0xf]
  %v2787 = vld [vmem:[%s1 + $0x17c] sm:$0xf]
  %v2788 = vld [vmem:[%s1 + $0x180] sm:$0xf]
  %v2789 = vld [vmem:[%s1 + $0x184] sm:$0xf]
  %v2790 = vld [vmem:[%s1 + $0x188] sm:$0xf]
  %v2791 = vld [vmem:[%s1 + $0x18c] sm:$0xf]
  %v2792 = vld [vmem:[%s1 + $0x190] sm:$0xf]
  %v2793 = vld [vmem:[%s1 + $0x194] sm:$0xf]
  %v2794 = vld [vmem:[%s1 + $0x198] sm:$0xf]
  %v2795 = vld [vmem:[%s1 + $0x19c] sm:$0xf]
  %v2796 = vld [vmem:[%s1 + $0x1a0] sm:$0xf]
  %v2797 = vld [vmem:[%s1 + $0x1a4] sm:$0xf]
  %v2798 = vld [vmem:[%s1 + $0x1a8] sm:$0xf]
  %v2799 = vld [vmem:[%s1 + $0x1ac] sm:$0xf]
  %v2800 = vld [vmem:[%s1 + $0x1b0] sm:$0xf]
  %v2801 = vld [vmem:[%s1 + $0x1b4] sm:$0xf]
  %v2802 = vld [vmem:[%s1 + $0x1b8] sm:$0xf]
  %v2803 = vld [vmem:[%s1 + $0x1bc] sm:$0xf]
  %v2804 = vld [vmem:[%s1 + $0x1c0] sm:$0xf]
  %v2805 = vld [vmem:[%s1 + $0x1c4] sm:$0xf]
  %v2806 = vld [vmem:[%s1 + $0x1c8] sm:$0xf]
  %v2807 = vld [vmem:[%s1 + $0x1cc] sm:$0xf]
  %v2808 = vld [vmem:[%s1 + $0x1d0] sm:$0xf]
  %v2809 = vld [vmem:[%s1 + $0x1d4] sm:$0xf]
  %v2810 = vld [vmem:[%s1 + $0x1d8] sm:$0xf]
  %v2811 = vld [vmem:[%s1 + $0x1dc] sm:$0xf]
  %v2812 = vld [vmem:[%s1 + $0x1e0] sm:$0xf]
  %v2813 = vld [vmem:[%s1 + $0x1e4] sm:$0xf]
  %v2814 = vld [vmem:[%s1 + $0x1e8] sm:$0xf]
  %v2815 = vld [vmem:[%s1 + $0x1ec] sm:$0xf]
  %v2816 = vld [vmem:[%s1 + $0x1f0] sm:$0xf]
  %v2817 = vld [vmem:[%s1 + $0x1f4] sm:$0xf]
  %v2818 = vld [vmem:[%s1 + $0x1f8] sm:$0xf]
  %v2819 = vld [vmem:[%s1 + $0x1fc] sm:$0xf]
  %v2820 = vld [vmem:[%s1 + $0x200] sm:$0xf]
  %v2821 = vld [vmem:[%s1 + $0x204] sm:$0xf]
  %v2822 = vld [vmem:[%s1 + $0x208] sm:$0xf]
  %v2823 = vld [vmem:[%s1 + $0x20c] sm:$0xf]
  %v2824 = vld [vmem:[%s1 + $0x210] sm:$0xf]
  %v2825 = vld [vmem:[%s1 + $0x214] sm:$0xf]
  %v2826 = vld [vmem:[%s1 + $0x218] sm:$0xf]
  %v2827 = vld [vmem:[%s1 + $0x21c] sm:$0xf]
  %v2828 = vld [vmem:[%s1 + $0x220] sm:$0xf]
  %v2829 = vld [vmem:[%s1 + $0x224] sm:$0xf]
  %v2830 = vld [vmem:[%s1 + $0x228] sm:$0xf]
  %v2831 = vld [vmem:[%s1 + $0x22c] sm:$0xf]
  %v2832 = vld [vmem:[%s1 + $0x230] sm:$0xf]
  %v2833 = vld [vmem:[%s1 + $0x234] sm:$0xf]
  %v2834 = vld [vmem:[%s1 + $0x238] sm:$0xf]
  %v2835 = vld [vmem:[%s1 + $0x23c] sm:$0xf]
  %v2836 = vld [vmem:[%s1 + $0x240] sm:$0xf]
  %v2837 = vld [vmem:[%s1 + $0x244] sm:$0xf]
  %v2838 = vld [vmem:[%s1 + $0x248] sm:$0xf]
  %v2839 = vld [vmem:[%s1 + $0x24c] sm:$0xf]
  %v2840 = vld [vmem:[%s1 + $0x250] sm:$0xf]
  %v2841 = vld [vmem:[%s1 + $0x254] sm:$0xf]
  %v2842 = vld [vmem:[%s1 + $0x258] sm:$0xf]
  %v2843 = vld [vmem:[%s1 + $0x25c] sm:$0xf]
  %v2844 = vld [vmem:[%s1 + $0x260] sm:$0xf]
  %v2845 = vld [vmem:[%s1 + $0x264] sm:$0xf]
  %v2846 = vld [vmem:[%s1 + $0x268] sm:$0xf]
  %v2847 = vld [vmem:[%s1 + $0x26c] sm:$0xf]
  %v2848 = vld [vmem:[%s1 + $0x270] sm:$0xf]
  %v2849 = vld [vmem:[%s1 + $0x274] sm:$0xf]
  %v2850 = vld [vmem:[%s1 + $0x278] sm:$0xf]
  %v2851 = vld [vmem:[%s1 + $0x27c] sm:$0xf]
  %v2852 = vld [vmem:[%s1 + $0x280] sm:$0xf]
  %v2853 = vld [vmem:[%s1 + $0x284] sm:$0xf]
  %v2854 = vld [vmem:[%s1 + $0x288] sm:$0xf]
  %v2855 = vld [vmem:[%s1 + $0x28c] sm:$0xf]
  %v2856 = vld [vmem:[%s1 + $0x290] sm:$0xf]
  %v2857 = vld [vmem:[%s1 + $0x294] sm:$0xf]
  %v2858 = vld [vmem:[%s1 + $0x298] sm:$0xf]
  %v2859 = vld [vmem:[%s1 + $0x29c] sm:$0xf]
  %v2860 = vld [vmem:[%s1 + $0x2a0] sm:$0xf]
  %v2861 = vld [vmem:[%s1 + $0x2a4] sm:$0xf]
  %v2862 = vld [vmem:[%s1 + $0x2a8] sm:$0xf]
  %v2863 = vld [vmem:[%s1 + $0x2ac] sm:$0xf]
  %v2864 = vld [vmem:[%s1 + $0x2b0] sm:$0xf]
  %v2865 = vld [vmem:[%s1 + $0x2b4] sm:$0xf]
  %v2866 = vld [vmem:[%s1 + $0x2b8] sm:$0xf]
  %v2867 = vld [vmem:[%s1 + $0x2bc] sm:$0xf]
  %v2868 = vld [vmem:[%s1 + $0x2c0] sm:$0xf]
  %v2869 = vld [vmem:[%s1 + $0x2c4] sm:$0xf]
  %v2870 = vld [vmem:[%s1 + $0x2c8] sm:$0xf]
  %v2871 = vld [vmem:[%s1 + $0x2cc] sm:$0xf]
  %v2872 = vld [vmem:[%s1 + $0x2d0] sm:$0xf]
  %v2873 = vld [vmem:[%s1 + $0x2d4] sm:$0xf]
  %v2874 = vld [vmem:[%s1 + $0x2d8] sm:$0xf]
  %v2875 = vld [vmem:[%s1 + $0x2dc] sm:$0xf]
  %v2876 = vld [vmem:[%s1 + $0x2e0] sm:$0xf]
  %v2877 = vld [vmem:[%s1 + $0x2e4] sm:$0xf]
  %v2878 = vld [vmem:[%s1 + $0x2e8] sm:$0xf]
  %v2879 = vld [vmem:[%s1 + $0x2ec] sm:$0xf]
  %v2880 = vld [vmem:[%s1 + $0x2f0] sm:$0xf]
  %v2881 = vld [vmem:[%s1 + $0x2f4] sm:$0xf]
  %v2882 = vld [vmem:[%s1 + $0x2f8] sm:$0xf]
  %v2883 = vld [vmem:[%s1 + $0x2fc] sm:$0xf]
  %v2884 = vld [vmem:[%s1 + $0x300] sm:$0xf]
  %v2885 = vld [vmem:[%s1 + $0x304] sm:$0xf]
  %v2886 = vld [vmem:[%s1 + $0x308] sm:$0xf]
  %v2887 = vld [vmem:[%s1 + $0x30c] sm:$0xf]
  %v2888 = vld [vmem:[%s1 + $0x310] sm:$0xf]
  %v2889 = vld [vmem:[%s1 + $0x314] sm:$0xf]
  %v2890 = vld [vmem:[%s1 + $0x318] sm:$0xf]
  %v2891 = vld [vmem:[%s1 + $0x31c] sm:$0xf]
  %v2892 = vld [vmem:[%s1 + $0x320] sm:$0xf]
  %v2893 = vld [vmem:[%s1 + $0x324] sm:$0xf]
  %v2894 = vld [vmem:[%s1 + $0x328] sm:$0xf]
  %v2895 = vld [vmem:[%s1 + $0x32c] sm:$0xf]
  %v2896 = vld [vmem:[%s1 + $0x330] sm:$0xf]
  %v2897 = vld [vmem:[%s1 + $0x334] sm:$0xf]
  %v2898 = vld [vmem:[%s1 + $0x338] sm:$0xf]
  %v2899 = vld [vmem:[%s1 + $0x33c] sm:$0xf]
  %v2900 = vld [vmem:[%s1 + $0x340] sm:$0xf]
  %v2901 = vld [vmem:[%s1 + $0x344] sm:$0xf]
  %v2902 = vld [vmem:[%s1 + $0x348] sm:$0xf]
  %v2903 = vld [vmem:[%s1 + $0x34c] sm:$0xf]
  %v2904 = vld [vmem:[%s1 + $0x350] sm:$0xf]
  %v2905 = vld [vmem:[%s1 + $0x354] sm:$0xf]
  %v2906 = vld [vmem:[%s1 + $0x358] sm:$0xf]
  %v2907 = vld [vmem:[%s1 + $0x35c] sm:$0xf]
  %v2908 = vld [vmem:[%s1 + $0x360] sm:$0xf]
  %v2909 = vld [vmem:[%s1 + $0x364] sm:$0xf]
  %v2910 = vld [vmem:[%s1 + $0x368] sm:$0xf]
  %v2911 = vld [vmem:[%s1 + $0x36c] sm:$0xf]
  %v2912 = vld [vmem:[%s1 + $0x370] sm:$0xf]
  %v2913 = vld [vmem:[%s1 + $0x374] sm:$0xf]
  %v2914 = vld [vmem:[%s1 + $0x378] sm:$0xf]
  %v2915 = vld [vmem:[%s1 + $0x37c] sm:$0xf]
  %v2916 = vld [vmem:[%s1 + $0x380] sm:$0xf]
  %v2917 = vld [vmem:[%s1 + $0x384] sm:$0xf]
  %v2918 = vld [vmem:[%s1 + $0x388] sm:$0xf]
  %v2919 = vld [vmem:[%s1 + $0x38c] sm:$0xf]
  %v2920 = vld [vmem:[%s1 + $0x390] sm:$0xf]
  %v2921 = vld [vmem:[%s1 + $0x394] sm:$0xf]
  %v2922 = vld [vmem:[%s1 + $0x398] sm:$0xf]
  %v2923 = vld [vmem:[%s1 + $0x39c] sm:$0xf]
  %v2924 = vld [vmem:[%s1 + $0x3a0] sm:$0xf]
  %v2925 = vld [vmem:[%s1 + $0x3a4] sm:$0xf]
  %v2926 = vld [vmem:[%s1 + $0x3a8] sm:$0xf]
  %v2927 = vld [vmem:[%s1 + $0x3ac] sm:$0xf]
  %v2928 = vld [vmem:[%s1 + $0x3b0] sm:$0xf]
  %v2929 = vld [vmem:[%s1 + $0x3b4] sm:$0xf]
  %v2930 = vld [vmem:[%s1 + $0x3b8] sm:$0xf]
  %v2931 = vld [vmem:[%s1 + $0x3bc] sm:$0xf]
  %v2932 = vld [vmem:[%s1 + $0x3c0] sm:$0xf]
  %v2933 = vld [vmem:[%s1 + $0x3c4] sm:$0xf]
  %v2934 = vld [vmem:[%s1 + $0x3c8] sm:$0xf]
  %v2935 = vld [vmem:[%s1 + $0x3cc] sm:$0xf]
  %v2936 = vld [vmem:[%s1 + $0x3d0] sm:$0xf]
  %v2937 = vld [vmem:[%s1 + $0x3d4] sm:$0xf]
  %v2938 = vld [vmem:[%s1 + $0x3d8] sm:$0xf]
  %v2939 = vld [vmem:[%s1 + $0x3dc] sm:$0xf]
  %v2940 = vld [vmem:[%s1 + $0x3e0] sm:$0xf]
  %v2941 = vld [vmem:[%s1 + $0x3e4] sm:$0xf]
  %v2942 = vld [vmem:[%s1 + $0x3e8] sm:$0xf]
  %v2943 = vld [vmem:[%s1 + $0x3ec] sm:$0xf]
  %v2944 = vld [vmem:[%s1 + $0x3f0] sm:$0xf]
  %v2945 = vld [vmem:[%s1 + $0x3f4] sm:$0xf]
  %v2946 = vld [vmem:[%s1 + $0x3f8] sm:$0xf]
  %v2947 = vld [vmem:[%s1 + $0x3fc] sm:$0xf]
  %v2956 = vunpack.c.l.b16 %v2684
  %v2957 = vunpack.c.h.b16 %v2684
  %v2958 = vunpack.c.l.b16 %v2685
  %v2959 = vunpack.c.h.b16 %v2685
  %v2960 = vunpack.c.l.b16 %v2686
  %v2961 = vunpack.c.h.b16 %v2686
  %v2962 = vunpack.c.l.b16 %v2687
  %v2963 = vunpack.c.h.b16 %v2687
  %v2964 = vunpack.c.l.b16 %v2688
  %v2965 = vunpack.c.h.b16 %v2688
  %v2966 = vunpack.c.l.b16 %v2689
  %v2967 = vunpack.c.h.b16 %v2689
  %v2968 = vunpack.c.l.b16 %v2690
  %v2969 = vunpack.c.h.b16 %v2690
  %v2970 = vunpack.c.l.b16 %v2691
  %v2971 = vunpack.c.h.b16 %v2691
  %v2972 = vpack.c.b16 %v2956, %v2956
  %v2973 = vpack.c.b16 %v2957, %v2957
  %v2974 = vpack.c.b16 %v2958, %v2958
  %v2975 = vpack.c.b16 %v2959, %v2959
  %v2976 = vpack.c.b16 %v2960, %v2960
  %v2977 = vpack.c.b16 %v2961, %v2961
  %v2978 = vpack.c.b16 %v2962, %v2962
  %v2979 = vpack.c.b16 %v2963, %v2963
  %v2980 = vpack.c.b16 %v2964, %v2964
  %v2981 = vpack.c.b16 %v2965, %v2965
  %v2982 = vpack.c.b16 %v2966, %v2966
  %v2983 = vpack.c.b16 %v2967, %v2967
  %v2984 = vpack.c.b16 %v2968, %v2968
  %v2985 = vpack.c.b16 %v2969, %v2969
  %v2986 = vpack.c.b16 %v2970, %v2970
  %v2987 = vpack.c.b16 %v2971, %v2971
  %v3260 = vunpack.c.l.b16 %v2692
  %v3261 = vunpack.c.l.b16 %v2693
  %v3262 = vunpack.c.l.b16 %v2694
  %v3263 = vunpack.c.l.b16 %v2695
  %v3264 = vunpack.c.l.b16 %v2696
  %v3265 = vunpack.c.l.b16 %v2697
  %v3266 = vunpack.c.l.b16 %v2698
  %v3267 = vunpack.c.l.b16 %v2699
  %v3268 = vunpack.c.l.b16 %v2700
  %v3269 = vunpack.c.l.b16 %v2701
  %v3270 = vunpack.c.l.b16 %v2702
  %v3271 = vunpack.c.l.b16 %v2703
  %v3272 = vunpack.c.l.b16 %v2704
  %v3273 = vunpack.c.l.b16 %v2705
  %v3274 = vunpack.c.l.b16 %v2706
  %v3275 = vunpack.c.l.b16 %v2707
  %v3276 = vunpack.c.l.b16 %v2708
  %v3277 = vunpack.c.l.b16 %v2709
  %v3278 = vunpack.c.l.b16 %v2710
  %v3279 = vunpack.c.l.b16 %v2711
  %v3280 = vunpack.c.l.b16 %v2712
  %v3281 = vunpack.c.l.b16 %v2713
  %v3282 = vunpack.c.l.b16 %v2714
  %v3283 = vunpack.c.l.b16 %v2715
  %v3284 = vunpack.c.l.b16 %v2716
  %v3285 = vunpack.c.l.b16 %v2717
  %v3286 = vunpack.c.l.b16 %v2718
  %v3287 = vunpack.c.l.b16 %v2719
  %v3288 = vunpack.c.l.b16 %v2720
  %v3289 = vunpack.c.l.b16 %v2721
  %v3290 = vunpack.c.l.b16 %v2722
  %v3291 = vunpack.c.l.b16 %v2723
  %v3292 = vunpack.c.l.b16 %v2724
  %v3293 = vunpack.c.l.b16 %v2725
  %v3294 = vunpack.c.l.b16 %v2726
  %v3295 = vunpack.c.l.b16 %v2727
  %v3296 = vunpack.c.l.b16 %v2728
  %v3297 = vunpack.c.l.b16 %v2729
  %v3298 = vunpack.c.l.b16 %v2730
  %v3299 = vunpack.c.l.b16 %v2731
  %v3300 = vunpack.c.l.b16 %v2732
  %v3301 = vunpack.c.l.b16 %v2733
  %v3302 = vunpack.c.l.b16 %v2734
  %v3303 = vunpack.c.l.b16 %v2735
  %v3304 = vunpack.c.l.b16 %v2736
  %v3305 = vunpack.c.l.b16 %v2737
  %v3306 = vunpack.c.l.b16 %v2738
  %v3307 = vunpack.c.l.b16 %v2739
  %v3308 = vunpack.c.l.b16 %v2740
  %v3309 = vunpack.c.l.b16 %v2741
  %v3310 = vunpack.c.l.b16 %v2742
  %v3311 = vunpack.c.l.b16 %v2743
  %v3312 = vunpack.c.l.b16 %v2744
  %v3313 = vunpack.c.l.b16 %v2745
  %v3314 = vunpack.c.l.b16 %v2746
  %v3315 = vunpack.c.l.b16 %v2747
  %v3316 = vunpack.c.l.b16 %v2748
  %v3317 = vunpack.c.l.b16 %v2749
  %v3318 = vunpack.c.l.b16 %v2750
  %v3319 = vunpack.c.l.b16 %v2751
  %v3320 = vunpack.c.l.b16 %v2752
  %v3321 = vunpack.c.l.b16 %v2753
  %v3322 = vunpack.c.l.b16 %v2754
  %v3323 = vunpack.c.l.b16 %v2755
  %v3324 = vunpack.c.l.b16 %v2756
  %v3325 = vunpack.c.l.b16 %v2757
  %v3326 = vunpack.c.l.b16 %v2758
  %v3327 = vunpack.c.l.b16 %v2759
  %v3328 = vunpack.c.l.b16 %v2760
  %v3329 = vunpack.c.l.b16 %v2761
  %v3330 = vunpack.c.l.b16 %v2762
  %v3331 = vunpack.c.l.b16 %v2763
  %v3332 = vunpack.c.l.b16 %v2764
  %v3333 = vunpack.c.l.b16 %v2765
  %v3334 = vunpack.c.l.b16 %v2766
  %v3335 = vunpack.c.l.b16 %v2767
  %v3336 = vunpack.c.l.b16 %v2768
  %v3337 = vunpack.c.l.b16 %v2769
  %v3338 = vunpack.c.l.b16 %v2770
  %v3339 = vunpack.c.l.b16 %v2771
  %v3340 = vunpack.c.l.b16 %v2772
  %v3341 = vunpack.c.l.b16 %v2773
  %v3342 = vunpack.c.l.b16 %v2774
  %v3343 = vunpack.c.l.b16 %v2775
  %v3344 = vunpack.c.l.b16 %v2776
  %v3345 = vunpack.c.l.b16 %v2777
  %v3346 = vunpack.c.l.b16 %v2778
  %v3347 = vunpack.c.l.b16 %v2779
  %v3348 = vunpack.c.l.b16 %v2780
  %v3349 = vunpack.c.l.b16 %v2781
  %v3350 = vunpack.c.l.b16 %v2782
  %v3351 = vunpack.c.l.b16 %v2783
  %v3352 = vunpack.c.l.b16 %v2784
  %v3353 = vunpack.c.l.b16 %v2785
  %v3354 = vunpack.c.l.b16 %v2786
  %v3355 = vunpack.c.l.b16 %v2787
  %v3356 = vunpack.c.l.b16 %v2788
  %v3357 = vunpack.c.l.b16 %v2789
  %v3358 = vunpack.c.l.b16 %v2790
  %v3359 = vunpack.c.l.b16 %v2791
  %v3360 = vunpack.c.l.b16 %v2792
  %v3361 = vunpack.c.l.b16 %v2793
  %v3362 = vunpack.c.l.b16 %v2794
  %v3363 = vunpack.c.l.b16 %v2795
  %v3364 = vunpack.c.l.b16 %v2796
  %v3365 = vunpack.c.l.b16 %v2797
  %v3366 = vunpack.c.l.b16 %v2798
  %v3367 = vunpack.c.l.b16 %v2799
  %v3368 = vunpack.c.l.b16 %v2800
  %v3369 = vunpack.c.l.b16 %v2801
  %v3370 = vunpack.c.l.b16 %v2802
  %v3371 = vunpack.c.l.b16 %v2803
  %v3372 = vunpack.c.l.b16 %v2804
  %v3373 = vunpack.c.l.b16 %v2805
  %v3374 = vunpack.c.l.b16 %v2806
  %v3375 = vunpack.c.l.b16 %v2807
  %v3376 = vunpack.c.l.b16 %v2808
  %v3377 = vunpack.c.l.b16 %v2809
  %v3378 = vunpack.c.l.b16 %v2810
  %v3379 = vunpack.c.l.b16 %v2811
  %v3380 = vunpack.c.l.b16 %v2812
  %v3381 = vunpack.c.l.b16 %v2813
  %v3382 = vunpack.c.l.b16 %v2814
  %v3383 = vunpack.c.l.b16 %v2815
  %v3384 = vunpack.c.l.b16 %v2816
  %v3385 = vunpack.c.l.b16 %v2817
  %v3386 = vunpack.c.l.b16 %v2818
  %v3387 = vunpack.c.l.b16 %v2819
  %v3388 = vunpack.c.l.b16 %v2820
  %v3389 = vunpack.c.l.b16 %v2821
  %v3390 = vunpack.c.l.b16 %v2822
  %v3391 = vunpack.c.l.b16 %v2823
  %v3392 = vunpack.c.l.b16 %v2824
  %v3393 = vunpack.c.l.b16 %v2825
  %v3394 = vunpack.c.l.b16 %v2826
  %v3395 = vunpack.c.l.b16 %v2827
  %v3396 = vunpack.c.l.b16 %v2828
  %v3397 = vunpack.c.l.b16 %v2829
  %v3398 = vunpack.c.l.b16 %v2830
  %v3399 = vunpack.c.l.b16 %v2831
  %v3400 = vunpack.c.l.b16 %v2832
  %v3401 = vunpack.c.l.b16 %v2833
  %v3402 = vunpack.c.l.b16 %v2834
  %v3403 = vunpack.c.l.b16 %v2835
  %v3404 = vunpack.c.l.b16 %v2836
  %v3405 = vunpack.c.l.b16 %v2837
  %v3406 = vunpack.c.l.b16 %v2838
  %v3407 = vunpack.c.l.b16 %v2839
  %v3408 = vunpack.c.l.b16 %v2840
  %v3409 = vunpack.c.l.b16 %v2841
  %v3410 = vunpack.c.l.b16 %v2842
  %v3411 = vunpack.c.l.b16 %v2843
  %v3412 = vunpack.c.l.b16 %v2844
  %v3413 = vunpack.c.l.b16 %v2845
  %v3414 = vunpack.c.l.b16 %v2846
  %v3415 = vunpack.c.l.b16 %v2847
  %v3416 = vunpack.c.l.b16 %v2848
  %v3417 = vunpack.c.l.b16 %v2849
  %v3418 = vunpack.c.l.b16 %v2850
  %v3419 = vunpack.c.l.b16 %v2851
  %v3420 = vunpack.c.l.b16 %v2852
  %v3421 = vunpack.c.l.b16 %v2853
  %v3422 = vunpack.c.l.b16 %v2854
  %v3423 = vunpack.c.l.b16 %v2855
  %v3424 = vunpack.c.l.b16 %v2856
  %v3425 = vunpack.c.l.b16 %v2857
  %v3426 = vunpack.c.l.b16 %v2858
  %v3427 = vunpack.c.l.b16 %v2859
  %v3428 = vunpack.c.l.b16 %v2860
  %v3429 = vunpack.c.l.b16 %v2861
  %v3430 = vunpack.c.l.b16 %v2862
  %v3431 = vunpack.c.l.b16 %v2863
  %v3432 = vunpack.c.l.b16 %v2864
  %v3433 = vunpack.c.l.b16 %v2865
  %v3434 = vunpack.c.l.b16 %v2866
  %v3435 = vunpack.c.l.b16 %v2867
  %v3436 = vunpack.c.l.b16 %v2868
  %v3437 = vunpack.c.l.b16 %v2869
  %v3438 = vunpack.c.l.b16 %v2870
  %v3439 = vunpack.c.l.b16 %v2871
  %v3440 = vunpack.c.l.b16 %v2872
  %v3441 = vunpack.c.l.b16 %v2873
  %v3442 = vunpack.c.l.b16 %v2874
  %v3443 = vunpack.c.l.b16 %v2875
  %v3444 = vunpack.c.l.b16 %v2876
  %v3445 = vunpack.c.l.b16 %v2877
  %v3446 = vunpack.c.l.b16 %v2878
  %v3447 = vunpack.c.l.b16 %v2879
  %v3448 = vunpack.c.l.b16 %v2880
  %v3449 = vunpack.c.l.b16 %v2881
  %v3450 = vunpack.c.l.b16 %v2882
  %v3451 = vunpack.c.l.b16 %v2883
  %v3452 = vunpack.c.l.b16 %v2884
  %v3453 = vunpack.c.l.b16 %v2885
  %v3454 = vunpack.c.l.b16 %v2886
  %v3455 = vunpack.c.l.b16 %v2887
  %v3456 = vunpack.c.l.b16 %v2888
  %v3457 = vunpack.c.l.b16 %v2889
  %v3458 = vunpack.c.l.b16 %v2890
  %v3459 = vunpack.c.l.b16 %v2891
  %v3460 = vunpack.c.l.b16 %v2892
  %v3461 = vunpack.c.l.b16 %v2893
  %v3462 = vunpack.c.l.b16 %v2894
  %v3463 = vunpack.c.l.b16 %v2895
  %v3464 = vunpack.c.l.b16 %v2896
  %v3465 = vunpack.c.l.b16 %v2897
  %v3466 = vunpack.c.l.b16 %v2898
  %v3467 = vunpack.c.l.b16 %v2899
  %v3468 = vunpack.c.l.b16 %v2900
  %v3469 = vunpack.c.l.b16 %v2901
  %v3470 = vunpack.c.l.b16 %v2902
  %v3471 = vunpack.c.l.b16 %v2903
  %v3472 = vunpack.c.l.b16 %v2904
  %v3473 = vunpack.c.l.b16 %v2905
  %v3474 = vunpack.c.l.b16 %v2906
  %v3475 = vunpack.c.l.b16 %v2907
  %v3476 = vunpack.c.l.b16 %v2908
  %v3477 = vunpack.c.l.b16 %v2909
  %v3478 = vunpack.c.l.b16 %v2910
  %v3479 = vunpack.c.l.b16 %v2911
  %v3480 = vunpack.c.l.b16 %v2912
  %v3481 = vunpack.c.l.b16 %v2913
  %v3482 = vunpack.c.l.b16 %v2914
  %v3483 = vunpack.c.l.b16 %v2915
  %v3484 = vunpack.c.l.b16 %v2916
  %v3485 = vunpack.c.l.b16 %v2917
  %v3486 = vunpack.c.l.b16 %v2918
  %v3487 = vunpack.c.l.b16 %v2919
  %v3488 = vunpack.c.l.b16 %v2920
  %v3489 = vunpack.c.l.b16 %v2921
  %v3490 = vunpack.c.l.b16 %v2922
  %v3491 = vunpack.c.l.b16 %v2923
  %v3492 = vunpack.c.l.b16 %v2924
  %v3493 = vunpack.c.l.b16 %v2925
  %v3494 = vunpack.c.l.b16 %v2926
  %v3495 = vunpack.c.l.b16 %v2927
  %v3496 = vunpack.c.l.b16 %v2928
  %v3497 = vunpack.c.l.b16 %v2929
  %v3498 = vunpack.c.l.b16 %v2930
  %v3499 = vunpack.c.l.b16 %v2931
  %v3500 = vunpack.c.l.b16 %v2932
  %v3501 = vunpack.c.l.b16 %v2933
  %v3502 = vunpack.c.l.b16 %v2934
  %v3503 = vunpack.c.l.b16 %v2935
  %v3504 = vunpack.c.l.b16 %v2936
  %v3505 = vunpack.c.l.b16 %v2937
  %v3506 = vunpack.c.l.b16 %v2938
  %v3507 = vunpack.c.l.b16 %v2939
  %v3508 = vunpack.c.l.b16 %v2940
  %v3509 = vunpack.c.l.b16 %v2941
  %v3510 = vunpack.c.l.b16 %v2942
  %v3511 = vunpack.c.l.b16 %v2943
  %v3512 = vunpack.c.l.b16 %v2944
  %v3513 = vunpack.c.l.b16 %v2945
  %v3514 = vunpack.c.l.b16 %v2946
  %v3515 = vunpack.c.l.b16 %v2947
  %v3516 = vpack.c.b16 %v3261, %v3260
  %v3517 = vpack.c.b16 %v3263, %v3262
  %v3518 = vpack.c.b16 %v3265, %v3264
  %v3519 = vpack.c.b16 %v3267, %v3266
  %v3520 = vpack.c.b16 %v3269, %v3268
  %v3521 = vpack.c.b16 %v3271, %v3270
  %v3522 = vpack.c.b16 %v3273, %v3272
  %v3523 = vpack.c.b16 %v3275, %v3274
  %v3524 = vpack.c.b16 %v3277, %v3276
  %v3525 = vpack.c.b16 %v3279, %v3278
  %v3526 = vpack.c.b16 %v3281, %v3280
  %v3527 = vpack.c.b16 %v3283, %v3282
  %v3528 = vpack.c.b16 %v3285, %v3284
  %v3529 = vpack.c.b16 %v3287, %v3286
  %v3530 = vpack.c.b16 %v3289, %v3288
  %v3531 = vpack.c.b16 %v3291, %v3290
  %v3532 = vpack.c.b16 %v3293, %v3292
  %v3533 = vpack.c.b16 %v3295, %v3294
  %v3534 = vpack.c.b16 %v3297, %v3296
  %v3535 = vpack.c.b16 %v3299, %v3298
  %v3536 = vpack.c.b16 %v3301, %v3300
  %v3537 = vpack.c.b16 %v3303, %v3302
  %v3538 = vpack.c.b16 %v3305, %v3304
  %v3539 = vpack.c.b16 %v3307, %v3306
  %v3540 = vpack.c.b16 %v3309, %v3308
  %v3541 = vpack.c.b16 %v3311, %v3310
  %v3542 = vpack.c.b16 %v3313, %v3312
  %v3543 = vpack.c.b16 %v3315, %v3314
  %v3544 = vpack.c.b16 %v3317, %v3316
  %v3545 = vpack.c.b16 %v3319, %v3318
  %v3546 = vpack.c.b16 %v3321, %v3320
  %v3547 = vpack.c.b16 %v3323, %v3322
  %v3548 = vpack.c.b16 %v3325, %v3324
  %v3549 = vpack.c.b16 %v3327, %v3326
  %v3550 = vpack.c.b16 %v3329, %v3328
  %v3551 = vpack.c.b16 %v3331, %v3330
  %v3552 = vpack.c.b16 %v3333, %v3332
  %v3553 = vpack.c.b16 %v3335, %v3334
  %v3554 = vpack.c.b16 %v3337, %v3336
  %v3555 = vpack.c.b16 %v3339, %v3338
  %v3556 = vpack.c.b16 %v3341, %v3340
  %v3557 = vpack.c.b16 %v3343, %v3342
  %v3558 = vpack.c.b16 %v3345, %v3344
  %v3559 = vpack.c.b16 %v3347, %v3346
  %v3560 = vpack.c.b16 %v3349, %v3348
  %v3561 = vpack.c.b16 %v3351, %v3350
  %v3562 = vpack.c.b16 %v3353, %v3352
  %v3563 = vpack.c.b16 %v3355, %v3354
  %v3564 = vpack.c.b16 %v3357, %v3356
  %v3565 = vpack.c.b16 %v3359, %v3358
  %v3566 = vpack.c.b16 %v3361, %v3360
  %v3567 = vpack.c.b16 %v3363, %v3362
  %v3568 = vpack.c.b16 %v3365, %v3364
  %v3569 = vpack.c.b16 %v3367, %v3366
  %v3570 = vpack.c.b16 %v3369, %v3368
  %v3571 = vpack.c.b16 %v3371, %v3370
  %v3572 = vpack.c.b16 %v3373, %v3372
  %v3573 = vpack.c.b16 %v3375, %v3374
  %v3574 = vpack.c.b16 %v3377, %v3376
  %v3575 = vpack.c.b16 %v3379, %v3378
  %v3576 = vpack.c.b16 %v3381, %v3380
  %v3577 = vpack.c.b16 %v3383, %v3382
  %v3578 = vpack.c.b16 %v3385, %v3384
  %v3579 = vpack.c.b16 %v3387, %v3386
  %v3580 = vpack.c.b16 %v3389, %v3388
  %v3581 = vpack.c.b16 %v3391, %v3390
  %v3582 = vpack.c.b16 %v3393, %v3392
  %v3583 = vpack.c.b16 %v3395, %v3394
  %v3584 = vpack.c.b16 %v3397, %v3396
  %v3585 = vpack.c.b16 %v3399, %v3398
  %v3586 = vpack.c.b16 %v3401, %v3400
  %v3587 = vpack.c.b16 %v3403, %v3402
  %v3588 = vpack.c.b16 %v3405, %v3404
  %v3589 = vpack.c.b16 %v3407, %v3406
  %v3590 = vpack.c.b16 %v3409, %v3408
  %v3591 = vpack.c.b16 %v3411, %v3410
  %v3592 = vpack.c.b16 %v3413, %v3412
  %v3593 = vpack.c.b16 %v3415, %v3414
  %v3594 = vpack.c.b16 %v3417, %v3416
  %v3595 = vpack.c.b16 %v3419, %v3418
  %v3596 = vpack.c.b16 %v3421, %v3420
  %v3597 = vpack.c.b16 %v3423, %v3422
  %v3598 = vpack.c.b16 %v3425, %v3424
  %v3599 = vpack.c.b16 %v3427, %v3426
  %v3600 = vpack.c.b16 %v3429, %v3428
  %v3601 = vpack.c.b16 %v3431, %v3430
  %v3602 = vpack.c.b16 %v3433, %v3432
  %v3603 = vpack.c.b16 %v3435, %v3434
  %v3604 = vpack.c.b16 %v3437, %v3436
  %v3605 = vpack.c.b16 %v3439, %v3438
  %v3606 = vpack.c.b16 %v3441, %v3440
  %v3607 = vpack.c.b16 %v3443, %v3442
  %v3608 = vpack.c.b16 %v3445, %v3444
  %v3609 = vpack.c.b16 %v3447, %v3446
  %v3610 = vpack.c.b16 %v3449, %v3448
  %v3611 = vpack.c.b16 %v3451, %v3450
  %v3612 = vpack.c.b16 %v3453, %v3452
  %v3613 = vpack.c.b16 %v3455, %v3454
  %v3614 = vpack.c.b16 %v3457, %v3456
  %v3615 = vpack.c.b16 %v3459, %v3458
  %v3616 = vpack.c.b16 %v3461, %v3460
  %v3617 = vpack.c.b16 %v3463, %v3462
  %v3618 = vpack.c.b16 %v3465, %v3464
  %v3619 = vpack.c.b16 %v3467, %v3466
  %v3620 = vpack.c.b16 %v3469, %v3468
  %v3621 = vpack.c.b16 %v3471, %v3470
  %v3622 = vpack.c.b16 %v3473, %v3472
  %v3623 = vpack.c.b16 %v3475, %v3474
  %v3624 = vpack.c.b16 %v3477, %v3476
  %v3625 = vpack.c.b16 %v3479, %v3478
  %v3626 = vpack.c.b16 %v3481, %v3480
  %v3627 = vpack.c.b16 %v3483, %v3482
  %v3628 = vpack.c.b16 %v3485, %v3484
  %v3629 = vpack.c.b16 %v3487, %v3486
  %v3630 = vpack.c.b16 %v3489, %v3488
  %v3631 = vpack.c.b16 %v3491, %v3490
  %v3632 = vpack.c.b16 %v3493, %v3492
  %v3633 = vpack.c.b16 %v3495, %v3494
  %v3634 = vpack.c.b16 %v3497, %v3496
  %v3635 = vpack.c.b16 %v3499, %v3498
  %v3636 = vpack.c.b16 %v3501, %v3500
  %v3637 = vpack.c.b16 %v3503, %v3502
  %v3638 = vpack.c.b16 %v3505, %v3504
  %v3639 = vpack.c.b16 %v3507, %v3506
  %v3640 = vpack.c.b16 %v3509, %v3508
  %v3641 = vpack.c.b16 %v3511, %v3510
  %v3642 = vpack.c.b16 %v3513, %v3512
  %v3643 = vpack.c.b16 %v3515, %v3514
  %3772 = vmatpush.bf16.msra.mxu0 %v3523
  %3773 = vmatpush.bf16.msra.mxu0 %v3522
  %3774 = vmatpush.bf16.msra.mxu0 %v3521
  %3775 = vmatpush.bf16.msra.mxu0 %v3520
  %3776 = vmatpush.bf16.msra.mxu0 %v3519
  %3777 = vmatpush.bf16.msra.mxu0 %v3518
  %3778 = vmatpush.bf16.msra.mxu0 %v3517
  %3779 = vmatpush.bf16.msra.mxu0 %v3516
  %3780 = vmatmul.bf16.gmra.mxu0 %v2972
  %v3781 = vpop.f32.mrf.mxu0
  %v3782 = vadd.f32 0.0, %v3781
  %v3783 = vpop.f32.mrf.mxu0
  %3784 = vdwg.mxu0
  %3785 = vmatpush.bf16.msra.mxu0 %v3531
  %3786 = vmatpush.bf16.msra.mxu0 %v3530
  %3787 = vmatpush.bf16.msra.mxu0 %v3529
  %3788 = vmatpush.bf16.msra.mxu0 %v3528
  %3789 = vmatpush.bf16.msra.mxu0 %v3527
  %3790 = vmatpush.bf16.msra.mxu0 %v3526
  %3791 = vmatpush.bf16.msra.mxu0 %v3525
  %3792 = vmatpush.bf16.msra.mxu0 %v3524
  %3793 = vmatmul.bf16.gmra.mxu0 %v2973
  %v3794 = vpop.f32.mrf.mxu0
  %v3795 = vadd.f32 %v3782, %v3794
  %v3796 = vpop.f32.mrf.mxu0
  %3797 = vdwg.mxu0
  %3798 = vmatpush.bf16.msra.mxu0 %v3539
  %3799 = vmatpush.bf16.msra.mxu0 %v3538
  %3800 = vmatpush.bf16.msra.mxu0 %v3537
  %3801 = vmatpush.bf16.msra.mxu0 %v3536
  %3802 = vmatpush.bf16.msra.mxu0 %v3535
  %3803 = vmatpush.bf16.msra.mxu0 %v3534
  %3804 = vmatpush.bf16.msra.mxu0 %v3533
  %3805 = vmatpush.bf16.msra.mxu0 %v3532
  %3806 = vmatmul.bf16.gmra.mxu0 %v2974
  %v3807 = vpop.f32.mrf.mxu0
  %v3808 = vadd.f32 %v3795, %v3807
  %v3809 = vpop.f32.mrf.mxu0
  %3810 = vdwg.mxu0
  %3811 = vmatpush.bf16.msra.mxu0 %v3547
  %3812 = vmatpush.bf16.msra.mxu0 %v3546
  %3813 = vmatpush.bf16.msra.mxu0 %v3545
  %3814 = vmatpush.bf16.msra.mxu0 %v3544
  %3815 = vmatpush.bf16.msra.mxu0 %v3543
  %3816 = vmatpush.bf16.msra.mxu0 %v3542
  %3817 = vmatpush.bf16.msra.mxu0 %v3541
  %3818 = vmatpush.bf16.msra.mxu0 %v3540
  %3819 = vmatmul.bf16.gmra.mxu0 %v2975
  %v3820 = vpop.f32.mrf.mxu0
  %v3821 = vadd.f32 %v3808, %v3820
  %v3822 = vpop.f32.mrf.mxu0
  %3823 = vdwg.mxu0
  %3824 = vmatpush.bf16.msra.mxu0 %v3555
  %3825 = vmatpush.bf16.msra.mxu0 %v3554
  %3826 = vmatpush.bf16.msra.mxu0 %v3553
  %3827 = vmatpush.bf16.msra.mxu0 %v3552
  %3828 = vmatpush.bf16.msra.mxu0 %v3551
  %3829 = vmatpush.bf16.msra.mxu0 %v3550
  %3830 = vmatpush.bf16.msra.mxu0 %v3549
  %3831 = vmatpush.bf16.msra.mxu0 %v3548
  %3832 = vmatmul.bf16.gmra.mxu0 %v2976
  %v3833 = vpop.f32.mrf.mxu0
  %v3834 = vadd.f32 %v3821, %v3833
  %v3835 = vpop.f32.mrf.mxu0
  %3836 = vdwg.mxu0
  %3837 = vmatpush.bf16.msra.mxu0 %v3563
  %3838 = vmatpush.bf16.msra.mxu0 %v3562
  %3839 = vmatpush.bf16.msra.mxu0 %v3561
  %3840 = vmatpush.bf16.msra.mxu0 %v3560
  %3841 = vmatpush.bf16.msra.mxu0 %v3559
  %3842 = vmatpush.bf16.msra.mxu0 %v3558
  %3843 = vmatpush.bf16.msra.mxu0 %v3557
  %3844 = vmatpush.bf16.msra.mxu0 %v3556
  %3845 = vmatmul.bf16.gmra.mxu0 %v2977
  %v3846 = vpop.f32.mrf.mxu0
  %v3847 = vadd.f32 %v3834, %v3846
  %v3848 = vpop.f32.mrf.mxu0
  %3849 = vdwg.mxu0
  %3850 = vmatpush.bf16.msra.mxu0 %v3571
  %3851 = vmatpush.bf16.msra.mxu0 %v3570
  %3852 = vmatpush.bf16.msra.mxu0 %v3569
  %3853 = vmatpush.bf16.msra.mxu0 %v3568
  %3854 = vmatpush.bf16.msra.mxu0 %v3567
  %3855 = vmatpush.bf16.msra.mxu0 %v3566
  %3856 = vmatpush.bf16.msra.mxu0 %v3565
  %3857 = vmatpush.bf16.msra.mxu0 %v3564
  %3858 = vmatmul.bf16.gmra.mxu0 %v2978
  %v3859 = vpop.f32.mrf.mxu0
  %v3860 = vadd.f32 %v3847, %v3859
  %v3861 = vpop.f32.mrf.mxu0
  %3862 = vdwg.mxu0
  %3863 = vmatpush.bf16.msra.mxu0 %v3579
  %3864 = vmatpush.bf16.msra.mxu0 %v3578
  %3865 = vmatpush.bf16.msra.mxu0 %v3577
  %3866 = vmatpush.bf16.msra.mxu0 %v3576
  %3867 = vmatpush.bf16.msra.mxu0 %v3575
  %3868 = vmatpush.bf16.msra.mxu0 %v3574
  %3869 = vmatpush.bf16.msra.mxu0 %v3573
  %3870 = vmatpush.bf16.msra.mxu0 %v3572
  %3871 = vmatmul.bf16.gmra.mxu0 %v2979
  %v3872 = vpop.f32.mrf.mxu0
  %v3873 = vadd.f32 %v3860, %v3872
  %v3874 = vpop.f32.mrf.mxu0
  %3875 = vdwg.mxu0
  %3876 = vmatpush.bf16.msra.mxu0 %v3587
  %3877 = vmatpush.bf16.msra.mxu0 %v3586
  %3878 = vmatpush.bf16.msra.mxu0 %v3585
  %3879 = vmatpush.bf16.msra.mxu0 %v3584
  %3880 = vmatpush.bf16.msra.mxu0 %v3583
  %3881 = vmatpush.bf16.msra.mxu0 %v3582
  %3882 = vmatpush.bf16.msra.mxu0 %v3581
  %3883 = vmatpush.bf16.msra.mxu0 %v3580
  %3884 = vmatmul.bf16.gmra.mxu0 %v2980
  %v3885 = vpop.f32.mrf.mxu0
  %v3886 = vadd.f32 %v3873, %v3885
  %v3887 = vpop.f32.mrf.mxu0
  %3888 = vdwg.mxu0
  %3889 = vmatpush.bf16.msra.mxu0 %v3595
  %3890 = vmatpush.bf16.msra.mxu0 %v3594
  %3891 = vmatpush.bf16.msra.mxu0 %v3593
  %3892 = vmatpush.bf16.msra.mxu0 %v3592
  %3893 = vmatpush.bf16.msra.mxu0 %v3591
  %3894 = vmatpush.bf16.msra.mxu0 %v3590
  %3895 = vmatpush.bf16.msra.mxu0 %v3589
  %3896 = vmatpush.bf16.msra.mxu0 %v3588
  %3897 = vmatmul.bf16.gmra.mxu0 %v2981
  %v3898 = vpop.f32.mrf.mxu0
  %v3899 = vadd.f32 %v3886, %v3898
  %v3900 = vpop.f32.mrf.mxu0
  %3901 = vdwg.mxu0
  %3902 = vmatpush.bf16.msra.mxu0 %v3603
  %3903 = vmatpush.bf16.msra.mxu0 %v3602
  %3904 = vmatpush.bf16.msra.mxu0 %v3601
  %3905 = vmatpush.bf16.msra.mxu0 %v3600
  %3906 = vmatpush.bf16.msra.mxu0 %v3599
  %3907 = vmatpush.bf16.msra.mxu0 %v3598
  %3908 = vmatpush.bf16.msra.mxu0 %v3597
  %3909 = vmatpush.bf16.msra.mxu0 %v3596
  %3910 = vmatmul.bf16.gmra.mxu0 %v2982
  %v3911 = vpop.f32.mrf.mxu0
  %v3912 = vadd.f32 %v3899, %v3911
  %v3913 = vpop.f32.mrf.mxu0
  %3914 = vdwg.mxu0
  %3915 = vmatpush.bf16.msra.mxu0 %v3611
  %3916 = vmatpush.bf16.msra.mxu0 %v3610
  %3917 = vmatpush.bf16.msra.mxu0 %v3609
  %3918 = vmatpush.bf16.msra.mxu0 %v3608
  %3919 = vmatpush.bf16.msra.mxu0 %v3607
  %3920 = vmatpush.bf16.msra.mxu0 %v3606
  %3921 = vmatpush.bf16.msra.mxu0 %v3605
  %3922 = vmatpush.bf16.msra.mxu0 %v3604
  %3923 = vmatmul.bf16.gmra.mxu0 %v2983
  %v3924 = vpop.f32.mrf.mxu0
  %v3925 = vadd.f32 %v3912, %v3924
  %v3926 = vpop.f32.mrf.mxu0
  %3927 = vdwg.mxu0
  %3928 = vmatpush.bf16.msra.mxu0 %v3619
  %3929 = vmatpush.bf16.msra.mxu0 %v3618
  %3930 = vmatpush.bf16.msra.mxu0 %v3617
  %3931 = vmatpush.bf16.msra.mxu0 %v3616
  %3932 = vmatpush.bf16.msra.mxu0 %v3615
  %3933 = vmatpush.bf16.msra.mxu0 %v3614
  %3934 = vmatpush.bf16.msra.mxu0 %v3613
  %3935 = vmatpush.bf16.msra.mxu0 %v3612
  %3936 = vmatmul.bf16.gmra.mxu0 %v2984
  %v3937 = vpop.f32.mrf.mxu0
  %v3938 = vadd.f32 %v3925, %v3937
  %v3939 = vpop.f32.mrf.mxu0
  %3940 = vdwg.mxu0
  %3941 = vmatpush.bf16.msra.mxu0 %v3627
  %3942 = vmatpush.bf16.msra.mxu0 %v3626
  %3943 = vmatpush.bf16.msra.mxu0 %v3625
  %3944 = vmatpush.bf16.msra.mxu0 %v3624
  %3945 = vmatpush.bf16.msra.mxu0 %v3623
  %3946 = vmatpush.bf16.msra.mxu0 %v3622
  %3947 = vmatpush.bf16.msra.mxu0 %v3621
  %3948 = vmatpush.bf16.msra.mxu0 %v3620
  %3949 = vmatmul.bf16.gmra.mxu0 %v2985
  %v3950 = vpop.f32.mrf.mxu0
  %v3951 = vadd.f32 %v3938, %v3950
  %v3952 = vpop.f32.mrf.mxu0
  %3953 = vdwg.mxu0
  %3954 = vmatpush.bf16.msra.mxu0 %v3635
  %3955 = vmatpush.bf16.msra.mxu0 %v3634
  %3956 = vmatpush.bf16.msra.mxu0 %v3633
  %3957 = vmatpush.bf16.msra.mxu0 %v3632
  %3958 = vmatpush.bf16.msra.mxu0 %v3631
  %3959 = vmatpush.bf16.msra.mxu0 %v3630
  %3960 = vmatpush.bf16.msra.mxu0 %v3629
  %3961 = vmatpush.bf16.msra.mxu0 %v3628
  %3962 = vmatmul.bf16.gmra.mxu0 %v2986
  %v3963 = vpop.f32.mrf.mxu0
  %v3964 = vadd.f32 %v3951, %v3963
  %v3965 = vpop.f32.mrf.mxu0
  %3966 = vdwg.mxu0
  %3967 = vmatpush.bf16.msra.mxu0 %v3643
  %3968 = vmatpush.bf16.msra.mxu0 %v3642
  %3969 = vmatpush.bf16.msra.mxu0 %v3641
  %3970 = vmatpush.bf16.msra.mxu0 %v3640
  %3971 = vmatpush.bf16.msra.mxu0 %v3639
  %3972 = vmatpush.bf16.msra.mxu0 %v3638
  %3973 = vmatpush.bf16.msra.mxu0 %v3637
  %3974 = vmatpush.bf16.msra.mxu0 %v3636
  %3975 = vmatmul.bf16.gmra.mxu0 %v2987
  %v3976 = vpop.f32.mrf.mxu0
  %v3977 = vadd.f32 %v3964, %v3976
  %v3978 = vpop.f32.mrf.mxu0
  %3979 = vdwg.mxu0
  %3980 = vst.msk [vmem:[#allocation2 + $0x4] sm:$0xf] %vm1330, %v3977
  %v3981 = vsel %vm1330, %v3977, 0.0
  %v3982 = vrot.slane %v3981, 4
  %v3983 = vadd.f32 %v3981, %v3982
  %v3984 = vrot.slane %v3983, 2
  %v3985 = vadd.f32 %v3983, %v3984
  %v3986 = vrot.slane %v3985, 1
  %v3987 = vadd.f32 %v3985, %v3986
  %v3988 = vadd.f32 %v2674, %v3987
  %v3989 = vmul.f32 %v3977, %v3977
  %v3990 = vsel %vm1330, %v3989, 0.0
  %v3991 = vrot.slane %v3990, 4
  %v3992 = vadd.f32 %v3990, %v3991
  %v3993 = vrot.slane %v3992, 2
  %v3994 = vadd.f32 %v3992, %v3993
  %v3995 = vrot.slane %v3994, 1
  %v3996 = vadd.f32 %v3994, %v3995
  %v3997 = vadd.f32 %v2683, %v3996
  %v3998 = vld [vmem:[%s0 + $0x40] sm:$0xcc]
  %v3999 = vld [vmem:[%s0 + $0x48] sm:$0xcc]
  %v4000 = vld [vmem:[%s0 + $0x50] sm:$0xcc]
  %v4001 = vld [vmem:[%s0 + $0x58] sm:$0xcc]
  %v4002 = vld [vmem:[%s0 + $0x60] sm:$0xcc]
  %v4003 = vld [vmem:[%s0 + $0x68] sm:$0xcc]
  %v4004 = vld [vmem:[%s0 + $0x70] sm:$0xcc]
  %v4005 = vld [vmem:[%s0 + $0x78] sm:$0xcc]
  %v4006 = vld [vmem:[%s1] sm:$0xf]
  %v4007 = vld [vmem:[%s1 + $0x4] sm:$0xf]
  %v4008 = vld [vmem:[%s1 + $0x8] sm:$0xf]
  %v4009 = vld [vmem:[%s1 + $0xc] sm:$0xf]
  %v4010 = vld [vmem:[%s1 + $0x10] sm:$0xf]
  %v4011 = vld [vmem:[%s1 + $0x14] sm:$0xf]
  %v4012 = vld [vmem:[%s1 + $0x18] sm:$0xf]
  %v4013 = vld [vmem:[%s1 + $0x1c] sm:$0xf]
  %v4014 = vld [vmem:[%s1 + $0x20] sm:$0xf]
  %v4015 = vld [vmem:[%s1 + $0x24] sm:$0xf]
  %v4016 = vld [vmem:[%s1 + $0x28] sm:$0xf]
  %v4017 = vld [vmem:[%s1 + $0x2c] sm:$0xf]
  %v4018 = vld [vmem:[%s1 + $0x30] sm:$0xf]
  %v4019 = vld [vmem:[%s1 + $0x34] sm:$0xf]
  %v4020 = vld [vmem:[%s1 + $0x38] sm:$0xf]
  %v4021 = vld [vmem:[%s1 + $0x3c] sm:$0xf]
  %v4022 = vld [vmem:[%s1 + $0x40] sm:$0xf]
  %v4023 = vld [vmem:[%s1 + $0x44] sm:$0xf]
  %v4024 = vld [vmem:[%s1 + $0x48] sm:$0xf]
  %v4025 = vld [vmem:[%s1 + $0x4c] sm:$0xf]
  %v4026 = vld [vmem:[%s1 + $0x50] sm:$0xf]
  %v4027 = vld [vmem:[%s1 + $0x54] sm:$0xf]
  %v4028 = vld [vmem:[%s1 + $0x58] sm:$0xf]
  %v4029 = vld [vmem:[%s1 + $0x5c] sm:$0xf]
  %v4030 = vld [vmem:[%s1 + $0x60] sm:$0xf]
  %v4031 = vld [vmem:[%s1 + $0x64] sm:$0xf]
  %v4032 = vld [vmem:[%s1 + $0x68] sm:$0xf]
  %v4033 = vld [vmem:[%s1 + $0x6c] sm:$0xf]
  %v4034 = vld [vmem:[%s1 + $0x70] sm:$0xf]
  %v4035 = vld [vmem:[%s1 + $0x74] sm:$0xf]
  %v4036 = vld [vmem:[%s1 + $0x78] sm:$0xf]
  %v4037 = vld [vmem:[%s1 + $0x7c] sm:$0xf]
  %v4038 = vld [vmem:[%s1 + $0x80] sm:$0xf]
  %v4039 = vld [vmem:[%s1 + $0x84] sm:$0xf]
  %v4040 = vld [vmem:[%s1 + $0x88] sm:$0xf]
  %v4041 = vld [vmem:[%s1 + $0x8c] sm:$0xf]
  %v4042 = vld [vmem:[%s1 + $0x90] sm:$0xf]
  %v4043 = vld [vmem:[%s1 + $0x94] sm:$0xf]
  %v4044 = vld [vmem:[%s1 + $0x98] sm:$0xf]
  %v4045 = vld [vmem:[%s1 + $0x9c] sm:$0xf]
  %v4046 = vld [vmem:[%s1 + $0xa0] sm:$0xf]
  %v4047 = vld [vmem:[%s1 + $0xa4] sm:$0xf]
  %v4048 = vld [vmem:[%s1 + $0xa8] sm:$0xf]
  %v4049 = vld [vmem:[%s1 + $0xac] sm:$0xf]
  %v4050 = vld [vmem:[%s1 + $0xb0] sm:$0xf]
  %v4051 = vld [vmem:[%s1 + $0xb4] sm:$0xf]
  %v4052 = vld [vmem:[%s1 + $0xb8] sm:$0xf]
  %v4053 = vld [vmem:[%s1 + $0xbc] sm:$0xf]
  %v4054 = vld [vmem:[%s1 + $0xc0] sm:$0xf]
  %v4055 = vld [vmem:[%s1 + $0xc4] sm:$0xf]
  %v4056 = vld [vmem:[%s1 + $0xc8] sm:$0xf]
  %v4057 = vld [vmem:[%s1 + $0xcc] sm:$0xf]
  %v4058 = vld [vmem:[%s1 + $0xd0] sm:$0xf]
  %v4059 = vld [vmem:[%s1 + $0xd4] sm:$0xf]
  %v4060 = vld [vmem:[%s1 + $0xd8] sm:$0xf]
  %v4061 = vld [vmem:[%s1 + $0xdc] sm:$0xf]
  %v4062 = vld [vmem:[%s1 + $0xe0] sm:$0xf]
  %v4063 = vld [vmem:[%s1 + $0xe4] sm:$0xf]
  %v4064 = vld [vmem:[%s1 + $0xe8] sm:$0xf]
  %v4065 = vld [vmem:[%s1 + $0xec] sm:$0xf]
  %v4066 = vld [vmem:[%s1 + $0xf0] sm:$0xf]
  %v4067 = vld [vmem:[%s1 + $0xf4] sm:$0xf]
  %v4068 = vld [vmem:[%s1 + $0xf8] sm:$0xf]
  %v4069 = vld [vmem:[%s1 + $0xfc] sm:$0xf]
  %v4070 = vld [vmem:[%s1 + $0x100] sm:$0xf]
  %v4071 = vld [vmem:[%s1 + $0x104] sm:$0xf]
  %v4072 = vld [vmem:[%s1 + $0x108] sm:$0xf]
  %v4073 = vld [vmem:[%s1 + $0x10c] sm:$0xf]
  %v4074 = vld [vmem:[%s1 + $0x110] sm:$0xf]
  %v4075 = vld [vmem:[%s1 + $0x114] sm:$0xf]
  %v4076 = vld [vmem:[%s1 + $0x118] sm:$0xf]
  %v4077 = vld [vmem:[%s1 + $0x11c] sm:$0xf]
  %v4078 = vld [vmem:[%s1 + $0x120] sm:$0xf]
  %v4079 = vld [vmem:[%s1 + $0x124] sm:$0xf]
  %v4080 = vld [vmem:[%s1 + $0x128] sm:$0xf]
  %v4081 = vld [vmem:[%s1 + $0x12c] sm:$0xf]
  %v4082 = vld [vmem:[%s1 + $0x130] sm:$0xf]
  %v4083 = vld [vmem:[%s1 + $0x134] sm:$0xf]
  %v4084 = vld [vmem:[%s1 + $0x138] sm:$0xf]
  %v4085 = vld [vmem:[%s1 + $0x13c] sm:$0xf]
  %v4086 = vld [vmem:[%s1 + $0x140] sm:$0xf]
  %v4087 = vld [vmem:[%s1 + $0x144] sm:$0xf]
  %v4088 = vld [vmem:[%s1 + $0x148] sm:$0xf]
  %v4089 = vld [vmem:[%s1 + $0x14c] sm:$0xf]
  %v4090 = vld [vmem:[%s1 + $0x150] sm:$0xf]
  %v4091 = vld [vmem:[%s1 + $0x154] sm:$0xf]
  %v4092 = vld [vmem:[%s1 + $0x158] sm:$0xf]
  %v4093 = vld [vmem:[%s1 + $0x15c] sm:$0xf]
  %v4094 = vld [vmem:[%s1 + $0x160] sm:$0xf]
  %v4095 = vld [vmem:[%s1 + $0x164] sm:$0xf]
  %v4096 = vld [vmem:[%s1 + $0x168] sm:$0xf]
  %v4097 = vld [vmem:[%s1 + $0x16c] sm:$0xf]
  %v4098 = vld [vmem:[%s1 + $0x170] sm:$0xf]
  %v4099 = vld [vmem:[%s1 + $0x174] sm:$0xf]
  %v4100 = vld [vmem:[%s1 + $0x178] sm:$0xf]
  %v4101 = vld [vmem:[%s1 + $0x17c] sm:$0xf]
  %v4102 = vld [vmem:[%s1 + $0x180] sm:$0xf]
  %v4103 = vld [vmem:[%s1 + $0x184] sm:$0xf]
  %v4104 = vld [vmem:[%s1 + $0x188] sm:$0xf]
  %v4105 = vld [vmem:[%s1 + $0x18c] sm:$0xf]
  %v4106 = vld [vmem:[%s1 + $0x190] sm:$0xf]
  %v4107 = vld [vmem:[%s1 + $0x194] sm:$0xf]
  %v4108 = vld [vmem:[%s1 + $0x198] sm:$0xf]
  %v4109 = vld [vmem:[%s1 + $0x19c] sm:$0xf]
  %v4110 = vld [vmem:[%s1 + $0x1a0] sm:$0xf]
  %v4111 = vld [vmem:[%s1 + $0x1a4] sm:$0xf]
  %v4112 = vld [vmem:[%s1 + $0x1a8] sm:$0xf]
  %v4113 = vld [vmem:[%s1 + $0x1ac] sm:$0xf]
  %v4114 = vld [vmem:[%s1 + $0x1b0] sm:$0xf]
  %v4115 = vld [vmem:[%s1 + $0x1b4] sm:$0xf]
  %v4116 = vld [vmem:[%s1 + $0x1b8] sm:$0xf]
  %v4117 = vld [vmem:[%s1 + $0x1bc] sm:$0xf]
  %v4118 = vld [vmem:[%s1 + $0x1c0] sm:$0xf]
  %v4119 = vld [vmem:[%s1 + $0x1c4] sm:$0xf]
  %v4120 = vld [vmem:[%s1 + $0x1c8] sm:$0xf]
  %v4121 = vld [vmem:[%s1 + $0x1cc] sm:$0xf]
  %v4122 = vld [vmem:[%s1 + $0x1d0] sm:$0xf]
  %v4123 = vld [vmem:[%s1 + $0x1d4] sm:$0xf]
  %v4124 = vld [vmem:[%s1 + $0x1d8] sm:$0xf]
  %v4125 = vld [vmem:[%s1 + $0x1dc] sm:$0xf]
  %v4126 = vld [vmem:[%s1 + $0x1e0] sm:$0xf]
  %v4127 = vld [vmem:[%s1 + $0x1e4] sm:$0xf]
  %v4128 = vld [vmem:[%s1 + $0x1e8] sm:$0xf]
  %v4129 = vld [vmem:[%s1 + $0x1ec] sm:$0xf]
  %v4130 = vld [vmem:[%s1 + $0x1f0] sm:$0xf]
  %v4131 = vld [vmem:[%s1 + $0x1f4] sm:$0xf]
  %v4132 = vld [vmem:[%s1 + $0x1f8] sm:$0xf]
  %v4133 = vld [vmem:[%s1 + $0x1fc] sm:$0xf]
  %v4134 = vld [vmem:[%s1 + $0x200] sm:$0xf]
  %v4135 = vld [vmem:[%s1 + $0x204] sm:$0xf]
  %v4136 = vld [vmem:[%s1 + $0x208] sm:$0xf]
  %v4137 = vld [vmem:[%s1 + $0x20c] sm:$0xf]
  %v4138 = vld [vmem:[%s1 + $0x210] sm:$0xf]
  %v4139 = vld [vmem:[%s1 + $0x214] sm:$0xf]
  %v4140 = vld [vmem:[%s1 + $0x218] sm:$0xf]
  %v4141 = vld [vmem:[%s1 + $0x21c] sm:$0xf]
  %v4142 = vld [vmem:[%s1 + $0x220] sm:$0xf]
  %v4143 = vld [vmem:[%s1 + $0x224] sm:$0xf]
  %v4144 = vld [vmem:[%s1 + $0x228] sm:$0xf]
  %v4145 = vld [vmem:[%s1 + $0x22c] sm:$0xf]
  %v4146 = vld [vmem:[%s1 + $0x230] sm:$0xf]
  %v4147 = vld [vmem:[%s1 + $0x234] sm:$0xf]
  %v4148 = vld [vmem:[%s1 + $0x238] sm:$0xf]
  %v4149 = vld [vmem:[%s1 + $0x23c] sm:$0xf]
  %v4150 = vld [vmem:[%s1 + $0x240] sm:$0xf]
  %v4151 = vld [vmem:[%s1 + $0x244] sm:$0xf]
  %v4152 = vld [vmem:[%s1 + $0x248] sm:$0xf]
  %v4153 = vld [vmem:[%s1 + $0x24c] sm:$0xf]
  %v4154 = vld [vmem:[%s1 + $0x250] sm:$0xf]
  %v4155 = vld [vmem:[%s1 + $0x254] sm:$0xf]
  %v4156 = vld [vmem:[%s1 + $0x258] sm:$0xf]
  %v4157 = vld [vmem:[%s1 + $0x25c] sm:$0xf]
  %v4158 = vld [vmem:[%s1 + $0x260] sm:$0xf]
  %v4159 = vld [vmem:[%s1 + $0x264] sm:$0xf]
  %v4160 = vld [vmem:[%s1 + $0x268] sm:$0xf]
  %v4161 = vld [vmem:[%s1 + $0x26c] sm:$0xf]
  %v4162 = vld [vmem:[%s1 + $0x270] sm:$0xf]
  %v4163 = vld [vmem:[%s1 + $0x274] sm:$0xf]
  %v4164 = vld [vmem:[%s1 + $0x278] sm:$0xf]
  %v4165 = vld [vmem:[%s1 + $0x27c] sm:$0xf]
  %v4166 = vld [vmem:[%s1 + $0x280] sm:$0xf]
  %v4167 = vld [vmem:[%s1 + $0x284] sm:$0xf]
  %v4168 = vld [vmem:[%s1 + $0x288] sm:$0xf]
  %v4169 = vld [vmem:[%s1 + $0x28c] sm:$0xf]
  %v4170 = vld [vmem:[%s1 + $0x290] sm:$0xf]
  %v4171 = vld [vmem:[%s1 + $0x294] sm:$0xf]
  %v4172 = vld [vmem:[%s1 + $0x298] sm:$0xf]
  %v4173 = vld [vmem:[%s1 + $0x29c] sm:$0xf]
  %v4174 = vld [vmem:[%s1 + $0x2a0] sm:$0xf]
  %v4175 = vld [vmem:[%s1 + $0x2a4] sm:$0xf]
  %v4176 = vld [vmem:[%s1 + $0x2a8] sm:$0xf]
  %v4177 = vld [vmem:[%s1 + $0x2ac] sm:$0xf]
  %v4178 = vld [vmem:[%s1 + $0x2b0] sm:$0xf]
  %v4179 = vld [vmem:[%s1 + $0x2b4] sm:$0xf]
  %v4180 = vld [vmem:[%s1 + $0x2b8] sm:$0xf]
  %v4181 = vld [vmem:[%s1 + $0x2bc] sm:$0xf]
  %v4182 = vld [vmem:[%s1 + $0x2c0] sm:$0xf]
  %v4183 = vld [vmem:[%s1 + $0x2c4] sm:$0xf]
  %v4184 = vld [vmem:[%s1 + $0x2c8] sm:$0xf]
  %v4185 = vld [vmem:[%s1 + $0x2cc] sm:$0xf]
  %v4186 = vld [vmem:[%s1 + $0x2d0] sm:$0xf]
  %v4187 = vld [vmem:[%s1 + $0x2d4] sm:$0xf]
  %v4188 = vld [vmem:[%s1 + $0x2d8] sm:$0xf]
  %v4189 = vld [vmem:[%s1 + $0x2dc] sm:$0xf]
  %v4190 = vld [vmem:[%s1 + $0x2e0] sm:$0xf]
  %v4191 = vld [vmem:[%s1 + $0x2e4] sm:$0xf]
  %v4192 = vld [vmem:[%s1 + $0x2e8] sm:$0xf]
  %v4193 = vld [vmem:[%s1 + $0x2ec] sm:$0xf]
  %v4194 = vld [vmem:[%s1 + $0x2f0] sm:$0xf]
  %v4195 = vld [vmem:[%s1 + $0x2f4] sm:$0xf]
  %v4196 = vld [vmem:[%s1 + $0x2f8] sm:$0xf]
  %v4197 = vld [vmem:[%s1 + $0x2fc] sm:$0xf]
  %v4198 = vld [vmem:[%s1 + $0x300] sm:$0xf]
  %v4199 = vld [vmem:[%s1 + $0x304] sm:$0xf]
  %v4200 = vld [vmem:[%s1 + $0x308] sm:$0xf]
  %v4201 = vld [vmem:[%s1 + $0x30c] sm:$0xf]
  %v4202 = vld [vmem:[%s1 + $0x310] sm:$0xf]
  %v4203 = vld [vmem:[%s1 + $0x314] sm:$0xf]
  %v4204 = vld [vmem:[%s1 + $0x318] sm:$0xf]
  %v4205 = vld [vmem:[%s1 + $0x31c] sm:$0xf]
  %v4206 = vld [vmem:[%s1 + $0x320] sm:$0xf]
  %v4207 = vld [vmem:[%s1 + $0x324] sm:$0xf]
  %v4208 = vld [vmem:[%s1 + $0x328] sm:$0xf]
  %v4209 = vld [vmem:[%s1 + $0x32c] sm:$0xf]
  %v4210 = vld [vmem:[%s1 + $0x330] sm:$0xf]
  %v4211 = vld [vmem:[%s1 + $0x334] sm:$0xf]
  %v4212 = vld [vmem:[%s1 + $0x338] sm:$0xf]
  %v4213 = vld [vmem:[%s1 + $0x33c] sm:$0xf]
  %v4214 = vld [vmem:[%s1 + $0x340] sm:$0xf]
  %v4215 = vld [vmem:[%s1 + $0x344] sm:$0xf]
  %v4216 = vld [vmem:[%s1 + $0x348] sm:$0xf]
  %v4217 = vld [vmem:[%s1 + $0x34c] sm:$0xf]
  %v4218 = vld [vmem:[%s1 + $0x350] sm:$0xf]
  %v4219 = vld [vmem:[%s1 + $0x354] sm:$0xf]
  %v4220 = vld [vmem:[%s1 + $0x358] sm:$0xf]
  %v4221 = vld [vmem:[%s1 + $0x35c] sm:$0xf]
  %v4222 = vld [vmem:[%s1 + $0x360] sm:$0xf]
  %v4223 = vld [vmem:[%s1 + $0x364] sm:$0xf]
  %v4224 = vld [vmem:[%s1 + $0x368] sm:$0xf]
  %v4225 = vld [vmem:[%s1 + $0x36c] sm:$0xf]
  %v4226 = vld [vmem:[%s1 + $0x370] sm:$0xf]
  %v4227 = vld [vmem:[%s1 + $0x374] sm:$0xf]
  %v4228 = vld [vmem:[%s1 + $0x378] sm:$0xf]
  %v4229 = vld [vmem:[%s1 + $0x37c] sm:$0xf]
  %v4230 = vld [vmem:[%s1 + $0x380] sm:$0xf]
  %v4231 = vld [vmem:[%s1 + $0x384] sm:$0xf]
  %v4232 = vld [vmem:[%s1 + $0x388] sm:$0xf]
  %v4233 = vld [vmem:[%s1 + $0x38c] sm:$0xf]
  %v4234 = vld [vmem:[%s1 + $0x390] sm:$0xf]
  %v4235 = vld [vmem:[%s1 + $0x394] sm:$0xf]
  %v4236 = vld [vmem:[%s1 + $0x398] sm:$0xf]
  %v4237 = vld [vmem:[%s1 + $0x39c] sm:$0xf]
  %v4238 = vld [vmem:[%s1 + $0x3a0] sm:$0xf]
  %v4239 = vld [vmem:[%s1 + $0x3a4] sm:$0xf]
  %v4240 = vld [vmem:[%s1 + $0x3a8] sm:$0xf]
  %v4241 = vld [vmem:[%s1 + $0x3ac] sm:$0xf]
  %v4242 = vld [vmem:[%s1 + $0x3b0] sm:$0xf]
  %v4243 = vld [vmem:[%s1 + $0x3b4] sm:$0xf]
  %v4244 = vld [vmem:[%s1 + $0x3b8] sm:$0xf]
  %v4245 = vld [vmem:[%s1 + $0x3bc] sm:$0xf]
  %v4246 = vld [vmem:[%s1 + $0x3c0] sm:$0xf]
  %v4247 = vld [vmem:[%s1 + $0x3c4] sm:$0xf]
  %v4248 = vld [vmem:[%s1 + $0x3c8] sm:$0xf]
  %v4249 = vld [vmem:[%s1 + $0x3cc] sm:$0xf]
  %v4250 = vld [vmem:[%s1 + $0x3d0] sm:$0xf]
  %v4251 = vld [vmem:[%s1 + $0x3d4] sm:$0xf]
  %v4252 = vld [vmem:[%s1 + $0x3d8] sm:$0xf]
  %v4253 = vld [vmem:[%s1 + $0x3dc] sm:$0xf]
  %v4254 = vld [vmem:[%s1 + $0x3e0] sm:$0xf]
  %v4255 = vld [vmem:[%s1 + $0x3e4] sm:$0xf]
  %v4256 = vld [vmem:[%s1 + $0x3e8] sm:$0xf]
  %v4257 = vld [vmem:[%s1 + $0x3ec] sm:$0xf]
  %v4258 = vld [vmem:[%s1 + $0x3f0] sm:$0xf]
  %v4259 = vld [vmem:[%s1 + $0x3f4] sm:$0xf]
  %v4260 = vld [vmem:[%s1 + $0x3f8] sm:$0xf]
  %v4261 = vld [vmem:[%s1 + $0x3fc] sm:$0xf]
  %v4270 = vunpack.c.l.b16 %v3998
  %v4271 = vunpack.c.h.b16 %v3998
  %v4272 = vunpack.c.l.b16 %v3999
  %v4273 = vunpack.c.h.b16 %v3999
  %v4274 = vunpack.c.l.b16 %v4000
  %v4275 = vunpack.c.h.b16 %v4000
  %v4276 = vunpack.c.l.b16 %v4001
  %v4277 = vunpack.c.h.b16 %v4001
  %v4278 = vunpack.c.l.b16 %v4002
  %v4279 = vunpack.c.h.b16 %v4002
  %v4280 = vunpack.c.l.b16 %v4003
  %v4281 = vunpack.c.h.b16 %v4003
  %v4282 = vunpack.c.l.b16 %v4004
  %v4283 = vunpack.c.h.b16 %v4004
  %v4284 = vunpack.c.l.b16 %v4005
  %v4285 = vunpack.c.h.b16 %v4005
  %v4286 = vpack.c.b16 %v4270, %v4270
  %v4287 = vpack.c.b16 %v4271, %v4271
  %v4288 = vpack.c.b16 %v4272, %v4272
  %v4289 = vpack.c.b16 %v4273, %v4273
  %v4290 = vpack.c.b16 %v4274, %v4274
  %v4291 = vpack.c.b16 %v4275, %v4275
  %v4292 = vpack.c.b16 %v4276, %v4276
  %v4293 = vpack.c.b16 %v4277, %v4277
  %v4294 = vpack.c.b16 %v4278, %v4278
  %v4295 = vpack.c.b16 %v4279, %v4279
  %v4296 = vpack.c.b16 %v4280, %v4280
  %v4297 = vpack.c.b16 %v4281, %v4281
  %v4298 = vpack.c.b16 %v4282, %v4282
  %v4299 = vpack.c.b16 %v4283, %v4283
  %v4300 = vpack.c.b16 %v4284, %v4284
  %v4301 = vpack.c.b16 %v4285, %v4285
  %v4302 = vrot.slane %v4286, 2
  %v4303 = vrot.slane %v4287, 2
  %v4304 = vrot.slane %v4288, 2
  %v4305 = vrot.slane %v4289, 2
  %v4306 = vrot.slane %v4290, 2
  %v4307 = vrot.slane %v4291, 2
  %v4308 = vrot.slane %v4292, 2
  %v4309 = vrot.slane %v4293, 2
  %v4310 = vrot.slane %v4294, 2
  %v4311 = vrot.slane %v4295, 2
  %v4312 = vrot.slane %v4296, 2
  %v4313 = vrot.slane %v4297, 2
  %v4314 = vrot.slane %v4298, 2
  %v4315 = vrot.slane %v4299, 2
  %v4316 = vrot.slane %v4300, 2
  %v4317 = vrot.slane %v4301, 2
  %v4590 = vunpack.c.l.b16 %v4006
  %v4591 = vunpack.c.l.b16 %v4007
  %v4592 = vunpack.c.l.b16 %v4008
  %v4593 = vunpack.c.l.b16 %v4009
  %v4594 = vunpack.c.l.b16 %v4010
  %v4595 = vunpack.c.l.b16 %v4011
  %v4596 = vunpack.c.l.b16 %v4012
  %v4597 = vunpack.c.l.b16 %v4013
  %v4598 = vunpack.c.l.b16 %v4014
  %v4599 = vunpack.c.l.b16 %v4015
  %v4600 = vunpack.c.l.b16 %v4016
  %v4601 = vunpack.c.l.b16 %v4017
  %v4602 = vunpack.c.l.b16 %v4018
  %v4603 = vunpack.c.l.b16 %v4019
  %v4604 = vunpack.c.l.b16 %v4020
  %v4605 = vunpack.c.l.b16 %v4021
  %v4606 = vunpack.c.l.b16 %v4022
  %v4607 = vunpack.c.l.b16 %v4023
  %v4608 = vunpack.c.l.b16 %v4024
  %v4609 = vunpack.c.l.b16 %v4025
  %v4610 = vunpack.c.l.b16 %v4026
  %v4611 = vunpack.c.l.b16 %v4027
  %v4612 = vunpack.c.l.b16 %v4028
  %v4613 = vunpack.c.l.b16 %v4029
  %v4614 = vunpack.c.l.b16 %v4030
  %v4615 = vunpack.c.l.b16 %v4031
  %v4616 = vunpack.c.l.b16 %v4032
  %v4617 = vunpack.c.l.b16 %v4033
  %v4618 = vunpack.c.l.b16 %v4034
  %v4619 = vunpack.c.l.b16 %v4035
  %v4620 = vunpack.c.l.b16 %v4036
  %v4621 = vunpack.c.l.b16 %v4037
  %v4622 = vunpack.c.l.b16 %v4038
  %v4623 = vunpack.c.l.b16 %v4039
  %v4624 = vunpack.c.l.b16 %v4040
  %v4625 = vunpack.c.l.b16 %v4041
  %v4626 = vunpack.c.l.b16 %v4042
  %v4627 = vunpack.c.l.b16 %v4043
  %v4628 = vunpack.c.l.b16 %v4044
  %v4629 = vunpack.c.l.b16 %v4045
  %v4630 = vunpack.c.l.b16 %v4046
  %v4631 = vunpack.c.l.b16 %v4047
  %v4632 = vunpack.c.l.b16 %v4048
  %v4633 = vunpack.c.l.b16 %v4049
  %v4634 = vunpack.c.l.b16 %v4050
  %v4635 = vunpack.c.l.b16 %v4051
  %v4636 = vunpack.c.l.b16 %v4052
  %v4637 = vunpack.c.l.b16 %v4053
  %v4638 = vunpack.c.l.b16 %v4054
  %v4639 = vunpack.c.l.b16 %v4055
  %v4640 = vunpack.c.l.b16 %v4056
  %v4641 = vunpack.c.l.b16 %v4057
  %v4642 = vunpack.c.l.b16 %v4058
  %v4643 = vunpack.c.l.b16 %v4059
  %v4644 = vunpack.c.l.b16 %v4060
  %v4645 = vunpack.c.l.b16 %v4061
  %v4646 = vunpack.c.l.b16 %v4062
  %v4647 = vunpack.c.l.b16 %v4063
  %v4648 = vunpack.c.l.b16 %v4064
  %v4649 = vunpack.c.l.b16 %v4065
  %v4650 = vunpack.c.l.b16 %v4066
  %v4651 = vunpack.c.l.b16 %v4067
  %v4652 = vunpack.c.l.b16 %v4068
  %v4653 = vunpack.c.l.b16 %v4069
  %v4654 = vunpack.c.l.b16 %v4070
  %v4655 = vunpack.c.l.b16 %v4071
  %v4656 = vunpack.c.l.b16 %v4072
  %v4657 = vunpack.c.l.b16 %v4073
  %v4658 = vunpack.c.l.b16 %v4074
  %v4659 = vunpack.c.l.b16 %v4075
  %v4660 = vunpack.c.l.b16 %v4076
  %v4661 = vunpack.c.l.b16 %v4077
  %v4662 = vunpack.c.l.b16 %v4078
  %v4663 = vunpack.c.l.b16 %v4079
  %v4664 = vunpack.c.l.b16 %v4080
  %v4665 = vunpack.c.l.b16 %v4081
  %v4666 = vunpack.c.l.b16 %v4082
  %v4667 = vunpack.c.l.b16 %v4083
  %v4668 = vunpack.c.l.b16 %v4084
  %v4669 = vunpack.c.l.b16 %v4085
  %v4670 = vunpack.c.l.b16 %v4086
  %v4671 = vunpack.c.l.b16 %v4087
  %v4672 = vunpack.c.l.b16 %v4088
  %v4673 = vunpack.c.l.b16 %v4089
  %v4674 = vunpack.c.l.b16 %v4090
  %v4675 = vunpack.c.l.b16 %v4091
  %v4676 = vunpack.c.l.b16 %v4092
  %v4677 = vunpack.c.l.b16 %v4093
  %v4678 = vunpack.c.l.b16 %v4094
  %v4679 = vunpack.c.l.b16 %v4095
  %v4680 = vunpack.c.l.b16 %v4096
  %v4681 = vunpack.c.l.b16 %v4097
  %v4682 = vunpack.c.l.b16 %v4098
  %v4683 = vunpack.c.l.b16 %v4099
  %v4684 = vunpack.c.l.b16 %v4100
  %v4685 = vunpack.c.l.b16 %v4101
  %v4686 = vunpack.c.l.b16 %v4102
  %v4687 = vunpack.c.l.b16 %v4103
  %v4688 = vunpack.c.l.b16 %v4104
  %v4689 = vunpack.c.l.b16 %v4105
  %v4690 = vunpack.c.l.b16 %v4106
  %v4691 = vunpack.c.l.b16 %v4107
  %v4692 = vunpack.c.l.b16 %v4108
  %v4693 = vunpack.c.l.b16 %v4109
  %v4694 = vunpack.c.l.b16 %v4110
  %v4695 = vunpack.c.l.b16 %v4111
  %v4696 = vunpack.c.l.b16 %v4112
  %v4697 = vunpack.c.l.b16 %v4113
  %v4698 = vunpack.c.l.b16 %v4114
  %v4699 = vunpack.c.l.b16 %v4115
  %v4700 = vunpack.c.l.b16 %v4116
  %v4701 = vunpack.c.l.b16 %v4117
  %v4702 = vunpack.c.l.b16 %v4118
  %v4703 = vunpack.c.l.b16 %v4119
  %v4704 = vunpack.c.l.b16 %v4120
  %v4705 = vunpack.c.l.b16 %v4121
  %v4706 = vunpack.c.l.b16 %v4122
  %v4707 = vunpack.c.l.b16 %v4123
  %v4708 = vunpack.c.l.b16 %v4124
  %v4709 = vunpack.c.l.b16 %v4125
  %v4710 = vunpack.c.l.b16 %v4126
  %v4711 = vunpack.c.l.b16 %v4127
  %v4712 = vunpack.c.l.b16 %v4128
  %v4713 = vunpack.c.l.b16 %v4129
  %v4714 = vunpack.c.l.b16 %v4130
  %v4715 = vunpack.c.l.b16 %v4131
  %v4716 = vunpack.c.l.b16 %v4132
  %v4717 = vunpack.c.l.b16 %v4133
  %v4718 = vunpack.c.l.b16 %v4134
  %v4719 = vunpack.c.l.b16 %v4135
  %v4720 = vunpack.c.l.b16 %v4136
  %v4721 = vunpack.c.l.b16 %v4137
  %v4722 = vunpack.c.l.b16 %v4138
  %v4723 = vunpack.c.l.b16 %v4139
  %v4724 = vunpack.c.l.b16 %v4140
  %v4725 = vunpack.c.l.b16 %v4141
  %v4726 = vunpack.c.l.b16 %v4142
  %v4727 = vunpack.c.l.b16 %v4143
  %v4728 = vunpack.c.l.b16 %v4144
  %v4729 = vunpack.c.l.b16 %v4145
  %v4730 = vunpack.c.l.b16 %v4146
  %v4731 = vunpack.c.l.b16 %v4147
  %v4732 = vunpack.c.l.b16 %v4148
  %v4733 = vunpack.c.l.b16 %v4149
  %v4734 = vunpack.c.l.b16 %v4150
  %v4735 = vunpack.c.l.b16 %v4151
  %v4736 = vunpack.c.l.b16 %v4152
  %v4737 = vunpack.c.l.b16 %v4153
  %v4738 = vunpack.c.l.b16 %v4154
  %v4739 = vunpack.c.l.b16 %v4155
  %v4740 = vunpack.c.l.b16 %v4156
  %v4741 = vunpack.c.l.b16 %v4157
  %v4742 = vunpack.c.l.b16 %v4158
  %v4743 = vunpack.c.l.b16 %v4159
  %v4744 = vunpack.c.l.b16 %v4160
  %v4745 = vunpack.c.l.b16 %v4161
  %v4746 = vunpack.c.l.b16 %v4162
  %v4747 = vunpack.c.l.b16 %v4163
  %v4748 = vunpack.c.l.b16 %v4164
  %v4749 = vunpack.c.l.b16 %v4165
  %v4750 = vunpack.c.l.b16 %v4166
  %v4751 = vunpack.c.l.b16 %v4167
  %v4752 = vunpack.c.l.b16 %v4168
  %v4753 = vunpack.c.l.b16 %v4169
  %v4754 = vunpack.c.l.b16 %v4170
  %v4755 = vunpack.c.l.b16 %v4171
  %v4756 = vunpack.c.l.b16 %v4172
  %v4757 = vunpack.c.l.b16 %v4173
  %v4758 = vunpack.c.l.b16 %v4174
  %v4759 = vunpack.c.l.b16 %v4175
  %v4760 = vunpack.c.l.b16 %v4176
  %v4761 = vunpack.c.l.b16 %v4177
  %v4762 = vunpack.c.l.b16 %v4178
  %v4763 = vunpack.c.l.b16 %v4179
  %v4764 = vunpack.c.l.b16 %v4180
  %v4765 = vunpack.c.l.b16 %v4181
  %v4766 = vunpack.c.l.b16 %v4182
  %v4767 = vunpack.c.l.b16 %v4183
  %v4768 = vunpack.c.l.b16 %v4184
  %v4769 = vunpack.c.l.b16 %v4185
  %v4770 = vunpack.c.l.b16 %v4186
  %v4771 = vunpack.c.l.b16 %v4187
  %v4772 = vunpack.c.l.b16 %v4188
  %v4773 = vunpack.c.l.b16 %v4189
  %v4774 = vunpack.c.l.b16 %v4190
  %v4775 = vunpack.c.l.b16 %v4191
  %v4776 = vunpack.c.l.b16 %v4192
  %v4777 = vunpack.c.l.b16 %v4193
  %v4778 = vunpack.c.l.b16 %v4194
  %v4779 = vunpack.c.l.b16 %v4195
  %v4780 = vunpack.c.l.b16 %v4196
  %v4781 = vunpack.c.l.b16 %v4197
  %v4782 = vunpack.c.l.b16 %v4198
  %v4783 = vunpack.c.l.b16 %v4199
  %v4784 = vunpack.c.l.b16 %v4200
  %v4785 = vunpack.c.l.b16 %v4201
  %v4786 = vunpack.c.l.b16 %v4202
  %v4787 = vunpack.c.l.b16 %v4203
  %v4788 = vunpack.c.l.b16 %v4204
  %v4789 = vunpack.c.l.b16 %v4205
  %v4790 = vunpack.c.l.b16 %v4206
  %v4791 = vunpack.c.l.b16 %v4207
  %v4792 = vunpack.c.l.b16 %v4208
  %v4793 = vunpack.c.l.b16 %v4209
  %v4794 = vunpack.c.l.b16 %v4210
  %v4795 = vunpack.c.l.b16 %v4211
  %v4796 = vunpack.c.l.b16 %v4212
  %v4797 = vunpack.c.l.b16 %v4213
  %v4798 = vunpack.c.l.b16 %v4214
  %v4799 = vunpack.c.l.b16 %v4215
  %v4800 = vunpack.c.l.b16 %v4216
  %v4801 = vunpack.c.l.b16 %v4217
  %v4802 = vunpack.c.l.b16 %v4218
  %v4803 = vunpack.c.l.b16 %v4219
  %v4804 = vunpack.c.l.b16 %v4220
  %v4805 = vunpack.c.l.b16 %v4221
  %v4806 = vunpack.c.l.b16 %v4222
  %v4807 = vunpack.c.l.b16 %v4223
  %v4808 = vunpack.c.l.b16 %v4224
  %v4809 = vunpack.c.l.b16 %v4225
  %v4810 = vunpack.c.l.b16 %v4226
  %v4811 = vunpack.c.l.b16 %v4227
  %v4812 = vunpack.c.l.b16 %v4228
  %v4813 = vunpack.c.l.b16 %v4229
  %v4814 = vunpack.c.l.b16 %v4230
  %v4815 = vunpack.c.l.b16 %v4231
  %v4816 = vunpack.c.l.b16 %v4232
  %v4817 = vunpack.c.l.b16 %v4233
  %v4818 = vunpack.c.l.b16 %v4234
  %v4819 = vunpack.c.l.b16 %v4235
  %v4820 = vunpack.c.l.b16 %v4236
  %v4821 = vunpack.c.l.b16 %v4237
  %v4822 = vunpack.c.l.b16 %v4238
  %v4823 = vunpack.c.l.b16 %v4239
  %v4824 = vunpack.c.l.b16 %v4240
  %v4825 = vunpack.c.l.b16 %v4241
  %v4826 = vunpack.c.l.b16 %v4242
  %v4827 = vunpack.c.l.b16 %v4243
  %v4828 = vunpack.c.l.b16 %v4244
  %v4829 = vunpack.c.l.b16 %v4245
  %v4830 = vunpack.c.l.b16 %v4246
  %v4831 = vunpack.c.l.b16 %v4247
  %v4832 = vunpack.c.l.b16 %v4248
  %v4833 = vunpack.c.l.b16 %v4249
  %v4834 = vunpack.c.l.b16 %v4250
  %v4835 = vunpack.c.l.b16 %v4251
  %v4836 = vunpack.c.l.b16 %v4252
  %v4837 = vunpack.c.l.b16 %v4253
  %v4838 = vunpack.c.l.b16 %v4254
  %v4839 = vunpack.c.l.b16 %v4255
  %v4840 = vunpack.c.l.b16 %v4256
  %v4841 = vunpack.c.l.b16 %v4257
  %v4842 = vunpack.c.l.b16 %v4258
  %v4843 = vunpack.c.l.b16 %v4259
  %v4844 = vunpack.c.l.b16 %v4260
  %v4845 = vunpack.c.l.b16 %v4261
  %v4846 = vpack.c.b16 %v4591, %v4590
  %v4847 = vpack.c.b16 %v4593, %v4592
  %v4848 = vpack.c.b16 %v4595, %v4594
  %v4849 = vpack.c.b16 %v4597, %v4596
  %v4850 = vpack.c.b16 %v4599, %v4598
  %v4851 = vpack.c.b16 %v4601, %v4600
  %v4852 = vpack.c.b16 %v4603, %v4602
  %v4853 = vpack.c.b16 %v4605, %v4604
  %v4854 = vpack.c.b16 %v4607, %v4606
  %v4855 = vpack.c.b16 %v4609, %v4608
  %v4856 = vpack.c.b16 %v4611, %v4610
  %v4857 = vpack.c.b16 %v4613, %v4612
  %v4858 = vpack.c.b16 %v4615, %v4614
  %v4859 = vpack.c.b16 %v4617, %v4616
  %v4860 = vpack.c.b16 %v4619, %v4618
  %v4861 = vpack.c.b16 %v4621, %v4620
  %v4862 = vpack.c.b16 %v4623, %v4622
  %v4863 = vpack.c.b16 %v4625, %v4624
  %v4864 = vpack.c.b16 %v4627, %v4626
  %v4865 = vpack.c.b16 %v4629, %v4628
  %v4866 = vpack.c.b16 %v4631, %v4630
  %v4867 = vpack.c.b16 %v4633, %v4632
  %v4868 = vpack.c.b16 %v4635, %v4634
  %v4869 = vpack.c.b16 %v4637, %v4636
  %v4870 = vpack.c.b16 %v4639, %v4638
  %v4871 = vpack.c.b16 %v4641, %v4640
  %v4872 = vpack.c.b16 %v4643, %v4642
  %v4873 = vpack.c.b16 %v4645, %v4644
  %v4874 = vpack.c.b16 %v4647, %v4646
  %v4875 = vpack.c.b16 %v4649, %v4648
  %v4876 = vpack.c.b16 %v4651, %v4650
  %v4877 = vpack.c.b16 %v4653, %v4652
  %v4878 = vpack.c.b16 %v4655, %v4654
  %v4879 = vpack.c.b16 %v4657, %v4656
  %v4880 = vpack.c.b16 %v4659, %v4658
  %v4881 = vpack.c.b16 %v4661, %v4660
  %v4882 = vpack.c.b16 %v4663, %v4662
  %v4883 = vpack.c.b16 %v4665, %v4664
  %v4884 = vpack.c.b16 %v4667, %v4666
  %v4885 = vpack.c.b16 %v4669, %v4668
  %v4886 = vpack.c.b16 %v4671, %v4670
  %v4887 = vpack.c.b16 %v4673, %v4672
  %v4888 = vpack.c.b16 %v4675, %v4674
  %v4889 = vpack.c.b16 %v4677, %v4676
  %v4890 = vpack.c.b16 %v4679, %v4678
  %v4891 = vpack.c.b16 %v4681, %v4680
  %v4892 = vpack.c.b16 %v4683, %v4682
  %v4893 = vpack.c.b16 %v4685, %v4684
  %v4894 = vpack.c.b16 %v4687, %v4686
  %v4895 = vpack.c.b16 %v4689, %v4688
  %v4896 = vpack.c.b16 %v4691, %v4690
  %v4897 = vpack.c.b16 %v4693, %v4692
  %v4898 = vpack.c.b16 %v4695, %v4694
  %v4899 = vpack.c.b16 %v4697, %v4696
  %v4900 = vpack.c.b16 %v4699, %v4698
  %v4901 = vpack.c.b16 %v4701, %v4700
  %v4902 = vpack.c.b16 %v4703, %v4702
  %v4903 = vpack.c.b16 %v4705, %v4704
  %v4904 = vpack.c.b16 %v4707, %v4706
  %v4905 = vpack.c.b16 %v4709, %v4708
  %v4906 = vpack.c.b16 %v4711, %v4710
  %v4907 = vpack.c.b16 %v4713, %v4712
  %v4908 = vpack.c.b16 %v4715, %v4714
  %v4909 = vpack.c.b16 %v4717, %v4716
  %v4910 = vpack.c.b16 %v4719, %v4718
  %v4911 = vpack.c.b16 %v4721, %v4720
  %v4912 = vpack.c.b16 %v4723, %v4722
  %v4913 = vpack.c.b16 %v4725, %v4724
  %v4914 = vpack.c.b16 %v4727, %v4726
  %v4915 = vpack.c.b16 %v4729, %v4728
  %v4916 = vpack.c.b16 %v4731, %v4730
  %v4917 = vpack.c.b16 %v4733, %v4732
  %v4918 = vpack.c.b16 %v4735, %v4734
  %v4919 = vpack.c.b16 %v4737, %v4736
  %v4920 = vpack.c.b16 %v4739, %v4738
  %v4921 = vpack.c.b16 %v4741, %v4740
  %v4922 = vpack.c.b16 %v4743, %v4742
  %v4923 = vpack.c.b16 %v4745, %v4744
  %v4924 = vpack.c.b16 %v4747, %v4746
  %v4925 = vpack.c.b16 %v4749, %v4748
  %v4926 = vpack.c.b16 %v4751, %v4750
  %v4927 = vpack.c.b16 %v4753, %v4752
  %v4928 = vpack.c.b16 %v4755, %v4754
  %v4929 = vpack.c.b16 %v4757, %v4756
  %v4930 = vpack.c.b16 %v4759, %v4758
  %v4931 = vpack.c.b16 %v4761, %v4760
  %v4932 = vpack.c.b16 %v4763, %v4762
  %v4933 = vpack.c.b16 %v4765, %v4764
  %v4934 = vpack.c.b16 %v4767, %v4766
  %v4935 = vpack.c.b16 %v4769, %v4768
  %v4936 = vpack.c.b16 %v4771, %v4770
  %v4937 = vpack.c.b16 %v4773, %v4772
  %v4938 = vpack.c.b16 %v4775, %v4774
  %v4939 = vpack.c.b16 %v4777, %v4776
  %v4940 = vpack.c.b16 %v4779, %v4778
  %v4941 = vpack.c.b16 %v4781, %v4780
  %v4942 = vpack.c.b16 %v4783, %v4782
  %v4943 = vpack.c.b16 %v4785, %v4784
  %v4944 = vpack.c.b16 %v4787, %v4786
  %v4945 = vpack.c.b16 %v4789, %v4788
  %v4946 = vpack.c.b16 %v4791, %v4790
  %v4947 = vpack.c.b16 %v4793, %v4792
  %v4948 = vpack.c.b16 %v4795, %v4794
  %v4949 = vpack.c.b16 %v4797, %v4796
  %v4950 = vpack.c.b16 %v4799, %v4798
  %v4951 = vpack.c.b16 %v4801, %v4800
  %v4952 = vpack.c.b16 %v4803, %v4802
  %v4953 = vpack.c.b16 %v4805, %v4804
  %v4954 = vpack.c.b16 %v4807, %v4806
  %v4955 = vpack.c.b16 %v4809, %v4808
  %v4956 = vpack.c.b16 %v4811, %v4810
  %v4957 = vpack.c.b16 %v4813, %v4812
  %v4958 = vpack.c.b16 %v4815, %v4814
  %v4959 = vpack.c.b16 %v4817, %v4816
  %v4960 = vpack.c.b16 %v4819, %v4818
  %v4961 = vpack.c.b16 %v4821, %v4820
  %v4962 = vpack.c.b16 %v4823, %v4822
  %v4963 = vpack.c.b16 %v4825, %v4824
  %v4964 = vpack.c.b16 %v4827, %v4826
  %v4965 = vpack.c.b16 %v4829, %v4828
  %v4966 = vpack.c.b16 %v4831, %v4830
  %v4967 = vpack.c.b16 %v4833, %v4832
  %v4968 = vpack.c.b16 %v4835, %v4834
  %v4969 = vpack.c.b16 %v4837, %v4836
  %v4970 = vpack.c.b16 %v4839, %v4838
  %v4971 = vpack.c.b16 %v4841, %v4840
  %v4972 = vpack.c.b16 %v4843, %v4842
  %v4973 = vpack.c.b16 %v4845, %v4844
  %5102 = vmatpush.bf16.msra.mxu0 %v4853
  %5103 = vmatpush.bf16.msra.mxu0 %v4852
  %5104 = vmatpush.bf16.msra.mxu0 %v4851
  %5105 = vmatpush.bf16.msra.mxu0 %v4850
  %5106 = vmatpush.bf16.msra.mxu0 %v4849
  %5107 = vmatpush.bf16.msra.mxu0 %v4848
  %5108 = vmatpush.bf16.msra.mxu0 %v4847
  %5109 = vmatpush.bf16.msra.mxu0 %v4846
  %5110 = vmatmul.bf16.gmra.mxu0 %v4302
  %v5111 = vpop.f32.mrf.mxu0
  %v5112 = vadd.f32 0.0, %v5111
  %v5113 = vpop.f32.mrf.mxu0
  %5114 = vdwg.mxu0
  %5115 = vmatpush.bf16.msra.mxu0 %v4861
  %5116 = vmatpush.bf16.msra.mxu0 %v4860
  %5117 = vmatpush.bf16.msra.mxu0 %v4859
  %5118 = vmatpush.bf16.msra.mxu0 %v4858
  %5119 = vmatpush.bf16.msra.mxu0 %v4857
  %5120 = vmatpush.bf16.msra.mxu0 %v4856
  %5121 = vmatpush.bf16.msra.mxu0 %v4855
  %5122 = vmatpush.bf16.msra.mxu0 %v4854
  %5123 = vmatmul.bf16.gmra.mxu0 %v4303
  %v5124 = vpop.f32.mrf.mxu0
  %v5125 = vadd.f32 %v5112, %v5124
  %v5126 = vpop.f32.mrf.mxu0
  %5127 = vdwg.mxu0
  %5128 = vmatpush.bf16.msra.mxu0 %v4869
  %5129 = vmatpush.bf16.msra.mxu0 %v4868
  %5130 = vmatpush.bf16.msra.mxu0 %v4867
  %5131 = vmatpush.bf16.msra.mxu0 %v4866
  %5132 = vmatpush.bf16.msra.mxu0 %v4865
  %5133 = vmatpush.bf16.msra.mxu0 %v4864
  %5134 = vmatpush.bf16.msra.mxu0 %v4863
  %5135 = vmatpush.bf16.msra.mxu0 %v4862
  %5136 = vmatmul.bf16.gmra.mxu0 %v4304
  %v5137 = vpop.f32.mrf.mxu0
  %v5138 = vadd.f32 %v5125, %v5137
  %v5139 = vpop.f32.mrf.mxu0
  %5140 = vdwg.mxu0
  %5141 = vmatpush.bf16.msra.mxu0 %v4877
  %5142 = vmatpush.bf16.msra.mxu0 %v4876
  %5143 = vmatpush.bf16.msra.mxu0 %v4875
  %5144 = vmatpush.bf16.msra.mxu0 %v4874
  %5145 = vmatpush.bf16.msra.mxu0 %v4873
  %5146 = vmatpush.bf16.msra.mxu0 %v4872
  %5147 = vmatpush.bf16.msra.mxu0 %v4871
  %5148 = vmatpush.bf16.msra.mxu0 %v4870
  %5149 = vmatmul.bf16.gmra.mxu0 %v4305
  %v5150 = vpop.f32.mrf.mxu0
  %v5151 = vadd.f32 %v5138, %v5150
  %v5152 = vpop.f32.mrf.mxu0
  %5153 = vdwg.mxu0
  %5154 = vmatpush.bf16.msra.mxu0 %v4885
  %5155 = vmatpush.bf16.msra.mxu0 %v4884
  %5156 = vmatpush.bf16.msra.mxu0 %v4883
  %5157 = vmatpush.bf16.msra.mxu0 %v4882
  %5158 = vmatpush.bf16.msra.mxu0 %v4881
  %5159 = vmatpush.bf16.msra.mxu0 %v4880
  %5160 = vmatpush.bf16.msra.mxu0 %v4879
  %5161 = vmatpush.bf16.msra.mxu0 %v4878
  %5162 = vmatmul.bf16.gmra.mxu0 %v4306
  %v5163 = vpop.f32.mrf.mxu0
  %v5164 = vadd.f32 %v5151, %v5163
  %v5165 = vpop.f32.mrf.mxu0
  %5166 = vdwg.mxu0
  %5167 = vmatpush.bf16.msra.mxu0 %v4893
  %5168 = vmatpush.bf16.msra.mxu0 %v4892
  %5169 = vmatpush.bf16.msra.mxu0 %v4891
  %5170 = vmatpush.bf16.msra.mxu0 %v4890
  %5171 = vmatpush.bf16.msra.mxu0 %v4889
  %5172 = vmatpush.bf16.msra.mxu0 %v4888
  %5173 = vmatpush.bf16.msra.mxu0 %v4887
  %5174 = vmatpush.bf16.msra.mxu0 %v4886
  %5175 = vmatmul.bf16.gmra.mxu0 %v4307
  %v5176 = vpop.f32.mrf.mxu0
  %v5177 = vadd.f32 %v5164, %v5176
  %v5178 = vpop.f32.mrf.mxu0
  %5179 = vdwg.mxu0
  %5180 = vmatpush.bf16.msra.mxu0 %v4901
  %5181 = vmatpush.bf16.msra.mxu0 %v4900
  %5182 = vmatpush.bf16.msra.mxu0 %v4899
  %5183 = vmatpush.bf16.msra.mxu0 %v4898
  %5184 = vmatpush.bf16.msra.mxu0 %v4897
  %5185 = vmatpush.bf16.msra.mxu0 %v4896
  %5186 = vmatpush.bf16.msra.mxu0 %v4895
  %5187 = vmatpush.bf16.msra.mxu0 %v4894
  %5188 = vmatmul.bf16.gmra.mxu0 %v4308
  %v5189 = vpop.f32.mrf.mxu0
  %v5190 = vadd.f32 %v5177, %v5189
  %v5191 = vpop.f32.mrf.mxu0
  %5192 = vdwg.mxu0
  %5193 = vmatpush.bf16.msra.mxu0 %v4909
  %5194 = vmatpush.bf16.msra.mxu0 %v4908
  %5195 = vmatpush.bf16.msra.mxu0 %v4907
  %5196 = vmatpush.bf16.msra.mxu0 %v4906
  %5197 = vmatpush.bf16.msra.mxu0 %v4905
  %5198 = vmatpush.bf16.msra.mxu0 %v4904
  %5199 = vmatpush.bf16.msra.mxu0 %v4903
  %5200 = vmatpush.bf16.msra.mxu0 %v4902
  %5201 = vmatmul.bf16.gmra.mxu0 %v4309
  %v5202 = vpop.f32.mrf.mxu0
  %v5203 = vadd.f32 %v5190, %v5202
  %v5204 = vpop.f32.mrf.mxu0
  %5205 = vdwg.mxu0
  %5206 = vmatpush.bf16.msra.mxu0 %v4917
  %5207 = vmatpush.bf16.msra.mxu0 %v4916
  %5208 = vmatpush.bf16.msra.mxu0 %v4915
  %5209 = vmatpush.bf16.msra.mxu0 %v4914
  %5210 = vmatpush.bf16.msra.mxu0 %v4913
  %5211 = vmatpush.bf16.msra.mxu0 %v4912
  %5212 = vmatpush.bf16.msra.mxu0 %v4911
  %5213 = vmatpush.bf16.msra.mxu0 %v4910
  %5214 = vmatmul.bf16.gmra.mxu0 %v4310
  %v5215 = vpop.f32.mrf.mxu0
  %v5216 = vadd.f32 %v5203, %v5215
  %v5217 = vpop.f32.mrf.mxu0
  %5218 = vdwg.mxu0
  %5219 = vmatpush.bf16.msra.mxu0 %v4925
  %5220 = vmatpush.bf16.msra.mxu0 %v4924
  %5221 = vmatpush.bf16.msra.mxu0 %v4923
  %5222 = vmatpush.bf16.msra.mxu0 %v4922
  %5223 = vmatpush.bf16.msra.mxu0 %v4921
  %5224 = vmatpush.bf16.msra.mxu0 %v4920
  %5225 = vmatpush.bf16.msra.mxu0 %v4919
  %5226 = vmatpush.bf16.msra.mxu0 %v4918
  %5227 = vmatmul.bf16.gmra.mxu0 %v4311
  %v5228 = vpop.f32.mrf.mxu0
  %v5229 = vadd.f32 %v5216, %v5228
  %v5230 = vpop.f32.mrf.mxu0
  %5231 = vdwg.mxu0
  %5232 = vmatpush.bf16.msra.mxu0 %v4933
  %5233 = vmatpush.bf16.msra.mxu0 %v4932
  %5234 = vmatpush.bf16.msra.mxu0 %v4931
  %5235 = vmatpush.bf16.msra.mxu0 %v4930
  %5236 = vmatpush.bf16.msra.mxu0 %v4929
  %5237 = vmatpush.bf16.msra.mxu0 %v4928
  %5238 = vmatpush.bf16.msra.mxu0 %v4927
  %5239 = vmatpush.bf16.msra.mxu0 %v4926
  %5240 = vmatmul.bf16.gmra.mxu0 %v4312
  %v5241 = vpop.f32.mrf.mxu0
  %v5242 = vadd.f32 %v5229, %v5241
  %v5243 = vpop.f32.mrf.mxu0
  %5244 = vdwg.mxu0
  %5245 = vmatpush.bf16.msra.mxu0 %v4941
  %5246 = vmatpush.bf16.msra.mxu0 %v4940
  %5247 = vmatpush.bf16.msra.mxu0 %v4939
  %5248 = vmatpush.bf16.msra.mxu0 %v4938
  %5249 = vmatpush.bf16.msra.mxu0 %v4937
  %5250 = vmatpush.bf16.msra.mxu0 %v4936
  %5251 = vmatpush.bf16.msra.mxu0 %v4935
  %5252 = vmatpush.bf16.msra.mxu0 %v4934
  %5253 = vmatmul.bf16.gmra.mxu0 %v4313
  %v5254 = vpop.f32.mrf.mxu0
  %v5255 = vadd.f32 %v5242, %v5254
  %v5256 = vpop.f32.mrf.mxu0
  %5257 = vdwg.mxu0
  %5258 = vmatpush.bf16.msra.mxu0 %v4949
  %5259 = vmatpush.bf16.msra.mxu0 %v4948
  %5260 = vmatpush.bf16.msra.mxu0 %v4947
  %5261 = vmatpush.bf16.msra.mxu0 %v4946
  %5262 = vmatpush.bf16.msra.mxu0 %v4945
  %5263 = vmatpush.bf16.msra.mxu0 %v4944
  %5264 = vmatpush.bf16.msra.mxu0 %v4943
  %5265 = vmatpush.bf16.msra.mxu0 %v4942
  %5266 = vmatmul.bf16.gmra.mxu0 %v4314
  %v5267 = vpop.f32.mrf.mxu0
  %v5268 = vadd.f32 %v5255, %v5267
  %v5269 = vpop.f32.mrf.mxu0
  %5270 = vdwg.mxu0
  %5271 = vmatpush.bf16.msra.mxu0 %v4957
  %5272 = vmatpush.bf16.msra.mxu0 %v4956
  %5273 = vmatpush.bf16.msra.mxu0 %v4955
  %5274 = vmatpush.bf16.msra.mxu0 %v4954
  %5275 = vmatpush.bf16.msra.mxu0 %v4953
  %5276 = vmatpush.bf16.msra.mxu0 %v4952
  %5277 = vmatpush.bf16.msra.mxu0 %v4951
  %5278 = vmatpush.bf16.msra.mxu0 %v4950
  %5279 = vmatmul.bf16.gmra.mxu0 %v4315
  %v5280 = vpop.f32.mrf.mxu0
  %v5281 = vadd.f32 %v5268, %v5280
  %v5282 = vpop.f32.mrf.mxu0
  %5283 = vdwg.mxu0
  %5284 = vmatpush.bf16.msra.mxu0 %v4965
  %5285 = vmatpush.bf16.msra.mxu0 %v4964
  %5286 = vmatpush.bf16.msra.mxu0 %v4963
  %5287 = vmatpush.bf16.msra.mxu0 %v4962
  %5288 = vmatpush.bf16.msra.mxu0 %v4961
  %5289 = vmatpush.bf16.msra.mxu0 %v4960
  %5290 = vmatpush.bf16.msra.mxu0 %v4959
  %5291 = vmatpush.bf16.msra.mxu0 %v4958
  %5292 = vmatmul.bf16.gmra.mxu0 %v4316
  %v5293 = vpop.f32.mrf.mxu0
  %v5294 = vadd.f32 %v5281, %v5293
  %v5295 = vpop.f32.mrf.mxu0
  %5296 = vdwg.mxu0
  %5297 = vmatpush.bf16.msra.mxu0 %v4973
  %5298 = vmatpush.bf16.msra.mxu0 %v4972
  %5299 = vmatpush.bf16.msra.mxu0 %v4971
  %5300 = vmatpush.bf16.msra.mxu0 %v4970
  %5301 = vmatpush.bf16.msra.mxu0 %v4969
  %5302 = vmatpush.bf16.msra.mxu0 %v4968
  %5303 = vmatpush.bf16.msra.mxu0 %v4967
  %5304 = vmatpush.bf16.msra.mxu0 %v4966
  %5305 = vmatmul.bf16.gmra.mxu0 %v4317
  %v5306 = vpop.f32.mrf.mxu0
  %v5307 = vadd.f32 %v5294, %v5306
  %v5308 = vpop.f32.mrf.mxu0
  %5309 = vdwg.mxu0
  %5311 = vrot.lane.b32.xlu0 %v5307, 64
  %v5312 = vpop.permute.xlu0 %5311
  %5314 = vst.msk [vmem:[#allocation2 + $0x4] sm:$0xf] %vm2665, %v5312
  %v5315 = vsel %vm1330, %v5307, 0.0
  %v5316 = vrot.slane %v5315, 4
  %v5317 = vadd.f32 %v5315, %v5316
  %v5318 = vrot.slane %v5317, 2
  %v5319 = vadd.f32 %v5317, %v5318
  %v5320 = vrot.slane %v5319, 1
  %v5321 = vadd.f32 %v5319, %v5320
  %v5322 = vadd.f32 %v3988, %v5321
  %v5323 = vmul.f32 %v5307, %v5307
  %v5324 = vsel %vm1330, %v5323, 0.0
  %v5325 = vrot.slane %v5324, 4
  %v5326 = vadd.f32 %v5324, %v5325
  %v5327 = vrot.slane %v5326, 2
  %v5328 = vadd.f32 %v5326, %v5327
  %v5329 = vrot.slane %v5328, 1
  %v5330 = vadd.f32 %v5328, %v5329
  %v5331 = vadd.f32 %v3997, %v5330
  %v5332 = vld [vmem:[%s0 + $0x80] sm:$0x33]
  %v5333 = vld [vmem:[%s0 + $0x88] sm:$0x33]
  %v5334 = vld [vmem:[%s0 + $0x90] sm:$0x33]
  %v5335 = vld [vmem:[%s0 + $0x98] sm:$0x33]
  %v5336 = vld [vmem:[%s0 + $0xa0] sm:$0x33]
  %v5337 = vld [vmem:[%s0 + $0xa8] sm:$0x33]
  %v5338 = vld [vmem:[%s0 + $0xb0] sm:$0x33]
  %v5339 = vld [vmem:[%s0 + $0xb8] sm:$0x33]
  %v5340 = vld [vmem:[%s1] sm:$0xf]
  %v5341 = vld [vmem:[%s1 + $0x4] sm:$0xf]
  %v5342 = vld [vmem:[%s1 + $0x8] sm:$0xf]
  %v5343 = vld [vmem:[%s1 + $0xc] sm:$0xf]
  %v5344 = vld [vmem:[%s1 + $0x10] sm:$0xf]
  %v5345 = vld [vmem:[%s1 + $0x14] sm:$0xf]
  %v5346 = vld [vmem:[%s1 + $0x18] sm:$0xf]
  %v5347 = vld [vmem:[%s1 + $0x1c] sm:$0xf]
  %v5348 = vld [vmem:[%s1 + $0x20] sm:$0xf]
  %v5349 = vld [vmem:[%s1 + $0x24] sm:$0xf]
  %v5350 = vld [vmem:[%s1 + $0x28] sm:$0xf]
  %v5351 = vld [vmem:[%s1 + $0x2c] sm:$0xf]
  %v5352 = vld [vmem:[%s1 + $0x30] sm:$0xf]
  %v5353 = vld [vmem:[%s1 + $0x34] sm:$0xf]
  %v5354 = vld [vmem:[%s1 + $0x38] sm:$0xf]
  %v5355 = vld [vmem:[%s1 + $0x3c] sm:$0xf]
  %v5356 = vld [vmem:[%s1 + $0x40] sm:$0xf]
  %v5357 = vld [vmem:[%s1 + $0x44] sm:$0xf]
  %v5358 = vld [vmem:[%s1 + $0x48] sm:$0xf]
  %v5359 = vld [vmem:[%s1 + $0x4c] sm:$0xf]
  %v5360 = vld [vmem:[%s1 + $0x50] sm:$0xf]
  %v5361 = vld [vmem:[%s1 + $0x54] sm:$0xf]
  %v5362 = vld [vmem:[%s1 + $0x58] sm:$0xf]
  %v5363 = vld [vmem:[%s1 + $0x5c] sm:$0xf]
  %v5364 = vld [vmem:[%s1 + $0x60] sm:$0xf]
  %v5365 = vld [vmem:[%s1 + $0x64] sm:$0xf]
  %v5366 = vld [vmem:[%s1 + $0x68] sm:$0xf]
  %v5367 = vld [vmem:[%s1 + $0x6c] sm:$0xf]
  %v5368 = vld [vmem:[%s1 + $0x70] sm:$0xf]
  %v5369 = vld [vmem:[%s1 + $0x74] sm:$0xf]
  %v5370 = vld [vmem:[%s1 + $0x78] sm:$0xf]
  %v5371 = vld [vmem:[%s1 + $0x7c] sm:$0xf]
  %v5372 = vld [vmem:[%s1 + $0x80] sm:$0xf]
  %v5373 = vld [vmem:[%s1 + $0x84] sm:$0xf]
  %v5374 = vld [vmem:[%s1 + $0x88] sm:$0xf]
  %v5375 = vld [vmem:[%s1 + $0x8c] sm:$0xf]
  %v5376 = vld [vmem:[%s1 + $0x90] sm:$0xf]
  %v5377 = vld [vmem:[%s1 + $0x94] sm:$0xf]
  %v5378 = vld [vmem:[%s1 + $0x98] sm:$0xf]
  %v5379 = vld [vmem:[%s1 + $0x9c] sm:$0xf]
  %v5380 = vld [vmem:[%s1 + $0xa0] sm:$0xf]
  %v5381 = vld [vmem:[%s1 + $0xa4] sm:$0xf]
  %v5382 = vld [vmem:[%s1 + $0xa8] sm:$0xf]
  %v5383 = vld [vmem:[%s1 + $0xac] sm:$0xf]
  %v5384 = vld [vmem:[%s1 + $0xb0] sm:$0xf]
  %v5385 = vld [vmem:[%s1 + $0xb4] sm:$0xf]
  %v5386 = vld [vmem:[%s1 + $0xb8] sm:$0xf]
  %v5387 = vld [vmem:[%s1 + $0xbc] sm:$0xf]
  %v5388 = vld [vmem:[%s1 + $0xc0] sm:$0xf]
  %v5389 = vld [vmem:[%s1 + $0xc4] sm:$0xf]
  %v5390 = vld [vmem:[%s1 + $0xc8] sm:$0xf]
  %v5391 = vld [vmem:[%s1 + $0xcc] sm:$0xf]
  %v5392 = vld [vmem:[%s1 + $0xd0] sm:$0xf]
  %v5393 = vld [vmem:[%s1 + $0xd4] sm:$0xf]
  %v5394 = vld [vmem:[%s1 + $0xd8] sm:$0xf]
  %v5395 = vld [vmem:[%s1 + $0xdc] sm:$0xf]
  %v5396 = vld [vmem:[%s1 + $0xe0] sm:$0xf]
  %v5397 = vld [vmem:[%s1 + $0xe4] sm:$0xf]
  %v5398 = vld [vmem:[%s1 + $0xe8] sm:$0xf]
  %v5399 = vld [vmem:[%s1 + $0xec] sm:$0xf]
  %v5400 = vld [vmem:[%s1 + $0xf0] sm:$0xf]
  %v5401 = vld [vmem:[%s1 + $0xf4] sm:$0xf]
  %v5402 = vld [vmem:[%s1 + $0xf8] sm:$0xf]
  %v5403 = vld [vmem:[%s1 + $0xfc] sm:$0xf]
  %v5404 = vld [vmem:[%s1 + $0x100] sm:$0xf]
  %v5405 = vld [vmem:[%s1 + $0x104] sm:$0xf]
  %v5406 = vld [vmem:[%s1 + $0x108] sm:$0xf]
  %v5407 = vld [vmem:[%s1 + $0x10c] sm:$0xf]
  %v5408 = vld [vmem:[%s1 + $0x110] sm:$0xf]
  %v5409 = vld [vmem:[%s1 + $0x114] sm:$0xf]
  %v5410 = vld [vmem:[%s1 + $0x118] sm:$0xf]
  %v5411 = vld [vmem:[%s1 + $0x11c] sm:$0xf]
  %v5412 = vld [vmem:[%s1 + $0x120] sm:$0xf]
  %v5413 = vld [vmem:[%s1 + $0x124] sm:$0xf]
  %v5414 = vld [vmem:[%s1 + $0x128] sm:$0xf]
  %v5415 = vld [vmem:[%s1 + $0x12c] sm:$0xf]
  %v5416 = vld [vmem:[%s1 + $0x130] sm:$0xf]
  %v5417 = vld [vmem:[%s1 + $0x134] sm:$0xf]
  %v5418 = vld [vmem:[%s1 + $0x138] sm:$0xf]
  %v5419 = vld [vmem:[%s1 + $0x13c] sm:$0xf]
  %v5420 = vld [vmem:[%s1 + $0x140] sm:$0xf]
  %v5421 = vld [vmem:[%s1 + $0x144] sm:$0xf]
  %v5422 = vld [vmem:[%s1 + $0x148] sm:$0xf]
  %v5423 = vld [vmem:[%s1 + $0x14c] sm:$0xf]
  %v5424 = vld [vmem:[%s1 + $0x150] sm:$0xf]
  %v5425 = vld [vmem:[%s1 + $0x154] sm:$0xf]
  %v5426 = vld [vmem:[%s1 + $0x158] sm:$0xf]
  %v5427 = vld [vmem:[%s1 + $0x15c] sm:$0xf]
  %v5428 = vld [vmem:[%s1 + $0x160] sm:$0xf]
  %v5429 = vld [vmem:[%s1 + $0x164] sm:$0xf]
  %v5430 = vld [vmem:[%s1 + $0x168] sm:$0xf]
  %v5431 = vld [vmem:[%s1 + $0x16c] sm:$0xf]
  %v5432 = vld [vmem:[%s1 + $0x170] sm:$0xf]
  %v5433 = vld [vmem:[%s1 + $0x174] sm:$0xf]
  %v5434 = vld [vmem:[%s1 + $0x178] sm:$0xf]
  %v5435 = vld [vmem:[%s1 + $0x17c] sm:$0xf]
  %v5436 = vld [vmem:[%s1 + $0x180] sm:$0xf]
  %v5437 = vld [vmem:[%s1 + $0x184] sm:$0xf]
  %v5438 = vld [vmem:[%s1 + $0x188] sm:$0xf]
  %v5439 = vld [vmem:[%s1 + $0x18c] sm:$0xf]
  %v5440 = vld [vmem:[%s1 + $0x190] sm:$0xf]
  %v5441 = vld [vmem:[%s1 + $0x194] sm:$0xf]
  %v5442 = vld [vmem:[%s1 + $0x198] sm:$0xf]
  %v5443 = vld [vmem:[%s1 + $0x19c] sm:$0xf]
  %v5444 = vld [vmem:[%s1 + $0x1a0] sm:$0xf]
  %v5445 = vld [vmem:[%s1 + $0x1a4] sm:$0xf]
  %v5446 = vld [vmem:[%s1 + $0x1a8] sm:$0xf]
  %v5447 = vld [vmem:[%s1 + $0x1ac] sm:$0xf]
  %v5448 = vld [vmem:[%s1 + $0x1b0] sm:$0xf]
  %v5449 = vld [vmem:[%s1 + $0x1b4] sm:$0xf]
  %v5450 = vld [vmem:[%s1 + $0x1b8] sm:$0xf]
  %v5451 = vld [vmem:[%s1 + $0x1bc] sm:$0xf]
  %v5452 = vld [vmem:[%s1 + $0x1c0] sm:$0xf]
  %v5453 = vld [vmem:[%s1 + $0x1c4] sm:$0xf]
  %v5454 = vld [vmem:[%s1 + $0x1c8] sm:$0xf]
  %v5455 = vld [vmem:[%s1 + $0x1cc] sm:$0xf]
  %v5456 = vld [vmem:[%s1 + $0x1d0] sm:$0xf]
  %v5457 = vld [vmem:[%s1 + $0x1d4] sm:$0xf]
  %v5458 = vld [vmem:[%s1 + $0x1d8] sm:$0xf]
  %v5459 = vld [vmem:[%s1 + $0x1dc] sm:$0xf]
  %v5460 = vld [vmem:[%s1 + $0x1e0] sm:$0xf]
  %v5461 = vld [vmem:[%s1 + $0x1e4] sm:$0xf]
  %v5462 = vld [vmem:[%s1 + $0x1e8] sm:$0xf]
  %v5463 = vld [vmem:[%s1 + $0x1ec] sm:$0xf]
  %v5464 = vld [vmem:[%s1 + $0x1f0] sm:$0xf]
  %v5465 = vld [vmem:[%s1 + $0x1f4] sm:$0xf]
  %v5466 = vld [vmem:[%s1 + $0x1f8] sm:$0xf]
  %v5467 = vld [vmem:[%s1 + $0x1fc] sm:$0xf]
  %v5468 = vld [vmem:[%s1 + $0x200] sm:$0xf]
  %v5469 = vld [vmem:[%s1 + $0x204] sm:$0xf]
  %v5470 = vld [vmem:[%s1 + $0x208] sm:$0xf]
  %v5471 = vld [vmem:[%s1 + $0x20c] sm:$0xf]
  %v5472 = vld [vmem:[%s1 + $0x210] sm:$0xf]
  %v5473 = vld [vmem:[%s1 + $0x214] sm:$0xf]
  %v5474 = vld [vmem:[%s1 + $0x218] sm:$0xf]
  %v5475 = vld [vmem:[%s1 + $0x21c] sm:$0xf]
  %v5476 = vld [vmem:[%s1 + $0x220] sm:$0xf]
  %v5477 = vld [vmem:[%s1 + $0x224] sm:$0xf]
  %v5478 = vld [vmem:[%s1 + $0x228] sm:$0xf]
  %v5479 = vld [vmem:[%s1 + $0x22c] sm:$0xf]
  %v5480 = vld [vmem:[%s1 + $0x230] sm:$0xf]
  %v5481 = vld [vmem:[%s1 + $0x234] sm:$0xf]
  %v5482 = vld [vmem:[%s1 + $0x238] sm:$0xf]
  %v5483 = vld [vmem:[%s1 + $0x23c] sm:$0xf]
  %v5484 = vld [vmem:[%s1 + $0x240] sm:$0xf]
  %v5485 = vld [vmem:[%s1 + $0x244] sm:$0xf]
  %v5486 = vld [vmem:[%s1 + $0x248] sm:$0xf]
  %v5487 = vld [vmem:[%s1 + $0x24c] sm:$0xf]
  %v5488 = vld [vmem:[%s1 + $0x250] sm:$0xf]
  %v5489 = vld [vmem:[%s1 + $0x254] sm:$0xf]
  %v5490 = vld [vmem:[%s1 + $0x258] sm:$0xf]
  %v5491 = vld [vmem:[%s1 + $0x25c] sm:$0xf]
  %v5492 = vld [vmem:[%s1 + $0x260] sm:$0xf]
  %v5493 = vld [vmem:[%s1 + $0x264] sm:$0xf]
  %v5494 = vld [vmem:[%s1 + $0x268] sm:$0xf]
  %v5495 = vld [vmem:[%s1 + $0x26c] sm:$0xf]
  %v5496 = vld [vmem:[%s1 + $0x270] sm:$0xf]
  %v5497 = vld [vmem:[%s1 + $0x274] sm:$0xf]
  %v5498 = vld [vmem:[%s1 + $0x278] sm:$0xf]
  %v5499 = vld [vmem:[%s1 + $0x27c] sm:$0xf]
  %v5500 = vld [vmem:[%s1 + $0x280] sm:$0xf]
  %v5501 = vld [vmem:[%s1 + $0x284] sm:$0xf]
  %v5502 = vld [vmem:[%s1 + $0x288] sm:$0xf]
  %v5503 = vld [vmem:[%s1 + $0x28c] sm:$0xf]
  %v5504 = vld [vmem:[%s1 + $0x290] sm:$0xf]
  %v5505 = vld [vmem:[%s1 + $0x294] sm:$0xf]
  %v5506 = vld [vmem:[%s1 + $0x298] sm:$0xf]
  %v5507 = vld [vmem:[%s1 + $0x29c] sm:$0xf]
  %v5508 = vld [vmem:[%s1 + $0x2a0] sm:$0xf]
  %v5509 = vld [vmem:[%s1 + $0x2a4] sm:$0xf]
  %v5510 = vld [vmem:[%s1 + $0x2a8] sm:$0xf]
  %v5511 = vld [vmem:[%s1 + $0x2ac] sm:$0xf]
  %v5512 = vld [vmem:[%s1 + $0x2b0] sm:$0xf]
  %v5513 = vld [vmem:[%s1 + $0x2b4] sm:$0xf]
  %v5514 = vld [vmem:[%s1 + $0x2b8] sm:$0xf]
  %v5515 = vld [vmem:[%s1 + $0x2bc] sm:$0xf]
  %v5516 = vld [vmem:[%s1 + $0x2c0] sm:$0xf]
  %v5517 = vld [vmem:[%s1 + $0x2c4] sm:$0xf]
  %v5518 = vld [vmem:[%s1 + $0x2c8] sm:$0xf]
  %v5519 = vld [vmem:[%s1 + $0x2cc] sm:$0xf]
  %v5520 = vld [vmem:[%s1 + $0x2d0] sm:$0xf]
  %v5521 = vld [vmem:[%s1 + $0x2d4] sm:$0xf]
  %v5522 = vld [vmem:[%s1 + $0x2d8] sm:$0xf]
  %v5523 = vld [vmem:[%s1 + $0x2dc] sm:$0xf]
  %v5524 = vld [vmem:[%s1 + $0x2e0] sm:$0xf]
  %v5525 = vld [vmem:[%s1 + $0x2e4] sm:$0xf]
  %v5526 = vld [vmem:[%s1 + $0x2e8] sm:$0xf]
  %v5527 = vld [vmem:[%s1 + $0x2ec] sm:$0xf]
  %v5528 = vld [vmem:[%s1 + $0x2f0] sm:$0xf]
  %v5529 = vld [vmem:[%s1 + $0x2f4] sm:$0xf]
  %v5530 = vld [vmem:[%s1 + $0x2f8] sm:$0xf]
  %v5531 = vld [vmem:[%s1 + $0x2fc] sm:$0xf]
  %v5532 = vld [vmem:[%s1 + $0x300] sm:$0xf]
  %v5533 = vld [vmem:[%s1 + $0x304] sm:$0xf]
  %v5534 = vld [vmem:[%s1 + $0x308] sm:$0xf]
  %v5535 = vld [vmem:[%s1 + $0x30c] sm:$0xf]
  %v5536 = vld [vmem:[%s1 + $0x310] sm:$0xf]
  %v5537 = vld [vmem:[%s1 + $0x314] sm:$0xf]
  %v5538 = vld [vmem:[%s1 + $0x318] sm:$0xf]
  %v5539 = vld [vmem:[%s1 + $0x31c] sm:$0xf]
  %v5540 = vld [vmem:[%s1 + $0x320] sm:$0xf]
  %v5541 = vld [vmem:[%s1 + $0x324] sm:$0xf]
  %v5542 = vld [vmem:[%s1 + $0x328] sm:$0xf]
  %v5543 = vld [vmem:[%s1 + $0x32c] sm:$0xf]
  %v5544 = vld [vmem:[%s1 + $0x330] sm:$0xf]
  %v5545 = vld [vmem:[%s1 + $0x334] sm:$0xf]
  %v5546 = vld [vmem:[%s1 + $0x338] sm:$0xf]
  %v5547 = vld [vmem:[%s1 + $0x33c] sm:$0xf]
  %v5548 = vld [vmem:[%s1 + $0x340] sm:$0xf]
  %v5549 = vld [vmem:[%s1 + $0x344] sm:$0xf]
  %v5550 = vld [vmem:[%s1 + $0x348] sm:$0xf]
  %v5551 = vld [vmem:[%s1 + $0x34c] sm:$0xf]
  %v5552 = vld [vmem:[%s1 + $0x350] sm:$0xf]
  %v5553 = vld [vmem:[%s1 + $0x354] sm:$0xf]
  %v5554 = vld [vmem:[%s1 + $0x358] sm:$0xf]
  %v5555 = vld [vmem:[%s1 + $0x35c] sm:$0xf]
  %v5556 = vld [vmem:[%s1 + $0x360] sm:$0xf]
  %v5557 = vld [vmem:[%s1 + $0x364] sm:$0xf]
  %v5558 = vld [vmem:[%s1 + $0x368] sm:$0xf]
  %v5559 = vld [vmem:[%s1 + $0x36c] sm:$0xf]
  %v5560 = vld [vmem:[%s1 + $0x370] sm:$0xf]
  %v5561 = vld [vmem:[%s1 + $0x374] sm:$0xf]
  %v5562 = vld [vmem:[%s1 + $0x378] sm:$0xf]
  %v5563 = vld [vmem:[%s1 + $0x37c] sm:$0xf]
  %v5564 = vld [vmem:[%s1 + $0x380] sm:$0xf]
  %v5565 = vld [vmem:[%s1 + $0x384] sm:$0xf]
  %v5566 = vld [vmem:[%s1 + $0x388] sm:$0xf]
  %v5567 = vld [vmem:[%s1 + $0x38c] sm:$0xf]
  %v5568 = vld [vmem:[%s1 + $0x390] sm:$0xf]
  %v5569 = vld [vmem:[%s1 + $0x394] sm:$0xf]
  %v5570 = vld [vmem:[%s1 + $0x398] sm:$0xf]
  %v5571 = vld [vmem:[%s1 + $0x39c] sm:$0xf]
  %v5572 = vld [vmem:[%s1 + $0x3a0] sm:$0xf]
  %v5573 = vld [vmem:[%s1 + $0x3a4] sm:$0xf]
  %v5574 = vld [vmem:[%s1 + $0x3a8] sm:$0xf]
  %v5575 = vld [vmem:[%s1 + $0x3ac] sm:$0xf]
  %v5576 = vld [vmem:[%s1 + $0x3b0] sm:$0xf]
  %v5577 = vld [vmem:[%s1 + $0x3b4] sm:$0xf]
  %v5578 = vld [vmem:[%s1 + $0x3b8] sm:$0xf]
  %v5579 = vld [vmem:[%s1 + $0x3bc] sm:$0xf]
  %v5580 = vld [vmem:[%s1 + $0x3c0] sm:$0xf]
  %v5581 = vld [vmem:[%s1 + $0x3c4] sm:$0xf]
  %v5582 = vld [vmem:[%s1 + $0x3c8] sm:$0xf]
  %v5583 = vld [vmem:[%s1 + $0x3cc] sm:$0xf]
  %v5584 = vld [vmem:[%s1 + $0x3d0] sm:$0xf]
  %v5585 = vld [vmem:[%s1 + $0x3d4] sm:$0xf]
  %v5586 = vld [vmem:[%s1 + $0x3d8] sm:$0xf]
  %v5587 = vld [vmem:[%s1 + $0x3dc] sm:$0xf]
  %v5588 = vld [vmem:[%s1 + $0x3e0] sm:$0xf]
  %v5589 = vld [vmem:[%s1 + $0x3e4] sm:$0xf]
  %v5590 = vld [vmem:[%s1 + $0x3e8] sm:$0xf]
  %v5591 = vld [vmem:[%s1 + $0x3ec] sm:$0xf]
  %v5592 = vld [vmem:[%s1 + $0x3f0] sm:$0xf]
  %v5593 = vld [vmem:[%s1 + $0x3f4] sm:$0xf]
  %v5594 = vld [vmem:[%s1 + $0x3f8] sm:$0xf]
  %v5595 = vld [vmem:[%s1 + $0x3fc] sm:$0xf]
  %v5604 = vunpack.c.l.b16 %v5332
  %v5605 = vunpack.c.h.b16 %v5332
  %v5606 = vunpack.c.l.b16 %v5333
  %v5607 = vunpack.c.h.b16 %v5333
  %v5608 = vunpack.c.l.b16 %v5334
  %v5609 = vunpack.c.h.b16 %v5334
  %v5610 = vunpack.c.l.b16 %v5335
  %v5611 = vunpack.c.h.b16 %v5335
  %v5612 = vunpack.c.l.b16 %v5336
  %v5613 = vunpack.c.h.b16 %v5336
  %v5614 = vunpack.c.l.b16 %v5337
  %v5615 = vunpack.c.h.b16 %v5337
  %v5616 = vunpack.c.l.b16 %v5338
  %v5617 = vunpack.c.h.b16 %v5338
  %v5618 = vunpack.c.l.b16 %v5339
  %v5619 = vunpack.c.h.b16 %v5339
  %v5620 = vpack.c.b16 %v5604, %v5604
  %v5621 = vpack.c.b16 %v5605, %v5605
  %v5622 = vpack.c.b16 %v5606, %v5606
  %v5623 = vpack.c.b16 %v5607, %v5607
  %v5624 = vpack.c.b16 %v5608, %v5608
  %v5625 = vpack.c.b16 %v5609, %v5609
  %v5626 = vpack.c.b16 %v5610, %v5610
  %v5627 = vpack.c.b16 %v5611, %v5611
  %v5628 = vpack.c.b16 %v5612, %v5612
  %v5629 = vpack.c.b16 %v5613, %v5613
  %v5630 = vpack.c.b16 %v5614, %v5614
  %v5631 = vpack.c.b16 %v5615, %v5615
  %v5632 = vpack.c.b16 %v5616, %v5616
  %v5633 = vpack.c.b16 %v5617, %v5617
  %v5634 = vpack.c.b16 %v5618, %v5618
  %v5635 = vpack.c.b16 %v5619, %v5619
  %v5908 = vunpack.c.l.b16 %v5340
  %v5909 = vunpack.c.l.b16 %v5341
  %v5910 = vunpack.c.l.b16 %v5342
  %v5911 = vunpack.c.l.b16 %v5343
  %v5912 = vunpack.c.l.b16 %v5344
  %v5913 = vunpack.c.l.b16 %v5345
  %v5914 = vunpack.c.l.b16 %v5346
  %v5915 = vunpack.c.l.b16 %v5347
  %v5916 = vunpack.c.l.b16 %v5348
  %v5917 = vunpack.c.l.b16 %v5349
  %v5918 = vunpack.c.l.b16 %v5350
  %v5919 = vunpack.c.l.b16 %v5351
  %v5920 = vunpack.c.l.b16 %v5352
  %v5921 = vunpack.c.l.b16 %v5353
  %v5922 = vunpack.c.l.b16 %v5354
  %v5923 = vunpack.c.l.b16 %v5355
  %v5924 = vunpack.c.l.b16 %v5356
  %v5925 = vunpack.c.l.b16 %v5357
  %v5926 = vunpack.c.l.b16 %v5358
  %v5927 = vunpack.c.l.b16 %v5359
  %v5928 = vunpack.c.l.b16 %v5360
  %v5929 = vunpack.c.l.b16 %v5361
  %v5930 = vunpack.c.l.b16 %v5362
  %v5931 = vunpack.c.l.b16 %v5363
  %v5932 = vunpack.c.l.b16 %v5364
  %v5933 = vunpack.c.l.b16 %v5365
  %v5934 = vunpack.c.l.b16 %v5366
  %v5935 = vunpack.c.l.b16 %v5367
  %v5936 = vunpack.c.l.b16 %v5368
  %v5937 = vunpack.c.l.b16 %v5369
  %v5938 = vunpack.c.l.b16 %v5370
  %v5939 = vunpack.c.l.b16 %v5371
  %v5940 = vunpack.c.l.b16 %v5372
  %v5941 = vunpack.c.l.b16 %v5373
  %v5942 = vunpack.c.l.b16 %v5374
  %v5943 = vunpack.c.l.b16 %v5375
  %v5944 = vunpack.c.l.b16 %v5376
  %v5945 = vunpack.c.l.b16 %v5377
  %v5946 = vunpack.c.l.b16 %v5378
  %v5947 = vunpack.c.l.b16 %v5379
  %v5948 = vunpack.c.l.b16 %v5380
  %v5949 = vunpack.c.l.b16 %v5381
  %v5950 = vunpack.c.l.b16 %v5382
  %v5951 = vunpack.c.l.b16 %v5383
  %v5952 = vunpack.c.l.b16 %v5384
  %v5953 = vunpack.c.l.b16 %v5385
  %v5954 = vunpack.c.l.b16 %v5386
  %v5955 = vunpack.c.l.b16 %v5387
  %v5956 = vunpack.c.l.b16 %v5388
  %v5957 = vunpack.c.l.b16 %v5389
  %v5958 = vunpack.c.l.b16 %v5390
  %v5959 = vunpack.c.l.b16 %v5391
  %v5960 = vunpack.c.l.b16 %v5392
  %v5961 = vunpack.c.l.b16 %v5393
  %v5962 = vunpack.c.l.b16 %v5394
  %v5963 = vunpack.c.l.b16 %v5395
  %v5964 = vunpack.c.l.b16 %v5396
  %v5965 = vunpack.c.l.b16 %v5397
  %v5966 = vunpack.c.l.b16 %v5398
  %v5967 = vunpack.c.l.b16 %v5399
  %v5968 = vunpack.c.l.b16 %v5400
  %v5969 = vunpack.c.l.b16 %v5401
  %v5970 = vunpack.c.l.b16 %v5402
  %v5971 = vunpack.c.l.b16 %v5403
  %v5972 = vunpack.c.l.b16 %v5404
  %v5973 = vunpack.c.l.b16 %v5405
  %v5974 = vunpack.c.l.b16 %v5406
  %v5975 = vunpack.c.l.b16 %v5407
  %v5976 = vunpack.c.l.b16 %v5408
  %v5977 = vunpack.c.l.b16 %v5409
  %v5978 = vunpack.c.l.b16 %v5410
  %v5979 = vunpack.c.l.b16 %v5411
  %v5980 = vunpack.c.l.b16 %v5412
  %v5981 = vunpack.c.l.b16 %v5413
  %v5982 = vunpack.c.l.b16 %v5414
  %v5983 = vunpack.c.l.b16 %v5415
  %v5984 = vunpack.c.l.b16 %v5416
  %v5985 = vunpack.c.l.b16 %v5417
  %v5986 = vunpack.c.l.b16 %v5418
  %v5987 = vunpack.c.l.b16 %v5419
  %v5988 = vunpack.c.l.b16 %v5420
  %v5989 = vunpack.c.l.b16 %v5421
  %v5990 = vunpack.c.l.b16 %v5422
  %v5991 = vunpack.c.l.b16 %v5423
  %v5992 = vunpack.c.l.b16 %v5424
  %v5993 = vunpack.c.l.b16 %v5425
  %v5994 = vunpack.c.l.b16 %v5426
  %v5995 = vunpack.c.l.b16 %v5427
  %v5996 = vunpack.c.l.b16 %v5428
  %v5997 = vunpack.c.l.b16 %v5429
  %v5998 = vunpack.c.l.b16 %v5430
  %v5999 = vunpack.c.l.b16 %v5431
  %v6000 = vunpack.c.l.b16 %v5432
  %v6001 = vunpack.c.l.b16 %v5433
  %v6002 = vunpack.c.l.b16 %v5434
  %v6003 = vunpack.c.l.b16 %v5435
  %v6004 = vunpack.c.l.b16 %v5436
  %v6005 = vunpack.c.l.b16 %v5437
  %v6006 = vunpack.c.l.b16 %v5438
  %v6007 = vunpack.c.l.b16 %v5439
  %v6008 = vunpack.c.l.b16 %v5440
  %v6009 = vunpack.c.l.b16 %v5441
  %v6010 = vunpack.c.l.b16 %v5442
  %v6011 = vunpack.c.l.b16 %v5443
  %v6012 = vunpack.c.l.b16 %v5444
  %v6013 = vunpack.c.l.b16 %v5445
  %v6014 = vunpack.c.l.b16 %v5446
  %v6015 = vunpack.c.l.b16 %v5447
  %v6016 = vunpack.c.l.b16 %v5448
  %v6017 = vunpack.c.l.b16 %v5449
  %v6018 = vunpack.c.l.b16 %v5450
  %v6019 = vunpack.c.l.b16 %v5451
  %v6020 = vunpack.c.l.b16 %v5452
  %v6021 = vunpack.c.l.b16 %v5453
  %v6022 = vunpack.c.l.b16 %v5454
  %v6023 = vunpack.c.l.b16 %v5455
  %v6024 = vunpack.c.l.b16 %v5456
  %v6025 = vunpack.c.l.b16 %v5457
  %v6026 = vunpack.c.l.b16 %v5458
  %v6027 = vunpack.c.l.b16 %v5459
  %v6028 = vunpack.c.l.b16 %v5460
  %v6029 = vunpack.c.l.b16 %v5461
  %v6030 = vunpack.c.l.b16 %v5462
  %v6031 = vunpack.c.l.b16 %v5463
  %v6032 = vunpack.c.l.b16 %v5464
  %v6033 = vunpack.c.l.b16 %v5465
  %v6034 = vunpack.c.l.b16 %v5466
  %v6035 = vunpack.c.l.b16 %v5467
  %v6036 = vunpack.c.l.b16 %v5468
  %v6037 = vunpack.c.l.b16 %v5469
  %v6038 = vunpack.c.l.b16 %v5470
  %v6039 = vunpack.c.l.b16 %v5471
  %v6040 = vunpack.c.l.b16 %v5472
  %v6041 = vunpack.c.l.b16 %v5473
  %v6042 = vunpack.c.l.b16 %v5474
  %v6043 = vunpack.c.l.b16 %v5475
  %v6044 = vunpack.c.l.b16 %v5476
  %v6045 = vunpack.c.l.b16 %v5477
  %v6046 = vunpack.c.l.b16 %v5478
  %v6047 = vunpack.c.l.b16 %v5479
  %v6048 = vunpack.c.l.b16 %v5480
  %v6049 = vunpack.c.l.b16 %v5481
  %v6050 = vunpack.c.l.b16 %v5482
  %v6051 = vunpack.c.l.b16 %v5483
  %v6052 = vunpack.c.l.b16 %v5484
  %v6053 = vunpack.c.l.b16 %v5485
  %v6054 = vunpack.c.l.b16 %v5486
  %v6055 = vunpack.c.l.b16 %v5487
  %v6056 = vunpack.c.l.b16 %v5488
  %v6057 = vunpack.c.l.b16 %v5489
  %v6058 = vunpack.c.l.b16 %v5490
  %v6059 = vunpack.c.l.b16 %v5491
  %v6060 = vunpack.c.l.b16 %v5492
  %v6061 = vunpack.c.l.b16 %v5493
  %v6062 = vunpack.c.l.b16 %v5494
  %v6063 = vunpack.c.l.b16 %v5495
  %v6064 = vunpack.c.l.b16 %v5496
  %v6065 = vunpack.c.l.b16 %v5497
  %v6066 = vunpack.c.l.b16 %v5498
  %v6067 = vunpack.c.l.b16 %v5499
  %v6068 = vunpack.c.l.b16 %v5500
  %v6069 = vunpack.c.l.b16 %v5501
  %v6070 = vunpack.c.l.b16 %v5502
  %v6071 = vunpack.c.l.b16 %v5503
  %v6072 = vunpack.c.l.b16 %v5504
  %v6073 = vunpack.c.l.b16 %v5505
  %v6074 = vunpack.c.l.b16 %v5506
  %v6075 = vunpack.c.l.b16 %v5507
  %v6076 = vunpack.c.l.b16 %v5508
  %v6077 = vunpack.c.l.b16 %v5509
  %v6078 = vunpack.c.l.b16 %v5510
  %v6079 = vunpack.c.l.b16 %v5511
  %v6080 = vunpack.c.l.b16 %v5512
  %v6081 = vunpack.c.l.b16 %v5513
  %v6082 = vunpack.c.l.b16 %v5514
  %v6083 = vunpack.c.l.b16 %v5515
  %v6084 = vunpack.c.l.b16 %v5516
  %v6085 = vunpack.c.l.b16 %v5517
  %v6086 = vunpack.c.l.b16 %v5518
  %v6087 = vunpack.c.l.b16 %v5519
  %v6088 = vunpack.c.l.b16 %v5520
  %v6089 = vunpack.c.l.b16 %v5521
  %v6090 = vunpack.c.l.b16 %v5522
  %v6091 = vunpack.c.l.b16 %v5523
  %v6092 = vunpack.c.l.b16 %v5524
  %v6093 = vunpack.c.l.b16 %v5525
  %v6094 = vunpack.c.l.b16 %v5526
  %v6095 = vunpack.c.l.b16 %v5527
  %v6096 = vunpack.c.l.b16 %v5528
  %v6097 = vunpack.c.l.b16 %v5529
  %v6098 = vunpack.c.l.b16 %v5530
  %v6099 = vunpack.c.l.b16 %v5531
  %v6100 = vunpack.c.l.b16 %v5532
  %v6101 = vunpack.c.l.b16 %v5533
  %v6102 = vunpack.c.l.b16 %v5534
  %v6103 = vunpack.c.l.b16 %v5535
  %v6104 = vunpack.c.l.b16 %v5536
  %v6105 = vunpack.c.l.b16 %v5537
  %v6106 = vunpack.c.l.b16 %v5538
  %v6107 = vunpack.c.l.b16 %v5539
  %v6108 = vunpack.c.l.b16 %v5540
  %v6109 = vunpack.c.l.b16 %v5541
  %v6110 = vunpack.c.l.b16 %v5542
  %v6111 = vunpack.c.l.b16 %v5543
  %v6112 = vunpack.c.l.b16 %v5544
  %v6113 = vunpack.c.l.b16 %v5545
  %v6114 = vunpack.c.l.b16 %v5546
  %v6115 = vunpack.c.l.b16 %v5547
  %v6116 = vunpack.c.l.b16 %v5548
  %v6117 = vunpack.c.l.b16 %v5549
  %v6118 = vunpack.c.l.b16 %v5550
  %v6119 = vunpack.c.l.b16 %v5551
  %v6120 = vunpack.c.l.b16 %v5552
  %v6121 = vunpack.c.l.b16 %v5553
  %v6122 = vunpack.c.l.b16 %v5554
  %v6123 = vunpack.c.l.b16 %v5555
  %v6124 = vunpack.c.l.b16 %v5556
  %v6125 = vunpack.c.l.b16 %v5557
  %v6126 = vunpack.c.l.b16 %v5558
  %v6127 = vunpack.c.l.b16 %v5559
  %v6128 = vunpack.c.l.b16 %v5560
  %v6129 = vunpack.c.l.b16 %v5561
  %v6130 = vunpack.c.l.b16 %v5562
  %v6131 = vunpack.c.l.b16 %v5563
  %v6132 = vunpack.c.l.b16 %v5564
  %v6133 = vunpack.c.l.b16 %v5565
  %v6134 = vunpack.c.l.b16 %v5566
  %v6135 = vunpack.c.l.b16 %v5567
  %v6136 = vunpack.c.l.b16 %v5568
  %v6137 = vunpack.c.l.b16 %v5569
  %v6138 = vunpack.c.l.b16 %v5570
  %v6139 = vunpack.c.l.b16 %v5571
  %v6140 = vunpack.c.l.b16 %v5572
  %v6141 = vunpack.c.l.b16 %v5573
  %v6142 = vunpack.c.l.b16 %v5574
  %v6143 = vunpack.c.l.b16 %v5575
  %v6144 = vunpack.c.l.b16 %v5576
  %v6145 = vunpack.c.l.b16 %v5577
  %v6146 = vunpack.c.l.b16 %v5578
  %v6147 = vunpack.c.l.b16 %v5579
  %v6148 = vunpack.c.l.b16 %v5580
  %v6149 = vunpack.c.l.b16 %v5581
  %v6150 = vunpack.c.l.b16 %v5582
  %v6151 = vunpack.c.l.b16 %v5583
  %v6152 = vunpack.c.l.b16 %v5584
  %v6153 = vunpack.c.l.b16 %v5585
  %v6154 = vunpack.c.l.b16 %v5586
  %v6155 = vunpack.c.l.b16 %v5587
  %v6156 = vunpack.c.l.b16 %v5588
  %v6157 = vunpack.c.l.b16 %v5589
  %v6158 = vunpack.c.l.b16 %v5590
  %v6159 = vunpack.c.l.b16 %v5591
  %v6160 = vunpack.c.l.b16 %v5592
  %v6161 = vunpack.c.l.b16 %v5593
  %v6162 = vunpack.c.l.b16 %v5594
  %v6163 = vunpack.c.l.b16 %v5595
  %v6164 = vpack.c.b16 %v5909, %v5908
  %v6165 = vpack.c.b16 %v5911, %v5910
  %v6166 = vpack.c.b16 %v5913, %v5912
  %v6167 = vpack.c.b16 %v5915, %v5914
  %v6168 = vpack.c.b16 %v5917, %v5916
  %v6169 = vpack.c.b16 %v5919, %v5918
  %v6170 = vpack.c.b16 %v5921, %v5920
  %v6171 = vpack.c.b16 %v5923, %v5922
  %v6172 = vpack.c.b16 %v5925, %v5924
  %v6173 = vpack.c.b16 %v5927, %v5926
  %v6174 = vpack.c.b16 %v5929, %v5928
  %v6175 = vpack.c.b16 %v5931, %v5930
  %v6176 = vpack.c.b16 %v5933, %v5932
  %v6177 = vpack.c.b16 %v5935, %v5934
  %v6178 = vpack.c.b16 %v5937, %v5936
  %v6179 = vpack.c.b16 %v5939, %v5938
  %v6180 = vpack.c.b16 %v5941, %v5940
  %v6181 = vpack.c.b16 %v5943, %v5942
  %v6182 = vpack.c.b16 %v5945, %v5944
  %v6183 = vpack.c.b16 %v5947, %v5946
  %v6184 = vpack.c.b16 %v5949, %v5948
  %v6185 = vpack.c.b16 %v5951, %v5950
  %v6186 = vpack.c.b16 %v5953, %v5952
  %v6187 = vpack.c.b16 %v5955, %v5954
  %v6188 = vpack.c.b16 %v5957, %v5956
  %v6189 = vpack.c.b16 %v5959, %v5958
  %v6190 = vpack.c.b16 %v5961, %v5960
  %v6191 = vpack.c.b16 %v5963, %v5962
  %v6192 = vpack.c.b16 %v5965, %v5964
  %v6193 = vpack.c.b16 %v5967, %v5966
  %v6194 = vpack.c.b16 %v5969, %v5968
  %v6195 = vpack.c.b16 %v5971, %v5970
  %v6196 = vpack.c.b16 %v5973, %v5972
  %v6197 = vpack.c.b16 %v5975, %v5974
  %v6198 = vpack.c.b16 %v5977, %v5976
  %v6199 = vpack.c.b16 %v5979, %v5978
  %v6200 = vpack.c.b16 %v5981, %v5980
  %v6201 = vpack.c.b16 %v5983, %v5982
  %v6202 = vpack.c.b16 %v5985, %v5984
  %v6203 = vpack.c.b16 %v5987, %v5986
  %v6204 = vpack.c.b16 %v5989, %v5988
  %v6205 = vpack.c.b16 %v5991, %v5990
  %v6206 = vpack.c.b16 %v5993, %v5992
  %v6207 = vpack.c.b16 %v5995, %v5994
  %v6208 = vpack.c.b16 %v5997, %v5996
  %v6209 = vpack.c.b16 %v5999, %v5998
  %v6210 = vpack.c.b16 %v6001, %v6000
  %v6211 = vpack.c.b16 %v6003, %v6002
  %v6212 = vpack.c.b16 %v6005, %v6004
  %v6213 = vpack.c.b16 %v6007, %v6006
  %v6214 = vpack.c.b16 %v6009, %v6008
  %v6215 = vpack.c.b16 %v6011, %v6010
  %v6216 = vpack.c.b16 %v6013, %v6012
  %v6217 = vpack.c.b16 %v6015, %v6014
  %v6218 = vpack.c.b16 %v6017, %v6016
  %v6219 = vpack.c.b16 %v6019, %v6018
  %v6220 = vpack.c.b16 %v6021, %v6020
  %v6221 = vpack.c.b16 %v6023, %v6022
  %v6222 = vpack.c.b16 %v6025, %v6024
  %v6223 = vpack.c.b16 %v6027, %v6026
  %v6224 = vpack.c.b16 %v6029, %v6028
  %v6225 = vpack.c.b16 %v6031, %v6030
  %v6226 = vpack.c.b16 %v6033, %v6032
  %v6227 = vpack.c.b16 %v6035, %v6034
  %v6228 = vpack.c.b16 %v6037, %v6036
  %v6229 = vpack.c.b16 %v6039, %v6038
  %v6230 = vpack.c.b16 %v6041, %v6040
  %v6231 = vpack.c.b16 %v6043, %v6042
  %v6232 = vpack.c.b16 %v6045, %v6044
  %v6233 = vpack.c.b16 %v6047, %v6046
  %v6234 = vpack.c.b16 %v6049, %v6048
  %v6235 = vpack.c.b16 %v6051, %v6050
  %v6236 = vpack.c.b16 %v6053, %v6052
  %v6237 = vpack.c.b16 %v6055, %v6054
  %v6238 = vpack.c.b16 %v6057, %v6056
  %v6239 = vpack.c.b16 %v6059, %v6058
  %v6240 = vpack.c.b16 %v6061, %v6060
  %v6241 = vpack.c.b16 %v6063, %v6062
  %v6242 = vpack.c.b16 %v6065, %v6064
  %v6243 = vpack.c.b16 %v6067, %v6066
  %v6244 = vpack.c.b16 %v6069, %v6068
  %v6245 = vpack.c.b16 %v6071, %v6070
  %v6246 = vpack.c.b16 %v6073, %v6072
  %v6247 = vpack.c.b16 %v6075, %v6074
  %v6248 = vpack.c.b16 %v6077, %v6076
  %v6249 = vpack.c.b16 %v6079, %v6078
  %v6250 = vpack.c.b16 %v6081, %v6080
  %v6251 = vpack.c.b16 %v6083, %v6082
  %v6252 = vpack.c.b16 %v6085, %v6084
  %v6253 = vpack.c.b16 %v6087, %v6086
  %v6254 = vpack.c.b16 %v6089, %v6088
  %v6255 = vpack.c.b16 %v6091, %v6090
  %v6256 = vpack.c.b16 %v6093, %v6092
  %v6257 = vpack.c.b16 %v6095, %v6094
  %v6258 = vpack.c.b16 %v6097, %v6096
  %v6259 = vpack.c.b16 %v6099, %v6098
  %v6260 = vpack.c.b16 %v6101, %v6100
  %v6261 = vpack.c.b16 %v6103, %v6102
  %v6262 = vpack.c.b16 %v6105, %v6104
  %v6263 = vpack.c.b16 %v6107, %v6106
  %v6264 = vpack.c.b16 %v6109, %v6108
  %v6265 = vpack.c.b16 %v6111, %v6110
  %v6266 = vpack.c.b16 %v6113, %v6112
  %v6267 = vpack.c.b16 %v6115, %v6114
  %v6268 = vpack.c.b16 %v6117, %v6116
  %v6269 = vpack.c.b16 %v6119, %v6118
  %v6270 = vpack.c.b16 %v6121, %v6120
  %v6271 = vpack.c.b16 %v6123, %v6122
  %v6272 = vpack.c.b16 %v6125, %v6124
  %v6273 = vpack.c.b16 %v6127, %v6126
  %v6274 = vpack.c.b16 %v6129, %v6128
  %v6275 = vpack.c.b16 %v6131, %v6130
  %v6276 = vpack.c.b16 %v6133, %v6132
  %v6277 = vpack.c.b16 %v6135, %v6134
  %v6278 = vpack.c.b16 %v6137, %v6136
  %v6279 = vpack.c.b16 %v6139, %v6138
  %v6280 = vpack.c.b16 %v6141, %v6140
  %v6281 = vpack.c.b16 %v6143, %v6142
  %v6282 = vpack.c.b16 %v6145, %v6144
  %v6283 = vpack.c.b16 %v6147, %v6146
  %v6284 = vpack.c.b16 %v6149, %v6148
  %v6285 = vpack.c.b16 %v6151, %v6150
  %v6286 = vpack.c.b16 %v6153, %v6152
  %v6287 = vpack.c.b16 %v6155, %v6154
  %v6288 = vpack.c.b16 %v6157, %v6156
  %v6289 = vpack.c.b16 %v6159, %v6158
  %v6290 = vpack.c.b16 %v6161, %v6160
  %v6291 = vpack.c.b16 %v6163, %v6162
  %6420 = vmatpush.bf16.msra.mxu0 %v6171
  %6421 = vmatpush.bf16.msra.mxu0 %v6170
  %6422 = vmatpush.bf16.msra.mxu0 %v6169
  %6423 = vmatpush.bf16.msra.mxu0 %v6168
  %6424 = vmatpush.bf16.msra.mxu0 %v6167
  %6425 = vmatpush.bf16.msra.mxu0 %v6166
  %6426 = vmatpush.bf16.msra.mxu0 %v6165
  %6427 = vmatpush.bf16.msra.mxu0 %v6164
  %6428 = vmatmul.bf16.gmra.mxu0 %v5620
  %v6429 = vpop.f32.mrf.mxu0
  %v6430 = vadd.f32 0.0, %v6429
  %v6431 = vpop.f32.mrf.mxu0
  %6432 = vdwg.mxu0
  %6433 = vmatpush.bf16.msra.mxu0 %v6179
  %6434 = vmatpush.bf16.msra.mxu0 %v6178
  %6435 = vmatpush.bf16.msra.mxu0 %v6177
  %6436 = vmatpush.bf16.msra.mxu0 %v6176
  %6437 = vmatpush.bf16.msra.mxu0 %v6175
  %6438 = vmatpush.bf16.msra.mxu0 %v6174
  %6439 = vmatpush.bf16.msra.mxu0 %v6173
  %6440 = vmatpush.bf16.msra.mxu0 %v6172
  %6441 = vmatmul.bf16.gmra.mxu0 %v5621
  %v6442 = vpop.f32.mrf.mxu0
  %v6443 = vadd.f32 %v6430, %v6442
  %v6444 = vpop.f32.mrf.mxu0
  %6445 = vdwg.mxu0
  %6446 = vmatpush.bf16.msra.mxu0 %v6187
  %6447 = vmatpush.bf16.msra.mxu0 %v6186
  %6448 = vmatpush.bf16.msra.mxu0 %v6185
  %6449 = vmatpush.bf16.msra.mxu0 %v6184
  %6450 = vmatpush.bf16.msra.mxu0 %v6183
  %6451 = vmatpush.bf16.msra.mxu0 %v6182
  %6452 = vmatpush.bf16.msra.mxu0 %v6181
  %6453 = vmatpush.bf16.msra.mxu0 %v6180
  %6454 = vmatmul.bf16.gmra.mxu0 %v5622
  %v6455 = vpop.f32.mrf.mxu0
  %v6456 = vadd.f32 %v6443, %v6455
  %v6457 = vpop.f32.mrf.mxu0
  %6458 = vdwg.mxu0
  %6459 = vmatpush.bf16.msra.mxu0 %v6195
  %6460 = vmatpush.bf16.msra.mxu0 %v6194
  %6461 = vmatpush.bf16.msra.mxu0 %v6193
  %6462 = vmatpush.bf16.msra.mxu0 %v6192
  %6463 = vmatpush.bf16.msra.mxu0 %v6191
  %6464 = vmatpush.bf16.msra.mxu0 %v6190
  %6465 = vmatpush.bf16.msra.mxu0 %v6189
  %6466 = vmatpush.bf16.msra.mxu0 %v6188
  %6467 = vmatmul.bf16.gmra.mxu0 %v5623
  %v6468 = vpop.f32.mrf.mxu0
  %v6469 = vadd.f32 %v6456, %v6468
  %v6470 = vpop.f32.mrf.mxu0
  %6471 = vdwg.mxu0
  %6472 = vmatpush.bf16.msra.mxu0 %v6203
  %6473 = vmatpush.bf16.msra.mxu0 %v6202
  %6474 = vmatpush.bf16.msra.mxu0 %v6201
  %6475 = vmatpush.bf16.msra.mxu0 %v6200
  %6476 = vmatpush.bf16.msra.mxu0 %v6199
  %6477 = vmatpush.bf16.msra.mxu0 %v6198
  %6478 = vmatpush.bf16.msra.mxu0 %v6197
  %6479 = vmatpush.bf16.msra.mxu0 %v6196
  %6480 = vmatmul.bf16.gmra.mxu0 %v5624
  %v6481 = vpop.f32.mrf.mxu0
  %v6482 = vadd.f32 %v6469, %v6481
  %v6483 = vpop.f32.mrf.mxu0
  %6484 = vdwg.mxu0
  %6485 = vmatpush.bf16.msra.mxu0 %v6211
  %6486 = vmatpush.bf16.msra.mxu0 %v6210
  %6487 = vmatpush.bf16.msra.mxu0 %v6209
  %6488 = vmatpush.bf16.msra.mxu0 %v6208
  %6489 = vmatpush.bf16.msra.mxu0 %v6207
  %6490 = vmatpush.bf16.msra.mxu0 %v6206
  %6491 = vmatpush.bf16.msra.mxu0 %v6205
  %6492 = vmatpush.bf16.msra.mxu0 %v6204
  %6493 = vmatmul.bf16.gmra.mxu0 %v5625
  %v6494 = vpop.f32.mrf.mxu0
  %v6495 = vadd.f32 %v6482, %v6494
  %v6496 = vpop.f32.mrf.mxu0
  %6497 = vdwg.mxu0
  %6498 = vmatpush.bf16.msra.mxu0 %v6219
  %6499 = vmatpush.bf16.msra.mxu0 %v6218
  %6500 = vmatpush.bf16.msra.mxu0 %v6217
  %6501 = vmatpush.bf16.msra.mxu0 %v6216
  %6502 = vmatpush.bf16.msra.mxu0 %v6215
  %6503 = vmatpush.bf16.msra.mxu0 %v6214
  %6504 = vmatpush.bf16.msra.mxu0 %v6213
  %6505 = vmatpush.bf16.msra.mxu0 %v6212
  %6506 = vmatmul.bf16.gmra.mxu0 %v5626
  %v6507 = vpop.f32.mrf.mxu0
  %v6508 = vadd.f32 %v6495, %v6507
  %v6509 = vpop.f32.mrf.mxu0
  %6510 = vdwg.mxu0
  %6511 = vmatpush.bf16.msra.mxu0 %v6227
  %6512 = vmatpush.bf16.msra.mxu0 %v6226
  %6513 = vmatpush.bf16.msra.mxu0 %v6225
  %6514 = vmatpush.bf16.msra.mxu0 %v6224
  %6515 = vmatpush.bf16.msra.mxu0 %v6223
  %6516 = vmatpush.bf16.msra.mxu0 %v6222
  %6517 = vmatpush.bf16.msra.mxu0 %v6221
  %6518 = vmatpush.bf16.msra.mxu0 %v6220
  %6519 = vmatmul.bf16.gmra.mxu0 %v5627
  %v6520 = vpop.f32.mrf.mxu0
  %v6521 = vadd.f32 %v6508, %v6520
  %v6522 = vpop.f32.mrf.mxu0
  %6523 = vdwg.mxu0
  %6524 = vmatpush.bf16.msra.mxu0 %v6235
  %6525 = vmatpush.bf16.msra.mxu0 %v6234
  %6526 = vmatpush.bf16.msra.mxu0 %v6233
  %6527 = vmatpush.bf16.msra.mxu0 %v6232
  %6528 = vmatpush.bf16.msra.mxu0 %v6231
  %6529 = vmatpush.bf16.msra.mxu0 %v6230
  %6530 = vmatpush.bf16.msra.mxu0 %v6229
  %6531 = vmatpush.bf16.msra.mxu0 %v6228
  %6532 = vmatmul.bf16.gmra.mxu0 %v5628
  %v6533 = vpop.f32.mrf.mxu0
  %v6534 = vadd.f32 %v6521, %v6533
  %v6535 = vpop.f32.mrf.mxu0
  %6536 = vdwg.mxu0
  %6537 = vmatpush.bf16.msra.mxu0 %v6243
  %6538 = vmatpush.bf16.msra.mxu0 %v6242
  %6539 = vmatpush.bf16.msra.mxu0 %v6241
  %6540 = vmatpush.bf16.msra.mxu0 %v6240
  %6541 = vmatpush.bf16.msra.mxu0 %v6239
  %6542 = vmatpush.bf16.msra.mxu0 %v6238
  %6543 = vmatpush.bf16.msra.mxu0 %v6237
  %6544 = vmatpush.bf16.msra.mxu0 %v6236
  %6545 = vmatmul.bf16.gmra.mxu0 %v5629
  %v6546 = vpop.f32.mrf.mxu0
  %v6547 = vadd.f32 %v6534, %v6546
  %v6548 = vpop.f32.mrf.mxu0
  %6549 = vdwg.mxu0
  %6550 = vmatpush.bf16.msra.mxu0 %v6251
  %6551 = vmatpush.bf16.msra.mxu0 %v6250
  %6552 = vmatpush.bf16.msra.mxu0 %v6249
  %6553 = vmatpush.bf16.msra.mxu0 %v6248
  %6554 = vmatpush.bf16.msra.mxu0 %v6247
  %6555 = vmatpush.bf16.msra.mxu0 %v6246
  %6556 = vmatpush.bf16.msra.mxu0 %v6245
  %6557 = vmatpush.bf16.msra.mxu0 %v6244
  %6558 = vmatmul.bf16.gmra.mxu0 %v5630
  %v6559 = vpop.f32.mrf.mxu0
  %v6560 = vadd.f32 %v6547, %v6559
  %v6561 = vpop.f32.mrf.mxu0
  %6562 = vdwg.mxu0
  %6563 = vmatpush.bf16.msra.mxu0 %v6259
  %6564 = vmatpush.bf16.msra.mxu0 %v6258
  %6565 = vmatpush.bf16.msra.mxu0 %v6257
  %6566 = vmatpush.bf16.msra.mxu0 %v6256
  %6567 = vmatpush.bf16.msra.mxu0 %v6255
  %6568 = vmatpush.bf16.msra.mxu0 %v6254
  %6569 = vmatpush.bf16.msra.mxu0 %v6253
  %6570 = vmatpush.bf16.msra.mxu0 %v6252
  %6571 = vmatmul.bf16.gmra.mxu0 %v5631
  %v6572 = vpop.f32.mrf.mxu0
  %v6573 = vadd.f32 %v6560, %v6572
  %v6574 = vpop.f32.mrf.mxu0
  %6575 = vdwg.mxu0
  %6576 = vmatpush.bf16.msra.mxu0 %v6267
  %6577 = vmatpush.bf16.msra.mxu0 %v6266
  %6578 = vmatpush.bf16.msra.mxu0 %v6265
  %6579 = vmatpush.bf16.msra.mxu0 %v6264
  %6580 = vmatpush.bf16.msra.mxu0 %v6263
  %6581 = vmatpush.bf16.msra.mxu0 %v6262
  %6582 = vmatpush.bf16.msra.mxu0 %v6261
  %6583 = vmatpush.bf16.msra.mxu0 %v6260
  %6584 = vmatmul.bf16.gmra.mxu0 %v5632
  %v6585 = vpop.f32.mrf.mxu0
  %v6586 = vadd.f32 %v6573, %v6585
  %v6587 = vpop.f32.mrf.mxu0
  %6588 = vdwg.mxu0
  %6589 = vmatpush.bf16.msra.mxu0 %v6275
  %6590 = vmatpush.bf16.msra.mxu0 %v6274
  %6591 = vmatpush.bf16.msra.mxu0 %v6273
  %6592 = vmatpush.bf16.msra.mxu0 %v6272
  %6593 = vmatpush.bf16.msra.mxu0 %v6271
  %6594 = vmatpush.bf16.msra.mxu0 %v6270
  %6595 = vmatpush.bf16.msra.mxu0 %v6269
  %6596 = vmatpush.bf16.msra.mxu0 %v6268
  %6597 = vmatmul.bf16.gmra.mxu0 %v5633
  %v6598 = vpop.f32.mrf.mxu0
  %v6599 = vadd.f32 %v6586, %v6598
  %v6600 = vpop.f32.mrf.mxu0
  %6601 = vdwg.mxu0
  %6602 = vmatpush.bf16.msra.mxu0 %v6283
  %6603 = vmatpush.bf16.msra.mxu0 %v6282
  %6604 = vmatpush.bf16.msra.mxu0 %v6281
  %6605 = vmatpush.bf16.msra.mxu0 %v6280
  %6606 = vmatpush.bf16.msra.mxu0 %v6279
  %6607 = vmatpush.bf16.msra.mxu0 %v6278
  %6608 = vmatpush.bf16.msra.mxu0 %v6277
  %6609 = vmatpush.bf16.msra.mxu0 %v6276
  %6610 = vmatmul.bf16.gmra.mxu0 %v5634
  %v6611 = vpop.f32.mrf.mxu0
  %v6612 = vadd.f32 %v6599, %v6611
  %v6613 = vpop.f32.mrf.mxu0
  %6614 = vdwg.mxu0
  %6615 = vmatpush.bf16.msra.mxu0 %v6291
  %6616 = vmatpush.bf16.msra.mxu0 %v6290
  %6617 = vmatpush.bf16.msra.mxu0 %v6289
  %6618 = vmatpush.bf16.msra.mxu0 %v6288
  %6619 = vmatpush.bf16.msra.mxu0 %v6287
  %6620 = vmatpush.bf16.msra.mxu0 %v6286
  %6621 = vmatpush.bf16.msra.mxu0 %v6285
  %6622 = vmatpush.bf16.msra.mxu0 %v6284
  %6623 = vmatmul.bf16.gmra.mxu0 %v5635
  %v6624 = vpop.f32.mrf.mxu0
  %v6625 = vadd.f32 %v6612, %v6624
  %v6626 = vpop.f32.mrf.mxu0
  %6627 = vdwg.mxu0
  %6628 = vst.msk [vmem:[#allocation2 + $0x8] sm:$0xf] %vm1330, %v6625
  %v6629 = vsel %vm1330, %v6625, 0.0
  %v6630 = vrot.slane %v6629, 4
  %v6631 = vadd.f32 %v6629, %v6630
  %v6632 = vrot.slane %v6631, 2
  %v6633 = vadd.f32 %v6631, %v6632
  %v6634 = vrot.slane %v6633, 1
  %v6635 = vadd.f32 %v6633, %v6634
  %v6636 = vadd.f32 %v5322, %v6635
  %v6637 = vmul.f32 %v6625, %v6625
  %v6638 = vsel %vm1330, %v6637, 0.0
  %v6639 = vrot.slane %v6638, 4
  %v6640 = vadd.f32 %v6638, %v6639
  %v6641 = vrot.slane %v6640, 2
  %v6642 = vadd.f32 %v6640, %v6641
  %v6643 = vrot.slane %v6642, 1
  %v6644 = vadd.f32 %v6642, %v6643
  %v6645 = vadd.f32 %v5331, %v6644
  %v6646 = vld [vmem:[%s0 + $0x80] sm:$0xcc]
  %v6647 = vld [vmem:[%s0 + $0x88] sm:$0xcc]
  %v6648 = vld [vmem:[%s0 + $0x90] sm:$0xcc]
  %v6649 = vld [vmem:[%s0 + $0x98] sm:$0xcc]
  %v6650 = vld [vmem:[%s0 + $0xa0] sm:$0xcc]
  %v6651 = vld [vmem:[%s0 + $0xa8] sm:$0xcc]
  %v6652 = vld [vmem:[%s0 + $0xb0] sm:$0xcc]
  %v6653 = vld [vmem:[%s0 + $0xb8] sm:$0xcc]
  %v6654 = vld [vmem:[%s1] sm:$0xf]
  %v6655 = vld [vmem:[%s1 + $0x4] sm:$0xf]
  %v6656 = vld [vmem:[%s1 + $0x8] sm:$0xf]
  %v6657 = vld [vmem:[%s1 + $0xc] sm:$0xf]
  %v6658 = vld [vmem:[%s1 + $0x10] sm:$0xf]
  %v6659 = vld [vmem:[%s1 + $0x14] sm:$0xf]
  %v6660 = vld [vmem:[%s1 + $0x18] sm:$0xf]
  %v6661 = vld [vmem:[%s1 + $0x1c] sm:$0xf]
  %v6662 = vld [vmem:[%s1 + $0x20] sm:$0xf]
  %v6663 = vld [vmem:[%s1 + $0x24] sm:$0xf]
  %v6664 = vld [vmem:[%s1 + $0x28] sm:$0xf]
  %v6665 = vld [vmem:[%s1 + $0x2c] sm:$0xf]
  %v6666 = vld [vmem:[%s1 + $0x30] sm:$0xf]
  %v6667 = vld [vmem:[%s1 + $0x34] sm:$0xf]
  %v6668 = vld [vmem:[%s1 + $0x38] sm:$0xf]
  %v6669 = vld [vmem:[%s1 + $0x3c] sm:$0xf]
  %v6670 = vld [vmem:[%s1 + $0x40] sm:$0xf]
  %v6671 = vld [vmem:[%s1 + $0x44] sm:$0xf]
  %v6672 = vld [vmem:[%s1 + $0x48] sm:$0xf]
  %v6673 = vld [vmem:[%s1 + $0x4c] sm:$0xf]
  %v6674 = vld [vmem:[%s1 + $0x50] sm:$0xf]
  %v6675 = vld [vmem:[%s1 + $0x54] sm:$0xf]
  %v6676 = vld [vmem:[%s1 + $0x58] sm:$0xf]
  %v6677 = vld [vmem:[%s1 + $0x5c] sm:$0xf]
  %v6678 = vld [vmem:[%s1 + $0x60] sm:$0xf]
  %v6679 = vld [vmem:[%s1 + $0x64] sm:$0xf]
  %v6680 = vld [vmem:[%s1 + $0x68] sm:$0xf]
  %v6681 = vld [vmem:[%s1 + $0x6c] sm:$0xf]
  %v6682 = vld [vmem:[%s1 + $0x70] sm:$0xf]
  %v6683 = vld [vmem:[%s1 + $0x74] sm:$0xf]
  %v6684 = vld [vmem:[%s1 + $0x78] sm:$0xf]
  %v6685 = vld [vmem:[%s1 + $0x7c] sm:$0xf]
  %v6686 = vld [vmem:[%s1 + $0x80] sm:$0xf]
  %v6687 = vld [vmem:[%s1 + $0x84] sm:$0xf]
  %v6688 = vld [vmem:[%s1 + $0x88] sm:$0xf]
  %v6689 = vld [vmem:[%s1 + $0x8c] sm:$0xf]
  %v6690 = vld [vmem:[%s1 + $0x90] sm:$0xf]
  %v6691 = vld [vmem:[%s1 + $0x94] sm:$0xf]
  %v6692 = vld [vmem:[%s1 + $0x98] sm:$0xf]
  %v6693 = vld [vmem:[%s1 + $0x9c] sm:$0xf]
  %v6694 = vld [vmem:[%s1 + $0xa0] sm:$0xf]
  %v6695 = vld [vmem:[%s1 + $0xa4] sm:$0xf]
  %v6696 = vld [vmem:[%s1 + $0xa8] sm:$0xf]
  %v6697 = vld [vmem:[%s1 + $0xac] sm:$0xf]
  %v6698 = vld [vmem:[%s1 + $0xb0] sm:$0xf]
  %v6699 = vld [vmem:[%s1 + $0xb4] sm:$0xf]
  %v6700 = vld [vmem:[%s1 + $0xb8] sm:$0xf]
  %v6701 = vld [vmem:[%s1 + $0xbc] sm:$0xf]
  %v6702 = vld [vmem:[%s1 + $0xc0] sm:$0xf]
  %v6703 = vld [vmem:[%s1 + $0xc4] sm:$0xf]
  %v6704 = vld [vmem:[%s1 + $0xc8] sm:$0xf]
  %v6705 = vld [vmem:[%s1 + $0xcc] sm:$0xf]
  %v6706 = vld [vmem:[%s1 + $0xd0] sm:$0xf]
  %v6707 = vld [vmem:[%s1 + $0xd4] sm:$0xf]
  %v6708 = vld [vmem:[%s1 + $0xd8] sm:$0xf]
  %v6709 = vld [vmem:[%s1 + $0xdc] sm:$0xf]
  %v6710 = vld [vmem:[%s1 + $0xe0] sm:$0xf]
  %v6711 = vld [vmem:[%s1 + $0xe4] sm:$0xf]
  %v6712 = vld [vmem:[%s1 + $0xe8] sm:$0xf]
  %v6713 = vld [vmem:[%s1 + $0xec] sm:$0xf]
  %v6714 = vld [vmem:[%s1 + $0xf0] sm:$0xf]
  %v6715 = vld [vmem:[%s1 + $0xf4] sm:$0xf]
  %v6716 = vld [vmem:[%s1 + $0xf8] sm:$0xf]
  %v6717 = vld [vmem:[%s1 + $0xfc] sm:$0xf]
  %v6718 = vld [vmem:[%s1 + $0x100] sm:$0xf]
  %v6719 = vld [vmem:[%s1 + $0x104] sm:$0xf]
  %v6720 = vld [vmem:[%s1 + $0x108] sm:$0xf]
  %v6721 = vld [vmem:[%s1 + $0x10c] sm:$0xf]
  %v6722 = vld [vmem:[%s1 + $0x110] sm:$0xf]
  %v6723 = vld [vmem:[%s1 + $0x114] sm:$0xf]
  %v6724 = vld [vmem:[%s1 + $0x118] sm:$0xf]
  %v6725 = vld [vmem:[%s1 + $0x11c] sm:$0xf]
  %v6726 = vld [vmem:[%s1 + $0x120] sm:$0xf]
  %v6727 = vld [vmem:[%s1 + $0x124] sm:$0xf]
  %v6728 = vld [vmem:[%s1 + $0x128] sm:$0xf]
  %v6729 = vld [vmem:[%s1 + $0x12c] sm:$0xf]
  %v6730 = vld [vmem:[%s1 + $0x130] sm:$0xf]
  %v6731 = vld [vmem:[%s1 + $0x134] sm:$0xf]
  %v6732 = vld [vmem:[%s1 + $0x138] sm:$0xf]
  %v6733 = vld [vmem:[%s1 + $0x13c] sm:$0xf]
  %v6734 = vld [vmem:[%s1 + $0x140] sm:$0xf]
  %v6735 = vld [vmem:[%s1 + $0x144] sm:$0xf]
  %v6736 = vld [vmem:[%s1 + $0x148] sm:$0xf]
  %v6737 = vld [vmem:[%s1 + $0x14c] sm:$0xf]
  %v6738 = vld [vmem:[%s1 + $0x150] sm:$0xf]
  %v6739 = vld [vmem:[%s1 + $0x154] sm:$0xf]
  %v6740 = vld [vmem:[%s1 + $0x158] sm:$0xf]
  %v6741 = vld [vmem:[%s1 + $0x15c] sm:$0xf]
  %v6742 = vld [vmem:[%s1 + $0x160] sm:$0xf]
  %v6743 = vld [vmem:[%s1 + $0x164] sm:$0xf]
  %v6744 = vld [vmem:[%s1 + $0x168] sm:$0xf]
  %v6745 = vld [vmem:[%s1 + $0x16c] sm:$0xf]
  %v6746 = vld [vmem:[%s1 + $0x170] sm:$0xf]
  %v6747 = vld [vmem:[%s1 + $0x174] sm:$0xf]
  %v6748 = vld [vmem:[%s1 + $0x178] sm:$0xf]
  %v6749 = vld [vmem:[%s1 + $0x17c] sm:$0xf]
  %v6750 = vld [vmem:[%s1 + $0x180] sm:$0xf]
  %v6751 = vld [vmem:[%s1 + $0x184] sm:$0xf]
  %v6752 = vld [vmem:[%s1 + $0x188] sm:$0xf]
  %v6753 = vld [vmem:[%s1 + $0x18c] sm:$0xf]
  %v6754 = vld [vmem:[%s1 + $0x190] sm:$0xf]
  %v6755 = vld [vmem:[%s1 + $0x194] sm:$0xf]
  %v6756 = vld [vmem:[%s1 + $0x198] sm:$0xf]
  %v6757 = vld [vmem:[%s1 + $0x19c] sm:$0xf]
  %v6758 = vld [vmem:[%s1 + $0x1a0] sm:$0xf]
  %v6759 = vld [vmem:[%s1 + $0x1a4] sm:$0xf]
  %v6760 = vld [vmem:[%s1 + $0x1a8] sm:$0xf]
  %v6761 = vld [vmem:[%s1 + $0x1ac] sm:$0xf]
  %v6762 = vld [vmem:[%s1 + $0x1b0] sm:$0xf]
  %v6763 = vld [vmem:[%s1 + $0x1b4] sm:$0xf]
  %v6764 = vld [vmem:[%s1 + $0x1b8] sm:$0xf]
  %v6765 = vld [vmem:[%s1 + $0x1bc] sm:$0xf]
  %v6766 = vld [vmem:[%s1 + $0x1c0] sm:$0xf]
  %v6767 = vld [vmem:[%s1 + $0x1c4] sm:$0xf]
  %v6768 = vld [vmem:[%s1 + $0x1c8] sm:$0xf]
  %v6769 = vld [vmem:[%s1 + $0x1cc] sm:$0xf]
  %v6770 = vld [vmem:[%s1 + $0x1d0] sm:$0xf]
  %v6771 = vld [vmem:[%s1 + $0x1d4] sm:$0xf]
  %v6772 = vld [vmem:[%s1 + $0x1d8] sm:$0xf]
  %v6773 = vld [vmem:[%s1 + $0x1dc] sm:$0xf]
  %v6774 = vld [vmem:[%s1 + $0x1e0] sm:$0xf]
  %v6775 = vld [vmem:[%s1 + $0x1e4] sm:$0xf]
  %v6776 = vld [vmem:[%s1 + $0x1e8] sm:$0xf]
  %v6777 = vld [vmem:[%s1 + $0x1ec] sm:$0xf]
  %v6778 = vld [vmem:[%s1 + $0x1f0] sm:$0xf]
  %v6779 = vld [vmem:[%s1 + $0x1f4] sm:$0xf]
  %v6780 = vld [vmem:[%s1 + $0x1f8] sm:$0xf]
  %v6781 = vld [vmem:[%s1 + $0x1fc] sm:$0xf]
  %v6782 = vld [vmem:[%s1 + $0x200] sm:$0xf]
  %v6783 = vld [vmem:[%s1 + $0x204] sm:$0xf]
  %v6784 = vld [vmem:[%s1 + $0x208] sm:$0xf]
  %v6785 = vld [vmem:[%s1 + $0x20c] sm:$0xf]
  %v6786 = vld [vmem:[%s1 + $0x210] sm:$0xf]
  %v6787 = vld [vmem:[%s1 + $0x214] sm:$0xf]
  %v6788 = vld [vmem:[%s1 + $0x218] sm:$0xf]
  %v6789 = vld [vmem:[%s1 + $0x21c] sm:$0xf]
  %v6790 = vld [vmem:[%s1 + $0x220] sm:$0xf]
  %v6791 = vld [vmem:[%s1 + $0x224] sm:$0xf]
  %v6792 = vld [vmem:[%s1 + $0x228] sm:$0xf]
  %v6793 = vld [vmem:[%s1 + $0x22c] sm:$0xf]
  %v6794 = vld [vmem:[%s1 + $0x230] sm:$0xf]
  %v6795 = vld [vmem:[%s1 + $0x234] sm:$0xf]
  %v6796 = vld [vmem:[%s1 + $0x238] sm:$0xf]
  %v6797 = vld [vmem:[%s1 + $0x23c] sm:$0xf]
  %v6798 = vld [vmem:[%s1 + $0x240] sm:$0xf]
  %v6799 = vld [vmem:[%s1 + $0x244] sm:$0xf]
  %v6800 = vld [vmem:[%s1 + $0x248] sm:$0xf]
  %v6801 = vld [vmem:[%s1 + $0x24c] sm:$0xf]
  %v6802 = vld [vmem:[%s1 + $0x250] sm:$0xf]
  %v6803 = vld [vmem:[%s1 + $0x254] sm:$0xf]
  %v6804 = vld [vmem:[%s1 + $0x258] sm:$0xf]
  %v6805 = vld [vmem:[%s1 + $0x25c] sm:$0xf]
  %v6806 = vld [vmem:[%s1 + $0x260] sm:$0xf]
  %v6807 = vld [vmem:[%s1 + $0x264] sm:$0xf]
  %v6808 = vld [vmem:[%s1 + $0x268] sm:$0xf]
  %v6809 = vld [vmem:[%s1 + $0x26c] sm:$0xf]
  %v6810 = vld [vmem:[%s1 + $0x270] sm:$0xf]
  %v6811 = vld [vmem:[%s1 + $0x274] sm:$0xf]
  %v6812 = vld [vmem:[%s1 + $0x278] sm:$0xf]
  %v6813 = vld [vmem:[%s1 + $0x27c] sm:$0xf]
  %v6814 = vld [vmem:[%s1 + $0x280] sm:$0xf]
  %v6815 = vld [vmem:[%s1 + $0x284] sm:$0xf]
  %v6816 = vld [vmem:[%s1 + $0x288] sm:$0xf]
  %v6817 = vld [vmem:[%s1 + $0x28c] sm:$0xf]
  %v6818 = vld [vmem:[%s1 + $0x290] sm:$0xf]
  %v6819 = vld [vmem:[%s1 + $0x294] sm:$0xf]
  %v6820 = vld [vmem:[%s1 + $0x298] sm:$0xf]
  %v6821 = vld [vmem:[%s1 + $0x29c] sm:$0xf]
  %v6822 = vld [vmem:[%s1 + $0x2a0] sm:$0xf]
  %v6823 = vld [vmem:[%s1 + $0x2a4] sm:$0xf]
  %v6824 = vld [vmem:[%s1 + $0x2a8] sm:$0xf]
  %v6825 = vld [vmem:[%s1 + $0x2ac] sm:$0xf]
  %v6826 = vld [vmem:[%s1 + $0x2b0] sm:$0xf]
  %v6827 = vld [vmem:[%s1 + $0x2b4] sm:$0xf]
  %v6828 = vld [vmem:[%s1 + $0x2b8] sm:$0xf]
  %v6829 = vld [vmem:[%s1 + $0x2bc] sm:$0xf]
  %v6830 = vld [vmem:[%s1 + $0x2c0] sm:$0xf]
  %v6831 = vld [vmem:[%s1 + $0x2c4] sm:$0xf]
  %v6832 = vld [vmem:[%s1 + $0x2c8] sm:$0xf]
  %v6833 = vld [vmem:[%s1 + $0x2cc] sm:$0xf]
  %v6834 = vld [vmem:[%s1 + $0x2d0] sm:$0xf]
  %v6835 = vld [vmem:[%s1 + $0x2d4] sm:$0xf]
  %v6836 = vld [vmem:[%s1 + $0x2d8] sm:$0xf]
  %v6837 = vld [vmem:[%s1 + $0x2dc] sm:$0xf]
  %v6838 = vld [vmem:[%s1 + $0x2e0] sm:$0xf]
  %v6839 = vld [vmem:[%s1 + $0x2e4] sm:$0xf]
  %v6840 = vld [vmem:[%s1 + $0x2e8] sm:$0xf]
  %v6841 = vld [vmem:[%s1 + $0x2ec] sm:$0xf]
  %v6842 = vld [vmem:[%s1 + $0x2f0] sm:$0xf]
  %v6843 = vld [vmem:[%s1 + $0x2f4] sm:$0xf]
  %v6844 = vld [vmem:[%s1 + $0x2f8] sm:$0xf]
  %v6845 = vld [vmem:[%s1 + $0x2fc] sm:$0xf]
  %v6846 = vld [vmem:[%s1 + $0x300] sm:$0xf]
  %v6847 = vld [vmem:[%s1 + $0x304] sm:$0xf]
  %v6848 = vld [vmem:[%s1 + $0x308] sm:$0xf]
  %v6849 = vld [vmem:[%s1 + $0x30c] sm:$0xf]
  %v6850 = vld [vmem:[%s1 + $0x310] sm:$0xf]
  %v6851 = vld [vmem:[%s1 + $0x314] sm:$0xf]
  %v6852 = vld [vmem:[%s1 + $0x318] sm:$0xf]
  %v6853 = vld [vmem:[%s1 + $0x31c] sm:$0xf]
  %v6854 = vld [vmem:[%s1 + $0x320] sm:$0xf]
  %v6855 = vld [vmem:[%s1 + $0x324] sm:$0xf]
  %v6856 = vld [vmem:[%s1 + $0x328] sm:$0xf]
  %v6857 = vld [vmem:[%s1 + $0x32c] sm:$0xf]
  %v6858 = vld [vmem:[%s1 + $0x330] sm:$0xf]
  %v6859 = vld [vmem:[%s1 + $0x334] sm:$0xf]
  %v6860 = vld [vmem:[%s1 + $0x338] sm:$0xf]
  %v6861 = vld [vmem:[%s1 + $0x33c] sm:$0xf]
  %v6862 = vld [vmem:[%s1 + $0x340] sm:$0xf]
  %v6863 = vld [vmem:[%s1 + $0x344] sm:$0xf]
  %v6864 = vld [vmem:[%s1 + $0x348] sm:$0xf]
  %v6865 = vld [vmem:[%s1 + $0x34c] sm:$0xf]
  %v6866 = vld [vmem:[%s1 + $0x350] sm:$0xf]
  %v6867 = vld [vmem:[%s1 + $0x354] sm:$0xf]
  %v6868 = vld [vmem:[%s1 + $0x358] sm:$0xf]
  %v6869 = vld [vmem:[%s1 + $0x35c] sm:$0xf]
  %v6870 = vld [vmem:[%s1 + $0x360] sm:$0xf]
  %v6871 = vld [vmem:[%s1 + $0x364] sm:$0xf]
  %v6872 = vld [vmem:[%s1 + $0x368] sm:$0xf]
  %v6873 = vld [vmem:[%s1 + $0x36c] sm:$0xf]
  %v6874 = vld [vmem:[%s1 + $0x370] sm:$0xf]
  %v6875 = vld [vmem:[%s1 + $0x374] sm:$0xf]
  %v6876 = vld [vmem:[%s1 + $0x378] sm:$0xf]
  %v6877 = vld [vmem:[%s1 + $0x37c] sm:$0xf]
  %v6878 = vld [vmem:[%s1 + $0x380] sm:$0xf]
  %v6879 = vld [vmem:[%s1 + $0x384] sm:$0xf]
  %v6880 = vld [vmem:[%s1 + $0x388] sm:$0xf]
  %v6881 = vld [vmem:[%s1 + $0x38c] sm:$0xf]
  %v6882 = vld [vmem:[%s1 + $0x390] sm:$0xf]
  %v6883 = vld [vmem:[%s1 + $0x394] sm:$0xf]
  %v6884 = vld [vmem:[%s1 + $0x398] sm:$0xf]
  %v6885 = vld [vmem:[%s1 + $0x39c] sm:$0xf]
  %v6886 = vld [vmem:[%s1 + $0x3a0] sm:$0xf]
  %v6887 = vld [vmem:[%s1 + $0x3a4] sm:$0xf]
  %v6888 = vld [vmem:[%s1 + $0x3a8] sm:$0xf]
  %v6889 = vld [vmem:[%s1 + $0x3ac] sm:$0xf]
  %v6890 = vld [vmem:[%s1 + $0x3b0] sm:$0xf]
  %v6891 = vld [vmem:[%s1 + $0x3b4] sm:$0xf]
  %v6892 = vld [vmem:[%s1 + $0x3b8] sm:$0xf]
  %v6893 = vld [vmem:[%s1 + $0x3bc] sm:$0xf]
  %v6894 = vld [vmem:[%s1 + $0x3c0] sm:$0xf]
  %v6895 = vld [vmem:[%s1 + $0x3c4] sm:$0xf]
  %v6896 = vld [vmem:[%s1 + $0x3c8] sm:$0xf]
  %v6897 = vld [vmem:[%s1 + $0x3cc] sm:$0xf]
  %v6898 = vld [vmem:[%s1 + $0x3d0] sm:$0xf]
  %v6899 = vld [vmem:[%s1 + $0x3d4] sm:$0xf]
  %v6900 = vld [vmem:[%s1 + $0x3d8] sm:$0xf]
  %v6901 = vld [vmem:[%s1 + $0x3dc] sm:$0xf]
  %v6902 = vld [vmem:[%s1 + $0x3e0] sm:$0xf]
  %v6903 = vld [vmem:[%s1 + $0x3e4] sm:$0xf]
  %v6904 = vld [vmem:[%s1 + $0x3e8] sm:$0xf]
  %v6905 = vld [vmem:[%s1 + $0x3ec] sm:$0xf]
  %v6906 = vld [vmem:[%s1 + $0x3f0] sm:$0xf]
  %v6907 = vld [vmem:[%s1 + $0x3f4] sm:$0xf]
  %v6908 = vld [vmem:[%s1 + $0x3f8] sm:$0xf]
  %v6909 = vld [vmem:[%s1 + $0x3fc] sm:$0xf]
  %v6918 = vunpack.c.l.b16 %v6646
  %v6919 = vunpack.c.h.b16 %v6646
  %v6920 = vunpack.c.l.b16 %v6647
  %v6921 = vunpack.c.h.b16 %v6647
  %v6922 = vunpack.c.l.b16 %v6648
  %v6923 = vunpack.c.h.b16 %v6648
  %v6924 = vunpack.c.l.b16 %v6649
  %v6925 = vunpack.c.h.b16 %v6649
  %v6926 = vunpack.c.l.b16 %v6650
  %v6927 = vunpack.c.h.b16 %v6650
  %v6928 = vunpack.c.l.b16 %v6651
  %v6929 = vunpack.c.h.b16 %v6651
  %v6930 = vunpack.c.l.b16 %v6652
  %v6931 = vunpack.c.h.b16 %v6652
  %v6932 = vunpack.c.l.b16 %v6653
  %v6933 = vunpack.c.h.b16 %v6653
  %v6934 = vpack.c.b16 %v6918, %v6918
  %v6935 = vpack.c.b16 %v6919, %v6919
  %v6936 = vpack.c.b16 %v6920, %v6920
  %v6937 = vpack.c.b16 %v6921, %v6921
  %v6938 = vpack.c.b16 %v6922, %v6922
  %v6939 = vpack.c.b16 %v6923, %v6923
  %v6940 = vpack.c.b16 %v6924, %v6924
  %v6941 = vpack.c.b16 %v6925, %v6925
  %v6942 = vpack.c.b16 %v6926, %v6926
  %v6943 = vpack.c.b16 %v6927, %v6927
  %v6944 = vpack.c.b16 %v6928, %v6928
  %v6945 = vpack.c.b16 %v6929, %v6929
  %v6946 = vpack.c.b16 %v6930, %v6930
  %v6947 = vpack.c.b16 %v6931, %v6931
  %v6948 = vpack.c.b16 %v6932, %v6932
  %v6949 = vpack.c.b16 %v6933, %v6933
  %v6950 = vrot.slane %v6934, 2
  %v6951 = vrot.slane %v6935, 2
  %v6952 = vrot.slane %v6936, 2
  %v6953 = vrot.slane %v6937, 2
  %v6954 = vrot.slane %v6938, 2
  %v6955 = vrot.slane %v6939, 2
  %v6956 = vrot.slane %v6940, 2
  %v6957 = vrot.slane %v6941, 2
  %v6958 = vrot.slane %v6942, 2
  %v6959 = vrot.slane %v6943, 2
  %v6960 = vrot.slane %v6944, 2
  %v6961 = vrot.slane %v6945, 2
  %v6962 = vrot.slane %v6946, 2
  %v6963 = vrot.slane %v6947, 2
  %v6964 = vrot.slane %v6948, 2
  %v6965 = vrot.slane %v6949, 2
  %v7238 = vunpack.c.l.b16 %v6654
  %v7239 = vunpack.c.l.b16 %v6655
  %v7240 = vunpack.c.l.b16 %v6656
  %v7241 = vunpack.c.l.b16 %v6657
  %v7242 = vunpack.c.l.b16 %v6658
  %v7243 = vunpack.c.l.b16 %v6659
  %v7244 = vunpack.c.l.b16 %v6660
  %v7245 = vunpack.c.l.b16 %v6661
  %v7246 = vunpack.c.l.b16 %v6662
  %v7247 = vunpack.c.l.b16 %v6663
  %v7248 = vunpack.c.l.b16 %v6664
  %v7249 = vunpack.c.l.b16 %v6665
  %v7250 = vunpack.c.l.b16 %v6666
  %v7251 = vunpack.c.l.b16 %v6667
  %v7252 = vunpack.c.l.b16 %v6668
  %v7253 = vunpack.c.l.b16 %v6669
  %v7254 = vunpack.c.l.b16 %v6670
  %v7255 = vunpack.c.l.b16 %v6671
  %v7256 = vunpack.c.l.b16 %v6672
  %v7257 = vunpack.c.l.b16 %v6673
  %v7258 = vunpack.c.l.b16 %v6674
  %v7259 = vunpack.c.l.b16 %v6675
  %v7260 = vunpack.c.l.b16 %v6676
  %v7261 = vunpack.c.l.b16 %v6677
  %v7262 = vunpack.c.l.b16 %v6678
  %v7263 = vunpack.c.l.b16 %v6679
  %v7264 = vunpack.c.l.b16 %v6680
  %v7265 = vunpack.c.l.b16 %v6681
  %v7266 = vunpack.c.l.b16 %v6682
  %v7267 = vunpack.c.l.b16 %v6683
  %v7268 = vunpack.c.l.b16 %v6684
  %v7269 = vunpack.c.l.b16 %v6685
  %v7270 = vunpack.c.l.b16 %v6686
  %v7271 = vunpack.c.l.b16 %v6687
  %v7272 = vunpack.c.l.b16 %v6688
  %v7273 = vunpack.c.l.b16 %v6689
  %v7274 = vunpack.c.l.b16 %v6690
  %v7275 = vunpack.c.l.b16 %v6691
  %v7276 = vunpack.c.l.b16 %v6692
  %v7277 = vunpack.c.l.b16 %v6693
  %v7278 = vunpack.c.l.b16 %v6694
  %v7279 = vunpack.c.l.b16 %v6695
  %v7280 = vunpack.c.l.b16 %v6696
  %v7281 = vunpack.c.l.b16 %v6697
  %v7282 = vunpack.c.l.b16 %v6698
  %v7283 = vunpack.c.l.b16 %v6699
  %v7284 = vunpack.c.l.b16 %v6700
  %v7285 = vunpack.c.l.b16 %v6701
  %v7286 = vunpack.c.l.b16 %v6702
  %v7287 = vunpack.c.l.b16 %v6703
  %v7288 = vunpack.c.l.b16 %v6704
  %v7289 = vunpack.c.l.b16 %v6705
  %v7290 = vunpack.c.l.b16 %v6706
  %v7291 = vunpack.c.l.b16 %v6707
  %v7292 = vunpack.c.l.b16 %v6708
  %v7293 = vunpack.c.l.b16 %v6709
  %v7294 = vunpack.c.l.b16 %v6710
  %v7295 = vunpack.c.l.b16 %v6711
  %v7296 = vunpack.c.l.b16 %v6712
  %v7297 = vunpack.c.l.b16 %v6713
  %v7298 = vunpack.c.l.b16 %v6714
  %v7299 = vunpack.c.l.b16 %v6715
  %v7300 = vunpack.c.l.b16 %v6716
  %v7301 = vunpack.c.l.b16 %v6717
  %v7302 = vunpack.c.l.b16 %v6718
  %v7303 = vunpack.c.l.b16 %v6719
  %v7304 = vunpack.c.l.b16 %v6720
  %v7305 = vunpack.c.l.b16 %v6721
  %v7306 = vunpack.c.l.b16 %v6722
  %v7307 = vunpack.c.l.b16 %v6723
  %v7308 = vunpack.c.l.b16 %v6724
  %v7309 = vunpack.c.l.b16 %v6725
  %v7310 = vunpack.c.l.b16 %v6726
  %v7311 = vunpack.c.l.b16 %v6727
  %v7312 = vunpack.c.l.b16 %v6728
  %v7313 = vunpack.c.l.b16 %v6729
  %v7314 = vunpack.c.l.b16 %v6730
  %v7315 = vunpack.c.l.b16 %v6731
  %v7316 = vunpack.c.l.b16 %v6732
  %v7317 = vunpack.c.l.b16 %v6733
  %v7318 = vunpack.c.l.b16 %v6734
  %v7319 = vunpack.c.l.b16 %v6735
  %v7320 = vunpack.c.l.b16 %v6736
  %v7321 = vunpack.c.l.b16 %v6737
  %v7322 = vunpack.c.l.b16 %v6738
  %v7323 = vunpack.c.l.b16 %v6739
  %v7324 = vunpack.c.l.b16 %v6740
  %v7325 = vunpack.c.l.b16 %v6741
  %v7326 = vunpack.c.l.b16 %v6742
  %v7327 = vunpack.c.l.b16 %v6743
  %v7328 = vunpack.c.l.b16 %v6744
  %v7329 = vunpack.c.l.b16 %v6745
  %v7330 = vunpack.c.l.b16 %v6746
  %v7331 = vunpack.c.l.b16 %v6747
  %v7332 = vunpack.c.l.b16 %v6748
  %v7333 = vunpack.c.l.b16 %v6749
  %v7334 = vunpack.c.l.b16 %v6750
  %v7335 = vunpack.c.l.b16 %v6751
  %v7336 = vunpack.c.l.b16 %v6752
  %v7337 = vunpack.c.l.b16 %v6753
  %v7338 = vunpack.c.l.b16 %v6754
  %v7339 = vunpack.c.l.b16 %v6755
  %v7340 = vunpack.c.l.b16 %v6756
  %v7341 = vunpack.c.l.b16 %v6757
  %v7342 = vunpack.c.l.b16 %v6758
  %v7343 = vunpack.c.l.b16 %v6759
  %v7344 = vunpack.c.l.b16 %v6760
  %v7345 = vunpack.c.l.b16 %v6761
  %v7346 = vunpack.c.l.b16 %v6762
  %v7347 = vunpack.c.l.b16 %v6763
  %v7348 = vunpack.c.l.b16 %v6764
  %v7349 = vunpack.c.l.b16 %v6765
  %v7350 = vunpack.c.l.b16 %v6766
  %v7351 = vunpack.c.l.b16 %v6767
  %v7352 = vunpack.c.l.b16 %v6768
  %v7353 = vunpack.c.l.b16 %v6769
  %v7354 = vunpack.c.l.b16 %v6770
  %v7355 = vunpack.c.l.b16 %v6771
  %v7356 = vunpack.c.l.b16 %v6772
  %v7357 = vunpack.c.l.b16 %v6773
  %v7358 = vunpack.c.l.b16 %v6774
  %v7359 = vunpack.c.l.b16 %v6775
  %v7360 = vunpack.c.l.b16 %v6776
  %v7361 = vunpack.c.l.b16 %v6777
  %v7362 = vunpack.c.l.b16 %v6778
  %v7363 = vunpack.c.l.b16 %v6779
  %v7364 = vunpack.c.l.b16 %v6780
  %v7365 = vunpack.c.l.b16 %v6781
  %v7366 = vunpack.c.l.b16 %v6782
  %v7367 = vunpack.c.l.b16 %v6783
  %v7368 = vunpack.c.l.b16 %v6784
  %v7369 = vunpack.c.l.b16 %v6785
  %v7370 = vunpack.c.l.b16 %v6786
  %v7371 = vunpack.c.l.b16 %v6787
  %v7372 = vunpack.c.l.b16 %v6788
  %v7373 = vunpack.c.l.b16 %v6789
  %v7374 = vunpack.c.l.b16 %v6790
  %v7375 = vunpack.c.l.b16 %v6791
  %v7376 = vunpack.c.l.b16 %v6792
  %v7377 = vunpack.c.l.b16 %v6793
  %v7378 = vunpack.c.l.b16 %v6794
  %v7379 = vunpack.c.l.b16 %v6795
  %v7380 = vunpack.c.l.b16 %v6796
  %v7381 = vunpack.c.l.b16 %v6797
  %v7382 = vunpack.c.l.b16 %v6798
  %v7383 = vunpack.c.l.b16 %v6799
  %v7384 = vunpack.c.l.b16 %v6800
  %v7385 = vunpack.c.l.b16 %v6801
  %v7386 = vunpack.c.l.b16 %v6802
  %v7387 = vunpack.c.l.b16 %v6803
  %v7388 = vunpack.c.l.b16 %v6804
  %v7389 = vunpack.c.l.b16 %v6805
  %v7390 = vunpack.c.l.b16 %v6806
  %v7391 = vunpack.c.l.b16 %v6807
  %v7392 = vunpack.c.l.b16 %v6808
  %v7393 = vunpack.c.l.b16 %v6809
  %v7394 = vunpack.c.l.b16 %v6810
  %v7395 = vunpack.c.l.b16 %v6811
  %v7396 = vunpack.c.l.b16 %v6812
  %v7397 = vunpack.c.l.b16 %v6813
  %v7398 = vunpack.c.l.b16 %v6814
  %v7399 = vunpack.c.l.b16 %v6815
  %v7400 = vunpack.c.l.b16 %v6816
  %v7401 = vunpack.c.l.b16 %v6817
  %v7402 = vunpack.c.l.b16 %v6818
  %v7403 = vunpack.c.l.b16 %v6819
  %v7404 = vunpack.c.l.b16 %v6820
  %v7405 = vunpack.c.l.b16 %v6821
  %v7406 = vunpack.c.l.b16 %v6822
  %v7407 = vunpack.c.l.b16 %v6823
  %v7408 = vunpack.c.l.b16 %v6824
  %v7409 = vunpack.c.l.b16 %v6825
  %v7410 = vunpack.c.l.b16 %v6826
  %v7411 = vunpack.c.l.b16 %v6827
  %v7412 = vunpack.c.l.b16 %v6828
  %v7413 = vunpack.c.l.b16 %v6829
  %v7414 = vunpack.c.l.b16 %v6830
  %v7415 = vunpack.c.l.b16 %v6831
  %v7416 = vunpack.c.l.b16 %v6832
  %v7417 = vunpack.c.l.b16 %v6833
  %v7418 = vunpack.c.l.b16 %v6834
  %v7419 = vunpack.c.l.b16 %v6835
  %v7420 = vunpack.c.l.b16 %v6836
  %v7421 = vunpack.c.l.b16 %v6837
  %v7422 = vunpack.c.l.b16 %v6838
  %v7423 = vunpack.c.l.b16 %v6839
  %v7424 = vunpack.c.l.b16 %v6840
  %v7425 = vunpack.c.l.b16 %v6841
  %v7426 = vunpack.c.l.b16 %v6842
  %v7427 = vunpack.c.l.b16 %v6843
  %v7428 = vunpack.c.l.b16 %v6844
  %v7429 = vunpack.c.l.b16 %v6845
  %v7430 = vunpack.c.l.b16 %v6846
  %v7431 = vunpack.c.l.b16 %v6847
  %v7432 = vunpack.c.l.b16 %v6848
  %v7433 = vunpack.c.l.b16 %v6849
  %v7434 = vunpack.c.l.b16 %v6850
  %v7435 = vunpack.c.l.b16 %v6851
  %v7436 = vunpack.c.l.b16 %v6852
  %v7437 = vunpack.c.l.b16 %v6853
  %v7438 = vunpack.c.l.b16 %v6854
  %v7439 = vunpack.c.l.b16 %v6855
  %v7440 = vunpack.c.l.b16 %v6856
  %v7441 = vunpack.c.l.b16 %v6857
  %v7442 = vunpack.c.l.b16 %v6858
  %v7443 = vunpack.c.l.b16 %v6859
  %v7444 = vunpack.c.l.b16 %v6860
  %v7445 = vunpack.c.l.b16 %v6861
  %v7446 = vunpack.c.l.b16 %v6862
  %v7447 = vunpack.c.l.b16 %v6863
  %v7448 = vunpack.c.l.b16 %v6864
  %v7449 = vunpack.c.l.b16 %v6865
  %v7450 = vunpack.c.l.b16 %v6866
  %v7451 = vunpack.c.l.b16 %v6867
  %v7452 = vunpack.c.l.b16 %v6868
  %v7453 = vunpack.c.l.b16 %v6869
  %v7454 = vunpack.c.l.b16 %v6870
  %v7455 = vunpack.c.l.b16 %v6871
  %v7456 = vunpack.c.l.b16 %v6872
  %v7457 = vunpack.c.l.b16 %v6873
  %v7458 = vunpack.c.l.b16 %v6874
  %v7459 = vunpack.c.l.b16 %v6875
  %v7460 = vunpack.c.l.b16 %v6876
  %v7461 = vunpack.c.l.b16 %v6877
  %v7462 = vunpack.c.l.b16 %v6878
  %v7463 = vunpack.c.l.b16 %v6879
  %v7464 = vunpack.c.l.b16 %v6880
  %v7465 = vunpack.c.l.b16 %v6881
  %v7466 = vunpack.c.l.b16 %v6882
  %v7467 = vunpack.c.l.b16 %v6883
  %v7468 = vunpack.c.l.b16 %v6884
  %v7469 = vunpack.c.l.b16 %v6885
  %v7470 = vunpack.c.l.b16 %v6886
  %v7471 = vunpack.c.l.b16 %v6887
  %v7472 = vunpack.c.l.b16 %v6888
  %v7473 = vunpack.c.l.b16 %v6889
  %v7474 = vunpack.c.l.b16 %v6890
  %v7475 = vunpack.c.l.b16 %v6891
  %v7476 = vunpack.c.l.b16 %v6892
  %v7477 = vunpack.c.l.b16 %v6893
  %v7478 = vunpack.c.l.b16 %v6894
  %v7479 = vunpack.c.l.b16 %v6895
  %v7480 = vunpack.c.l.b16 %v6896
  %v7481 = vunpack.c.l.b16 %v6897
  %v7482 = vunpack.c.l.b16 %v6898
  %v7483 = vunpack.c.l.b16 %v6899
  %v7484 = vunpack.c.l.b16 %v6900
  %v7485 = vunpack.c.l.b16 %v6901
  %v7486 = vunpack.c.l.b16 %v6902
  %v7487 = vunpack.c.l.b16 %v6903
  %v7488 = vunpack.c.l.b16 %v6904
  %v7489 = vunpack.c.l.b16 %v6905
  %v7490 = vunpack.c.l.b16 %v6906
  %v7491 = vunpack.c.l.b16 %v6907
  %v7492 = vunpack.c.l.b16 %v6908
  %v7493 = vunpack.c.l.b16 %v6909
  %v7494 = vpack.c.b16 %v7239, %v7238
  %v7495 = vpack.c.b16 %v7241, %v7240
  %v7496 = vpack.c.b16 %v7243, %v7242
  %v7497 = vpack.c.b16 %v7245, %v7244
  %v7498 = vpack.c.b16 %v7247, %v7246
  %v7499 = vpack.c.b16 %v7249, %v7248
  %v7500 = vpack.c.b16 %v7251, %v7250
  %v7501 = vpack.c.b16 %v7253, %v7252
  %v7502 = vpack.c.b16 %v7255, %v7254
  %v7503 = vpack.c.b16 %v7257, %v7256
  %v7504 = vpack.c.b16 %v7259, %v7258
  %v7505 = vpack.c.b16 %v7261, %v7260
  %v7506 = vpack.c.b16 %v7263, %v7262
  %v7507 = vpack.c.b16 %v7265, %v7264
  %v7508 = vpack.c.b16 %v7267, %v7266
  %v7509 = vpack.c.b16 %v7269, %v7268
  %v7510 = vpack.c.b16 %v7271, %v7270
  %v7511 = vpack.c.b16 %v7273, %v7272
  %v7512 = vpack.c.b16 %v7275, %v7274
  %v7513 = vpack.c.b16 %v7277, %v7276
  %v7514 = vpack.c.b16 %v7279, %v7278
  %v7515 = vpack.c.b16 %v7281, %v7280
  %v7516 = vpack.c.b16 %v7283, %v7282
  %v7517 = vpack.c.b16 %v7285, %v7284
  %v7518 = vpack.c.b16 %v7287, %v7286
  %v7519 = vpack.c.b16 %v7289, %v7288
  %v7520 = vpack.c.b16 %v7291, %v7290
  %v7521 = vpack.c.b16 %v7293, %v7292
  %v7522 = vpack.c.b16 %v7295, %v7294
  %v7523 = vpack.c.b16 %v7297, %v7296
  %v7524 = vpack.c.b16 %v7299, %v7298
  %v7525 = vpack.c.b16 %v7301, %v7300
  %v7526 = vpack.c.b16 %v7303, %v7302
  %v7527 = vpack.c.b16 %v7305, %v7304
  %v7528 = vpack.c.b16 %v7307, %v7306
  %v7529 = vpack.c.b16 %v7309, %v7308
  %v7530 = vpack.c.b16 %v7311, %v7310
  %v7531 = vpack.c.b16 %v7313, %v7312
  %v7532 = vpack.c.b16 %v7315, %v7314
  %v7533 = vpack.c.b16 %v7317, %v7316
  %v7534 = vpack.c.b16 %v7319, %v7318
  %v7535 = vpack.c.b16 %v7321, %v7320
  %v7536 = vpack.c.b16 %v7323, %v7322
  %v7537 = vpack.c.b16 %v7325, %v7324
  %v7538 = vpack.c.b16 %v7327, %v7326
  %v7539 = vpack.c.b16 %v7329, %v7328
  %v7540 = vpack.c.b16 %v7331, %v7330
  %v7541 = vpack.c.b16 %v7333, %v7332
  %v7542 = vpack.c.b16 %v7335, %v7334
  %v7543 = vpack.c.b16 %v7337, %v7336
  %v7544 = vpack.c.b16 %v7339, %v7338
  %v7545 = vpack.c.b16 %v7341, %v7340
  %v7546 = vpack.c.b16 %v7343, %v7342
  %v7547 = vpack.c.b16 %v7345, %v7344
  %v7548 = vpack.c.b16 %v7347, %v7346
  %v7549 = vpack.c.b16 %v7349, %v7348
  %v7550 = vpack.c.b16 %v7351, %v7350
  %v7551 = vpack.c.b16 %v7353, %v7352
  %v7552 = vpack.c.b16 %v7355, %v7354
  %v7553 = vpack.c.b16 %v7357, %v7356
  %v7554 = vpack.c.b16 %v7359, %v7358
  %v7555 = vpack.c.b16 %v7361, %v7360
  %v7556 = vpack.c.b16 %v7363, %v7362
  %v7557 = vpack.c.b16 %v7365, %v7364
  %v7558 = vpack.c.b16 %v7367, %v7366
  %v7559 = vpack.c.b16 %v7369, %v7368
  %v7560 = vpack.c.b16 %v7371, %v7370
  %v7561 = vpack.c.b16 %v7373, %v7372
  %v7562 = vpack.c.b16 %v7375, %v7374
  %v7563 = vpack.c.b16 %v7377, %v7376
  %v7564 = vpack.c.b16 %v7379, %v7378
  %v7565 = vpack.c.b16 %v7381, %v7380
  %v7566 = vpack.c.b16 %v7383, %v7382
  %v7567 = vpack.c.b16 %v7385, %v7384
  %v7568 = vpack.c.b16 %v7387, %v7386
  %v7569 = vpack.c.b16 %v7389, %v7388
  %v7570 = vpack.c.b16 %v7391, %v7390
  %v7571 = vpack.c.b16 %v7393, %v7392
  %v7572 = vpack.c.b16 %v7395, %v7394
  %v7573 = vpack.c.b16 %v7397, %v7396
  %v7574 = vpack.c.b16 %v7399, %v7398
  %v7575 = vpack.c.b16 %v7401, %v7400
  %v7576 = vpack.c.b16 %v7403, %v7402
  %v7577 = vpack.c.b16 %v7405, %v7404
  %v7578 = vpack.c.b16 %v7407, %v7406
  %v7579 = vpack.c.b16 %v7409, %v7408
  %v7580 = vpack.c.b16 %v7411, %v7410
  %v7581 = vpack.c.b16 %v7413, %v7412
  %v7582 = vpack.c.b16 %v7415, %v7414
  %v7583 = vpack.c.b16 %v7417, %v7416
  %v7584 = vpack.c.b16 %v7419, %v7418
  %v7585 = vpack.c.b16 %v7421, %v7420
  %v7586 = vpack.c.b16 %v7423, %v7422
  %v7587 = vpack.c.b16 %v7425, %v7424
  %v7588 = vpack.c.b16 %v7427, %v7426
  %v7589 = vpack.c.b16 %v7429, %v7428
  %v7590 = vpack.c.b16 %v7431, %v7430
  %v7591 = vpack.c.b16 %v7433, %v7432
  %v7592 = vpack.c.b16 %v7435, %v7434
  %v7593 = vpack.c.b16 %v7437, %v7436
  %v7594 = vpack.c.b16 %v7439, %v7438
  %v7595 = vpack.c.b16 %v7441, %v7440
  %v7596 = vpack.c.b16 %v7443, %v7442
  %v7597 = vpack.c.b16 %v7445, %v7444
  %v7598 = vpack.c.b16 %v7447, %v7446
  %v7599 = vpack.c.b16 %v7449, %v7448
  %v7600 = vpack.c.b16 %v7451, %v7450
  %v7601 = vpack.c.b16 %v7453, %v7452
  %v7602 = vpack.c.b16 %v7455, %v7454
  %v7603 = vpack.c.b16 %v7457, %v7456
  %v7604 = vpack.c.b16 %v7459, %v7458
  %v7605 = vpack.c.b16 %v7461, %v7460
  %v7606 = vpack.c.b16 %v7463, %v7462
  %v7607 = vpack.c.b16 %v7465, %v7464
  %v7608 = vpack.c.b16 %v7467, %v7466
  %v7609 = vpack.c.b16 %v7469, %v7468
  %v7610 = vpack.c.b16 %v7471, %v7470
  %v7611 = vpack.c.b16 %v7473, %v7472
  %v7612 = vpack.c.b16 %v7475, %v7474
  %v7613 = vpack.c.b16 %v7477, %v7476
  %v7614 = vpack.c.b16 %v7479, %v7478
  %v7615 = vpack.c.b16 %v7481, %v7480
  %v7616 = vpack.c.b16 %v7483, %v7482
  %v7617 = vpack.c.b16 %v7485, %v7484
  %v7618 = vpack.c.b16 %v7487, %v7486
  %v7619 = vpack.c.b16 %v7489, %v7488
  %v7620 = vpack.c.b16 %v7491, %v7490
  %v7621 = vpack.c.b16 %v7493, %v7492
  %7750 = vmatpush.bf16.msra.mxu0 %v7501
  %7751 = vmatpush.bf16.msra.mxu0 %v7500
  %7752 = vmatpush.bf16.msra.mxu0 %v7499
  %7753 = vmatpush.bf16.msra.mxu0 %v7498
  %7754 = vmatpush.bf16.msra.mxu0 %v7497
  %7755 = vmatpush.bf16.msra.mxu0 %v7496
  %7756 = vmatpush.bf16.msra.mxu0 %v7495
  %7757 = vmatpush.bf16.msra.mxu0 %v7494
  %7758 = vmatmul.bf16.gmra.mxu0 %v6950
  %v7759 = vpop.f32.mrf.mxu0
  %v7760 = vadd.f32 0.0, %v7759
  %v7761 = vpop.f32.mrf.mxu0
  %7762 = vdwg.mxu0
  %7763 = vmatpush.bf16.msra.mxu0 %v7509
  %7764 = vmatpush.bf16.msra.mxu0 %v7508
  %7765 = vmatpush.bf16.msra.mxu0 %v7507
  %7766 = vmatpush.bf16.msra.mxu0 %v7506
  %7767 = vmatpush.bf16.msra.mxu0 %v7505
  %7768 = vmatpush.bf16.msra.mxu0 %v7504
  %7769 = vmatpush.bf16.msra.mxu0 %v7503
  %7770 = vmatpush.bf16.msra.mxu0 %v7502
  %7771 = vmatmul.bf16.gmra.mxu0 %v6951
  %v7772 = vpop.f32.mrf.mxu0
  %v7773 = vadd.f32 %v7760, %v7772
  %v7774 = vpop.f32.mrf.mxu0
  %7775 = vdwg.mxu0
  %7776 = vmatpush.bf16.msra.mxu0 %v7517
  %7777 = vmatpush.bf16.msra.mxu0 %v7516
  %7778 = vmatpush.bf16.msra.mxu0 %v7515
  %7779 = vmatpush.bf16.msra.mxu0 %v7514
  %7780 = vmatpush.bf16.msra.mxu0 %v7513
  %7781 = vmatpush.bf16.msra.mxu0 %v7512
  %7782 = vmatpush.bf16.msra.mxu0 %v7511
  %7783 = vmatpush.bf16.msra.mxu0 %v7510
  %7784 = vmatmul.bf16.gmra.mxu0 %v6952
  %v7785 = vpop.f32.mrf.mxu0
  %v7786 = vadd.f32 %v7773, %v7785
  %v7787 = vpop.f32.mrf.mxu0
  %7788 = vdwg.mxu0
  %7789 = vmatpush.bf16.msra.mxu0 %v7525
  %7790 = vmatpush.bf16.msra.mxu0 %v7524
  %7791 = vmatpush.bf16.msra.mxu0 %v7523
  %7792 = vmatpush.bf16.msra.mxu0 %v7522
  %7793 = vmatpush.bf16.msra.mxu0 %v7521
  %7794 = vmatpush.bf16.msra.mxu0 %v7520
  %7795 = vmatpush.bf16.msra.mxu0 %v7519
  %7796 = vmatpush.bf16.msra.mxu0 %v7518
  %7797 = vmatmul.bf16.gmra.mxu0 %v6953
  %v7798 = vpop.f32.mrf.mxu0
  %v7799 = vadd.f32 %v7786, %v7798
  %v7800 = vpop.f32.mrf.mxu0
  %7801 = vdwg.mxu0
  %7802 = vmatpush.bf16.msra.mxu0 %v7533
  %7803 = vmatpush.bf16.msra.mxu0 %v7532
  %7804 = vmatpush.bf16.msra.mxu0 %v7531
  %7805 = vmatpush.bf16.msra.mxu0 %v7530
  %7806 = vmatpush.bf16.msra.mxu0 %v7529
  %7807 = vmatpush.bf16.msra.mxu0 %v7528
  %7808 = vmatpush.bf16.msra.mxu0 %v7527
  %7809 = vmatpush.bf16.msra.mxu0 %v7526
  %7810 = vmatmul.bf16.gmra.mxu0 %v6954
  %v7811 = vpop.f32.mrf.mxu0
  %v7812 = vadd.f32 %v7799, %v7811
  %v7813 = vpop.f32.mrf.mxu0
  %7814 = vdwg.mxu0
  %7815 = vmatpush.bf16.msra.mxu0 %v7541
  %7816 = vmatpush.bf16.msra.mxu0 %v7540
  %7817 = vmatpush.bf16.msra.mxu0 %v7539
  %7818 = vmatpush.bf16.msra.mxu0 %v7538
  %7819 = vmatpush.bf16.msra.mxu0 %v7537
  %7820 = vmatpush.bf16.msra.mxu0 %v7536
  %7821 = vmatpush.bf16.msra.mxu0 %v7535
  %7822 = vmatpush.bf16.msra.mxu0 %v7534
  %7823 = vmatmul.bf16.gmra.mxu0 %v6955
  %v7824 = vpop.f32.mrf.mxu0
  %v7825 = vadd.f32 %v7812, %v7824
  %v7826 = vpop.f32.mrf.mxu0
  %7827 = vdwg.mxu0
  %7828 = vmatpush.bf16.msra.mxu0 %v7549
  %7829 = vmatpush.bf16.msra.mxu0 %v7548
  %7830 = vmatpush.bf16.msra.mxu0 %v7547
  %7831 = vmatpush.bf16.msra.mxu0 %v7546
  %7832 = vmatpush.bf16.msra.mxu0 %v7545
  %7833 = vmatpush.bf16.msra.mxu0 %v7544
  %7834 = vmatpush.bf16.msra.mxu0 %v7543
  %7835 = vmatpush.bf16.msra.mxu0 %v7542
  %7836 = vmatmul.bf16.gmra.mxu0 %v6956
  %v7837 = vpop.f32.mrf.mxu0
  %v7838 = vadd.f32 %v7825, %v7837
  %v7839 = vpop.f32.mrf.mxu0
  %7840 = vdwg.mxu0
  %7841 = vmatpush.bf16.msra.mxu0 %v7557
  %7842 = vmatpush.bf16.msra.mxu0 %v7556
  %7843 = vmatpush.bf16.msra.mxu0 %v7555
  %7844 = vmatpush.bf16.msra.mxu0 %v7554
  %7845 = vmatpush.bf16.msra.mxu0 %v7553
  %7846 = vmatpush.bf16.msra.mxu0 %v7552
  %7847 = vmatpush.bf16.msra.mxu0 %v7551
  %7848 = vmatpush.bf16.msra.mxu0 %v7550
  %7849 = vmatmul.bf16.gmra.mxu0 %v6957
  %v7850 = vpop.f32.mrf.mxu0
  %v7851 = vadd.f32 %v7838, %v7850
  %v7852 = vpop.f32.mrf.mxu0
  %7853 = vdwg.mxu0
  %7854 = vmatpush.bf16.msra.mxu0 %v7565
  %7855 = vmatpush.bf16.msra.mxu0 %v7564
  %7856 = vmatpush.bf16.msra.mxu0 %v7563
  %7857 = vmatpush.bf16.msra.mxu0 %v7562
  %7858 = vmatpush.bf16.msra.mxu0 %v7561
  %7859 = vmatpush.bf16.msra.mxu0 %v7560
  %7860 = vmatpush.bf16.msra.mxu0 %v7559
  %7861 = vmatpush.bf16.msra.mxu0 %v7558
  %7862 = vmatmul.bf16.gmra.mxu0 %v6958
  %v7863 = vpop.f32.mrf.mxu0
  %v7864 = vadd.f32 %v7851, %v7863
  %v7865 = vpop.f32.mrf.mxu0
  %7866 = vdwg.mxu0
  %7867 = vmatpush.bf16.msra.mxu0 %v7573
  %7868 = vmatpush.bf16.msra.mxu0 %v7572
  %7869 = vmatpush.bf16.msra.mxu0 %v7571
  %7870 = vmatpush.bf16.msra.mxu0 %v7570
  %7871 = vmatpush.bf16.msra.mxu0 %v7569
  %7872 = vmatpush.bf16.msra.mxu0 %v7568
  %7873 = vmatpush.bf16.msra.mxu0 %v7567
  %7874 = vmatpush.bf16.msra.mxu0 %v7566
  %7875 = vmatmul.bf16.gmra.mxu0 %v6959
  %v7876 = vpop.f32.mrf.mxu0
  %v7877 = vadd.f32 %v7864, %v7876
  %v7878 = vpop.f32.mrf.mxu0
  %7879 = vdwg.mxu0
  %7880 = vmatpush.bf16.msra.mxu0 %v7581
  %7881 = vmatpush.bf16.msra.mxu0 %v7580
  %7882 = vmatpush.bf16.msra.mxu0 %v7579
  %7883 = vmatpush.bf16.msra.mxu0 %v7578
  %7884 = vmatpush.bf16.msra.mxu0 %v7577
  %7885 = vmatpush.bf16.msra.mxu0 %v7576
  %7886 = vmatpush.bf16.msra.mxu0 %v7575
  %7887 = vmatpush.bf16.msra.mxu0 %v7574
  %7888 = vmatmul.bf16.gmra.mxu0 %v6960
  %v7889 = vpop.f32.mrf.mxu0
  %v7890 = vadd.f32 %v7877, %v7889
  %v7891 = vpop.f32.mrf.mxu0
  %7892 = vdwg.mxu0
  %7893 = vmatpush.bf16.msra.mxu0 %v7589
  %7894 = vmatpush.bf16.msra.mxu0 %v7588
  %7895 = vmatpush.bf16.msra.mxu0 %v7587
  %7896 = vmatpush.bf16.msra.mxu0 %v7586
  %7897 = vmatpush.bf16.msra.mxu0 %v7585
  %7898 = vmatpush.bf16.msra.mxu0 %v7584
  %7899 = vmatpush.bf16.msra.mxu0 %v7583
  %7900 = vmatpush.bf16.msra.mxu0 %v7582
  %7901 = vmatmul.bf16.gmra.mxu0 %v6961
  %v7902 = vpop.f32.mrf.mxu0
  %v7903 = vadd.f32 %v7890, %v7902
  %v7904 = vpop.f32.mrf.mxu0
  %7905 = vdwg.mxu0
  %7906 = vmatpush.bf16.msra.mxu0 %v7597
  %7907 = vmatpush.bf16.msra.mxu0 %v7596
  %7908 = vmatpush.bf16.msra.mxu0 %v7595
  %7909 = vmatpush.bf16.msra.mxu0 %v7594
  %7910 = vmatpush.bf16.msra.mxu0 %v7593
  %7911 = vmatpush.bf16.msra.mxu0 %v7592
  %7912 = vmatpush.bf16.msra.mxu0 %v7591
  %7913 = vmatpush.bf16.msra.mxu0 %v7590
  %7914 = vmatmul.bf16.gmra.mxu0 %v6962
  %v7915 = vpop.f32.mrf.mxu0
  %v7916 = vadd.f32 %v7903, %v7915
  %v7917 = vpop.f32.mrf.mxu0
  %7918 = vdwg.mxu0
  %7919 = vmatpush.bf16.msra.mxu0 %v7605
  %7920 = vmatpush.bf16.msra.mxu0 %v7604
  %7921 = vmatpush.bf16.msra.mxu0 %v7603
  %7922 = vmatpush.bf16.msra.mxu0 %v7602
  %7923 = vmatpush.bf16.msra.mxu0 %v7601
  %7924 = vmatpush.bf16.msra.mxu0 %v7600
  %7925 = vmatpush.bf16.msra.mxu0 %v7599
  %7926 = vmatpush.bf16.msra.mxu0 %v7598
  %7927 = vmatmul.bf16.gmra.mxu0 %v6963
  %v7928 = vpop.f32.mrf.mxu0
  %v7929 = vadd.f32 %v7916, %v7928
  %v7930 = vpop.f32.mrf.mxu0
  %7931 = vdwg.mxu0
  %7932 = vmatpush.bf16.msra.mxu0 %v7613
  %7933 = vmatpush.bf16.msra.mxu0 %v7612
  %7934 = vmatpush.bf16.msra.mxu0 %v7611
  %7935 = vmatpush.bf16.msra.mxu0 %v7610
  %7936 = vmatpush.bf16.msra.mxu0 %v7609
  %7937 = vmatpush.bf16.msra.mxu0 %v7608
  %7938 = vmatpush.bf16.msra.mxu0 %v7607
  %7939 = vmatpush.bf16.msra.mxu0 %v7606
  %7940 = vmatmul.bf16.gmra.mxu0 %v6964
  %v7941 = vpop.f32.mrf.mxu0
  %v7942 = vadd.f32 %v7929, %v7941
  %v7943 = vpop.f32.mrf.mxu0
  %7944 = vdwg.mxu0
  %7945 = vmatpush.bf16.msra.mxu0 %v7621
  %7946 = vmatpush.bf16.msra.mxu0 %v7620
  %7947 = vmatpush.bf16.msra.mxu0 %v7619
  %7948 = vmatpush.bf16.msra.mxu0 %v7618
  %7949 = vmatpush.bf16.msra.mxu0 %v7617
  %7950 = vmatpush.bf16.msra.mxu0 %v7616
  %7951 = vmatpush.bf16.msra.mxu0 %v7615
  %7952 = vmatpush.bf16.msra.mxu0 %v7614
  %7953 = vmatmul.bf16.gmra.mxu0 %v6965
  %v7954 = vpop.f32.mrf.mxu0
  %v7955 = vadd.f32 %v7942, %v7954
  %v7956 = vpop.f32.mrf.mxu0
  %7957 = vdwg.mxu0
  %7959 = vrot.lane.b32.xlu0 %v7955, 64
  %v7960 = vpop.permute.xlu0 %7959
  %7962 = vst.msk [vmem:[#allocation2 + $0x8] sm:$0xf] %vm2665, %v7960
  %v7963 = vsel %vm1330, %v7955, 0.0
  %v7964 = vrot.slane %v7963, 4
  %v7965 = vadd.f32 %v7963, %v7964
  %v7966 = vrot.slane %v7965, 2
  %v7967 = vadd.f32 %v7965, %v7966
  %v7968 = vrot.slane %v7967, 1
  %v7969 = vadd.f32 %v7967, %v7968
  %v7970 = vadd.f32 %v6636, %v7969
  %v7971 = vmul.f32 %v7955, %v7955
  %v7972 = vsel %vm1330, %v7971, 0.0
  %v7973 = vrot.slane %v7972, 4
  %v7974 = vadd.f32 %v7972, %v7973
  %v7975 = vrot.slane %v7974, 2
  %v7976 = vadd.f32 %v7974, %v7975
  %v7977 = vrot.slane %v7976, 1
  %v7978 = vadd.f32 %v7976, %v7977
  %v7979 = vadd.f32 %v6645, %v7978
  %v7980 = vld [vmem:[%s0 + $0xc0] sm:$0x33]
  %v7981 = vld [vmem:[%s0 + $0xc8] sm:$0x33]
  %v7982 = vld [vmem:[%s0 + $0xd0] sm:$0x33]
  %v7983 = vld [vmem:[%s0 + $0xd8] sm:$0x33]
  %v7984 = vld [vmem:[%s0 + $0xe0] sm:$0x33]
  %v7985 = vld [vmem:[%s0 + $0xe8] sm:$0x33]
  %v7986 = vld [vmem:[%s0 + $0xf0] sm:$0x33]
  %v7987 = vld [vmem:[%s0 + $0xf8] sm:$0x33]
  %v7988 = vld [vmem:[%s1] sm:$0xf]
  %v7989 = vld [vmem:[%s1 + $0x4] sm:$0xf]
  %v7990 = vld [vmem:[%s1 + $0x8] sm:$0xf]
  %v7991 = vld [vmem:[%s1 + $0xc] sm:$0xf]
  %v7992 = vld [vmem:[%s1 + $0x10] sm:$0xf]
  %v7993 = vld [vmem:[%s1 + $0x14] sm:$0xf]
  %v7994 = vld [vmem:[%s1 + $0x18] sm:$0xf]
  %v7995 = vld [vmem:[%s1 + $0x1c] sm:$0xf]
  %v7996 = vld [vmem:[%s1 + $0x20] sm:$0xf]
  %v7997 = vld [vmem:[%s1 + $0x24] sm:$0xf]
  %v7998 = vld [vmem:[%s1 + $0x28] sm:$0xf]
  %v7999 = vld [vmem:[%s1 + $0x2c] sm:$0xf]
  %v8000 = vld [vmem:[%s1 + $0x30] sm:$0xf]
  %v8001 = vld [vmem:[%s1 + $0x34] sm:$0xf]
  %v8002 = vld [vmem:[%s1 + $0x38] sm:$0xf]
  %v8003 = vld [vmem:[%s1 + $0x3c] sm:$0xf]
  %v8004 = vld [vmem:[%s1 + $0x40] sm:$0xf]
  %v8005 = vld [vmem:[%s1 + $0x44] sm:$0xf]
  %v8006 = vld [vmem:[%s1 + $0x48] sm:$0xf]
  %v8007 = vld [vmem:[%s1 + $0x4c] sm:$0xf]
  %v8008 = vld [vmem:[%s1 + $0x50] sm:$0xf]
  %v8009 = vld [vmem:[%s1 + $0x54] sm:$0xf]
  %v8010 = vld [vmem:[%s1 + $0x58] sm:$0xf]
  %v8011 = vld [vmem:[%s1 + $0x5c] sm:$0xf]
  %v8012 = vld [vmem:[%s1 + $0x60] sm:$0xf]
  %v8013 = vld [vmem:[%s1 + $0x64] sm:$0xf]
  %v8014 = vld [vmem:[%s1 + $0x68] sm:$0xf]
  %v8015 = vld [vmem:[%s1 + $0x6c] sm:$0xf]
  %v8016 = vld [vmem:[%s1 + $0x70] sm:$0xf]
  %v8017 = vld [vmem:[%s1 + $0x74] sm:$0xf]
  %v8018 = vld [vmem:[%s1 + $0x78] sm:$0xf]
  %v8019 = vld [vmem:[%s1 + $0x7c] sm:$0xf]
  %v8020 = vld [vmem:[%s1 + $0x80] sm:$0xf]
  %v8021 = vld [vmem:[%s1 + $0x84] sm:$0xf]
  %v8022 = vld [vmem:[%s1 + $0x88] sm:$0xf]
  %v8023 = vld [vmem:[%s1 + $0x8c] sm:$0xf]
  %v8024 = vld [vmem:[%s1 + $0x90] sm:$0xf]
  %v8025 = vld [vmem:[%s1 + $0x94] sm:$0xf]
  %v8026 = vld [vmem:[%s1 + $0x98] sm:$0xf]
  %v8027 = vld [vmem:[%s1 + $0x9c] sm:$0xf]
  %v8028 = vld [vmem:[%s1 + $0xa0] sm:$0xf]
  %v8029 = vld [vmem:[%s1 + $0xa4] sm:$0xf]
  %v8030 = vld [vmem:[%s1 + $0xa8] sm:$0xf]
  %v8031 = vld [vmem:[%s1 + $0xac] sm:$0xf]
  %v8032 = vld [vmem:[%s1 + $0xb0] sm:$0xf]
  %v8033 = vld [vmem:[%s1 + $0xb4] sm:$0xf]
  %v8034 = vld [vmem:[%s1 + $0xb8] sm:$0xf]
  %v8035 = vld [vmem:[%s1 + $0xbc] sm:$0xf]
  %v8036 = vld [vmem:[%s1 + $0xc0] sm:$0xf]
  %v8037 = vld [vmem:[%s1 + $0xc4] sm:$0xf]
  %v8038 = vld [vmem:[%s1 + $0xc8] sm:$0xf]
  %v8039 = vld [vmem:[%s1 + $0xcc] sm:$0xf]
  %v8040 = vld [vmem:[%s1 + $0xd0] sm:$0xf]
  %v8041 = vld [vmem:[%s1 + $0xd4] sm:$0xf]
  %v8042 = vld [vmem:[%s1 + $0xd8] sm:$0xf]
  %v8043 = vld [vmem:[%s1 + $0xdc] sm:$0xf]
  %v8044 = vld [vmem:[%s1 + $0xe0] sm:$0xf]
  %v8045 = vld [vmem:[%s1 + $0xe4] sm:$0xf]
  %v8046 = vld [vmem:[%s1 + $0xe8] sm:$0xf]
  %v8047 = vld [vmem:[%s1 + $0xec] sm:$0xf]
  %v8048 = vld [vmem:[%s1 + $0xf0] sm:$0xf]
  %v8049 = vld [vmem:[%s1 + $0xf4] sm:$0xf]
  %v8050 = vld [vmem:[%s1 + $0xf8] sm:$0xf]
  %v8051 = vld [vmem:[%s1 + $0xfc] sm:$0xf]
  %v8052 = vld [vmem:[%s1 + $0x100] sm:$0xf]
  %v8053 = vld [vmem:[%s1 + $0x104] sm:$0xf]
  %v8054 = vld [vmem:[%s1 + $0x108] sm:$0xf]
  %v8055 = vld [vmem:[%s1 + $0x10c] sm:$0xf]
  %v8056 = vld [vmem:[%s1 + $0x110] sm:$0xf]
  %v8057 = vld [vmem:[%s1 + $0x114] sm:$0xf]
  %v8058 = vld [vmem:[%s1 + $0x118] sm:$0xf]
  %v8059 = vld [vmem:[%s1 + $0x11c] sm:$0xf]
  %v8060 = vld [vmem:[%s1 + $0x120] sm:$0xf]
  %v8061 = vld [vmem:[%s1 + $0x124] sm:$0xf]
  %v8062 = vld [vmem:[%s1 + $0x128] sm:$0xf]
  %v8063 = vld [vmem:[%s1 + $0x12c] sm:$0xf]
  %v8064 = vld [vmem:[%s1 + $0x130] sm:$0xf]
  %v8065 = vld [vmem:[%s1 + $0x134] sm:$0xf]
  %v8066 = vld [vmem:[%s1 + $0x138] sm:$0xf]
  %v8067 = vld [vmem:[%s1 + $0x13c] sm:$0xf]
  %v8068 = vld [vmem:[%s1 + $0x140] sm:$0xf]
  %v8069 = vld [vmem:[%s1 + $0x144] sm:$0xf]
  %v8070 = vld [vmem:[%s1 + $0x148] sm:$0xf]
  %v8071 = vld [vmem:[%s1 + $0x14c] sm:$0xf]
  %v8072 = vld [vmem:[%s1 + $0x150] sm:$0xf]
  %v8073 = vld [vmem:[%s1 + $0x154] sm:$0xf]
  %v8074 = vld [vmem:[%s1 + $0x158] sm:$0xf]
  %v8075 = vld [vmem:[%s1 + $0x15c] sm:$0xf]
  %v8076 = vld [vmem:[%s1 + $0x160] sm:$0xf]
  %v8077 = vld [vmem:[%s1 + $0x164] sm:$0xf]
  %v8078 = vld [vmem:[%s1 + $0x168] sm:$0xf]
  %v8079 = vld [vmem:[%s1 + $0x16c] sm:$0xf]
  %v8080 = vld [vmem:[%s1 + $0x170] sm:$0xf]
  %v8081 = vld [vmem:[%s1 + $0x174] sm:$0xf]
  %v8082 = vld [vmem:[%s1 + $0x178] sm:$0xf]
  %v8083 = vld [vmem:[%s1 + $0x17c] sm:$0xf]
  %v8084 = vld [vmem:[%s1 + $0x180] sm:$0xf]
  %v8085 = vld [vmem:[%s1 + $0x184] sm:$0xf]
  %v8086 = vld [vmem:[%s1 + $0x188] sm:$0xf]
  %v8087 = vld [vmem:[%s1 + $0x18c] sm:$0xf]
  %v8088 = vld [vmem:[%s1 + $0x190] sm:$0xf]
  %v8089 = vld [vmem:[%s1 + $0x194] sm:$0xf]
  %v8090 = vld [vmem:[%s1 + $0x198] sm:$0xf]
  %v8091 = vld [vmem:[%s1 + $0x19c] sm:$0xf]
  %v8092 = vld [vmem:[%s1 + $0x1a0] sm:$0xf]
  %v8093 = vld [vmem:[%s1 + $0x1a4] sm:$0xf]
  %v8094 = vld [vmem:[%s1 + $0x1a8] sm:$0xf]
  %v8095 = vld [vmem:[%s1 + $0x1ac] sm:$0xf]
  %v8096 = vld [vmem:[%s1 + $0x1b0] sm:$0xf]
  %v8097 = vld [vmem:[%s1 + $0x1b4] sm:$0xf]
  %v8098 = vld [vmem:[%s1 + $0x1b8] sm:$0xf]
  %v8099 = vld [vmem:[%s1 + $0x1bc] sm:$0xf]
  %v8100 = vld [vmem:[%s1 + $0x1c0] sm:$0xf]
  %v8101 = vld [vmem:[%s1 + $0x1c4] sm:$0xf]
  %v8102 = vld [vmem:[%s1 + $0x1c8] sm:$0xf]
  %v8103 = vld [vmem:[%s1 + $0x1cc] sm:$0xf]
  %v8104 = vld [vmem:[%s1 + $0x1d0] sm:$0xf]
  %v8105 = vld [vmem:[%s1 + $0x1d4] sm:$0xf]
  %v8106 = vld [vmem:[%s1 + $0x1d8] sm:$0xf]
  %v8107 = vld [vmem:[%s1 + $0x1dc] sm:$0xf]
  %v8108 = vld [vmem:[%s1 + $0x1e0] sm:$0xf]
  %v8109 = vld [vmem:[%s1 + $0x1e4] sm:$0xf]
  %v8110 = vld [vmem:[%s1 + $0x1e8] sm:$0xf]
  %v8111 = vld [vmem:[%s1 + $0x1ec] sm:$0xf]
  %v8112 = vld [vmem:[%s1 + $0x1f0] sm:$0xf]
  %v8113 = vld [vmem:[%s1 + $0x1f4] sm:$0xf]
  %v8114 = vld [vmem:[%s1 + $0x1f8] sm:$0xf]
  %v8115 = vld [vmem:[%s1 + $0x1fc] sm:$0xf]
  %v8116 = vld [vmem:[%s1 + $0x200] sm:$0xf]
  %v8117 = vld [vmem:[%s1 + $0x204] sm:$0xf]
  %v8118 = vld [vmem:[%s1 + $0x208] sm:$0xf]
  %v8119 = vld [vmem:[%s1 + $0x20c] sm:$0xf]
  %v8120 = vld [vmem:[%s1 + $0x210] sm:$0xf]
  %v8121 = vld [vmem:[%s1 + $0x214] sm:$0xf]
  %v8122 = vld [vmem:[%s1 + $0x218] sm:$0xf]
  %v8123 = vld [vmem:[%s1 + $0x21c] sm:$0xf]
  %v8124 = vld [vmem:[%s1 + $0x220] sm:$0xf]
  %v8125 = vld [vmem:[%s1 + $0x224] sm:$0xf]
  %v8126 = vld [vmem:[%s1 + $0x228] sm:$0xf]
  %v8127 = vld [vmem:[%s1 + $0x22c] sm:$0xf]
  %v8128 = vld [vmem:[%s1 + $0x230] sm:$0xf]
  %v8129 = vld [vmem:[%s1 + $0x234] sm:$0xf]
  %v8130 = vld [vmem:[%s1 + $0x238] sm:$0xf]
  %v8131 = vld [vmem:[%s1 + $0x23c] sm:$0xf]
  %v8132 = vld [vmem:[%s1 + $0x240] sm:$0xf]
  %v8133 = vld [vmem:[%s1 + $0x244] sm:$0xf]
  %v8134 = vld [vmem:[%s1 + $0x248] sm:$0xf]
  %v8135 = vld [vmem:[%s1 + $0x24c] sm:$0xf]
  %v8136 = vld [vmem:[%s1 + $0x250] sm:$0xf]
  %v8137 = vld [vmem:[%s1 + $0x254] sm:$0xf]
  %v8138 = vld [vmem:[%s1 + $0x258] sm:$0xf]
  %v8139 = vld [vmem:[%s1 + $0x25c] sm:$0xf]
  %v8140 = vld [vmem:[%s1 + $0x260] sm:$0xf]
  %v8141 = vld [vmem:[%s1 + $0x264] sm:$0xf]
  %v8142 = vld [vmem:[%s1 + $0x268] sm:$0xf]
  %v8143 = vld [vmem:[%s1 + $0x26c] sm:$0xf]
  %v8144 = vld [vmem:[%s1 + $0x270] sm:$0xf]
  %v8145 = vld [vmem:[%s1 + $0x274] sm:$0xf]
  %v8146 = vld [vmem:[%s1 + $0x278] sm:$0xf]
  %v8147 = vld [vmem:[%s1 + $0x27c] sm:$0xf]
  %v8148 = vld [vmem:[%s1 + $0x280] sm:$0xf]
  %v8149 = vld [vmem:[%s1 + $0x284] sm:$0xf]
  %v8150 = vld [vmem:[%s1 + $0x288] sm:$0xf]
  %v8151 = vld [vmem:[%s1 + $0x28c] sm:$0xf]
  %v8152 = vld [vmem:[%s1 + $0x290] sm:$0xf]
  %v8153 = vld [vmem:[%s1 + $0x294] sm:$0xf]
  %v8154 = vld [vmem:[%s1 + $0x298] sm:$0xf]
  %v8155 = vld [vmem:[%s1 + $0x29c] sm:$0xf]
  %v8156 = vld [vmem:[%s1 + $0x2a0] sm:$0xf]
  %v8157 = vld [vmem:[%s1 + $0x2a4] sm:$0xf]
  %v8158 = vld [vmem:[%s1 + $0x2a8] sm:$0xf]
  %v8159 = vld [vmem:[%s1 + $0x2ac] sm:$0xf]
  %v8160 = vld [vmem:[%s1 + $0x2b0] sm:$0xf]
  %v8161 = vld [vmem:[%s1 + $0x2b4] sm:$0xf]
  %v8162 = vld [vmem:[%s1 + $0x2b8] sm:$0xf]
  %v8163 = vld [vmem:[%s1 + $0x2bc] sm:$0xf]
  %v8164 = vld [vmem:[%s1 + $0x2c0] sm:$0xf]
  %v8165 = vld [vmem:[%s1 + $0x2c4] sm:$0xf]
  %v8166 = vld [vmem:[%s1 + $0x2c8] sm:$0xf]
  %v8167 = vld [vmem:[%s1 + $0x2cc] sm:$0xf]
  %v8168 = vld [vmem:[%s1 + $0x2d0] sm:$0xf]
  %v8169 = vld [vmem:[%s1 + $0x2d4] sm:$0xf]
  %v8170 = vld [vmem:[%s1 + $0x2d8] sm:$0xf]
  %v8171 = vld [vmem:[%s1 + $0x2dc] sm:$0xf]
  %v8172 = vld [vmem:[%s1 + $0x2e0] sm:$0xf]
  %v8173 = vld [vmem:[%s1 + $0x2e4] sm:$0xf]
  %v8174 = vld [vmem:[%s1 + $0x2e8] sm:$0xf]
  %v8175 = vld [vmem:[%s1 + $0x2ec] sm:$0xf]
  %v8176 = vld [vmem:[%s1 + $0x2f0] sm:$0xf]
  %v8177 = vld [vmem:[%s1 + $0x2f4] sm:$0xf]
  %v8178 = vld [vmem:[%s1 + $0x2f8] sm:$0xf]
  %v8179 = vld [vmem:[%s1 + $0x2fc] sm:$0xf]
  %v8180 = vld [vmem:[%s1 + $0x300] sm:$0xf]
  %v8181 = vld [vmem:[%s1 + $0x304] sm:$0xf]
  %v8182 = vld [vmem:[%s1 + $0x308] sm:$0xf]
  %v8183 = vld [vmem:[%s1 + $0x30c] sm:$0xf]
  %v8184 = vld [vmem:[%s1 + $0x310] sm:$0xf]
  %v8185 = vld [vmem:[%s1 + $0x314] sm:$0xf]
  %v8186 = vld [vmem:[%s1 + $0x318] sm:$0xf]
  %v8187 = vld [vmem:[%s1 + $0x31c] sm:$0xf]
  %v8188 = vld [vmem:[%s1 + $0x320] sm:$0xf]
  %v8189 = vld [vmem:[%s1 + $0x324] sm:$0xf]
  %v8190 = vld [vmem:[%s1 + $0x328] sm:$0xf]
  %v8191 = vld [vmem:[%s1 + $0x32c] sm:$0xf]
  %v8192 = vld [vmem:[%s1 + $0x330] sm:$0xf]
  %v8193 = vld [vmem:[%s1 + $0x334] sm:$0xf]
  %v8194 = vld [vmem:[%s1 + $0x338] sm:$0xf]
  %v8195 = vld [vmem:[%s1 + $0x33c] sm:$0xf]
  %v8196 = vld [vmem:[%s1 + $0x340] sm:$0xf]
  %v8197 = vld [vmem:[%s1 + $0x344] sm:$0xf]
  %v8198 = vld [vmem:[%s1 + $0x348] sm:$0xf]
  %v8199 = vld [vmem:[%s1 + $0x34c] sm:$0xf]
  %v8200 = vld [vmem:[%s1 + $0x350] sm:$0xf]
  %v8201 = vld [vmem:[%s1 + $0x354] sm:$0xf]
  %v8202 = vld [vmem:[%s1 + $0x358] sm:$0xf]
  %v8203 = vld [vmem:[%s1 + $0x35c] sm:$0xf]
  %v8204 = vld [vmem:[%s1 + $0x360] sm:$0xf]
  %v8205 = vld [vmem:[%s1 + $0x364] sm:$0xf]
  %v8206 = vld [vmem:[%s1 + $0x368] sm:$0xf]
  %v8207 = vld [vmem:[%s1 + $0x36c] sm:$0xf]
  %v8208 = vld [vmem:[%s1 + $0x370] sm:$0xf]
  %v8209 = vld [vmem:[%s1 + $0x374] sm:$0xf]
  %v8210 = vld [vmem:[%s1 + $0x378] sm:$0xf]
  %v8211 = vld [vmem:[%s1 + $0x37c] sm:$0xf]
  %v8212 = vld [vmem:[%s1 + $0x380] sm:$0xf]
  %v8213 = vld [vmem:[%s1 + $0x384] sm:$0xf]
  %v8214 = vld [vmem:[%s1 + $0x388] sm:$0xf]
  %v8215 = vld [vmem:[%s1 + $0x38c] sm:$0xf]
  %v8216 = vld [vmem:[%s1 + $0x390] sm:$0xf]
  %v8217 = vld [vmem:[%s1 + $0x394] sm:$0xf]
  %v8218 = vld [vmem:[%s1 + $0x398] sm:$0xf]
  %v8219 = vld [vmem:[%s1 + $0x39c] sm:$0xf]
  %v8220 = vld [vmem:[%s1 + $0x3a0] sm:$0xf]
  %v8221 = vld [vmem:[%s1 + $0x3a4] sm:$0xf]
  %v8222 = vld [vmem:[%s1 + $0x3a8] sm:$0xf]
  %v8223 = vld [vmem:[%s1 + $0x3ac] sm:$0xf]
  %v8224 = vld [vmem:[%s1 + $0x3b0] sm:$0xf]
  %v8225 = vld [vmem:[%s1 + $0x3b4] sm:$0xf]
  %v8226 = vld [vmem:[%s1 + $0x3b8] sm:$0xf]
  %v8227 = vld [vmem:[%s1 + $0x3bc] sm:$0xf]
  %v8228 = vld [vmem:[%s1 + $0x3c0] sm:$0xf]
  %v8229 = vld [vmem:[%s1 + $0x3c4] sm:$0xf]
  %v8230 = vld [vmem:[%s1 + $0x3c8] sm:$0xf]
  %v8231 = vld [vmem:[%s1 + $0x3cc] sm:$0xf]
  %v8232 = vld [vmem:[%s1 + $0x3d0] sm:$0xf]
  %v8233 = vld [vmem:[%s1 + $0x3d4] sm:$0xf]
  %v8234 = vld [vmem:[%s1 + $0x3d8] sm:$0xf]
  %v8235 = vld [vmem:[%s1 + $0x3dc] sm:$0xf]
  %v8236 = vld [vmem:[%s1 + $0x3e0] sm:$0xf]
  %v8237 = vld [vmem:[%s1 + $0x3e4] sm:$0xf]
  %v8238 = vld [vmem:[%s1 + $0x3e8] sm:$0xf]
  %v8239 = vld [vmem:[%s1 + $0x3ec] sm:$0xf]
  %v8240 = vld [vmem:[%s1 + $0x3f0] sm:$0xf]
  %v8241 = vld [vmem:[%s1 + $0x3f4] sm:$0xf]
  %v8242 = vld [vmem:[%s1 + $0x3f8] sm:$0xf]
  %v8243 = vld [vmem:[%s1 + $0x3fc] sm:$0xf]
  %v8252 = vunpack.c.l.b16 %v7980
  %v8253 = vunpack.c.h.b16 %v7980
  %v8254 = vunpack.c.l.b16 %v7981
  %v8255 = vunpack.c.h.b16 %v7981
  %v8256 = vunpack.c.l.b16 %v7982
  %v8257 = vunpack.c.h.b16 %v7982
  %v8258 = vunpack.c.l.b16 %v7983
  %v8259 = vunpack.c.h.b16 %v7983
  %v8260 = vunpack.c.l.b16 %v7984
  %v8261 = vunpack.c.h.b16 %v7984
  %v8262 = vunpack.c.l.b16 %v7985
  %v8263 = vunpack.c.h.b16 %v7985
  %v8264 = vunpack.c.l.b16 %v7986
  %v8265 = vunpack.c.h.b16 %v7986
  %v8266 = vunpack.c.l.b16 %v7987
  %v8267 = vunpack.c.h.b16 %v7987
  %v8268 = vpack.c.b16 %v8252, %v8252
  %v8269 = vpack.c.b16 %v8253, %v8253
  %v8270 = vpack.c.b16 %v8254, %v8254
  %v8271 = vpack.c.b16 %v8255, %v8255
  %v8272 = vpack.c.b16 %v8256, %v8256
  %v8273 = vpack.c.b16 %v8257, %v8257
  %v8274 = vpack.c.b16 %v8258, %v8258
  %v8275 = vpack.c.b16 %v8259, %v8259
  %v8276 = vpack.c.b16 %v8260, %v8260
  %v8277 = vpack.c.b16 %v8261, %v8261
  %v8278 = vpack.c.b16 %v8262, %v8262
  %v8279 = vpack.c.b16 %v8263, %v8263
  %v8280 = vpack.c.b16 %v8264, %v8264
  %v8281 = vpack.c.b16 %v8265, %v8265
  %v8282 = vpack.c.b16 %v8266, %v8266
  %v8283 = vpack.c.b16 %v8267, %v8267
  %v8556 = vunpack.c.l.b16 %v7988
  %v8557 = vunpack.c.l.b16 %v7989
  %v8558 = vunpack.c.l.b16 %v7990
  %v8559 = vunpack.c.l.b16 %v7991
  %v8560 = vunpack.c.l.b16 %v7992
  %v8561 = vunpack.c.l.b16 %v7993
  %v8562 = vunpack.c.l.b16 %v7994
  %v8563 = vunpack.c.l.b16 %v7995
  %v8564 = vunpack.c.l.b16 %v7996
  %v8565 = vunpack.c.l.b16 %v7997
  %v8566 = vunpack.c.l.b16 %v7998
  %v8567 = vunpack.c.l.b16 %v7999
  %v8568 = vunpack.c.l.b16 %v8000
  %v8569 = vunpack.c.l.b16 %v8001
  %v8570 = vunpack.c.l.b16 %v8002
  %v8571 = vunpack.c.l.b16 %v8003
  %v8572 = vunpack.c.l.b16 %v8004
  %v8573 = vunpack.c.l.b16 %v8005
  %v8574 = vunpack.c.l.b16 %v8006
  %v8575 = vunpack.c.l.b16 %v8007
  %v8576 = vunpack.c.l.b16 %v8008
  %v8577 = vunpack.c.l.b16 %v8009
  %v8578 = vunpack.c.l.b16 %v8010
  %v8579 = vunpack.c.l.b16 %v8011
  %v8580 = vunpack.c.l.b16 %v8012
  %v8581 = vunpack.c.l.b16 %v8013
  %v8582 = vunpack.c.l.b16 %v8014
  %v8583 = vunpack.c.l.b16 %v8015
  %v8584 = vunpack.c.l.b16 %v8016
  %v8585 = vunpack.c.l.b16 %v8017
  %v8586 = vunpack.c.l.b16 %v8018
  %v8587 = vunpack.c.l.b16 %v8019
  %v8588 = vunpack.c.l.b16 %v8020
  %v8589 = vunpack.c.l.b16 %v8021
  %v8590 = vunpack.c.l.b16 %v8022
  %v8591 = vunpack.c.l.b16 %v8023
  %v8592 = vunpack.c.l.b16 %v8024
  %v8593 = vunpack.c.l.b16 %v8025
  %v8594 = vunpack.c.l.b16 %v8026
  %v8595 = vunpack.c.l.b16 %v8027
  %v8596 = vunpack.c.l.b16 %v8028
  %v8597 = vunpack.c.l.b16 %v8029
  %v8598 = vunpack.c.l.b16 %v8030
  %v8599 = vunpack.c.l.b16 %v8031
  %v8600 = vunpack.c.l.b16 %v8032
  %v8601 = vunpack.c.l.b16 %v8033
  %v8602 = vunpack.c.l.b16 %v8034
  %v8603 = vunpack.c.l.b16 %v8035
  %v8604 = vunpack.c.l.b16 %v8036
  %v8605 = vunpack.c.l.b16 %v8037
  %v8606 = vunpack.c.l.b16 %v8038
  %v8607 = vunpack.c.l.b16 %v8039
  %v8608 = vunpack.c.l.b16 %v8040
  %v8609 = vunpack.c.l.b16 %v8041
  %v8610 = vunpack.c.l.b16 %v8042
  %v8611 = vunpack.c.l.b16 %v8043
  %v8612 = vunpack.c.l.b16 %v8044
  %v8613 = vunpack.c.l.b16 %v8045
  %v8614 = vunpack.c.l.b16 %v8046
  %v8615 = vunpack.c.l.b16 %v8047
  %v8616 = vunpack.c.l.b16 %v8048
  %v8617 = vunpack.c.l.b16 %v8049
  %v8618 = vunpack.c.l.b16 %v8050
  %v8619 = vunpack.c.l.b16 %v8051
  %v8620 = vunpack.c.l.b16 %v8052
  %v8621 = vunpack.c.l.b16 %v8053
  %v8622 = vunpack.c.l.b16 %v8054
  %v8623 = vunpack.c.l.b16 %v8055
  %v8624 = vunpack.c.l.b16 %v8056
  %v8625 = vunpack.c.l.b16 %v8057
  %v8626 = vunpack.c.l.b16 %v8058
  %v8627 = vunpack.c.l.b16 %v8059
  %v8628 = vunpack.c.l.b16 %v8060
  %v8629 = vunpack.c.l.b16 %v8061
  %v8630 = vunpack.c.l.b16 %v8062
  %v8631 = vunpack.c.l.b16 %v8063
  %v8632 = vunpack.c.l.b16 %v8064
  %v8633 = vunpack.c.l.b16 %v8065
  %v8634 = vunpack.c.l.b16 %v8066
  %v8635 = vunpack.c.l.b16 %v8067
  %v8636 = vunpack.c.l.b16 %v8068
  %v8637 = vunpack.c.l.b16 %v8069
  %v8638 = vunpack.c.l.b16 %v8070
  %v8639 = vunpack.c.l.b16 %v8071
  %v8640 = vunpack.c.l.b16 %v8072
  %v8641 = vunpack.c.l.b16 %v8073
  %v8642 = vunpack.c.l.b16 %v8074
  %v8643 = vunpack.c.l.b16 %v8075
  %v8644 = vunpack.c.l.b16 %v8076
  %v8645 = vunpack.c.l.b16 %v8077
  %v8646 = vunpack.c.l.b16 %v8078
  %v8647 = vunpack.c.l.b16 %v8079
  %v8648 = vunpack.c.l.b16 %v8080
  %v8649 = vunpack.c.l.b16 %v8081
  %v8650 = vunpack.c.l.b16 %v8082
  %v8651 = vunpack.c.l.b16 %v8083
  %v8652 = vunpack.c.l.b16 %v8084
  %v8653 = vunpack.c.l.b16 %v8085
  %v8654 = vunpack.c.l.b16 %v8086
  %v8655 = vunpack.c.l.b16 %v8087
  %v8656 = vunpack.c.l.b16 %v8088
  %v8657 = vunpack.c.l.b16 %v8089
  %v8658 = vunpack.c.l.b16 %v8090
  %v8659 = vunpack.c.l.b16 %v8091
  %v8660 = vunpack.c.l.b16 %v8092
  %v8661 = vunpack.c.l.b16 %v8093
  %v8662 = vunpack.c.l.b16 %v8094
  %v8663 = vunpack.c.l.b16 %v8095
  %v8664 = vunpack.c.l.b16 %v8096
  %v8665 = vunpack.c.l.b16 %v8097
  %v8666 = vunpack.c.l.b16 %v8098
  %v8667 = vunpack.c.l.b16 %v8099
  %v8668 = vunpack.c.l.b16 %v8100
  %v8669 = vunpack.c.l.b16 %v8101
  %v8670 = vunpack.c.l.b16 %v8102
  %v8671 = vunpack.c.l.b16 %v8103
  %v8672 = vunpack.c.l.b16 %v8104
  %v8673 = vunpack.c.l.b16 %v8105
  %v8674 = vunpack.c.l.b16 %v8106
  %v8675 = vunpack.c.l.b16 %v8107
  %v8676 = vunpack.c.l.b16 %v8108
  %v8677 = vunpack.c.l.b16 %v8109
  %v8678 = vunpack.c.l.b16 %v8110
  %v8679 = vunpack.c.l.b16 %v8111
  %v8680 = vunpack.c.l.b16 %v8112
  %v8681 = vunpack.c.l.b16 %v8113
  %v8682 = vunpack.c.l.b16 %v8114
  %v8683 = vunpack.c.l.b16 %v8115
  %v8684 = vunpack.c.l.b16 %v8116
  %v8685 = vunpack.c.l.b16 %v8117
  %v8686 = vunpack.c.l.b16 %v8118
  %v8687 = vunpack.c.l.b16 %v8119
  %v8688 = vunpack.c.l.b16 %v8120
  %v8689 = vunpack.c.l.b16 %v8121
  %v8690 = vunpack.c.l.b16 %v8122
  %v8691 = vunpack.c.l.b16 %v8123
  %v8692 = vunpack.c.l.b16 %v8124
  %v8693 = vunpack.c.l.b16 %v8125
  %v8694 = vunpack.c.l.b16 %v8126
  %v8695 = vunpack.c.l.b16 %v8127
  %v8696 = vunpack.c.l.b16 %v8128
  %v8697 = vunpack.c.l.b16 %v8129
  %v8698 = vunpack.c.l.b16 %v8130
  %v8699 = vunpack.c.l.b16 %v8131
  %v8700 = vunpack.c.l.b16 %v8132
  %v8701 = vunpack.c.l.b16 %v8133
  %v8702 = vunpack.c.l.b16 %v8134
  %v8703 = vunpack.c.l.b16 %v8135
  %v8704 = vunpack.c.l.b16 %v8136
  %v8705 = vunpack.c.l.b16 %v8137
  %v8706 = vunpack.c.l.b16 %v8138
  %v8707 = vunpack.c.l.b16 %v8139
  %v8708 = vunpack.c.l.b16 %v8140
  %v8709 = vunpack.c.l.b16 %v8141
  %v8710 = vunpack.c.l.b16 %v8142
  %v8711 = vunpack.c.l.b16 %v8143
  %v8712 = vunpack.c.l.b16 %v8144
  %v8713 = vunpack.c.l.b16 %v8145
  %v8714 = vunpack.c.l.b16 %v8146
  %v8715 = vunpack.c.l.b16 %v8147
  %v8716 = vunpack.c.l.b16 %v8148
  %v8717 = vunpack.c.l.b16 %v8149
  %v8718 = vunpack.c.l.b16 %v8150
  %v8719 = vunpack.c.l.b16 %v8151
  %v8720 = vunpack.c.l.b16 %v8152
  %v8721 = vunpack.c.l.b16 %v8153
  %v8722 = vunpack.c.l.b16 %v8154
  %v8723 = vunpack.c.l.b16 %v8155
  %v8724 = vunpack.c.l.b16 %v8156
  %v8725 = vunpack.c.l.b16 %v8157
  %v8726 = vunpack.c.l.b16 %v8158
  %v8727 = vunpack.c.l.b16 %v8159
  %v8728 = vunpack.c.l.b16 %v8160
  %v8729 = vunpack.c.l.b16 %v8161
  %v8730 = vunpack.c.l.b16 %v8162
  %v8731 = vunpack.c.l.b16 %v8163
  %v8732 = vunpack.c.l.b16 %v8164
  %v8733 = vunpack.c.l.b16 %v8165
  %v8734 = vunpack.c.l.b16 %v8166
  %v8735 = vunpack.c.l.b16 %v8167
  %v8736 = vunpack.c.l.b16 %v8168
  %v8737 = vunpack.c.l.b16 %v8169
  %v8738 = vunpack.c.l.b16 %v8170
  %v8739 = vunpack.c.l.b16 %v8171
  %v8740 = vunpack.c.l.b16 %v8172
  %v8741 = vunpack.c.l.b16 %v8173
  %v8742 = vunpack.c.l.b16 %v8174
  %v8743 = vunpack.c.l.b16 %v8175
  %v8744 = vunpack.c.l.b16 %v8176
  %v8745 = vunpack.c.l.b16 %v8177
  %v8746 = vunpack.c.l.b16 %v8178
  %v8747 = vunpack.c.l.b16 %v8179
  %v8748 = vunpack.c.l.b16 %v8180
  %v8749 = vunpack.c.l.b16 %v8181
  %v8750 = vunpack.c.l.b16 %v8182
  %v8751 = vunpack.c.l.b16 %v8183
  %v8752 = vunpack.c.l.b16 %v8184
  %v8753 = vunpack.c.l.b16 %v8185
  %v8754 = vunpack.c.l.b16 %v8186
  %v8755 = vunpack.c.l.b16 %v8187
  %v8756 = vunpack.c.l.b16 %v8188
  %v8757 = vunpack.c.l.b16 %v8189
  %v8758 = vunpack.c.l.b16 %v8190
  %v8759 = vunpack.c.l.b16 %v8191
  %v8760 = vunpack.c.l.b16 %v8192
  %v8761 = vunpack.c.l.b16 %v8193
  %v8762 = vunpack.c.l.b16 %v8194
  %v8763 = vunpack.c.l.b16 %v8195
  %v8764 = vunpack.c.l.b16 %v8196
  %v8765 = vunpack.c.l.b16 %v8197
  %v8766 = vunpack.c.l.b16 %v8198
  %v8767 = vunpack.c.l.b16 %v8199
  %v8768 = vunpack.c.l.b16 %v8200
  %v8769 = vunpack.c.l.b16 %v8201
  %v8770 = vunpack.c.l.b16 %v8202
  %v8771 = vunpack.c.l.b16 %v8203
  %v8772 = vunpack.c.l.b16 %v8204
  %v8773 = vunpack.c.l.b16 %v8205
  %v8774 = vunpack.c.l.b16 %v8206
  %v8775 = vunpack.c.l.b16 %v8207
  %v8776 = vunpack.c.l.b16 %v8208
  %v8777 = vunpack.c.l.b16 %v8209
  %v8778 = vunpack.c.l.b16 %v8210
  %v8779 = vunpack.c.l.b16 %v8211
  %v8780 = vunpack.c.l.b16 %v8212
  %v8781 = vunpack.c.l.b16 %v8213
  %v8782 = vunpack.c.l.b16 %v8214
  %v8783 = vunpack.c.l.b16 %v8215
  %v8784 = vunpack.c.l.b16 %v8216
  %v8785 = vunpack.c.l.b16 %v8217
  %v8786 = vunpack.c.l.b16 %v8218
  %v8787 = vunpack.c.l.b16 %v8219
  %v8788 = vunpack.c.l.b16 %v8220
  %v8789 = vunpack.c.l.b16 %v8221
  %v8790 = vunpack.c.l.b16 %v8222
  %v8791 = vunpack.c.l.b16 %v8223
  %v8792 = vunpack.c.l.b16 %v8224
  %v8793 = vunpack.c.l.b16 %v8225
  %v8794 = vunpack.c.l.b16 %v8226
  %v8795 = vunpack.c.l.b16 %v8227
  %v8796 = vunpack.c.l.b16 %v8228
  %v8797 = vunpack.c.l.b16 %v8229
  %v8798 = vunpack.c.l.b16 %v8230
  %v8799 = vunpack.c.l.b16 %v8231
  %v8800 = vunpack.c.l.b16 %v8232
  %v8801 = vunpack.c.l.b16 %v8233
  %v8802 = vunpack.c.l.b16 %v8234
  %v8803 = vunpack.c.l.b16 %v8235
  %v8804 = vunpack.c.l.b16 %v8236
  %v8805 = vunpack.c.l.b16 %v8237
  %v8806 = vunpack.c.l.b16 %v8238
  %v8807 = vunpack.c.l.b16 %v8239
  %v8808 = vunpack.c.l.b16 %v8240
  %v8809 = vunpack.c.l.b16 %v8241
  %v8810 = vunpack.c.l.b16 %v8242
  %v8811 = vunpack.c.l.b16 %v8243
  %v8812 = vpack.c.b16 %v8557, %v8556
  %v8813 = vpack.c.b16 %v8559, %v8558
  %v8814 = vpack.c.b16 %v8561, %v8560
  %v8815 = vpack.c.b16 %v8563, %v8562
  %v8816 = vpack.c.b16 %v8565, %v8564
  %v8817 = vpack.c.b16 %v8567, %v8566
  %v8818 = vpack.c.b16 %v8569, %v8568
  %v8819 = vpack.c.b16 %v8571, %v8570
  %v8820 = vpack.c.b16 %v8573, %v8572
  %v8821 = vpack.c.b16 %v8575, %v8574
  %v8822 = vpack.c.b16 %v8577, %v8576
  %v8823 = vpack.c.b16 %v8579, %v8578
  %v8824 = vpack.c.b16 %v8581, %v8580
  %v8825 = vpack.c.b16 %v8583, %v8582
  %v8826 = vpack.c.b16 %v8585, %v8584
  %v8827 = vpack.c.b16 %v8587, %v8586
  %v8828 = vpack.c.b16 %v8589, %v8588
  %v8829 = vpack.c.b16 %v8591, %v8590
  %v8830 = vpack.c.b16 %v8593, %v8592
  %v8831 = vpack.c.b16 %v8595, %v8594
  %v8832 = vpack.c.b16 %v8597, %v8596
  %v8833 = vpack.c.b16 %v8599, %v8598
  %v8834 = vpack.c.b16 %v8601, %v8600
  %v8835 = vpack.c.b16 %v8603, %v8602
  %v8836 = vpack.c.b16 %v8605, %v8604
  %v8837 = vpack.c.b16 %v8607, %v8606
  %v8838 = vpack.c.b16 %v8609, %v8608
  %v8839 = vpack.c.b16 %v8611, %v8610
  %v8840 = vpack.c.b16 %v8613, %v8612
  %v8841 = vpack.c.b16 %v8615, %v8614
  %v8842 = vpack.c.b16 %v8617, %v8616
  %v8843 = vpack.c.b16 %v8619, %v8618
  %v8844 = vpack.c.b16 %v8621, %v8620
  %v8845 = vpack.c.b16 %v8623, %v8622
  %v8846 = vpack.c.b16 %v8625, %v8624
  %v8847 = vpack.c.b16 %v8627, %v8626
  %v8848 = vpack.c.b16 %v8629, %v8628
  %v8849 = vpack.c.b16 %v8631, %v8630
  %v8850 = vpack.c.b16 %v8633, %v8632
  %v8851 = vpack.c.b16 %v8635, %v8634
  %v8852 = vpack.c.b16 %v8637, %v8636
  %v8853 = vpack.c.b16 %v8639, %v8638
  %v8854 = vpack.c.b16 %v8641, %v8640
  %v8855 = vpack.c.b16 %v8643, %v8642
  %v8856 = vpack.c.b16 %v8645, %v8644
  %v8857 = vpack.c.b16 %v8647, %v8646
  %v8858 = vpack.c.b16 %v8649, %v8648
  %v8859 = vpack.c.b16 %v8651, %v8650
  %v8860 = vpack.c.b16 %v8653, %v8652
  %v8861 = vpack.c.b16 %v8655, %v8654
  %v8862 = vpack.c.b16 %v8657, %v8656
  %v8863 = vpack.c.b16 %v8659, %v8658
  %v8864 = vpack.c.b16 %v8661, %v8660
  %v8865 = vpack.c.b16 %v8663, %v8662
  %v8866 = vpack.c.b16 %v8665, %v8664
  %v8867 = vpack.c.b16 %v8667, %v8666
  %v8868 = vpack.c.b16 %v8669, %v8668
  %v8869 = vpack.c.b16 %v8671, %v8670
  %v8870 = vpack.c.b16 %v8673, %v8672
  %v8871 = vpack.c.b16 %v8675, %v8674
  %v8872 = vpack.c.b16 %v8677, %v8676
  %v8873 = vpack.c.b16 %v8679, %v8678
  %v8874 = vpack.c.b16 %v8681, %v8680
  %v8875 = vpack.c.b16 %v8683, %v8682
  %v8876 = vpack.c.b16 %v8685, %v8684
  %v8877 = vpack.c.b16 %v8687, %v8686
  %v8878 = vpack.c.b16 %v8689, %v8688
  %v8879 = vpack.c.b16 %v8691, %v8690
  %v8880 = vpack.c.b16 %v8693, %v8692
  %v8881 = vpack.c.b16 %v8695, %v8694
  %v8882 = vpack.c.b16 %v8697, %v8696
  %v8883 = vpack.c.b16 %v8699, %v8698
  %v8884 = vpack.c.b16 %v8701, %v8700
  %v8885 = vpack.c.b16 %v8703, %v8702
  %v8886 = vpack.c.b16 %v8705, %v8704
  %v8887 = vpack.c.b16 %v8707, %v8706
  %v8888 = vpack.c.b16 %v8709, %v8708
  %v8889 = vpack.c.b16 %v8711, %v8710
  %v8890 = vpack.c.b16 %v8713, %v8712
  %v8891 = vpack.c.b16 %v8715, %v8714
  %v8892 = vpack.c.b16 %v8717, %v8716
  %v8893 = vpack.c.b16 %v8719, %v8718
  %v8894 = vpack.c.b16 %v8721, %v8720
  %v8895 = vpack.c.b16 %v8723, %v8722
  %v8896 = vpack.c.b16 %v8725, %v8724
  %v8897 = vpack.c.b16 %v8727, %v8726
  %v8898 = vpack.c.b16 %v8729, %v8728
  %v8899 = vpack.c.b16 %v8731, %v8730
  %v8900 = vpack.c.b16 %v8733, %v8732
  %v8901 = vpack.c.b16 %v8735, %v8734
  %v8902 = vpack.c.b16 %v8737, %v8736
  %v8903 = vpack.c.b16 %v8739, %v8738
  %v8904 = vpack.c.b16 %v8741, %v8740
  %v8905 = vpack.c.b16 %v8743, %v8742
  %v8906 = vpack.c.b16 %v8745, %v8744
  %v8907 = vpack.c.b16 %v8747, %v8746
  %v8908 = vpack.c.b16 %v8749, %v8748
  %v8909 = vpack.c.b16 %v8751, %v8750
  %v8910 = vpack.c.b16 %v8753, %v8752
  %v8911 = vpack.c.b16 %v8755, %v8754
  %v8912 = vpack.c.b16 %v8757, %v8756
  %v8913 = vpack.c.b16 %v8759, %v8758
  %v8914 = vpack.c.b16 %v8761, %v8760
  %v8915 = vpack.c.b16 %v8763, %v8762
  %v8916 = vpack.c.b16 %v8765, %v8764
  %v8917 = vpack.c.b16 %v8767, %v8766
  %v8918 = vpack.c.b16 %v8769, %v8768
  %v8919 = vpack.c.b16 %v8771, %v8770
  %v8920 = vpack.c.b16 %v8773, %v8772
  %v8921 = vpack.c.b16 %v8775, %v8774
  %v8922 = vpack.c.b16 %v8777, %v8776
  %v8923 = vpack.c.b16 %v8779, %v8778
  %v8924 = vpack.c.b16 %v8781, %v8780
  %v8925 = vpack.c.b16 %v8783, %v8782
  %v8926 = vpack.c.b16 %v8785, %v8784
  %v8927 = vpack.c.b16 %v8787, %v8786
  %v8928 = vpack.c.b16 %v8789, %v8788
  %v8929 = vpack.c.b16 %v8791, %v8790
  %v8930 = vpack.c.b16 %v8793, %v8792
  %v8931 = vpack.c.b16 %v8795, %v8794
  %v8932 = vpack.c.b16 %v8797, %v8796
  %v8933 = vpack.c.b16 %v8799, %v8798
  %v8934 = vpack.c.b16 %v8801, %v8800
  %v8935 = vpack.c.b16 %v8803, %v8802
  %v8936 = vpack.c.b16 %v8805, %v8804
  %v8937 = vpack.c.b16 %v8807, %v8806
  %v8938 = vpack.c.b16 %v8809, %v8808
  %v8939 = vpack.c.b16 %v8811, %v8810
  %9068 = vmatpush.bf16.msra.mxu0 %v8819
  %9069 = vmatpush.bf16.msra.mxu0 %v8818
  %9070 = vmatpush.bf16.msra.mxu0 %v8817
  %9071 = vmatpush.bf16.msra.mxu0 %v8816
  %9072 = vmatpush.bf16.msra.mxu0 %v8815
  %9073 = vmatpush.bf16.msra.mxu0 %v8814
  %9074 = vmatpush.bf16.msra.mxu0 %v8813
  %9075 = vmatpush.bf16.msra.mxu0 %v8812
  %9076 = vmatmul.bf16.gmra.mxu0 %v8268
  %v9077 = vpop.f32.mrf.mxu0
  %v9078 = vadd.f32 0.0, %v9077
  %v9079 = vpop.f32.mrf.mxu0
  %9080 = vdwg.mxu0
  %9081 = vmatpush.bf16.msra.mxu0 %v8827
  %9082 = vmatpush.bf16.msra.mxu0 %v8826
  %9083 = vmatpush.bf16.msra.mxu0 %v8825
  %9084 = vmatpush.bf16.msra.mxu0 %v8824
  %9085 = vmatpush.bf16.msra.mxu0 %v8823
  %9086 = vmatpush.bf16.msra.mxu0 %v8822
  %9087 = vmatpush.bf16.msra.mxu0 %v8821
  %9088 = vmatpush.bf16.msra.mxu0 %v8820
  %9089 = vmatmul.bf16.gmra.mxu0 %v8269
  %v9090 = vpop.f32.mrf.mxu0
  %v9091 = vadd.f32 %v9078, %v9090
  %v9092 = vpop.f32.mrf.mxu0
  %9093 = vdwg.mxu0
  %9094 = vmatpush.bf16.msra.mxu0 %v8835
  %9095 = vmatpush.bf16.msra.mxu0 %v8834
  %9096 = vmatpush.bf16.msra.mxu0 %v8833
  %9097 = vmatpush.bf16.msra.mxu0 %v8832
  %9098 = vmatpush.bf16.msra.mxu0 %v8831
  %9099 = vmatpush.bf16.msra.mxu0 %v8830
  %9100 = vmatpush.bf16.msra.mxu0 %v8829
  %9101 = vmatpush.bf16.msra.mxu0 %v8828
  %9102 = vmatmul.bf16.gmra.mxu0 %v8270
  %v9103 = vpop.f32.mrf.mxu0
  %v9104 = vadd.f32 %v9091, %v9103
  %v9105 = vpop.f32.mrf.mxu0
  %9106 = vdwg.mxu0
  %9107 = vmatpush.bf16.msra.mxu0 %v8843
  %9108 = vmatpush.bf16.msra.mxu0 %v8842
  %9109 = vmatpush.bf16.msra.mxu0 %v8841
  %9110 = vmatpush.bf16.msra.mxu0 %v8840
  %9111 = vmatpush.bf16.msra.mxu0 %v8839
  %9112 = vmatpush.bf16.msra.mxu0 %v8838
  %9113 = vmatpush.bf16.msra.mxu0 %v8837
  %9114 = vmatpush.bf16.msra.mxu0 %v8836
  %9115 = vmatmul.bf16.gmra.mxu0 %v8271
  %v9116 = vpop.f32.mrf.mxu0
  %v9117 = vadd.f32 %v9104, %v9116
  %v9118 = vpop.f32.mrf.mxu0
  %9119 = vdwg.mxu0
  %9120 = vmatpush.bf16.msra.mxu0 %v8851
  %9121 = vmatpush.bf16.msra.mxu0 %v8850
  %9122 = vmatpush.bf16.msra.mxu0 %v8849
  %9123 = vmatpush.bf16.msra.mxu0 %v8848
  %9124 = vmatpush.bf16.msra.mxu0 %v8847
  %9125 = vmatpush.bf16.msra.mxu0 %v8846
  %9126 = vmatpush.bf16.msra.mxu0 %v8845
  %9127 = vmatpush.bf16.msra.mxu0 %v8844
  %9128 = vmatmul.bf16.gmra.mxu0 %v8272
  %v9129 = vpop.f32.mrf.mxu0
  %v9130 = vadd.f32 %v9117, %v9129
  %v9131 = vpop.f32.mrf.mxu0
  %9132 = vdwg.mxu0
  %9133 = vmatpush.bf16.msra.mxu0 %v8859
  %9134 = vmatpush.bf16.msra.mxu0 %v8858
  %9135 = vmatpush.bf16.msra.mxu0 %v8857
  %9136 = vmatpush.bf16.msra.mxu0 %v8856
  %9137 = vmatpush.bf16.msra.mxu0 %v8855
  %9138 = vmatpush.bf16.msra.mxu0 %v8854
  %9139 = vmatpush.bf16.msra.mxu0 %v8853
  %9140 = vmatpush.bf16.msra.mxu0 %v8852
  %9141 = vmatmul.bf16.gmra.mxu0 %v8273
  %v9142 = vpop.f32.mrf.mxu0
  %v9143 = vadd.f32 %v9130, %v9142
  %v9144 = vpop.f32.mrf.mxu0
  %9145 = vdwg.mxu0
  %9146 = vmatpush.bf16.msra.mxu0 %v8867
  %9147 = vmatpush.bf16.msra.mxu0 %v8866
  %9148 = vmatpush.bf16.msra.mxu0 %v8865
  %9149 = vmatpush.bf16.msra.mxu0 %v8864
  %9150 = vmatpush.bf16.msra.mxu0 %v8863
  %9151 = vmatpush.bf16.msra.mxu0 %v8862
  %9152 = vmatpush.bf16.msra.mxu0 %v8861
  %9153 = vmatpush.bf16.msra.mxu0 %v8860
  %9154 = vmatmul.bf16.gmra.mxu0 %v8274
  %v9155 = vpop.f32.mrf.mxu0
  %v9156 = vadd.f32 %v9143, %v9155
  %v9157 = vpop.f32.mrf.mxu0
  %9158 = vdwg.mxu0
  %9159 = vmatpush.bf16.msra.mxu0 %v8875
  %9160 = vmatpush.bf16.msra.mxu0 %v8874
  %9161 = vmatpush.bf16.msra.mxu0 %v8873
  %9162 = vmatpush.bf16.msra.mxu0 %v8872
  %9163 = vmatpush.bf16.msra.mxu0 %v8871
  %9164 = vmatpush.bf16.msra.mxu0 %v8870
  %9165 = vmatpush.bf16.msra.mxu0 %v8869
  %9166 = vmatpush.bf16.msra.mxu0 %v8868
  %9167 = vmatmul.bf16.gmra.mxu0 %v8275
  %v9168 = vpop.f32.mrf.mxu0
  %v9169 = vadd.f32 %v9156, %v9168
  %v9170 = vpop.f32.mrf.mxu0
  %9171 = vdwg.mxu0
  %9172 = vmatpush.bf16.msra.mxu0 %v8883
  %9173 = vmatpush.bf16.msra.mxu0 %v8882
  %9174 = vmatpush.bf16.msra.mxu0 %v8881
  %9175 = vmatpush.bf16.msra.mxu0 %v8880
  %9176 = vmatpush.bf16.msra.mxu0 %v8879
  %9177 = vmatpush.bf16.msra.mxu0 %v8878
  %9178 = vmatpush.bf16.msra.mxu0 %v8877
  %9179 = vmatpush.bf16.msra.mxu0 %v8876
  %9180 = vmatmul.bf16.gmra.mxu0 %v8276
  %v9181 = vpop.f32.mrf.mxu0
  %v9182 = vadd.f32 %v9169, %v9181
  %v9183 = vpop.f32.mrf.mxu0
  %9184 = vdwg.mxu0
  %9185 = vmatpush.bf16.msra.mxu0 %v8891
  %9186 = vmatpush.bf16.msra.mxu0 %v8890
  %9187 = vmatpush.bf16.msra.mxu0 %v8889
  %9188 = vmatpush.bf16.msra.mxu0 %v8888
  %9189 = vmatpush.bf16.msra.mxu0 %v8887
  %9190 = vmatpush.bf16.msra.mxu0 %v8886
  %9191 = vmatpush.bf16.msra.mxu0 %v8885
  %9192 = vmatpush.bf16.msra.mxu0 %v8884
  %9193 = vmatmul.bf16.gmra.mxu0 %v8277
  %v9194 = vpop.f32.mrf.mxu0
  %v9195 = vadd.f32 %v9182, %v9194
  %v9196 = vpop.f32.mrf.mxu0
  %9197 = vdwg.mxu0
  %9198 = vmatpush.bf16.msra.mxu0 %v8899
  %9199 = vmatpush.bf16.msra.mxu0 %v8898
  %9200 = vmatpush.bf16.msra.mxu0 %v8897
  %9201 = vmatpush.bf16.msra.mxu0 %v8896
  %9202 = vmatpush.bf16.msra.mxu0 %v8895
  %9203 = vmatpush.bf16.msra.mxu0 %v8894
  %9204 = vmatpush.bf16.msra.mxu0 %v8893
  %9205 = vmatpush.bf16.msra.mxu0 %v8892
  %9206 = vmatmul.bf16.gmra.mxu0 %v8278
  %v9207 = vpop.f32.mrf.mxu0
  %v9208 = vadd.f32 %v9195, %v9207
  %v9209 = vpop.f32.mrf.mxu0
  %9210 = vdwg.mxu0
  %9211 = vmatpush.bf16.msra.mxu0 %v8907
  %9212 = vmatpush.bf16.msra.mxu0 %v8906
  %9213 = vmatpush.bf16.msra.mxu0 %v8905
  %9214 = vmatpush.bf16.msra.mxu0 %v8904
  %9215 = vmatpush.bf16.msra.mxu0 %v8903
  %9216 = vmatpush.bf16.msra.mxu0 %v8902
  %9217 = vmatpush.bf16.msra.mxu0 %v8901
  %9218 = vmatpush.bf16.msra.mxu0 %v8900
  %9219 = vmatmul.bf16.gmra.mxu0 %v8279
  %v9220 = vpop.f32.mrf.mxu0
  %v9221 = vadd.f32 %v9208, %v9220
  %v9222 = vpop.f32.mrf.mxu0
  %9223 = vdwg.mxu0
  %9224 = vmatpush.bf16.msra.mxu0 %v8915
  %9225 = vmatpush.bf16.msra.mxu0 %v8914
  %9226 = vmatpush.bf16.msra.mxu0 %v8913
  %9227 = vmatpush.bf16.msra.mxu0 %v8912
  %9228 = vmatpush.bf16.msra.mxu0 %v8911
  %9229 = vmatpush.bf16.msra.mxu0 %v8910
  %9230 = vmatpush.bf16.msra.mxu0 %v8909
  %9231 = vmatpush.bf16.msra.mxu0 %v8908
  %9232 = vmatmul.bf16.gmra.mxu0 %v8280
  %v9233 = vpop.f32.mrf.mxu0
  %v9234 = vadd.f32 %v9221, %v9233
  %v9235 = vpop.f32.mrf.mxu0
  %9236 = vdwg.mxu0
  %9237 = vmatpush.bf16.msra.mxu0 %v8923
  %9238 = vmatpush.bf16.msra.mxu0 %v8922
  %9239 = vmatpush.bf16.msra.mxu0 %v8921
  %9240 = vmatpush.bf16.msra.mxu0 %v8920
  %9241 = vmatpush.bf16.msra.mxu0 %v8919
  %9242 = vmatpush.bf16.msra.mxu0 %v8918
  %9243 = vmatpush.bf16.msra.mxu0 %v8917
  %9244 = vmatpush.bf16.msra.mxu0 %v8916
  %9245 = vmatmul.bf16.gmra.mxu0 %v8281
  %v9246 = vpop.f32.mrf.mxu0
  %v9247 = vadd.f32 %v9234, %v9246
  %v9248 = vpop.f32.mrf.mxu0
  %9249 = vdwg.mxu0
  %9250 = vmatpush.bf16.msra.mxu0 %v8931
  %9251 = vmatpush.bf16.msra.mxu0 %v8930
  %9252 = vmatpush.bf16.msra.mxu0 %v8929
  %9253 = vmatpush.bf16.msra.mxu0 %v8928
  %9254 = vmatpush.bf16.msra.mxu0 %v8927
  %9255 = vmatpush.bf16.msra.mxu0 %v8926
  %9256 = vmatpush.bf16.msra.mxu0 %v8925
  %9257 = vmatpush.bf16.msra.mxu0 %v8924
  %9258 = vmatmul.bf16.gmra.mxu0 %v8282
  %v9259 = vpop.f32.mrf.mxu0
  %v9260 = vadd.f32 %v9247, %v9259
  %v9261 = vpop.f32.mrf.mxu0
  %9262 = vdwg.mxu0
  %9263 = vmatpush.bf16.msra.mxu0 %v8939
  %9264 = vmatpush.bf16.msra.mxu0 %v8938
  %9265 = vmatpush.bf16.msra.mxu0 %v8937
  %9266 = vmatpush.bf16.msra.mxu0 %v8936
  %9267 = vmatpush.bf16.msra.mxu0 %v8935
  %9268 = vmatpush.bf16.msra.mxu0 %v8934
  %9269 = vmatpush.bf16.msra.mxu0 %v8933
  %9270 = vmatpush.bf16.msra.mxu0 %v8932
  %9271 = vmatmul.bf16.gmra.mxu0 %v8283
  %v9272 = vpop.f32.mrf.mxu0
  %v9273 = vadd.f32 %v9260, %v9272
  %v9274 = vpop.f32.mrf.mxu0
  %9275 = vdwg.mxu0
  %9276 = vst.msk [vmem:[#allocation2 + $0xc] sm:$0xf] %vm1330, %v9273
  %v9277 = vsel %vm1330, %v9273, 0.0
  %v9278 = vrot.slane %v9277, 4
  %v9279 = vadd.f32 %v9277, %v9278
  %v9280 = vrot.slane %v9279, 2
  %v9281 = vadd.f32 %v9279, %v9280
  %v9282 = vrot.slane %v9281, 1
  %v9283 = vadd.f32 %v9281, %v9282
  %v9284 = vadd.f32 %v7970, %v9283
  %v9285 = vmul.f32 %v9273, %v9273
  %v9286 = vsel %vm1330, %v9285, 0.0
  %v9287 = vrot.slane %v9286, 4
  %v9288 = vadd.f32 %v9286, %v9287
  %v9289 = vrot.slane %v9288, 2
  %v9290 = vadd.f32 %v9288, %v9289
  %v9291 = vrot.slane %v9290, 1
  %v9292 = vadd.f32 %v9290, %v9291
  %v9293 = vadd.f32 %v7979, %v9292
  %v9294 = vld [vmem:[%s0 + $0xc0] sm:$0xcc]
  %v9295 = vld [vmem:[%s0 + $0xc8] sm:$0xcc]
  %v9296 = vld [vmem:[%s0 + $0xd0] sm:$0xcc]
  %v9297 = vld [vmem:[%s0 + $0xd8] sm:$0xcc]
  %v9298 = vld [vmem:[%s0 + $0xe0] sm:$0xcc]
  %v9299 = vld [vmem:[%s0 + $0xe8] sm:$0xcc]
  %v9300 = vld [vmem:[%s0 + $0xf0] sm:$0xcc]
  %v9301 = vld [vmem:[%s0 + $0xf8] sm:$0xcc]
  %v9302 = vld [vmem:[%s1] sm:$0xf]
  %v9303 = vld [vmem:[%s1 + $0x4] sm:$0xf]
  %v9304 = vld [vmem:[%s1 + $0x8] sm:$0xf]
  %v9305 = vld [vmem:[%s1 + $0xc] sm:$0xf]
  %v9306 = vld [vmem:[%s1 + $0x10] sm:$0xf]
  %v9307 = vld [vmem:[%s1 + $0x14] sm:$0xf]
  %v9308 = vld [vmem:[%s1 + $0x18] sm:$0xf]
  %v9309 = vld [vmem:[%s1 + $0x1c] sm:$0xf]
  %v9310 = vld [vmem:[%s1 + $0x20] sm:$0xf]
  %v9311 = vld [vmem:[%s1 + $0x24] sm:$0xf]
  %v9312 = vld [vmem:[%s1 + $0x28] sm:$0xf]
  %v9313 = vld [vmem:[%s1 + $0x2c] sm:$0xf]
  %v9314 = vld [vmem:[%s1 + $0x30] sm:$0xf]
  %v9315 = vld [vmem:[%s1 + $0x34] sm:$0xf]
  %v9316 = vld [vmem:[%s1 + $0x38] sm:$0xf]
  %v9317 = vld [vmem:[%s1 + $0x3c] sm:$0xf]
  %v9318 = vld [vmem:[%s1 + $0x40] sm:$0xf]
  %v9319 = vld [vmem:[%s1 + $0x44] sm:$0xf]
  %v9320 = vld [vmem:[%s1 + $0x48] sm:$0xf]
  %v9321 = vld [vmem:[%s1 + $0x4c] sm:$0xf]
  %v9322 = vld [vmem:[%s1 + $0x50] sm:$0xf]
  %v9323 = vld [vmem:[%s1 + $0x54] sm:$0xf]
  %v9324 = vld [vmem:[%s1 + $0x58] sm:$0xf]
  %v9325 = vld [vmem:[%s1 + $0x5c] sm:$0xf]
  %v9326 = vld [vmem:[%s1 + $0x60] sm:$0xf]
  %v9327 = vld [vmem:[%s1 + $0x64] sm:$0xf]
  %v9328 = vld [vmem:[%s1 + $0x68] sm:$0xf]
  %v9329 = vld [vmem:[%s1 + $0x6c] sm:$0xf]
  %v9330 = vld [vmem:[%s1 + $0x70] sm:$0xf]
  %v9331 = vld [vmem:[%s1 + $0x74] sm:$0xf]
  %v9332 = vld [vmem:[%s1 + $0x78] sm:$0xf]
  %v9333 = vld [vmem:[%s1 + $0x7c] sm:$0xf]
  %v9334 = vld [vmem:[%s1 + $0x80] sm:$0xf]
  %v9335 = vld [vmem:[%s1 + $0x84] sm:$0xf]
  %v9336 = vld [vmem:[%s1 + $0x88] sm:$0xf]
  %v9337 = vld [vmem:[%s1 + $0x8c] sm:$0xf]
  %v9338 = vld [vmem:[%s1 + $0x90] sm:$0xf]
  %v9339 = vld [vmem:[%s1 + $0x94] sm:$0xf]
  %v9340 = vld [vmem:[%s1 + $0x98] sm:$0xf]
  %v9341 = vld [vmem:[%s1 + $0x9c] sm:$0xf]
  %v9342 = vld [vmem:[%s1 + $0xa0] sm:$0xf]
  %v9343 = vld [vmem:[%s1 + $0xa4] sm:$0xf]
  %v9344 = vld [vmem:[%s1 + $0xa8] sm:$0xf]
  %v9345 = vld [vmem:[%s1 + $0xac] sm:$0xf]
  %v9346 = vld [vmem:[%s1 + $0xb0] sm:$0xf]
  %v9347 = vld [vmem:[%s1 + $0xb4] sm:$0xf]
  %v9348 = vld [vmem:[%s1 + $0xb8] sm:$0xf]
  %v9349 = vld [vmem:[%s1 + $0xbc] sm:$0xf]
  %v9350 = vld [vmem:[%s1 + $0xc0] sm:$0xf]
  %v9351 = vld [vmem:[%s1 + $0xc4] sm:$0xf]
  %v9352 = vld [vmem:[%s1 + $0xc8] sm:$0xf]
  %v9353 = vld [vmem:[%s1 + $0xcc] sm:$0xf]
  %v9354 = vld [vmem:[%s1 + $0xd0] sm:$0xf]
  %v9355 = vld [vmem:[%s1 + $0xd4] sm:$0xf]
  %v9356 = vld [vmem:[%s1 + $0xd8] sm:$0xf]
  %v9357 = vld [vmem:[%s1 + $0xdc] sm:$0xf]
  %v9358 = vld [vmem:[%s1 + $0xe0] sm:$0xf]
  %v9359 = vld [vmem:[%s1 + $0xe4] sm:$0xf]
  %v9360 = vld [vmem:[%s1 + $0xe8] sm:$0xf]
  %v9361 = vld [vmem:[%s1 + $0xec] sm:$0xf]
  %v9362 = vld [vmem:[%s1 + $0xf0] sm:$0xf]
  %v9363 = vld [vmem:[%s1 + $0xf4] sm:$0xf]
  %v9364 = vld [vmem:[%s1 + $0xf8] sm:$0xf]
  %v9365 = vld [vmem:[%s1 + $0xfc] sm:$0xf]
  %v9366 = vld [vmem:[%s1 + $0x100] sm:$0xf]
  %v9367 = vld [vmem:[%s1 + $0x104] sm:$0xf]
  %v9368 = vld [vmem:[%s1 + $0x108] sm:$0xf]
  %v9369 = vld [vmem:[%s1 + $0x10c] sm:$0xf]
  %v9370 = vld [vmem:[%s1 + $0x110] sm:$0xf]
  %v9371 = vld [vmem:[%s1 + $0x114] sm:$0xf]
  %v9372 = vld [vmem:[%s1 + $0x118] sm:$0xf]
  %v9373 = vld [vmem:[%s1 + $0x11c] sm:$0xf]
  %v9374 = vld [vmem:[%s1 + $0x120] sm:$0xf]
  %v9375 = vld [vmem:[%s1 + $0x124] sm:$0xf]
  %v9376 = vld [vmem:[%s1 + $0x128] sm:$0xf]
  %v9377 = vld [vmem:[%s1 + $0x12c] sm:$0xf]
  %v9378 = vld [vmem:[%s1 + $0x130] sm:$0xf]
  %v9379 = vld [vmem:[%s1 + $0x134] sm:$0xf]
  %v9380 = vld [vmem:[%s1 + $0x138] sm:$0xf]
  %v9381 = vld [vmem:[%s1 + $0x13c] sm:$0xf]
  %v9382 = vld [vmem:[%s1 + $0x140] sm:$0xf]
  %v9383 = vld [vmem:[%s1 + $0x144] sm:$0xf]
  %v9384 = vld [vmem:[%s1 + $0x148] sm:$0xf]
  %v9385 = vld [vmem:[%s1 + $0x14c] sm:$0xf]
  %v9386 = vld [vmem:[%s1 + $0x150] sm:$0xf]
  %v9387 = vld [vmem:[%s1 + $0x154] sm:$0xf]
  %v9388 = vld [vmem:[%s1 + $0x158] sm:$0xf]
  %v9389 = vld [vmem:[%s1 + $0x15c] sm:$0xf]
  %v9390 = vld [vmem:[%s1 + $0x160] sm:$0xf]
  %v9391 = vld [vmem:[%s1 + $0x164] sm:$0xf]
  %v9392 = vld [vmem:[%s1 + $0x168] sm:$0xf]
  %v9393 = vld [vmem:[%s1 + $0x16c] sm:$0xf]
  %v9394 = vld [vmem:[%s1 + $0x170] sm:$0xf]
  %v9395 = vld [vmem:[%s1 + $0x174] sm:$0xf]
  %v9396 = vld [vmem:[%s1 + $0x178] sm:$0xf]
  %v9397 = vld [vmem:[%s1 + $0x17c] sm:$0xf]
  %v9398 = vld [vmem:[%s1 + $0x180] sm:$0xf]
  %v9399 = vld [vmem:[%s1 + $0x184] sm:$0xf]
  %v9400 = vld [vmem:[%s1 + $0x188] sm:$0xf]
  %v9401 = vld [vmem:[%s1 + $0x18c] sm:$0xf]
  %v9402 = vld [vmem:[%s1 + $0x190] sm:$0xf]
  %v9403 = vld [vmem:[%s1 + $0x194] sm:$0xf]
  %v9404 = vld [vmem:[%s1 + $0x198] sm:$0xf]
  %v9405 = vld [vmem:[%s1 + $0x19c] sm:$0xf]
  %v9406 = vld [vmem:[%s1 + $0x1a0] sm:$0xf]
  %v9407 = vld [vmem:[%s1 + $0x1a4] sm:$0xf]
  %v9408 = vld [vmem:[%s1 + $0x1a8] sm:$0xf]
  %v9409 = vld [vmem:[%s1 + $0x1ac] sm:$0xf]
  %v9410 = vld [vmem:[%s1 + $0x1b0] sm:$0xf]
  %v9411 = vld [vmem:[%s1 + $0x1b4] sm:$0xf]
  %v9412 = vld [vmem:[%s1 + $0x1b8] sm:$0xf]
  %v9413 = vld [vmem:[%s1 + $0x1bc] sm:$0xf]
  %v9414 = vld [vmem:[%s1 + $0x1c0] sm:$0xf]
  %v9415 = vld [vmem:[%s1 + $0x1c4] sm:$0xf]
  %v9416 = vld [vmem:[%s1 + $0x1c8] sm:$0xf]
  %v9417 = vld [vmem:[%s1 + $0x1cc] sm:$0xf]
  %v9418 = vld [vmem:[%s1 + $0x1d0] sm:$0xf]
  %v9419 = vld [vmem:[%s1 + $0x1d4] sm:$0xf]
  %v9420 = vld [vmem:[%s1 + $0x1d8] sm:$0xf]
  %v9421 = vld [vmem:[%s1 + $0x1dc] sm:$0xf]
  %v9422 = vld [vmem:[%s1 + $0x1e0] sm:$0xf]
  %v9423 = vld [vmem:[%s1 + $0x1e4] sm:$0xf]
  %v9424 = vld [vmem:[%s1 + $0x1e8] sm:$0xf]
  %v9425 = vld [vmem:[%s1 + $0x1ec] sm:$0xf]
  %v9426 = vld [vmem:[%s1 + $0x1f0] sm:$0xf]
  %v9427 = vld [vmem:[%s1 + $0x1f4] sm:$0xf]
  %v9428 = vld [vmem:[%s1 + $0x1f8] sm:$0xf]
  %v9429 = vld [vmem:[%s1 + $0x1fc] sm:$0xf]
  %v9430 = vld [vmem:[%s1 + $0x200] sm:$0xf]
  %v9431 = vld [vmem:[%s1 + $0x204] sm:$0xf]
  %v9432 = vld [vmem:[%s1 + $0x208] sm:$0xf]
  %v9433 = vld [vmem:[%s1 + $0x20c] sm:$0xf]
  %v9434 = vld [vmem:[%s1 + $0x210] sm:$0xf]
  %v9435 = vld [vmem:[%s1 + $0x214] sm:$0xf]
  %v9436 = vld [vmem:[%s1 + $0x218] sm:$0xf]
  %v9437 = vld [vmem:[%s1 + $0x21c] sm:$0xf]
  %v9438 = vld [vmem:[%s1 + $0x220] sm:$0xf]
  %v9439 = vld [vmem:[%s1 + $0x224] sm:$0xf]
  %v9440 = vld [vmem:[%s1 + $0x228] sm:$0xf]
  %v9441 = vld [vmem:[%s1 + $0x22c] sm:$0xf]
  %v9442 = vld [vmem:[%s1 + $0x230] sm:$0xf]
  %v9443 = vld [vmem:[%s1 + $0x234] sm:$0xf]
  %v9444 = vld [vmem:[%s1 + $0x238] sm:$0xf]
  %v9445 = vld [vmem:[%s1 + $0x23c] sm:$0xf]
  %v9446 = vld [vmem:[%s1 + $0x240] sm:$0xf]
  %v9447 = vld [vmem:[%s1 + $0x244] sm:$0xf]
  %v9448 = vld [vmem:[%s1 + $0x248] sm:$0xf]
  %v9449 = vld [vmem:[%s1 + $0x24c] sm:$0xf]
  %v9450 = vld [vmem:[%s1 + $0x250] sm:$0xf]
  %v9451 = vld [vmem:[%s1 + $0x254] sm:$0xf]
  %v9452 = vld [vmem:[%s1 + $0x258] sm:$0xf]
  %v9453 = vld [vmem:[%s1 + $0x25c] sm:$0xf]
  %v9454 = vld [vmem:[%s1 + $0x260] sm:$0xf]
  %v9455 = vld [vmem:[%s1 + $0x264] sm:$0xf]
  %v9456 = vld [vmem:[%s1 + $0x268] sm:$0xf]
  %v9457 = vld [vmem:[%s1 + $0x26c] sm:$0xf]
  %v9458 = vld [vmem:[%s1 + $0x270] sm:$0xf]
  %v9459 = vld [vmem:[%s1 + $0x274] sm:$0xf]
  %v9460 = vld [vmem:[%s1 + $0x278] sm:$0xf]
  %v9461 = vld [vmem:[%s1 + $0x27c] sm:$0xf]
  %v9462 = vld [vmem:[%s1 + $0x280] sm:$0xf]
  %v9463 = vld [vmem:[%s1 + $0x284] sm:$0xf]
  %v9464 = vld [vmem:[%s1 + $0x288] sm:$0xf]
  %v9465 = vld [vmem:[%s1 + $0x28c] sm:$0xf]
  %v9466 = vld [vmem:[%s1 + $0x290] sm:$0xf]
  %v9467 = vld [vmem:[%s1 + $0x294] sm:$0xf]
  %v9468 = vld [vmem:[%s1 + $0x298] sm:$0xf]
  %v9469 = vld [vmem:[%s1 + $0x29c] sm:$0xf]
  %v9470 = vld [vmem:[%s1 + $0x2a0] sm:$0xf]
  %v9471 = vld [vmem:[%s1 + $0x2a4] sm:$0xf]
  %v9472 = vld [vmem:[%s1 + $0x2a8] sm:$0xf]
  %v9473 = vld [vmem:[%s1 + $0x2ac] sm:$0xf]
  %v9474 = vld [vmem:[%s1 + $0x2b0] sm:$0xf]
  %v9475 = vld [vmem:[%s1 + $0x2b4] sm:$0xf]
  %v9476 = vld [vmem:[%s1 + $0x2b8] sm:$0xf]
  %v9477 = vld [vmem:[%s1 + $0x2bc] sm:$0xf]
  %v9478 = vld [vmem:[%s1 + $0x2c0] sm:$0xf]
  %v9479 = vld [vmem:[%s1 + $0x2c4] sm:$0xf]
  %v9480 = vld [vmem:[%s1 + $0x2c8] sm:$0xf]
  %v9481 = vld [vmem:[%s1 + $0x2cc] sm:$0xf]
  %v9482 = vld [vmem:[%s1 + $0x2d0] sm:$0xf]
  %v9483 = vld [vmem:[%s1 + $0x2d4] sm:$0xf]
  %v9484 = vld [vmem:[%s1 + $0x2d8] sm:$0xf]
  %v9485 = vld [vmem:[%s1 + $0x2dc] sm:$0xf]
  %v9486 = vld [vmem:[%s1 + $0x2e0] sm:$0xf]
  %v9487 = vld [vmem:[%s1 + $0x2e4] sm:$0xf]
  %v9488 = vld [vmem:[%s1 + $0x2e8] sm:$0xf]
  %v9489 = vld [vmem:[%s1 + $0x2ec] sm:$0xf]
  %v9490 = vld [vmem:[%s1 + $0x2f0] sm:$0xf]
  %v9491 = vld [vmem:[%s1 + $0x2f4] sm:$0xf]
  %v9492 = vld [vmem:[%s1 + $0x2f8] sm:$0xf]
  %v9493 = vld [vmem:[%s1 + $0x2fc] sm:$0xf]
  %v9494 = vld [vmem:[%s1 + $0x300] sm:$0xf]
  %v9495 = vld [vmem:[%s1 + $0x304] sm:$0xf]
  %v9496 = vld [vmem:[%s1 + $0x308] sm:$0xf]
  %v9497 = vld [vmem:[%s1 + $0x30c] sm:$0xf]
  %v9498 = vld [vmem:[%s1 + $0x310] sm:$0xf]
  %v9499 = vld [vmem:[%s1 + $0x314] sm:$0xf]
  %v9500 = vld [vmem:[%s1 + $0x318] sm:$0xf]
  %v9501 = vld [vmem:[%s1 + $0x31c] sm:$0xf]
  %v9502 = vld [vmem:[%s1 + $0x320] sm:$0xf]
  %v9503 = vld [vmem:[%s1 + $0x324] sm:$0xf]
  %v9504 = vld [vmem:[%s1 + $0x328] sm:$0xf]
  %v9505 = vld [vmem:[%s1 + $0x32c] sm:$0xf]
  %v9506 = vld [vmem:[%s1 + $0x330] sm:$0xf]
  %v9507 = vld [vmem:[%s1 + $0x334] sm:$0xf]
  %v9508 = vld [vmem:[%s1 + $0x338] sm:$0xf]
  %v9509 = vld [vmem:[%s1 + $0x33c] sm:$0xf]
  %v9510 = vld [vmem:[%s1 + $0x340] sm:$0xf]
  %v9511 = vld [vmem:[%s1 + $0x344] sm:$0xf]
  %v9512 = vld [vmem:[%s1 + $0x348] sm:$0xf]
  %v9513 = vld [vmem:[%s1 + $0x34c] sm:$0xf]
  %v9514 = vld [vmem:[%s1 + $0x350] sm:$0xf]
  %v9515 = vld [vmem:[%s1 + $0x354] sm:$0xf]
  %v9516 = vld [vmem:[%s1 + $0x358] sm:$0xf]
  %v9517 = vld [vmem:[%s1 + $0x35c] sm:$0xf]
  %v9518 = vld [vmem:[%s1 + $0x360] sm:$0xf]
  %v9519 = vld [vmem:[%s1 + $0x364] sm:$0xf]
  %v9520 = vld [vmem:[%s1 + $0x368] sm:$0xf]
  %v9521 = vld [vmem:[%s1 + $0x36c] sm:$0xf]
  %v9522 = vld [vmem:[%s1 + $0x370] sm:$0xf]
  %v9523 = vld [vmem:[%s1 + $0x374] sm:$0xf]
  %v9524 = vld [vmem:[%s1 + $0x378] sm:$0xf]
  %v9525 = vld [vmem:[%s1 + $0x37c] sm:$0xf]
  %v9526 = vld [vmem:[%s1 + $0x380] sm:$0xf]
  %v9527 = vld [vmem:[%s1 + $0x384] sm:$0xf]
  %v9528 = vld [vmem:[%s1 + $0x388] sm:$0xf]
  %v9529 = vld [vmem:[%s1 + $0x38c] sm:$0xf]
  %v9530 = vld [vmem:[%s1 + $0x390] sm:$0xf]
  %v9531 = vld [vmem:[%s1 + $0x394] sm:$0xf]
  %v9532 = vld [vmem:[%s1 + $0x398] sm:$0xf]
  %v9533 = vld [vmem:[%s1 + $0x39c] sm:$0xf]
  %v9534 = vld [vmem:[%s1 + $0x3a0] sm:$0xf]
  %v9535 = vld [vmem:[%s1 + $0x3a4] sm:$0xf]
  %v9536 = vld [vmem:[%s1 + $0x3a8] sm:$0xf]
  %v9537 = vld [vmem:[%s1 + $0x3ac] sm:$0xf]
  %v9538 = vld [vmem:[%s1 + $0x3b0] sm:$0xf]
  %v9539 = vld [vmem:[%s1 + $0x3b4] sm:$0xf]
  %v9540 = vld [vmem:[%s1 + $0x3b8] sm:$0xf]
  %v9541 = vld [vmem:[%s1 + $0x3bc] sm:$0xf]
  %v9542 = vld [vmem:[%s1 + $0x3c0] sm:$0xf]
  %v9543 = vld [vmem:[%s1 + $0x3c4] sm:$0xf]
  %v9544 = vld [vmem:[%s1 + $0x3c8] sm:$0xf]
  %v9545 = vld [vmem:[%s1 + $0x3cc] sm:$0xf]
  %v9546 = vld [vmem:[%s1 + $0x3d0] sm:$0xf]
  %v9547 = vld [vmem:[%s1 + $0x3d4] sm:$0xf]
  %v9548 = vld [vmem:[%s1 + $0x3d8] sm:$0xf]
  %v9549 = vld [vmem:[%s1 + $0x3dc] sm:$0xf]
  %v9550 = vld [vmem:[%s1 + $0x3e0] sm:$0xf]
  %v9551 = vld [vmem:[%s1 + $0x3e4] sm:$0xf]
  %v9552 = vld [vmem:[%s1 + $0x3e8] sm:$0xf]
  %v9553 = vld [vmem:[%s1 + $0x3ec] sm:$0xf]
  %v9554 = vld [vmem:[%s1 + $0x3f0] sm:$0xf]
  %v9555 = vld [vmem:[%s1 + $0x3f4] sm:$0xf]
  %v9556 = vld [vmem:[%s1 + $0x3f8] sm:$0xf]
  %v9557 = vld [vmem:[%s1 + $0x3fc] sm:$0xf]
  %v9566 = vunpack.c.l.b16 %v9294
  %v9567 = vunpack.c.h.b16 %v9294
  %v9568 = vunpack.c.l.b16 %v9295
  %v9569 = vunpack.c.h.b16 %v9295
  %v9570 = vunpack.c.l.b16 %v9296
  %v9571 = vunpack.c.h.b16 %v9296
  %v9572 = vunpack.c.l.b16 %v9297
  %v9573 = vunpack.c.h.b16 %v9297
  %v9574 = vunpack.c.l.b16 %v9298
  %v9575 = vunpack.c.h.b16 %v9298
  %v9576 = vunpack.c.l.b16 %v9299
  %v9577 = vunpack.c.h.b16 %v9299
  %v9578 = vunpack.c.l.b16 %v9300
  %v9579 = vunpack.c.h.b16 %v9300
  %v9580 = vunpack.c.l.b16 %v9301
  %v9581 = vunpack.c.h.b16 %v9301
  %v9582 = vpack.c.b16 %v9566, %v9566
  %v9583 = vpack.c.b16 %v9567, %v9567
  %v9584 = vpack.c.b16 %v9568, %v9568
  %v9585 = vpack.c.b16 %v9569, %v9569
  %v9586 = vpack.c.b16 %v9570, %v9570
  %v9587 = vpack.c.b16 %v9571, %v9571
  %v9588 = vpack.c.b16 %v9572, %v9572
  %v9589 = vpack.c.b16 %v9573, %v9573
  %v9590 = vpack.c.b16 %v9574, %v9574
  %v9591 = vpack.c.b16 %v9575, %v9575
  %v9592 = vpack.c.b16 %v9576, %v9576
  %v9593 = vpack.c.b16 %v9577, %v9577
  %v9594 = vpack.c.b16 %v9578, %v9578
  %v9595 = vpack.c.b16 %v9579, %v9579
  %v9596 = vpack.c.b16 %v9580, %v9580
  %v9597 = vpack.c.b16 %v9581, %v9581
  %v9598 = vrot.slane %v9582, 2
  %v9599 = vrot.slane %v9583, 2
  %v9600 = vrot.slane %v9584, 2
  %v9601 = vrot.slane %v9585, 2
  %v9602 = vrot.slane %v9586, 2
  %v9603 = vrot.slane %v9587, 2
  %v9604 = vrot.slane %v9588, 2
  %v9605 = vrot.slane %v9589, 2
  %v9606 = vrot.slane %v9590, 2
  %v9607 = vrot.slane %v9591, 2
  %v9608 = vrot.slane %v9592, 2
  %v9609 = vrot.slane %v9593, 2
  %v9610 = vrot.slane %v9594, 2
  %v9611 = vrot.slane %v9595, 2
  %v9612 = vrot.slane %v9596, 2
  %v9613 = vrot.slane %v9597, 2
  %v9886 = vunpack.c.l.b16 %v9302
  %v9887 = vunpack.c.l.b16 %v9303
  %v9888 = vunpack.c.l.b16 %v9304
  %v9889 = vunpack.c.l.b16 %v9305
  %v9890 = vunpack.c.l.b16 %v9306
  %v9891 = vunpack.c.l.b16 %v9307
  %v9892 = vunpack.c.l.b16 %v9308
  %v9893 = vunpack.c.l.b16 %v9309
  %v9894 = vunpack.c.l.b16 %v9310
  %v9895 = vunpack.c.l.b16 %v9311
  %v9896 = vunpack.c.l.b16 %v9312
  %v9897 = vunpack.c.l.b16 %v9313
  %v9898 = vunpack.c.l.b16 %v9314
  %v9899 = vunpack.c.l.b16 %v9315
  %v9900 = vunpack.c.l.b16 %v9316
  %v9901 = vunpack.c.l.b16 %v9317
  %v9902 = vunpack.c.l.b16 %v9318
  %v9903 = vunpack.c.l.b16 %v9319
  %v9904 = vunpack.c.l.b16 %v9320
  %v9905 = vunpack.c.l.b16 %v9321
  %v9906 = vunpack.c.l.b16 %v9322
  %v9907 = vunpack.c.l.b16 %v9323
  %v9908 = vunpack.c.l.b16 %v9324
  %v9909 = vunpack.c.l.b16 %v9325
  %v9910 = vunpack.c.l.b16 %v9326
  %v9911 = vunpack.c.l.b16 %v9327
  %v9912 = vunpack.c.l.b16 %v9328
  %v9913 = vunpack.c.l.b16 %v9329
  %v9914 = vunpack.c.l.b16 %v9330
  %v9915 = vunpack.c.l.b16 %v9331
  %v9916 = vunpack.c.l.b16 %v9332
  %v9917 = vunpack.c.l.b16 %v9333
  %v9918 = vunpack.c.l.b16 %v9334
  %v9919 = vunpack.c.l.b16 %v9335
  %v9920 = vunpack.c.l.b16 %v9336
  %v9921 = vunpack.c.l.b16 %v9337
  %v9922 = vunpack.c.l.b16 %v9338
  %v9923 = vunpack.c.l.b16 %v9339
  %v9924 = vunpack.c.l.b16 %v9340
  %v9925 = vunpack.c.l.b16 %v9341
  %v9926 = vunpack.c.l.b16 %v9342
  %v9927 = vunpack.c.l.b16 %v9343
  %v9928 = vunpack.c.l.b16 %v9344
  %v9929 = vunpack.c.l.b16 %v9345
  %v9930 = vunpack.c.l.b16 %v9346
  %v9931 = vunpack.c.l.b16 %v9347
  %v9932 = vunpack.c.l.b16 %v9348
  %v9933 = vunpack.c.l.b16 %v9349
  %v9934 = vunpack.c.l.b16 %v9350
  %v9935 = vunpack.c.l.b16 %v9351
  %v9936 = vunpack.c.l.b16 %v9352
  %v9937 = vunpack.c.l.b16 %v9353
  %v9938 = vunpack.c.l.b16 %v9354
  %v9939 = vunpack.c.l.b16 %v9355
  %v9940 = vunpack.c.l.b16 %v9356
  %v9941 = vunpack.c.l.b16 %v9357
  %v9942 = vunpack.c.l.b16 %v9358
  %v9943 = vunpack.c.l.b16 %v9359
  %v9944 = vunpack.c.l.b16 %v9360
  %v9945 = vunpack.c.l.b16 %v9361
  %v9946 = vunpack.c.l.b16 %v9362
  %v9947 = vunpack.c.l.b16 %v9363
  %v9948 = vunpack.c.l.b16 %v9364
  %v9949 = vunpack.c.l.b16 %v9365
  %v9950 = vunpack.c.l.b16 %v9366
  %v9951 = vunpack.c.l.b16 %v9367
  %v9952 = vunpack.c.l.b16 %v9368
  %v9953 = vunpack.c.l.b16 %v9369
  %v9954 = vunpack.c.l.b16 %v9370
  %v9955 = vunpack.c.l.b16 %v9371
  %v9956 = vunpack.c.l.b16 %v9372
  %v9957 = vunpack.c.l.b16 %v9373
  %v9958 = vunpack.c.l.b16 %v9374
  %v9959 = vunpack.c.l.b16 %v9375
  %v9960 = vunpack.c.l.b16 %v9376
  %v9961 = vunpack.c.l.b16 %v9377
  %v9962 = vunpack.c.l.b16 %v9378
  %v9963 = vunpack.c.l.b16 %v9379
  %v9964 = vunpack.c.l.b16 %v9380
  %v9965 = vunpack.c.l.b16 %v9381
  %v9966 = vunpack.c.l.b16 %v9382
  %v9967 = vunpack.c.l.b16 %v9383
  %v9968 = vunpack.c.l.b16 %v9384
  %v9969 = vunpack.c.l.b16 %v9385
  %v9970 = vunpack.c.l.b16 %v9386
  %v9971 = vunpack.c.l.b16 %v9387
  %v9972 = vunpack.c.l.b16 %v9388
  %v9973 = vunpack.c.l.b16 %v9389
  %v9974 = vunpack.c.l.b16 %v9390
  %v9975 = vunpack.c.l.b16 %v9391
  %v9976 = vunpack.c.l.b16 %v9392
  %v9977 = vunpack.c.l.b16 %v9393
  %v9978 = vunpack.c.l.b16 %v9394
  %v9979 = vunpack.c.l.b16 %v9395
  %v9980 = vunpack.c.l.b16 %v9396
  %v9981 = vunpack.c.l.b16 %v9397
  %v9982 = vunpack.c.l.b16 %v9398
  %v9983 = vunpack.c.l.b16 %v9399
  %v9984 = vunpack.c.l.b16 %v9400
  %v9985 = vunpack.c.l.b16 %v9401
  %v9986 = vunpack.c.l.b16 %v9402
  %v9987 = vunpack.c.l.b16 %v9403
  %v9988 = vunpack.c.l.b16 %v9404
  %v9989 = vunpack.c.l.b16 %v9405
  %v9990 = vunpack.c.l.b16 %v9406
  %v9991 = vunpack.c.l.b16 %v9407
  %v9992 = vunpack.c.l.b16 %v9408
  %v9993 = vunpack.c.l.b16 %v9409
  %v9994 = vunpack.c.l.b16 %v9410
  %v9995 = vunpack.c.l.b16 %v9411
  %v9996 = vunpack.c.l.b16 %v9412
  %v9997 = vunpack.c.l.b16 %v9413
  %v9998 = vunpack.c.l.b16 %v9414
  %v9999 = vunpack.c.l.b16 %v9415
  %v10000 = vunpack.c.l.b16 %v9416
  %v10001 = vunpack.c.l.b16 %v9417
  %v10002 = vunpack.c.l.b16 %v9418
  %v10003 = vunpack.c.l.b16 %v9419
  %v10004 = vunpack.c.l.b16 %v9420
  %v10005 = vunpack.c.l.b16 %v9421
  %v10006 = vunpack.c.l.b16 %v9422
  %v10007 = vunpack.c.l.b16 %v9423
  %v10008 = vunpack.c.l.b16 %v9424
  %v10009 = vunpack.c.l.b16 %v9425
  %v10010 = vunpack.c.l.b16 %v9426
  %v10011 = vunpack.c.l.b16 %v9427
  %v10012 = vunpack.c.l.b16 %v9428
  %v10013 = vunpack.c.l.b16 %v9429
  %v10014 = vunpack.c.l.b16 %v9430
  %v10015 = vunpack.c.l.b16 %v9431
  %v10016 = vunpack.c.l.b16 %v9432
  %v10017 = vunpack.c.l.b16 %v9433
  %v10018 = vunpack.c.l.b16 %v9434
  %v10019 = vunpack.c.l.b16 %v9435
  %v10020 = vunpack.c.l.b16 %v9436
  %v10021 = vunpack.c.l.b16 %v9437
  %v10022 = vunpack.c.l.b16 %v9438
  %v10023 = vunpack.c.l.b16 %v9439
  %v10024 = vunpack.c.l.b16 %v9440
  %v10025 = vunpack.c.l.b16 %v9441
  %v10026 = vunpack.c.l.b16 %v9442
  %v10027 = vunpack.c.l.b16 %v9443
  %v10028 = vunpack.c.l.b16 %v9444
  %v10029 = vunpack.c.l.b16 %v9445
  %v10030 = vunpack.c.l.b16 %v9446
  %v10031 = vunpack.c.l.b16 %v9447
  %v10032 = vunpack.c.l.b16 %v9448
  %v10033 = vunpack.c.l.b16 %v9449
  %v10034 = vunpack.c.l.b16 %v9450
  %v10035 = vunpack.c.l.b16 %v9451
  %v10036 = vunpack.c.l.b16 %v9452
  %v10037 = vunpack.c.l.b16 %v9453
  %v10038 = vunpack.c.l.b16 %v9454
  %v10039 = vunpack.c.l.b16 %v9455
  %v10040 = vunpack.c.l.b16 %v9456
  %v10041 = vunpack.c.l.b16 %v9457
  %v10042 = vunpack.c.l.b16 %v9458
  %v10043 = vunpack.c.l.b16 %v9459
  %v10044 = vunpack.c.l.b16 %v9460
  %v10045 = vunpack.c.l.b16 %v9461
  %v10046 = vunpack.c.l.b16 %v9462
  %v10047 = vunpack.c.l.b16 %v9463
  %v10048 = vunpack.c.l.b16 %v9464
  %v10049 = vunpack.c.l.b16 %v9465
  %v10050 = vunpack.c.l.b16 %v9466
  %v10051 = vunpack.c.l.b16 %v9467
  %v10052 = vunpack.c.l.b16 %v9468
  %v10053 = vunpack.c.l.b16 %v9469
  %v10054 = vunpack.c.l.b16 %v9470
  %v10055 = vunpack.c.l.b16 %v9471
  %v10056 = vunpack.c.l.b16 %v9472
  %v10057 = vunpack.c.l.b16 %v9473
  %v10058 = vunpack.c.l.b16 %v9474
  %v10059 = vunpack.c.l.b16 %v9475
  %v10060 = vunpack.c.l.b16 %v9476
  %v10061 = vunpack.c.l.b16 %v9477
  %v10062 = vunpack.c.l.b16 %v9478
  %v10063 = vunpack.c.l.b16 %v9479
  %v10064 = vunpack.c.l.b16 %v9480
  %v10065 = vunpack.c.l.b16 %v9481
  %v10066 = vunpack.c.l.b16 %v9482
  %v10067 = vunpack.c.l.b16 %v9483
  %v10068 = vunpack.c.l.b16 %v9484
  %v10069 = vunpack.c.l.b16 %v9485
  %v10070 = vunpack.c.l.b16 %v9486
  %v10071 = vunpack.c.l.b16 %v9487
  %v10072 = vunpack.c.l.b16 %v9488
  %v10073 = vunpack.c.l.b16 %v9489
  %v10074 = vunpack.c.l.b16 %v9490
  %v10075 = vunpack.c.l.b16 %v9491
  %v10076 = vunpack.c.l.b16 %v9492
  %v10077 = vunpack.c.l.b16 %v9493
  %v10078 = vunpack.c.l.b16 %v9494
  %v10079 = vunpack.c.l.b16 %v9495
  %v10080 = vunpack.c.l.b16 %v9496
  %v10081 = vunpack.c.l.b16 %v9497
  %v10082 = vunpack.c.l.b16 %v9498
  %v10083 = vunpack.c.l.b16 %v9499
  %v10084 = vunpack.c.l.b16 %v9500
  %v10085 = vunpack.c.l.b16 %v9501
  %v10086 = vunpack.c.l.b16 %v9502
  %v10087 = vunpack.c.l.b16 %v9503
  %v10088 = vunpack.c.l.b16 %v9504
  %v10089 = vunpack.c.l.b16 %v9505
  %v10090 = vunpack.c.l.b16 %v9506
  %v10091 = vunpack.c.l.b16 %v9507
  %v10092 = vunpack.c.l.b16 %v9508
  %v10093 = vunpack.c.l.b16 %v9509
  %v10094 = vunpack.c.l.b16 %v9510
  %v10095 = vunpack.c.l.b16 %v9511
  %v10096 = vunpack.c.l.b16 %v9512
  %v10097 = vunpack.c.l.b16 %v9513
  %v10098 = vunpack.c.l.b16 %v9514
  %v10099 = vunpack.c.l.b16 %v9515
  %v10100 = vunpack.c.l.b16 %v9516
  %v10101 = vunpack.c.l.b16 %v9517
  %v10102 = vunpack.c.l.b16 %v9518
  %v10103 = vunpack.c.l.b16 %v9519
  %v10104 = vunpack.c.l.b16 %v9520
  %v10105 = vunpack.c.l.b16 %v9521
  %v10106 = vunpack.c.l.b16 %v9522
  %v10107 = vunpack.c.l.b16 %v9523
  %v10108 = vunpack.c.l.b16 %v9524
  %v10109 = vunpack.c.l.b16 %v9525
  %v10110 = vunpack.c.l.b16 %v9526
  %v10111 = vunpack.c.l.b16 %v9527
  %v10112 = vunpack.c.l.b16 %v9528
  %v10113 = vunpack.c.l.b16 %v9529
  %v10114 = vunpack.c.l.b16 %v9530
  %v10115 = vunpack.c.l.b16 %v9531
  %v10116 = vunpack.c.l.b16 %v9532
  %v10117 = vunpack.c.l.b16 %v9533
  %v10118 = vunpack.c.l.b16 %v9534
  %v10119 = vunpack.c.l.b16 %v9535
  %v10120 = vunpack.c.l.b16 %v9536
  %v10121 = vunpack.c.l.b16 %v9537
  %v10122 = vunpack.c.l.b16 %v9538
  %v10123 = vunpack.c.l.b16 %v9539
  %v10124 = vunpack.c.l.b16 %v9540
  %v10125 = vunpack.c.l.b16 %v9541
  %v10126 = vunpack.c.l.b16 %v9542
  %v10127 = vunpack.c.l.b16 %v9543
  %v10128 = vunpack.c.l.b16 %v9544
  %v10129 = vunpack.c.l.b16 %v9545
  %v10130 = vunpack.c.l.b16 %v9546
  %v10131 = vunpack.c.l.b16 %v9547
  %v10132 = vunpack.c.l.b16 %v9548
  %v10133 = vunpack.c.l.b16 %v9549
  %v10134 = vunpack.c.l.b16 %v9550
  %v10135 = vunpack.c.l.b16 %v9551
  %v10136 = vunpack.c.l.b16 %v9552
  %v10137 = vunpack.c.l.b16 %v9553
  %v10138 = vunpack.c.l.b16 %v9554
  %v10139 = vunpack.c.l.b16 %v9555
  %v10140 = vunpack.c.l.b16 %v9556
  %v10141 = vunpack.c.l.b16 %v9557
  %v10142 = vpack.c.b16 %v9887, %v9886
  %v10143 = vpack.c.b16 %v9889, %v9888
  %v10144 = vpack.c.b16 %v9891, %v9890
  %v10145 = vpack.c.b16 %v9893, %v9892
  %v10146 = vpack.c.b16 %v9895, %v9894
  %v10147 = vpack.c.b16 %v9897, %v9896
  %v10148 = vpack.c.b16 %v9899, %v9898
  %v10149 = vpack.c.b16 %v9901, %v9900
  %v10150 = vpack.c.b16 %v9903, %v9902
  %v10151 = vpack.c.b16 %v9905, %v9904
  %v10152 = vpack.c.b16 %v9907, %v9906
  %v10153 = vpack.c.b16 %v9909, %v9908
  %v10154 = vpack.c.b16 %v9911, %v9910
  %v10155 = vpack.c.b16 %v9913, %v9912
  %v10156 = vpack.c.b16 %v9915, %v9914
  %v10157 = vpack.c.b16 %v9917, %v9916
  %v10158 = vpack.c.b16 %v9919, %v9918
  %v10159 = vpack.c.b16 %v9921, %v9920
  %v10160 = vpack.c.b16 %v9923, %v9922
  %v10161 = vpack.c.b16 %v9925, %v9924
  %v10162 = vpack.c.b16 %v9927, %v9926
  %v10163 = vpack.c.b16 %v9929, %v9928
  %v10164 = vpack.c.b16 %v9931, %v9930
  %v10165 = vpack.c.b16 %v9933, %v9932
  %v10166 = vpack.c.b16 %v9935, %v9934
  %v10167 = vpack.c.b16 %v9937, %v9936
  %v10168 = vpack.c.b16 %v9939, %v9938
  %v10169 = vpack.c.b16 %v9941, %v9940
  %v10170 = vpack.c.b16 %v9943, %v9942
  %v10171 = vpack.c.b16 %v9945, %v9944
  %v10172 = vpack.c.b16 %v9947, %v9946
  %v10173 = vpack.c.b16 %v9949, %v9948
  %v10174 = vpack.c.b16 %v9951, %v9950
  %v10175 = vpack.c.b16 %v9953, %v9952
  %v10176 = vpack.c.b16 %v9955, %v9954
  %v10177 = vpack.c.b16 %v9957, %v9956
  %v10178 = vpack.c.b16 %v9959, %v9958
  %v10179 = vpack.c.b16 %v9961, %v9960
  %v10180 = vpack.c.b16 %v9963, %v9962
  %v10181 = vpack.c.b16 %v9965, %v9964
  %v10182 = vpack.c.b16 %v9967, %v9966
  %v10183 = vpack.c.b16 %v9969, %v9968
  %v10184 = vpack.c.b16 %v9971, %v9970
  %v10185 = vpack.c.b16 %v9973, %v9972
  %v10186 = vpack.c.b16 %v9975, %v9974
  %v10187 = vpack.c.b16 %v9977, %v9976
  %v10188 = vpack.c.b16 %v9979, %v9978
  %v10189 = vpack.c.b16 %v9981, %v9980
  %v10190 = vpack.c.b16 %v9983, %v9982
  %v10191 = vpack.c.b16 %v9985, %v9984
  %v10192 = vpack.c.b16 %v9987, %v9986
  %v10193 = vpack.c.b16 %v9989, %v9988
  %v10194 = vpack.c.b16 %v9991, %v9990
  %v10195 = vpack.c.b16 %v9993, %v9992
  %v10196 = vpack.c.b16 %v9995, %v9994
  %v10197 = vpack.c.b16 %v9997, %v9996
  %v10198 = vpack.c.b16 %v9999, %v9998
  %v10199 = vpack.c.b16 %v10001, %v10000
  %v10200 = vpack.c.b16 %v10003, %v10002
  %v10201 = vpack.c.b16 %v10005, %v10004
  %v10202 = vpack.c.b16 %v10007, %v10006
  %v10203 = vpack.c.b16 %v10009, %v10008
  %v10204 = vpack.c.b16 %v10011, %v10010
  %v10205 = vpack.c.b16 %v10013, %v10012
  %v10206 = vpack.c.b16 %v10015, %v10014
  %v10207 = vpack.c.b16 %v10017, %v10016
  %v10208 = vpack.c.b16 %v10019, %v10018
  %v10209 = vpack.c.b16 %v10021, %v10020
  %v10210 = vpack.c.b16 %v10023, %v10022
  %v10211 = vpack.c.b16 %v10025, %v10024
  %v10212 = vpack.c.b16 %v10027, %v10026
  %v10213 = vpack.c.b16 %v10029, %v10028
  %v10214 = vpack.c.b16 %v10031, %v10030
  %v10215 = vpack.c.b16 %v10033, %v10032
  %v10216 = vpack.c.b16 %v10035, %v10034
  %v10217 = vpack.c.b16 %v10037, %v10036
  %v10218 = vpack.c.b16 %v10039, %v10038
  %v10219 = vpack.c.b16 %v10041, %v10040
  %v10220 = vpack.c.b16 %v10043, %v10042
  %v10221 = vpack.c.b16 %v10045, %v10044
  %v10222 = vpack.c.b16 %v10047, %v10046
  %v10223 = vpack.c.b16 %v10049, %v10048
  %v10224 = vpack.c.b16 %v10051, %v10050
  %v10225 = vpack.c.b16 %v10053, %v10052
  %v10226 = vpack.c.b16 %v10055, %v10054
  %v10227 = vpack.c.b16 %v10057, %v10056
  %v10228 = vpack.c.b16 %v10059, %v10058
  %v10229 = vpack.c.b16 %v10061, %v10060
  %v10230 = vpack.c.b16 %v10063, %v10062
  %v10231 = vpack.c.b16 %v10065, %v10064
  %v10232 = vpack.c.b16 %v10067, %v10066
  %v10233 = vpack.c.b16 %v10069, %v10068
  %v10234 = vpack.c.b16 %v10071, %v10070
  %v10235 = vpack.c.b16 %v10073, %v10072
  %v10236 = vpack.c.b16 %v10075, %v10074
  %v10237 = vpack.c.b16 %v10077, %v10076
  %v10238 = vpack.c.b16 %v10079, %v10078
  %v10239 = vpack.c.b16 %v10081, %v10080
  %v10240 = vpack.c.b16 %v10083, %v10082
  %v10241 = vpack.c.b16 %v10085, %v10084
  %v10242 = vpack.c.b16 %v10087, %v10086
  %v10243 = vpack.c.b16 %v10089, %v10088
  %v10244 = vpack.c.b16 %v10091, %v10090
  %v10245 = vpack.c.b16 %v10093, %v10092
  %v10246 = vpack.c.b16 %v10095, %v10094
  %v10247 = vpack.c.b16 %v10097, %v10096
  %v10248 = vpack.c.b16 %v10099, %v10098
  %v10249 = vpack.c.b16 %v10101, %v10100
  %v10250 = vpack.c.b16 %v10103, %v10102
  %v10251 = vpack.c.b16 %v10105, %v10104
  %v10252 = vpack.c.b16 %v10107, %v10106
  %v10253 = vpack.c.b16 %v10109, %v10108
  %v10254 = vpack.c.b16 %v10111, %v10110
  %v10255 = vpack.c.b16 %v10113, %v10112
  %v10256 = vpack.c.b16 %v10115, %v10114
  %v10257 = vpack.c.b16 %v10117, %v10116
  %v10258 = vpack.c.b16 %v10119, %v10118
  %v10259 = vpack.c.b16 %v10121, %v10120
  %v10260 = vpack.c.b16 %v10123, %v10122
  %v10261 = vpack.c.b16 %v10125, %v10124
  %v10262 = vpack.c.b16 %v10127, %v10126
  %v10263 = vpack.c.b16 %v10129, %v10128
  %v10264 = vpack.c.b16 %v10131, %v10130
  %v10265 = vpack.c.b16 %v10133, %v10132
  %v10266 = vpack.c.b16 %v10135, %v10134
  %v10267 = vpack.c.b16 %v10137, %v10136
  %v10268 = vpack.c.b16 %v10139, %v10138
  %v10269 = vpack.c.b16 %v10141, %v10140
  %10398 = vmatpush.bf16.msra.mxu0 %v10149
  %10399 = vmatpush.bf16.msra.mxu0 %v10148
  %10400 = vmatpush.bf16.msra.mxu0 %v10147
  %10401 = vmatpush.bf16.msra.mxu0 %v10146
  %10402 = vmatpush.bf16.msra.mxu0 %v10145
  %10403 = vmatpush.bf16.msra.mxu0 %v10144
  %10404 = vmatpush.bf16.msra.mxu0 %v10143
  %10405 = vmatpush.bf16.msra.mxu0 %v10142
  %10406 = vmatmul.bf16.gmra.mxu0 %v9598
  %v10407 = vpop.f32.mrf.mxu0
  %v10408 = vadd.f32 0.0, %v10407
  %v10409 = vpop.f32.mrf.mxu0
  %10410 = vdwg.mxu0
  %10411 = vmatpush.bf16.msra.mxu0 %v10157
  %10412 = vmatpush.bf16.msra.mxu0 %v10156
  %10413 = vmatpush.bf16.msra.mxu0 %v10155
  %10414 = vmatpush.bf16.msra.mxu0 %v10154
  %10415 = vmatpush.bf16.msra.mxu0 %v10153
  %10416 = vmatpush.bf16.msra.mxu0 %v10152
  %10417 = vmatpush.bf16.msra.mxu0 %v10151
  %10418 = vmatpush.bf16.msra.mxu0 %v10150
  %10419 = vmatmul.bf16.gmra.mxu0 %v9599
  %v10420 = vpop.f32.mrf.mxu0
  %v10421 = vadd.f32 %v10408, %v10420
  %v10422 = vpop.f32.mrf.mxu0
  %10423 = vdwg.mxu0
  %10424 = vmatpush.bf16.msra.mxu0 %v10165
  %10425 = vmatpush.bf16.msra.mxu0 %v10164
  %10426 = vmatpush.bf16.msra.mxu0 %v10163
  %10427 = vmatpush.bf16.msra.mxu0 %v10162
  %10428 = vmatpush.bf16.msra.mxu0 %v10161
  %10429 = vmatpush.bf16.msra.mxu0 %v10160
  %10430 = vmatpush.bf16.msra.mxu0 %v10159
  %10431 = vmatpush.bf16.msra.mxu0 %v10158
  %10432 = vmatmul.bf16.gmra.mxu0 %v9600
  %v10433 = vpop.f32.mrf.mxu0
  %v10434 = vadd.f32 %v10421, %v10433
  %v10435 = vpop.f32.mrf.mxu0
  %10436 = vdwg.mxu0
  %10437 = vmatpush.bf16.msra.mxu0 %v10173
  %10438 = vmatpush.bf16.msra.mxu0 %v10172
  %10439 = vmatpush.bf16.msra.mxu0 %v10171
  %10440 = vmatpush.bf16.msra.mxu0 %v10170
  %10441 = vmatpush.bf16.msra.mxu0 %v10169
  %10442 = vmatpush.bf16.msra.mxu0 %v10168
  %10443 = vmatpush.bf16.msra.mxu0 %v10167
  %10444 = vmatpush.bf16.msra.mxu0 %v10166
  %10445 = vmatmul.bf16.gmra.mxu0 %v9601
  %v10446 = vpop.f32.mrf.mxu0
  %v10447 = vadd.f32 %v10434, %v10446
  %v10448 = vpop.f32.mrf.mxu0
  %10449 = vdwg.mxu0
  %10450 = vmatpush.bf16.msra.mxu0 %v10181
  %10451 = vmatpush.bf16.msra.mxu0 %v10180
  %10452 = vmatpush.bf16.msra.mxu0 %v10179
  %10453 = vmatpush.bf16.msra.mxu0 %v10178
  %10454 = vmatpush.bf16.msra.mxu0 %v10177
  %10455 = vmatpush.bf16.msra.mxu0 %v10176
  %10456 = vmatpush.bf16.msra.mxu0 %v10175
  %10457 = vmatpush.bf16.msra.mxu0 %v10174
  %10458 = vmatmul.bf16.gmra.mxu0 %v9602
  %v10459 = vpop.f32.mrf.mxu0
  %v10460 = vadd.f32 %v10447, %v10459
  %v10461 = vpop.f32.mrf.mxu0
  %10462 = vdwg.mxu0
  %10463 = vmatpush.bf16.msra.mxu0 %v10189
  %10464 = vmatpush.bf16.msra.mxu0 %v10188
  %10465 = vmatpush.bf16.msra.mxu0 %v10187
  %10466 = vmatpush.bf16.msra.mxu0 %v10186
  %10467 = vmatpush.bf16.msra.mxu0 %v10185
  %10468 = vmatpush.bf16.msra.mxu0 %v10184
  %10469 = vmatpush.bf16.msra.mxu0 %v10183
  %10470 = vmatpush.bf16.msra.mxu0 %v10182
  %10471 = vmatmul.bf16.gmra.mxu0 %v9603
  %v10472 = vpop.f32.mrf.mxu0
  %v10473 = vadd.f32 %v10460, %v10472
  %v10474 = vpop.f32.mrf.mxu0
  %10475 = vdwg.mxu0
  %10476 = vmatpush.bf16.msra.mxu0 %v10197
  %10477 = vmatpush.bf16.msra.mxu0 %v10196
  %10478 = vmatpush.bf16.msra.mxu0 %v10195
  %10479 = vmatpush.bf16.msra.mxu0 %v10194
  %10480 = vmatpush.bf16.msra.mxu0 %v10193
  %10481 = vmatpush.bf16.msra.mxu0 %v10192
  %10482 = vmatpush.bf16.msra.mxu0 %v10191
  %10483 = vmatpush.bf16.msra.mxu0 %v10190
  %10484 = vmatmul.bf16.gmra.mxu0 %v9604
  %v10485 = vpop.f32.mrf.mxu0
  %v10486 = vadd.f32 %v10473, %v10485
  %v10487 = vpop.f32.mrf.mxu0
  %10488 = vdwg.mxu0
  %10489 = vmatpush.bf16.msra.mxu0 %v10205
  %10490 = vmatpush.bf16.msra.mxu0 %v10204
  %10491 = vmatpush.bf16.msra.mxu0 %v10203
  %10492 = vmatpush.bf16.msra.mxu0 %v10202
  %10493 = vmatpush.bf16.msra.mxu0 %v10201
  %10494 = vmatpush.bf16.msra.mxu0 %v10200
  %10495 = vmatpush.bf16.msra.mxu0 %v10199
  %10496 = vmatpush.bf16.msra.mxu0 %v10198
  %10497 = vmatmul.bf16.gmra.mxu0 %v9605
  %v10498 = vpop.f32.mrf.mxu0
  %v10499 = vadd.f32 %v10486, %v10498
  %v10500 = vpop.f32.mrf.mxu0
  %10501 = vdwg.mxu0
  %10502 = vmatpush.bf16.msra.mxu0 %v10213
  %10503 = vmatpush.bf16.msra.mxu0 %v10212
  %10504 = vmatpush.bf16.msra.mxu0 %v10211
  %10505 = vmatpush.bf16.msra.mxu0 %v10210
  %10506 = vmatpush.bf16.msra.mxu0 %v10209
  %10507 = vmatpush.bf16.msra.mxu0 %v10208
  %10508 = vmatpush.bf16.msra.mxu0 %v10207
  %10509 = vmatpush.bf16.msra.mxu0 %v10206
  %10510 = vmatmul.bf16.gmra.mxu0 %v9606
  %v10511 = vpop.f32.mrf.mxu0
  %v10512 = vadd.f32 %v10499, %v10511
  %v10513 = vpop.f32.mrf.mxu0
  %10514 = vdwg.mxu0
  %10515 = vmatpush.bf16.msra.mxu0 %v10221
  %10516 = vmatpush.bf16.msra.mxu0 %v10220
  %10517 = vmatpush.bf16.msra.mxu0 %v10219
  %10518 = vmatpush.bf16.msra.mxu0 %v10218
  %10519 = vmatpush.bf16.msra.mxu0 %v10217
  %10520 = vmatpush.bf16.msra.mxu0 %v10216
  %10521 = vmatpush.bf16.msra.mxu0 %v10215
  %10522 = vmatpush.bf16.msra.mxu0 %v10214
  %10523 = vmatmul.bf16.gmra.mxu0 %v9607
  %v10524 = vpop.f32.mrf.mxu0
  %v10525 = vadd.f32 %v10512, %v10524
  %v10526 = vpop.f32.mrf.mxu0
  %10527 = vdwg.mxu0
  %10528 = vmatpush.bf16.msra.mxu0 %v10229
  %10529 = vmatpush.bf16.msra.mxu0 %v10228
  %10530 = vmatpush.bf16.msra.mxu0 %v10227
  %10531 = vmatpush.bf16.msra.mxu0 %v10226
  %10532 = vmatpush.bf16.msra.mxu0 %v10225
  %10533 = vmatpush.bf16.msra.mxu0 %v10224
  %10534 = vmatpush.bf16.msra.mxu0 %v10223
  %10535 = vmatpush.bf16.msra.mxu0 %v10222
  %10536 = vmatmul.bf16.gmra.mxu0 %v9608
  %v10537 = vpop.f32.mrf.mxu0
  %v10538 = vadd.f32 %v10525, %v10537
  %v10539 = vpop.f32.mrf.mxu0
  %10540 = vdwg.mxu0
  %10541 = vmatpush.bf16.msra.mxu0 %v10237
  %10542 = vmatpush.bf16.msra.mxu0 %v10236
  %10543 = vmatpush.bf16.msra.mxu0 %v10235
  %10544 = vmatpush.bf16.msra.mxu0 %v10234
  %10545 = vmatpush.bf16.msra.mxu0 %v10233
  %10546 = vmatpush.bf16.msra.mxu0 %v10232
  %10547 = vmatpush.bf16.msra.mxu0 %v10231
  %10548 = vmatpush.bf16.msra.mxu0 %v10230
  %10549 = vmatmul.bf16.gmra.mxu0 %v9609
  %v10550 = vpop.f32.mrf.mxu0
  %v10551 = vadd.f32 %v10538, %v10550
  %v10552 = vpop.f32.mrf.mxu0
  %10553 = vdwg.mxu0
  %10554 = vmatpush.bf16.msra.mxu0 %v10245
  %10555 = vmatpush.bf16.msra.mxu0 %v10244
  %10556 = vmatpush.bf16.msra.mxu0 %v10243
  %10557 = vmatpush.bf16.msra.mxu0 %v10242
  %10558 = vmatpush.bf16.msra.mxu0 %v10241
  %10559 = vmatpush.bf16.msra.mxu0 %v10240
  %10560 = vmatpush.bf16.msra.mxu0 %v10239
  %10561 = vmatpush.bf16.msra.mxu0 %v10238
  %10562 = vmatmul.bf16.gmra.mxu0 %v9610
  %v10563 = vpop.f32.mrf.mxu0
  %v10564 = vadd.f32 %v10551, %v10563
  %v10565 = vpop.f32.mrf.mxu0
  %10566 = vdwg.mxu0
  %10567 = vmatpush.bf16.msra.mxu0 %v10253
  %10568 = vmatpush.bf16.msra.mxu0 %v10252
  %10569 = vmatpush.bf16.msra.mxu0 %v10251
  %10570 = vmatpush.bf16.msra.mxu0 %v10250
  %10571 = vmatpush.bf16.msra.mxu0 %v10249
  %10572 = vmatpush.bf16.msra.mxu0 %v10248
  %10573 = vmatpush.bf16.msra.mxu0 %v10247
  %10574 = vmatpush.bf16.msra.mxu0 %v10246
  %10575 = vmatmul.bf16.gmra.mxu0 %v9611
  %v10576 = vpop.f32.mrf.mxu0
  %v10577 = vadd.f32 %v10564, %v10576
  %v10578 = vpop.f32.mrf.mxu0
  %10579 = vdwg.mxu0
  %10580 = vmatpush.bf16.msra.mxu0 %v10261
  %10581 = vmatpush.bf16.msra.mxu0 %v10260
  %10582 = vmatpush.bf16.msra.mxu0 %v10259
  %10583 = vmatpush.bf16.msra.mxu0 %v10258
  %10584 = vmatpush.bf16.msra.mxu0 %v10257
  %10585 = vmatpush.bf16.msra.mxu0 %v10256
  %10586 = vmatpush.bf16.msra.mxu0 %v10255
  %10587 = vmatpush.bf16.msra.mxu0 %v10254
  %10588 = vmatmul.bf16.gmra.mxu0 %v9612
  %v10589 = vpop.f32.mrf.mxu0
  %v10590 = vadd.f32 %v10577, %v10589
  %v10591 = vpop.f32.mrf.mxu0
  %10592 = vdwg.mxu0
  %10593 = vmatpush.bf16.msra.mxu0 %v10269
  %10594 = vmatpush.bf16.msra.mxu0 %v10268
  %10595 = vmatpush.bf16.msra.mxu0 %v10267
  %10596 = vmatpush.bf16.msra.mxu0 %v10266
  %10597 = vmatpush.bf16.msra.mxu0 %v10265
  %10598 = vmatpush.bf16.msra.mxu0 %v10264
  %10599 = vmatpush.bf16.msra.mxu0 %v10263
  %10600 = vmatpush.bf16.msra.mxu0 %v10262
  %10601 = vmatmul.bf16.gmra.mxu0 %v9613
  %v10602 = vpop.f32.mrf.mxu0
  %v10603 = vadd.f32 %v10590, %v10602
  %v10604 = vpop.f32.mrf.mxu0
  %10605 = vdwg.mxu0
  %10607 = vrot.lane.b32.xlu0 %v10603, 64
  %v10608 = vpop.permute.xlu0 %10607
  %10610 = vst.msk [vmem:[#allocation2 + $0xc] sm:$0xf] %vm2665, %v10608
  %v10611 = vsel %vm1330, %v10603, 0.0
  %v10612 = vrot.slane %v10611, 4
  %v10613 = vadd.f32 %v10611, %v10612
  %v10614 = vrot.slane %v10613, 2
  %v10615 = vadd.f32 %v10613, %v10614
  %v10616 = vrot.slane %v10615, 1
  %v10617 = vadd.f32 %v10615, %v10616
  %v10618 = vadd.f32 %v9284, %v10617
  %v10619 = vmul.f32 %v10603, %v10603
  %v10620 = vsel %vm1330, %v10619, 0.0
  %v10621 = vrot.slane %v10620, 4
  %v10622 = vadd.f32 %v10620, %v10621
  %v10623 = vrot.slane %v10622, 2
  %v10624 = vadd.f32 %v10622, %v10623
  %v10625 = vrot.slane %v10624, 1
  %v10626 = vadd.f32 %v10624, %v10625
  %v10627 = vadd.f32 %v9293, %v10626
  %v10628 = vrcp.pop 32.0
  %v10629 = vmul.f32 32.0, %v10628
  %v10630 = vsub.f32 1.0, %v10629
  %v10631 = vmul.f32 %v10628, %v10630
  %v10632 = vadd.f32 %v10628, %v10631
  %vm10633 = vweird.f32 %v10628
  %v10634 = vsel %vm10633, %v10628, %v10632
  %v10635 = vmul.f32 %v10618, %v10634
  %v10636 = vmul.f32 %v10627, %v10634
  %v10637 = vmul.f32 %v10635, %v10635
  %v10638 = vsub.f32 %v10636, %v10637
  %v10639 = vmax.f32 %v10638, 0.0
  %v10640 = vld [vmem:[%s2] sm:$0x1]
  %v10641 = vadd.f32 %v10639, 1e-05
  %v10642 = vrsqrt.pop %v10641
  %v10643 = vmul.f32 %v10642, %v10641
  %v10644 = vmul.f32 %v10643, %v10642
  %v10645 = vmul.f32 0.5, %v10644
  %v10646 = vsub.f32 1.5, %v10645
  %v10647 = vmul.f32 %v10642, %v10646
  %vm10648 = vweird.f32 %v10641
  %vm10649 = vweird.f32 %v10642
  %vm10650 = vmor %vm10648, %vm10649
  %v10651 = vsel %vm10650, %v10642, %v10647
  %v10652 = vmul.f32 %v10640, %v10651
  %v10653 = vld [vmem:[%s3] sm:$0x1]
  %v10654 = vmul.f32 %v10635, %v10652
  %v10655 = vsub.f32 %v10653, %v10654
  %v10656 = vld [vmem:[#allocation2] sm:$0xf]
  %v10658 = vperm.slane %v10652, 0
  %v10660 = vmul.f32 %v10656, %v10658
  %v10662 = vperm.slane %v10655, 0
  %v10664 = vadd.f32 %v10660, %v10662
  %vm10665 = vcmp.ge.f32.partialorder %v10664, 0.0
  %v10666 = vmul.f32 %v10664, 0.2
  %v10667 = vsel %vm10665, %v10664, %v10666
  %v10668 = vpack.c.bf16 %v10667, %v10667
  %vm10669 = vcmask 517120
  %10670 = vst.msk [vmem:[#allocation3] sm:$0x3] %vm10669, %v10668
  %v10671 = vld [vmem:[#allocation2] sm:$0xf]
  %10672 = vrot.lane.b32.xlu0 %v10658, 64
  %v10673 = vpop.permute.xlu0 %10672
  %v10675 = vmul.f32 %v10671, %v10673
  %10676 = vrot.lane.b32.xlu0 %v10662, 64
  %v10677 = vpop.permute.xlu0 %10676
  %v10679 = vadd.f32 %v10675, %v10677
  %vm10680 = vcmp.ge.f32.partialorder %v10679, 0.0
  %v10681 = vmul.f32 %v10679, 0.2
  %v10682 = vsel %vm10680, %v10679, %v10681
  %v10683 = vpack.c.bf16 %v10682, %v10682
  %vm10684 = vcmask 1041920
  %10685 = vst.msk [vmem:[#allocation3] sm:$0x3] %vm10684, %v10683
  %v10686 = vld [vmem:[#allocation2 + $0x4] sm:$0xf]
  %v10687 = vmul.f32 %v10686, %v10658
  %v10688 = vadd.f32 %v10687, %v10662
  %vm10689 = vcmp.ge.f32.partialorder %v10688, 0.0
  %v10690 = vmul.f32 %v10688, 0.2
  %v10691 = vsel %vm10689, %v10688, %v10690
  %v10692 = vpack.c.bf16 %v10691, %v10691
  %10693 = vst.msk [vmem:[#allocation3 + $0x2] sm:$0x3] %vm10669, %v10692
  %v10694 = vld [vmem:[#allocation2 + $0x4] sm:$0xf]
  %v10695 = vmul.f32 %v10694, %v10673
  %v10696 = vadd.f32 %v10695, %v10677
  %vm10697 = vcmp.ge.f32.partialorder %v10696, 0.0
  %v10698 = vmul.f32 %v10696, 0.2
  %v10699 = vsel %vm10697, %v10696, %v10698
  %v10700 = vpack.c.bf16 %v10699, %v10699
  %10701 = vst.msk [vmem:[#allocation3 + $0x2] sm:$0x3] %vm10684, %v10700
  %v10702 = vld [vmem:[#allocation2 + $0x8] sm:$0xf]
  %v10703 = vmul.f32 %v10702, %v10658
  %v10704 = vadd.f32 %v10703, %v10662
  %vm10705 = vcmp.ge.f32.partialorder %v10704, 0.0
  %v10706 = vmul.f32 %v10704, 0.2
  %v10707 = vsel %vm10705, %v10704, %v10706
  %v10708 = vpack.c.bf16 %v10707, %v10707
  %10709 = vst.msk [vmem:[#allocation3 + $0x4] sm:$0x3] %vm10669, %v10708
  %v10710 = vld [vmem:[#allocation2 + $0x8] sm:$0xf]
  %v10711 = vmul.f32 %v10710, %v10673
  %v10712 = vadd.f32 %v10711, %v10677
  %vm10713 = vcmp.ge.f32.partialorder %v10712, 0.0
  %v10714 = vmul.f32 %v10712, 0.2
  %v10715 = vsel %vm10713, %v10712, %v10714
  %v10716 = vpack.c.bf16 %v10715, %v10715
  %10717 = vst.msk [vmem:[#allocation3 + $0x4] sm:$0x3] %vm10684, %v10716
  %v10718 = vld [vmem:[#allocation2 + $0xc] sm:$0xf]
  %v10719 = vmul.f32 %v10718, %v10658
  %v10720 = vadd.f32 %v10719, %v10662
  %vm10721 = vcmp.ge.f32.partialorder %v10720, 0.0
  %v10722 = vmul.f32 %v10720, 0.2
  %v10723 = vsel %vm10721, %v10720, %v10722
  %v10724 = vpack.c.bf16 %v10723, %v10723
  %10725 = vst.msk [vmem:[#allocation3 + $0x6] sm:$0x3] %vm10669, %v10724
  %v10726 = vld [vmem:[#allocation2 + $0xc] sm:$0xf]
  %v10727 = vmul.f32 %v10726, %v10673
  %v10728 = vadd.f32 %v10727, %v10677
  %vm10729 = vcmp.ge.f32.partialorder %v10728, 0.0
  %v10730 = vmul.f32 %v10728, 0.2
  %v10731 = vsel %vm10729, %v10728, %v10730
  %v10732 = vpack.c.bf16 %v10731, %v10731
  %10733 = vst.msk [vmem:[#allocation3 + $0x6] sm:$0x3] %vm10684, %v10732
  %v10734 = vld [vmem:[#allocation3] sm:$0xff]
  %v10735 = vld [vmem:[%s4] sm:$0xf]
  %v10736 = vld [vmem:[%s4 + $0x4] sm:$0xf]
  %v10737 = vld [vmem:[%s4 + $0x8] sm:$0xf]
  %v10738 = vld [vmem:[%s4 + $0xc] sm:$0xf]
  %v10739 = vld [vmem:[%s4 + $0x10] sm:$0xf]
  %v10740 = vld [vmem:[%s4 + $0x14] sm:$0xf]
  %v10741 = vld [vmem:[%s4 + $0x18] sm:$0xf]
  %v10742 = vld [vmem:[%s4 + $0x1c] sm:$0xf]
  %v10743 = vld [vmem:[%s4 + $0x20] sm:$0xf]
  %v10744 = vld [vmem:[%s4 + $0x24] sm:$0xf]
  %v10745 = vld [vmem:[%s4 + $0x28] sm:$0xf]
  %v10746 = vld [vmem:[%s4 + $0x2c] sm:$0xf]
  %v10747 = vld [vmem:[%s4 + $0x30] sm:$0xf]
  %v10748 = vld [vmem:[%s4 + $0x34] sm:$0xf]
  %v10749 = vld [vmem:[%s4 + $0x38] sm:$0xf]
  %v10750 = vld [vmem:[%s4 + $0x3c] sm:$0xf]
  %v10751 = vld [vmem:[%s4 + $0x40] sm:$0xf]
  %v10752 = vld [vmem:[%s4 + $0x44] sm:$0xf]
  %v10753 = vld [vmem:[%s4 + $0x48] sm:$0xf]
  %v10754 = vld [vmem:[%s4 + $0x4c] sm:$0xf]
  %v10755 = vld [vmem:[%s4 + $0x50] sm:$0xf]
  %v10756 = vld [vmem:[%s4 + $0x54] sm:$0xf]
  %v10757 = vld [vmem:[%s4 + $0x58] sm:$0xf]
  %v10758 = vld [vmem:[%s4 + $0x5c] sm:$0xf]
  %v10759 = vld [vmem:[%s4 + $0x60] sm:$0xf]
  %v10760 = vld [vmem:[%s4 + $0x64] sm:$0xf]
  %v10761 = vld [vmem:[%s4 + $0x68] sm:$0xf]
  %v10762 = vld [vmem:[%s4 + $0x6c] sm:$0xf]
  %v10763 = vld [vmem:[%s4 + $0x70] sm:$0xf]
  %v10764 = vld [vmem:[%s4 + $0x74] sm:$0xf]
  %v10765 = vld [vmem:[%s4 + $0x78] sm:$0xf]
  %v10766 = vld [vmem:[%s4 + $0x7c] sm:$0xf]
  %v10767 = vld [vmem:[%s4 + $0x80] sm:$0xf]
  %v10768 = vld [vmem:[%s4 + $0x84] sm:$0xf]
  %v10769 = vld [vmem:[%s4 + $0x88] sm:$0xf]
  %v10770 = vld [vmem:[%s4 + $0x8c] sm:$0xf]
  %v10771 = vld [vmem:[%s4 + $0x90] sm:$0xf]
  %v10772 = vld [vmem:[%s4 + $0x94] sm:$0xf]
  %v10773 = vld [vmem:[%s4 + $0x98] sm:$0xf]
  %v10774 = vld [vmem:[%s4 + $0x9c] sm:$0xf]
  %v10775 = vld [vmem:[%s4 + $0xa0] sm:$0xf]
  %v10776 = vld [vmem:[%s4 + $0xa4] sm:$0xf]
  %v10777 = vld [vmem:[%s4 + $0xa8] sm:$0xf]
  %v10778 = vld [vmem:[%s4 + $0xac] sm:$0xf]
  %v10779 = vld [vmem:[%s4 + $0xb0] sm:$0xf]
  %v10780 = vld [vmem:[%s4 + $0xb4] sm:$0xf]
  %v10781 = vld [vmem:[%s4 + $0xb8] sm:$0xf]
  %v10782 = vld [vmem:[%s4 + $0xbc] sm:$0xf]
  %v10783 = vld [vmem:[%s4 + $0xc0] sm:$0xf]
  %v10784 = vld [vmem:[%s4 + $0xc4] sm:$0xf]
  %v10785 = vld [vmem:[%s4 + $0xc8] sm:$0xf]
  %v10786 = vld [vmem:[%s4 + $0xcc] sm:$0xf]
  %v10787 = vld [vmem:[%s4 + $0xd0] sm:$0xf]
  %v10788 = vld [vmem:[%s4 + $0xd4] sm:$0xf]
  %v10789 = vld [vmem:[%s4 + $0xd8] sm:$0xf]
  %v10790 = vld [vmem:[%s4 + $0xdc] sm:$0xf]
  %v10791 = vld [vmem:[%s4 + $0xe0] sm:$0xf]
  %v10792 = vld [vmem:[%s4 + $0xe4] sm:$0xf]
  %v10793 = vld [vmem:[%s4 + $0xe8] sm:$0xf]
  %v10794 = vld [vmem:[%s4 + $0xec] sm:$0xf]
  %v10795 = vld [vmem:[%s4 + $0xf0] sm:$0xf]
  %v10796 = vld [vmem:[%s4 + $0xf4] sm:$0xf]
  %v10797 = vld [vmem:[%s4 + $0xf8] sm:$0xf]
  %v10798 = vld [vmem:[%s4 + $0xfc] sm:$0xf]
  %10800 = vst [vmem:[#allocation1] ss:$4 sm:$0xff] %v10734
  %v10801 = vld.sshfl [vmem:[#allocation1] sm:$0xff pattern:$0x73625140]
  %v10802 = vld.sshfl [vmem:[#allocation1 + $0x8] sm:$0xff pattern:$0x73625140]
  %v10803 = vld.sshfl [vmem:[#allocation1 + $0x10] sm:$0xff pattern:$0x73625140]
  %v10804 = vld.sshfl [vmem:[#allocation1 + $0x18] sm:$0xff pattern:$0x73625140]
  %v10873 = vunpack.c.l.b16 %v10735
  %v10874 = vunpack.c.l.b16 %v10736
  %v10875 = vunpack.c.l.b16 %v10737
  %v10876 = vunpack.c.l.b16 %v10738
  %v10877 = vunpack.c.l.b16 %v10739
  %v10878 = vunpack.c.l.b16 %v10740
  %v10879 = vunpack.c.l.b16 %v10741
  %v10880 = vunpack.c.l.b16 %v10742
  %v10881 = vunpack.c.l.b16 %v10743
  %v10882 = vunpack.c.l.b16 %v10744
  %v10883 = vunpack.c.l.b16 %v10745
  %v10884 = vunpack.c.l.b16 %v10746
  %v10885 = vunpack.c.l.b16 %v10747
  %v10886 = vunpack.c.l.b16 %v10748
  %v10887 = vunpack.c.l.b16 %v10749
  %v10888 = vunpack.c.l.b16 %v10750
  %v10889 = vunpack.c.l.b16 %v10751
  %v10890 = vunpack.c.l.b16 %v10752
  %v10891 = vunpack.c.l.b16 %v10753
  %v10892 = vunpack.c.l.b16 %v10754
  %v10893 = vunpack.c.l.b16 %v10755
  %v10894 = vunpack.c.l.b16 %v10756
  %v10895 = vunpack.c.l.b16 %v10757
  %v10896 = vunpack.c.l.b16 %v10758
  %v10897 = vunpack.c.l.b16 %v10759
  %v10898 = vunpack.c.l.b16 %v10760
  %v10899 = vunpack.c.l.b16 %v10761
  %v10900 = vunpack.c.l.b16 %v10762
  %v10901 = vunpack.c.l.b16 %v10763
  %v10902 = vunpack.c.l.b16 %v10764
  %v10903 = vunpack.c.l.b16 %v10765
  %v10904 = vunpack.c.l.b16 %v10766
  %v10905 = vunpack.c.l.b16 %v10767
  %v10906 = vunpack.c.l.b16 %v10768
  %v10907 = vunpack.c.l.b16 %v10769
  %v10908 = vunpack.c.l.b16 %v10770
  %v10909 = vunpack.c.l.b16 %v10771
  %v10910 = vunpack.c.l.b16 %v10772
  %v10911 = vunpack.c.l.b16 %v10773
  %v10912 = vunpack.c.l.b16 %v10774
  %v10913 = vunpack.c.l.b16 %v10775
  %v10914 = vunpack.c.l.b16 %v10776
  %v10915 = vunpack.c.l.b16 %v10777
  %v10916 = vunpack.c.l.b16 %v10778
  %v10917 = vunpack.c.l.b16 %v10779
  %v10918 = vunpack.c.l.b16 %v10780
  %v10919 = vunpack.c.l.b16 %v10781
  %v10920 = vunpack.c.l.b16 %v10782
  %v10921 = vunpack.c.l.b16 %v10783
  %v10922 = vunpack.c.l.b16 %v10784
  %v10923 = vunpack.c.l.b16 %v10785
  %v10924 = vunpack.c.l.b16 %v10786
  %v10925 = vunpack.c.l.b16 %v10787
  %v10926 = vunpack.c.l.b16 %v10788
  %v10927 = vunpack.c.l.b16 %v10789
  %v10928 = vunpack.c.l.b16 %v10790
  %v10929 = vunpack.c.l.b16 %v10791
  %v10930 = vunpack.c.l.b16 %v10792
  %v10931 = vunpack.c.l.b16 %v10793
  %v10932 = vunpack.c.l.b16 %v10794
  %v10933 = vunpack.c.l.b16 %v10795
  %v10934 = vunpack.c.l.b16 %v10796
  %v10935 = vunpack.c.l.b16 %v10797
  %v10936 = vunpack.c.l.b16 %v10798
  %v10937 = vpack.c.b16 %v10874, %v10873
  %v10938 = vpack.c.b16 %v10876, %v10875
  %v10939 = vpack.c.b16 %v10878, %v10877
  %v10940 = vpack.c.b16 %v10880, %v10879
  %v10941 = vpack.c.b16 %v10882, %v10881
  %v10942 = vpack.c.b16 %v10884, %v10883
  %v10943 = vpack.c.b16 %v10886, %v10885
  %v10944 = vpack.c.b16 %v10888, %v10887
  %v10945 = vpack.c.b16 %v10890, %v10889
  %v10946 = vpack.c.b16 %v10892, %v10891
  %v10947 = vpack.c.b16 %v10894, %v10893
  %v10948 = vpack.c.b16 %v10896, %v10895
  %v10949 = vpack.c.b16 %v10898, %v10897
  %v10950 = vpack.c.b16 %v10900, %v10899
  %v10951 = vpack.c.b16 %v10902, %v10901
  %v10952 = vpack.c.b16 %v10904, %v10903
  %v10953 = vpack.c.b16 %v10906, %v10905
  %v10954 = vpack.c.b16 %v10908, %v10907
  %v10955 = vpack.c.b16 %v10910, %v10909
  %v10956 = vpack.c.b16 %v10912, %v10911
  %v10957 = vpack.c.b16 %v10914, %v10913
  %v10958 = vpack.c.b16 %v10916, %v10915
  %v10959 = vpack.c.b16 %v10918, %v10917
  %v10960 = vpack.c.b16 %v10920, %v10919
  %v10961 = vpack.c.b16 %v10922, %v10921
  %v10962 = vpack.c.b16 %v10924, %v10923
  %v10963 = vpack.c.b16 %v10926, %v10925
  %v10964 = vpack.c.b16 %v10928, %v10927
  %v10965 = vpack.c.b16 %v10930, %v10929
  %v10966 = vpack.c.b16 %v10932, %v10931
  %v10967 = vpack.c.b16 %v10934, %v10933
  %v10968 = vpack.c.b16 %v10936, %v10935
  %11001 = vmatpush.bf16.msra.mxu0 %v10944
  %11002 = vmatpush.bf16.msra.mxu0 %v10943
  %11003 = vmatpush.bf16.msra.mxu0 %v10942
  %11004 = vmatpush.bf16.msra.mxu0 %v10941
  %11005 = vmatpush.bf16.msra.mxu0 %v10940
  %11006 = vmatpush.bf16.msra.mxu0 %v10939
  %11007 = vmatpush.bf16.msra.mxu0 %v10938
  %11008 = vmatpush.bf16.msra.mxu0 %v10937
  %11009 = vmatmul.bf16.gmra.mxu0 %v10801
  %v11010 = vpop.f32.mrf.mxu0
  %v11011 = vadd.f32 0.0, %v11010
  %v11012 = vpop.f32.mrf.mxu0
  %11013 = vdwg.mxu0
  %11014 = vmatpush.bf16.msra.mxu0 %v10952
  %11015 = vmatpush.bf16.msra.mxu0 %v10951
  %11016 = vmatpush.bf16.msra.mxu0 %v10950
  %11017 = vmatpush.bf16.msra.mxu0 %v10949
  %11018 = vmatpush.bf16.msra.mxu0 %v10948
  %11019 = vmatpush.bf16.msra.mxu0 %v10947
  %11020 = vmatpush.bf16.msra.mxu0 %v10946
  %11021 = vmatpush.bf16.msra.mxu0 %v10945
  %11022 = vmatmul.bf16.gmra.mxu0 %v10802
  %v11023 = vpop.f32.mrf.mxu0
  %v11024 = vadd.f32 %v11011, %v11023
  %v11025 = vpop.f32.mrf.mxu0
  %11026 = vdwg.mxu0
  %11027 = vmatpush.bf16.msra.mxu0 %v10960
  %11028 = vmatpush.bf16.msra.mxu0 %v10959
  %11029 = vmatpush.bf16.msra.mxu0 %v10958
  %11030 = vmatpush.bf16.msra.mxu0 %v10957
  %11031 = vmatpush.bf16.msra.mxu0 %v10956
  %11032 = vmatpush.bf16.msra.mxu0 %v10955
  %11033 = vmatpush.bf16.msra.mxu0 %v10954
  %11034 = vmatpush.bf16.msra.mxu0 %v10953
  %11035 = vmatmul.bf16.gmra.mxu0 %v10803
  %v11036 = vpop.f32.mrf.mxu0
  %v11037 = vadd.f32 %v11024, %v11036
  %v11038 = vpop.f32.mrf.mxu0
  %11039 = vdwg.mxu0
  %11040 = vmatpush.bf16.msra.mxu0 %v10968
  %11041 = vmatpush.bf16.msra.mxu0 %v10967
  %11042 = vmatpush.bf16.msra.mxu0 %v10966
  %11043 = vmatpush.bf16.msra.mxu0 %v10965
  %11044 = vmatpush.bf16.msra.mxu0 %v10964
  %11045 = vmatpush.bf16.msra.mxu0 %v10963
  %11046 = vmatpush.bf16.msra.mxu0 %v10962
  %11047 = vmatpush.bf16.msra.mxu0 %v10961
  %11048 = vmatmul.bf16.gmra.mxu0 %v10804
  %v11049 = vpop.f32.mrf.mxu0
  %v11050 = vadd.f32 %v11037, %v11049
  %v11051 = vpop.f32.mrf.mxu0
  %11052 = vdwg.mxu0
  %vm11053 = vcmask 1043456
  %v11054 = vsel %vm11053, %v11050, 0.0
  %v11055 = vrot.slane %v11054, 4
  %v11056 = vadd.f32 %v11054, %v11055
  %v11057 = vrot.slane %v11056, 2
  %v11058 = vadd.f32 %v11056, %v11057
  %v11059 = vrot.slane %v11058, 1
  %v11060 = vadd.f32 %v11058, %v11059
  %v11061 = vrcp.pop 4.0
  %v11062 = vmul.f32 4.0, %v11061
  %v11063 = vsub.f32 1.0, %v11062
  %v11064 = vmul.f32 %v11061, %v11063
  %v11065 = vadd.f32 %v11061, %v11064
  %vm11066 = vweird.f32 %v11061
  %v11067 = vsel %vm11066, %v11061, %v11065
  %v11068 = vmul.f32 %v11060, %v11067
  %v11069 = vsub.f32 %v11050, %v11068
  %v11070 = vmul.f32 %v11069, %v11069
  %v11071 = vsel %vm11053, %v11070, 0.0
  %v11072 = vrot.slane %v11071, 4
  %v11073 = vadd.f32 %v11071, %v11072
  %v11074 = vrot.slane %v11073, 2
  %v11075 = vadd.f32 %v11073, %v11074
  %v11076 = vrot.slane %v11075, 1
  %v11077 = vadd.f32 %v11075, %v11076
  %v11078 = vmul.f32 %v11077, %v11067
  %v11079 = vadd.f32 %v11078, 1e-05
  %v11080 = vrsqrt.pop %v11079
  %v11081 = vmul.f32 %v11080, %v11079
  %v11082 = vmul.f32 %v11081, %v11080
  %v11083 = vmul.f32 0.5, %v11082
  %v11084 = vsub.f32 1.5, %v11083
  %v11085 = vmul.f32 %v11080, %v11084
  %vm11086 = vweird.f32 %v11079
  %vm11087 = vweird.f32 %v11080
  %vm11088 = vmor %vm11086, %vm11087
  %v11089 = vsel %vm11088, %v11080, %v11085
  %v11090 = vmul.f32 %v11069, %v11089
  %v11091 = vld [vmem:[%s5] sm:$0x1]
  %v11093 = vperm.slane %v11091, 0
  %v11095 = vmul.f32 %v11090, %v11093
  %v11096 = vld [vmem:[%s6] sm:$0x1]
  %v11098 = vperm.slane %v11096, 0
  %v11100 = vadd.f32 %v11095, %v11098
  %vm11101 = vcmp.ge.f32.partialorder %v11100, 0.0
  %v11102 = vmul.f32 %v11100, 0.2
  %v11103 = vsel %vm11101, %v11100, %v11102
  %v11104 = vld [vmem:[%s7] sm:$0x1]
  %v11106 = vperm.slane %v11104, 0
  %v11108 = vmul.f32 %v11103, %v11106
  %v11109 = vsel %vm11053, %v11108, 0.0
  %11110 = vadd.xlane.f32.xlu0 %v11109
  %v11111 = vpop.xlane.xlu0 %11110
  %v11112 = vld [vmem:[#allocation4] sm:$0x1]
  %v11114 = vperm.slane %v11112, 0
  %v11116 = vadd.f32 %v11111, %v11114
  %vm11117 = vcmask 3072
  %11118 = vst.msk [vmem:[%s9] sm:$0xf] %vm11117, %v11116
  // Predicated region
  $region38: #{discriminator_forward.5} parent=0 // pred_check
    _
  $region39: #{discriminator_forward.5} parent=0 // pred_check_branch
    %11120 = sbr.rel (0) target = $region41
  $region40: #{discriminator_forward.5} parent=0 // pred_region
    _
  $region41: #{discriminator_forward.5} parent=0 // pred_fallthru
    _
  // Predicated region
  $region42: #{discriminator_forward.5} parent=0 // pred_check
    _
  $region43: #{discriminator_forward.5} parent=0 // pred_check_branch
    %11122 = sbr.rel (0) target = $region45
  $region44: #{discriminator_forward.5} parent=0 // pred_region
    _
  $region45: #{discriminator_forward.5} parent=0 // pred_fallthru
    _

</llo_original>
